<compile_context>
chip_gen: v7x
topology: tpu7x:2x2x1
jax: 0.10.0
libtpu: 0.0.40
codegen_flags: <defaults>
</compile_context>

<pallas_src>
import jax
import jax.numpy as jnp
import numpy as np
from jax.experimental import pallas as pl
from jax.experimental.pallas import tpu as pltpu


# ---------- fused kernel: multi-scale convs + SE gate + 1x1 fusion + BN partial stats ----------
def _msffe_fused_kernel(xpad_ref, w1_ref, w3c_ref, w5c_ref, b1_ref, b3_ref, b5_ref,
                        sew1_ref, sew2_ref, wf_ref, bf_ref, z_ref, stats_ref):
    # xpad_ref : (1, H+4, W+4, C) bf16  input padded by 2 (shared pad for 1x1/3x3/5x5 taps)
    # w1_ref   : (C, C)           bf16  1x1 conv weight
    # w3c_ref  : (3, 3C, C)       bf16  3x3 conv weight, one (3C, C) block per dx in (2,1,3)
    # w5c_ref  : (5, 5C, C)       bf16  5x5 conv weight, one (5C, C) block per dx in (2,1,3,0,4)
    # b1/b3/b5 : (1, C)           f32   conv biases
    # sew1_ref : (3C, r)          bf16  SE squeeze weight
    # sew2_ref : (r, 3C)          bf16  SE excite  weight
    # wf_ref   : (3, C, C)        bf16  1x1 fusion weight split per branch [c1|c3|c5]
    # bf_ref   : (1, C)           f32   fusion bias
    # z_ref    : (1, H*W, C)      f32   pre-BN output
    # stats_ref: (1, 2, C)        f32   row0 = sum(z), row1 = sum((z - mean_b)^2) over H*W
    H = xpad_ref.shape[1] - 4
    W = xpad_ref.shape[2] - 4
    C = xpad_ref.shape[3]
    f32 = jnp.float32

    # Nested tap order: dx (and dy) visited as (2,1,3,0,4) so the 1x1 tap is lane block 0 and
    # the 3x3 taps are the first 3 lane blocks / first 3 dx iterations of the 5x5 footprint.
    ORD = (2, 1, 3, 0, 4)

    acc1 = acc3 = acc5 = None
    for j, dx in enumerate(ORD):
        # one sublane-offset slice per dx; the 5 dy taps below are free leading-dim slices.
        col = xpad_ref[0, :, dx:dx + W, :]                                # (H+4, W, C) bf16
        slab = jnp.concatenate([col[dy:dy + H] for dy in ORD],
                               axis=-1).reshape(H * W, 5 * C)             # (H*W, 5C) bf16
        d5 = jnp.dot(slab, w5c_ref[j], preferred_element_type=f32)        # (H*W, C) f32
        acc5 = d5 if acc5 is None else acc5 + d5
        if j < 3:                                 # dx in {2,1,3}: this column feeds the 3x3
            d3 = jnp.dot(slab[:, :3 * C], w3c_ref[j], preferred_element_type=f32)
            acc3 = d3 if acc3 is None else acc3 + d3
        if j == 0:                                # (dy,dx) = (2,2): the 1x1 (center) tap
            acc1 = jnp.dot(slab[:, :C], w1_ref[...], preferred_element_type=f32)

    f1 = acc1 + b1_ref[...]                                               # (H*W, C) f32
    f3 = acc3 + b3_ref[...]
    f5 = acc5 + b5_ref[...]

    # Squeeze-Excitation: per-branch global average pool -> MLP -> sigmoid channel gate.
    inv_hw = 1.0 / float(H * W)
    pooled = jnp.concatenate([jnp.sum(f1, axis=0, keepdims=True),
                              jnp.sum(f3, axis=0, keepdims=True),
                              jnp.sum(f5, axis=0, keepdims=True)], axis=-1) * inv_hw  # (1, 3C)
    h = jnp.maximum(jnp.dot(pooled.astype(jnp.bfloat16), sew1_ref[...],
                            preferred_element_type=f32), 0.0)             # (1, r)
    s = jax.nn.sigmoid(jnp.dot(h.astype(jnp.bfloat16), sew2_ref[...],
                               preferred_element_type=f32))               # (1, 3C)

    # channel gate + 1x1 fusion conv, accumulated per branch (no (H*W, 3C) concat anywhere).
    g1 = (f1 * s[:, :C]).astype(jnp.bfloat16)
    g3 = (f3 * s[:, C:2 * C]).astype(jnp.bfloat16)
    g5 = (f5 * s[:, 2 * C:]).astype(jnp.bfloat16)
    z = (jnp.dot(g1, wf_ref[0], preferred_element_type=f32)
         + jnp.dot(g3, wf_ref[1], preferred_element_type=f32)
         + jnp.dot(g5, wf_ref[2], preferred_element_type=f32)
         + bf_ref[...])                                                   # (H*W, C) f32

    z_ref[0] = z

    # BN partial stats: per-image sum and sum of squared deviations about the per-image mean.
    zsum = jnp.sum(z, axis=0, keepdims=True)                              # (1, C)
    d = z - zsum * inv_hw
    m2 = jnp.sum(d * d, axis=0, keepdims=True)                            # (1, C)
    stats_ref[0] = jnp.concatenate([zsum, m2], axis=0)                    # (2, C)


# ------------------------------------------- wrapper -------------------------------------------
def msffe_pallas(x_nchw, p):
    """MSFFE forward. x_nchw: (B, C, H, W) f32 (PyTorch layout). Returns (B, C, H, W) f32."""
    x = jnp.transpose(x_nchw, (0, 2, 3, 1))                      # NCHW -> NHWC (channels on lanes)
    B, H, W, C = x.shape
    # shared pad-2 slab, cast once to bf16 for the MXU path (halves the big HBM read)
    xpad = jnp.pad(x, ((0, 0), (2, 2), (2, 2), (0, 0))).astype(jnp.bfloat16)

    # Per-dx (column) conv weights; dy rows ordered (2,1,3,0,4) to match the kernel's slab lanes.
    # NOTE: this ordering must stay in lockstep with ORD inside the kernel.
    ORD = (2, 1, 3, 0, 4)
    w5c = jnp.stack([jnp.concatenate([p['w5'][dy, dx] for dy in ORD], axis=0)
                     for dx in ORD])                                        # (5, 5C, C)
    w3c = jnp.stack([jnp.concatenate([p['w3'][dy - 1, dx - 1] for dy in ORD[:3]], axis=0)
                     for dx in ORD[:3]])                                    # (3, 3C, C)
    wf3 = jnp.stack([p['wf'][0:C], p['wf'][C:2 * C], p['wf'][2 * C:]])      # (3, C, C)
    bf16 = lambda a: a.astype(jnp.bfloat16)

    def full(a):
        return pl.BlockSpec(a.shape, lambda b, _n=a.ndim: (0,) * _n)

    z, stats = pl.pallas_call(
        _msffe_fused_kernel,
        out_shape=(jax.ShapeDtypeStruct((B, H * W, C), jnp.float32),
                   jax.ShapeDtypeStruct((B, 2, C), jnp.float32)),
        grid=(B,),
        in_specs=[
            pl.BlockSpec((1, H + 4, W + 4, C), lambda b: (b, 0, 0, 0)),
            full(p['w1']), full(w3c), full(w5c),
            full(p['b1']), full(p['b3']), full(p['b5']),
            full(p['sew1']), full(p['sew2']), full(wf3), full(p['bf']),
        ],
        out_specs=(pl.BlockSpec((1, H * W, C), lambda b: (b, 0, 0)),
                   pl.BlockSpec((1, 2, C), lambda b: (b, 0, 0))),
        compiler_params=pltpu.CompilerParams(
            # batch axis across TensorCores on v7x (no-op on single-TC v5e/v6e).
            dimension_semantics=("parallel",)),
    )(xpad, bf16(p['w1']), bf16(w3c), bf16(w5c), p['b1'], p['b3'], p['b5'],
      bf16(p['sew1']), bf16(p['sew2']), bf16(wf3), p['bf'])

    # --- combine per-image BN stats (training-mode batch stats, biased variance, eps=1e-5) ---
    n = H * W
    mean_b = stats[:, 0, :] / n                                    # (B, C)
    m2_b = stats[:, 1, :]                                          # (B, C)
    mean = jnp.mean(mean_b, axis=0)                                # (C,)  (equal count per image)
    m2 = jnp.sum(m2_b, axis=0) + n * jnp.sum((mean_b - mean) ** 2, axis=0)
    var = m2 / (B * n)

    # --- BN + ReLU + NHWC->NCHW epilogue: single fused XLA elementwise+transpose pass.
    scale = p['gamma'][0] * jax.lax.rsqrt(var + 1e-5)              # (C,)
    shift = p['beta'][0] - mean * scale
    out = jnp.maximum(z.reshape(B, H, W, C) * scale + shift, 0.0)
    return jnp.transpose(out, (0, 3, 1, 2))                        # NHWC -> NCHW


# -------------------------- deterministic parameter init --------------------------
def init_params(key, C, reduction=16):
    C3 = 3 * C
    r = max(C3 // reduction, 1)
    ks = jax.random.split(key, 10)

    def w(k, shape, fan_in):
        return (jax.random.normal(k, shape, jnp.float32) / np.sqrt(fan_in)).astype(jnp.float32)

    return dict(
        w1=w(ks[0], (C, C), C),            b1=w(ks[1], (1, C), C),
        w3=w(ks[2], (3, 3, C, C), 9 * C),  b3=w(ks[3], (1, C), 9 * C),     # HWIO
        w5=w(ks[4], (5, 5, C, C), 25 * C), b5=w(ks[5], (1, C), 25 * C),    # HWIO
        sew1=w(ks[6], (C3, r), C3),        sew2=w(ks[7], (r, C3), r),      # nn.Linear(bias=False)
        wf=w(ks[8], (C3, C), C3),          bf=w(ks[9], (1, C), C3),
        gamma=jnp.ones((1, C), jnp.float32),
        beta=jnp.zeros((1, C), jnp.float32),
    )


# ------------------------------- pure-JAX reference -------------------------------
def ref_forward(x_nchw, p):
    """XLA reference. Applies the same bf16 rounding to every MXU input that the kernel uses
    (activations, conv/fusion/SE weights); accumulation and post-matmul math stays f32, so the
    comparison isolates kernel correctness rather than bf16 quantization noise."""
    q = lambda a: a.astype(jnp.bfloat16).astype(jnp.float32)
    x = q(jnp.transpose(x_nchw, (0, 2, 3, 1)))

    def conv(x, w, b, pad):
        y = jax.lax.conv_general_dilated(
            x, q(w), (1, 1), [(pad, pad), (pad, pad)],
            dimension_numbers=('NHWC', 'HWIO', 'NHWC'))
        return y + b

    c1 = conv(x, p['w1'][None, None, :, :], p['b1'], 0)
    c3 = conv(x, p['w3'], p['b3'], 1)
    c5 = conv(x, p['w5'], p['b5'], 2)
    f = jnp.concatenate([c1, c3, c5], axis=-1)
    y = jnp.mean(f, axis=(1, 2))                                    # (B, 3C)
    h = jnp.maximum(q(y) @ q(p['sew1']), 0.0)
    s = jax.nn.sigmoid(q(h) @ q(p['sew2']))
    f = q(f * s[:, None, None, :])
    z = jnp.einsum('bhwc,cd->bhwd', f, q(p['wf'])) + p['bf']
    mu = jnp.mean(z, axis=(0, 1, 2))
    var = jnp.mean((z - mu) ** 2, axis=(0, 1, 2))
    zn = (z - mu) / jnp.sqrt(var + 1e-5) * p['gamma'] + p['beta']
    out = jnp.maximum(zn, 0.0)
    return jnp.transpose(out, (0, 3, 1, 2))


if __name__ == "__main__":
    key = jax.random.PRNGKey(0)
    kx, kp = jax.random.split(key)
    # C=16 is the smallest channel count that keeps the SE squeeze dim (3C // 16 = 3) faithful.
    B, C, H, W = 2, 16, 16, 16
    x = jax.random.normal(kx, (B, C, H, W), jnp.float32)            # PyTorch NCHW layout
    params = init_params(kp, C)

    out = jax.jit(msffe_pallas)(x, params)
    out = jax.block_until_ready(out)

    ref = ref_forward(x, params)
    np.testing.assert_allclose(np.asarray(out), np.asarray(ref), rtol=1e-2, atol=1e-2)
    assert out.shape == (B, C, H, W)
    print("KERNEL_OK")
</pallas_src>

<mosaic_0001>
module attributes {stable_mosaic.version = 11 : i64} {
  func.func @_msffe_fused_kernel(%arg0: i32, %arg1: memref<1x20x20x16xbf16, #tpu.memory_space<vmem>>, %arg2: memref<16x16xbf16, #tpu.memory_space<vmem>>, %arg3: memref<3x48x16xbf16, #tpu.memory_space<vmem>>, %arg4: memref<5x80x16xbf16, #tpu.memory_space<vmem>>, %arg5: memref<1x16xf32, #tpu.memory_space<vmem>>, %arg6: memref<1x16xf32, #tpu.memory_space<vmem>>, %arg7: memref<1x16xf32, #tpu.memory_space<vmem>>, %arg8: memref<48x3xbf16, #tpu.memory_space<vmem>>, %arg9: memref<3x48xbf16, #tpu.memory_space<vmem>>, %arg10: memref<3x16x16xbf16, #tpu.memory_space<vmem>>, %arg11: memref<1x16xf32, #tpu.memory_space<vmem>>, %arg12: memref<1x256x16xf32, #tpu.memory_space<vmem>>, %arg13: memref<1x2x16xf32, #tpu.memory_space<vmem>>) attributes {dimension_semantics = [#tpu.dimension_semantics<parallel>], iteration_bounds = array<i64: 2>, scalar_prefetch = 0 : i64, scratch_operands = 0 : i64, tpu.core_type = #tpu.core_type<tc>, window_params = [{transform_indices = @transform_0, window_bounds = array<i64: 1, 20, 20, 16>}, {pipeline_mode = #tpu.pipeline_mode<synchronous>, transform_indices = @transform_1, window_bounds = array<i64: 16, 16>}, {pipeline_mode = #tpu.pipeline_mode<synchronous>, transform_indices = @transform_2, window_bounds = array<i64: 3, 48, 16>}, {pipeline_mode = #tpu.pipeline_mode<synchronous>, transform_indices = @transform_3, window_bounds = array<i64: 5, 80, 16>}, {pipeline_mode = #tpu.pipeline_mode<synchronous>, transform_indices = @transform_4, window_bounds = array<i64: 1, 16>}, {pipeline_mode = #tpu.pipeline_mode<synchronous>, transform_indices = @transform_5, window_bounds = array<i64: 1, 16>}, {pipeline_mode = #tpu.pipeline_mode<synchronous>, transform_indices = @transform_6, window_bounds = array<i64: 1, 16>}, {pipeline_mode = #tpu.pipeline_mode<synchronous>, transform_indices = @transform_7, window_bounds = array<i64: 48, 3>}, {pipeline_mode = #tpu.pipeline_mode<synchronous>, transform_indices = @transform_8, window_bounds = array<i64: 3, 48>}, {pipeline_mode = #tpu.pipeline_mode<synchronous>, transform_indices = @transform_9, window_bounds = array<i64: 3, 16, 16>}, {pipeline_mode = #tpu.pipeline_mode<synchronous>, transform_indices = @transform_10, window_bounds = array<i64: 1, 16>}, {transform_indices = @transform_11, window_bounds = array<i64: 1, 256, 16>}, {transform_indices = @transform_12, window_bounds = array<i64: 1, 2, 16>}]} {
    %c0 = arith.constant 0 : index
    %c0_0 = arith.constant 0 : index
    %c2 = arith.constant 2 : index
    %c0_1 = arith.constant 0 : index
    %0 = vector.load %arg1[%c0, %c0_0, %c2, %c0_1] : memref<1x20x20x16xbf16, #tpu.memory_space<vmem>>, vector<1x20x16x16xbf16>
    %1 = vector.shape_cast %0 : vector<1x20x16x16xbf16> to vector<20x16x16xbf16>
    %2 = vector.extract_strided_slice %1 {offsets = [2, 0, 0], sizes = [16, 16, 16], strides = [1, 1, 1]} : vector<20x16x16xbf16> to vector<16x16x16xbf16>
    %3 = vector.extract_strided_slice %1 {offsets = [1, 0, 0], sizes = [16, 16, 16], strides = [1, 1, 1]} : vector<20x16x16xbf16> to vector<16x16x16xbf16>
    %4 = vector.extract_strided_slice %1 {offsets = [3, 0, 0], sizes = [16, 16, 16], strides = [1, 1, 1]} : vector<20x16x16xbf16> to vector<16x16x16xbf16>
    %5 = vector.extract_strided_slice %1 {offsets = [0, 0, 0], sizes = [16, 16, 16], strides = [1, 1, 1]} : vector<20x16x16xbf16> to vector<16x16x16xbf16>
    %6 = vector.extract_strided_slice %1 {offsets = [4, 0, 0], sizes = [16, 16, 16], strides = [1, 1, 1]} : vector<20x16x16xbf16> to vector<16x16x16xbf16>
    %7 = tpu.concatenate %2, %3, %4, %5, %6 in 2 : vector<16x16x16xbf16>, vector<16x16x16xbf16>, vector<16x16x16xbf16>, vector<16x16x16xbf16>, vector<16x16x16xbf16> -> vector<16x16x80xbf16>
    %8 = vector.shape_cast %7 : vector<16x16x80xbf16> to vector<256x80xbf16>
    %c0_2 = arith.constant 0 : index
    %c0_3 = arith.constant 0 : index
    %c0_4 = arith.constant 0 : index
    %9 = vector.load %arg4[%c0_2, %c0_3, %c0_4] : memref<5x80x16xbf16, #tpu.memory_space<vmem>>, vector<1x80x16xbf16>
    %10 = vector.shape_cast %9 : vector<1x80x16xbf16> to vector<80x16xbf16>
    %cst = arith.constant dense<0.000000e+00> : vector<256x16xf32>
    %11 = tpu.matmul %8, %10, %cst {dimension_numbers = #tpu.dot_dimension_numbers<[1], [0], [0], [1], [0, 0, 1, 1], [], []>} : vector<256x80xbf16>, vector<80x16xbf16>, vector<256x16xf32> -> vector<256x16xf32>
    %12 = vector.extract_strided_slice %8 {offsets = [0, 0], sizes = [256, 48], strides = [1, 1]} : vector<256x80xbf16> to vector<256x48xbf16>
    %c0_5 = arith.constant 0 : index
    %c0_6 = arith.constant 0 : index
    %c0_7 = arith.constant 0 : index
    %13 = vector.load %arg3[%c0_5, %c0_6, %c0_7] : memref<3x48x16xbf16, #tpu.memory_space<vmem>>, vector<1x48x16xbf16>
    %14 = vector.shape_cast %13 : vector<1x48x16xbf16> to vector<48x16xbf16>
    %cst_8 = arith.constant dense<0.000000e+00> : vector<256x16xf32>
    %15 = tpu.matmul %12, %14, %cst_8 {dimension_numbers = #tpu.dot_dimension_numbers<[1], [0], [0], [1], [0, 0, 1, 1], [], []>} : vector<256x48xbf16>, vector<48x16xbf16>, vector<256x16xf32> -> vector<256x16xf32>
    %16 = vector.extract_strided_slice %8 {offsets = [0, 0], sizes = [256, 16], strides = [1, 1]} : vector<256x80xbf16> to vector<256x16xbf16>
    %c0_9 = arith.constant 0 : index
    %c0_10 = arith.constant 0 : index
    %17 = vector.load %arg2[%c0_9, %c0_10] : memref<16x16xbf16, #tpu.memory_space<vmem>>, vector<16x16xbf16>
    %cst_11 = arith.constant dense<0.000000e+00> : vector<256x16xf32>
    %18 = tpu.matmul %16, %17, %cst_11 {dimension_numbers = #tpu.dot_dimension_numbers<[1], [0], [0], [1], [0, 0, 1, 1], [], []>} : vector<256x16xbf16>, vector<16x16xbf16>, vector<256x16xf32> -> vector<256x16xf32>
    %c0_12 = arith.constant 0 : index
    %c0_13 = arith.constant 0 : index
    %c1 = arith.constant 1 : index
    %c0_14 = arith.constant 0 : index
    %19 = vector.load %arg1[%c0_12, %c0_13, %c1, %c0_14] : memref<1x20x20x16xbf16, #tpu.memory_space<vmem>>, vector<1x20x16x16xbf16>
    %20 = vector.shape_cast %19 : vector<1x20x16x16xbf16> to vector<20x16x16xbf16>
    %21 = vector.extract_strided_slice %20 {offsets = [2, 0, 0], sizes = [16, 16, 16], strides = [1, 1, 1]} : vector<20x16x16xbf16> to vector<16x16x16xbf16>
    %22 = vector.extract_strided_slice %20 {offsets = [1, 0, 0], sizes = [16, 16, 16], strides = [1, 1, 1]} : vector<20x16x16xbf16> to vector<16x16x16xbf16>
    %23 = vector.extract_strided_slice %20 {offsets = [3, 0, 0], sizes = [16, 16, 16], strides = [1, 1, 1]} : vector<20x16x16xbf16> to vector<16x16x16xbf16>
    %24 = vector.extract_strided_slice %20 {offsets = [0, 0, 0], sizes = [16, 16, 16], strides = [1, 1, 1]} : vector<20x16x16xbf16> to vector<16x16x16xbf16>
    %25 = vector.extract_strided_slice %20 {offsets = [4, 0, 0], sizes = [16, 16, 16], strides = [1, 1, 1]} : vector<20x16x16xbf16> to vector<16x16x16xbf16>
    %26 = tpu.concatenate %21, %22, %23, %24, %25 in 2 : vector<16x16x16xbf16>, vector<16x16x16xbf16>, vector<16x16x16xbf16>, vector<16x16x16xbf16>, vector<16x16x16xbf16> -> vector<16x16x80xbf16>
    %27 = vector.shape_cast %26 : vector<16x16x80xbf16> to vector<256x80xbf16>
    %c1_15 = arith.constant 1 : index
    %c0_16 = arith.constant 0 : index
    %c0_17 = arith.constant 0 : index
    %28 = vector.load %arg4[%c1_15, %c0_16, %c0_17] : memref<5x80x16xbf16, #tpu.memory_space<vmem>>, vector<1x80x16xbf16>
    %29 = vector.shape_cast %28 : vector<1x80x16xbf16> to vector<80x16xbf16>
    %cst_18 = arith.constant dense<0.000000e+00> : vector<256x16xf32>
    %30 = tpu.matmul %27, %29, %cst_18 {dimension_numbers = #tpu.dot_dimension_numbers<[1], [0], [0], [1], [0, 0, 1, 1], [], []>} : vector<256x80xbf16>, vector<80x16xbf16>, vector<256x16xf32> -> vector<256x16xf32>
    %31 = arith.addf %11, %30 : vector<256x16xf32>
    %32 = vector.extract_strided_slice %27 {offsets = [0, 0], sizes = [256, 48], strides = [1, 1]} : vector<256x80xbf16> to vector<256x48xbf16>
    %c1_19 = arith.constant 1 : index
    %c0_20 = arith.constant 0 : index
    %c0_21 = arith.constant 0 : index
    %33 = vector.load %arg3[%c1_19, %c0_20, %c0_21] : memref<3x48x16xbf16, #tpu.memory_space<vmem>>, vector<1x48x16xbf16>
    %34 = vector.shape_cast %33 : vector<1x48x16xbf16> to vector<48x16xbf16>
    %cst_22 = arith.constant dense<0.000000e+00> : vector<256x16xf32>
    %35 = tpu.matmul %32, %34, %cst_22 {dimension_numbers = #tpu.dot_dimension_numbers<[1], [0], [0], [1], [0, 0, 1, 1], [], []>} : vector<256x48xbf16>, vector<48x16xbf16>, vector<256x16xf32> -> vector<256x16xf32>
    %36 = arith.addf %15, %35 : vector<256x16xf32>
    %c0_23 = arith.constant 0 : index
    %c0_24 = arith.constant 0 : index
    %c3 = arith.constant 3 : index
    %c0_25 = arith.constant 0 : index
    %37 = vector.load %arg1[%c0_23, %c0_24, %c3, %c0_25] : memref<1x20x20x16xbf16, #tpu.memory_space<vmem>>, vector<1x20x16x16xbf16>
    %38 = vector.shape_cast %37 : vector<1x20x16x16xbf16> to vector<20x16x16xbf16>
    %39 = vector.extract_strided_slice %38 {offsets = [2, 0, 0], sizes = [16, 16, 16], strides = [1, 1, 1]} : vector<20x16x16xbf16> to vector<16x16x16xbf16>
    %40 = vector.extract_strided_slice %38 {offsets = [1, 0, 0], sizes = [16, 16, 16], strides = [1, 1, 1]} : vector<20x16x16xbf16> to vector<16x16x16xbf16>
    %41 = vector.extract_strided_slice %38 {offsets = [3, 0, 0], sizes = [16, 16, 16], strides = [1, 1, 1]} : vector<20x16x16xbf16> to vector<16x16x16xbf16>
    %42 = vector.extract_strided_slice %38 {offsets = [0, 0, 0], sizes = [16, 16, 16], strides = [1, 1, 1]} : vector<20x16x16xbf16> to vector<16x16x16xbf16>
    %43 = vector.extract_strided_slice %38 {offsets = [4, 0, 0], sizes = [16, 16, 16], strides = [1, 1, 1]} : vector<20x16x16xbf16> to vector<16x16x16xbf16>
    %44 = tpu.concatenate %39, %40, %41, %42, %43 in 2 : vector<16x16x16xbf16>, vector<16x16x16xbf16>, vector<16x16x16xbf16>, vector<16x16x16xbf16>, vector<16x16x16xbf16> -> vector<16x16x80xbf16>
    %45 = vector.shape_cast %44 : vector<16x16x80xbf16> to vector<256x80xbf16>
    %c2_26 = arith.constant 2 : index
    %c0_27 = arith.constant 0 : index
    %c0_28 = arith.constant 0 : index
    %46 = vector.load %arg4[%c2_26, %c0_27, %c0_28] : memref<5x80x16xbf16, #tpu.memory_space<vmem>>, vector<1x80x16xbf16>
    %47 = vector.shape_cast %46 : vector<1x80x16xbf16> to vector<80x16xbf16>
    %cst_29 = arith.constant dense<0.000000e+00> : vector<256x16xf32>
    %48 = tpu.matmul %45, %47, %cst_29 {dimension_numbers = #tpu.dot_dimension_numbers<[1], [0], [0], [1], [0, 0, 1, 1], [], []>} : vector<256x80xbf16>, vector<80x16xbf16>, vector<256x16xf32> -> vector<256x16xf32>
    %49 = arith.addf %31, %48 : vector<256x16xf32>
    %50 = vector.extract_strided_slice %45 {offsets = [0, 0], sizes = [256, 48], strides = [1, 1]} : vector<256x80xbf16> to vector<256x48xbf16>
    %c2_30 = arith.constant 2 : index
    %c0_31 = arith.constant 0 : index
    %c0_32 = arith.constant 0 : index
    %51 = vector.load %arg3[%c2_30, %c0_31, %c0_32] : memref<3x48x16xbf16, #tpu.memory_space<vmem>>, vector<1x48x16xbf16>
    %52 = vector.shape_cast %51 : vector<1x48x16xbf16> to vector<48x16xbf16>
    %cst_33 = arith.constant dense<0.000000e+00> : vector<256x16xf32>
    %53 = tpu.matmul %50, %52, %cst_33 {dimension_numbers = #tpu.dot_dimension_numbers<[1], [0], [0], [1], [0, 0, 1, 1], [], []>} : vector<256x48xbf16>, vector<48x16xbf16>, vector<256x16xf32> -> vector<256x16xf32>
    %54 = arith.addf %36, %53 : vector<256x16xf32>
    %c0_34 = arith.constant 0 : index
    %c0_35 = arith.constant 0 : index
    %c0_36 = arith.constant 0 : index
    %c0_37 = arith.constant 0 : index
    %55 = vector.load %arg1[%c0_34, %c0_35, %c0_36, %c0_37] : memref<1x20x20x16xbf16, #tpu.memory_space<vmem>>, vector<1x20x16x16xbf16>
    %56 = vector.shape_cast %55 : vector<1x20x16x16xbf16> to vector<20x16x16xbf16>
    %57 = vector.extract_strided_slice %56 {offsets = [2, 0, 0], sizes = [16, 16, 16], strides = [1, 1, 1]} : vector<20x16x16xbf16> to vector<16x16x16xbf16>
    %58 = vector.extract_strided_slice %56 {offsets = [1, 0, 0], sizes = [16, 16, 16], strides = [1, 1, 1]} : vector<20x16x16xbf16> to vector<16x16x16xbf16>
    %59 = vector.extract_strided_slice %56 {offsets = [3, 0, 0], sizes = [16, 16, 16], strides = [1, 1, 1]} : vector<20x16x16xbf16> to vector<16x16x16xbf16>
    %60 = vector.extract_strided_slice %56 {offsets = [0, 0, 0], sizes = [16, 16, 16], strides = [1, 1, 1]} : vector<20x16x16xbf16> to vector<16x16x16xbf16>
    %61 = vector.extract_strided_slice %56 {offsets = [4, 0, 0], sizes = [16, 16, 16], strides = [1, 1, 1]} : vector<20x16x16xbf16> to vector<16x16x16xbf16>
    %62 = tpu.concatenate %57, %58, %59, %60, %61 in 2 : vector<16x16x16xbf16>, vector<16x16x16xbf16>, vector<16x16x16xbf16>, vector<16x16x16xbf16>, vector<16x16x16xbf16> -> vector<16x16x80xbf16>
    %63 = vector.shape_cast %62 : vector<16x16x80xbf16> to vector<256x80xbf16>
    %c3_38 = arith.constant 3 : index
    %c0_39 = arith.constant 0 : index
    %c0_40 = arith.constant 0 : index
    %64 = vector.load %arg4[%c3_38, %c0_39, %c0_40] : memref<5x80x16xbf16, #tpu.memory_space<vmem>>, vector<1x80x16xbf16>
    %65 = vector.shape_cast %64 : vector<1x80x16xbf16> to vector<80x16xbf16>
    %cst_41 = arith.constant dense<0.000000e+00> : vector<256x16xf32>
    %66 = tpu.matmul %63, %65, %cst_41 {dimension_numbers = #tpu.dot_dimension_numbers<[1], [0], [0], [1], [0, 0, 1, 1], [], []>} : vector<256x80xbf16>, vector<80x16xbf16>, vector<256x16xf32> -> vector<256x16xf32>
    %67 = arith.addf %49, %66 : vector<256x16xf32>
    %c0_42 = arith.constant 0 : index
    %c0_43 = arith.constant 0 : index
    %c4 = arith.constant 4 : index
    %c0_44 = arith.constant 0 : index
    %68 = vector.load %arg1[%c0_42, %c0_43, %c4, %c0_44] : memref<1x20x20x16xbf16, #tpu.memory_space<vmem>>, vector<1x20x16x16xbf16>
    %69 = vector.shape_cast %68 : vector<1x20x16x16xbf16> to vector<20x16x16xbf16>
    %70 = vector.extract_strided_slice %69 {offsets = [2, 0, 0], sizes = [16, 16, 16], strides = [1, 1, 1]} : vector<20x16x16xbf16> to vector<16x16x16xbf16>
    %71 = vector.extract_strided_slice %69 {offsets = [1, 0, 0], sizes = [16, 16, 16], strides = [1, 1, 1]} : vector<20x16x16xbf16> to vector<16x16x16xbf16>
    %72 = vector.extract_strided_slice %69 {offsets = [3, 0, 0], sizes = [16, 16, 16], strides = [1, 1, 1]} : vector<20x16x16xbf16> to vector<16x16x16xbf16>
    %73 = vector.extract_strided_slice %69 {offsets = [0, 0, 0], sizes = [16, 16, 16], strides = [1, 1, 1]} : vector<20x16x16xbf16> to vector<16x16x16xbf16>
    %74 = vector.extract_strided_slice %69 {offsets = [4, 0, 0], sizes = [16, 16, 16], strides = [1, 1, 1]} : vector<20x16x16xbf16> to vector<16x16x16xbf16>
    %75 = tpu.concatenate %70, %71, %72, %73, %74 in 2 : vector<16x16x16xbf16>, vector<16x16x16xbf16>, vector<16x16x16xbf16>, vector<16x16x16xbf16>, vector<16x16x16xbf16> -> vector<16x16x80xbf16>
    %76 = vector.shape_cast %75 : vector<16x16x80xbf16> to vector<256x80xbf16>
    %c4_45 = arith.constant 4 : index
    %c0_46 = arith.constant 0 : index
    %c0_47 = arith.constant 0 : index
    %77 = vector.load %arg4[%c4_45, %c0_46, %c0_47] : memref<5x80x16xbf16, #tpu.memory_space<vmem>>, vector<1x80x16xbf16>
    %78 = vector.shape_cast %77 : vector<1x80x16xbf16> to vector<80x16xbf16>
    %cst_48 = arith.constant dense<0.000000e+00> : vector<256x16xf32>
    %79 = tpu.matmul %76, %78, %cst_48 {dimension_numbers = #tpu.dot_dimension_numbers<[1], [0], [0], [1], [0, 0, 1, 1], [], []>} : vector<256x80xbf16>, vector<80x16xbf16>, vector<256x16xf32> -> vector<256x16xf32>
    %80 = arith.addf %67, %79 : vector<256x16xf32>
    %c0_49 = arith.constant 0 : index
    %c0_50 = arith.constant 0 : index
    %81 = vector.load %arg5[%c0_49, %c0_50] : memref<1x16xf32, #tpu.memory_space<vmem>>, vector<1x16xf32>
    %82 = vector.broadcast %81 : vector<1x16xf32> to vector<256x16xf32>
    %83 = arith.addf %18, %82 : vector<256x16xf32>
    %c0_51 = arith.constant 0 : index
    %c0_52 = arith.constant 0 : index
    %84 = vector.load %arg6[%c0_51, %c0_52] : memref<1x16xf32, #tpu.memory_space<vmem>>, vector<1x16xf32>
    %85 = vector.broadcast %84 : vector<1x16xf32> to vector<256x16xf32>
    %86 = arith.addf %54, %85 : vector<256x16xf32>
    %c0_53 = arith.constant 0 : index
    %c0_54 = arith.constant 0 : index
    %87 = vector.load %arg7[%c0_53, %c0_54] : memref<1x16xf32, #tpu.memory_space<vmem>>, vector<1x16xf32>
    %88 = vector.broadcast %87 : vector<1x16xf32> to vector<256x16xf32>
    %89 = arith.addf %80, %88 : vector<256x16xf32>
    %cst_55 = arith.constant dense<0.000000e+00> : vector<16xf32>
    %90 = vector.multi_reduction <add>, %83, %cst_55 [0] : vector<256x16xf32> to vector<16xf32>
    %91 = vector.shape_cast %90 : vector<16xf32> to vector<1x16xf32>
    %cst_56 = arith.constant dense<0.000000e+00> : vector<16xf32>
    %92 = vector.multi_reduction <add>, %86, %cst_56 [0] : vector<256x16xf32> to vector<16xf32>
    %93 = vector.shape_cast %92 : vector<16xf32> to vector<1x16xf32>
    %cst_57 = arith.constant dense<0.000000e+00> : vector<16xf32>
    %94 = vector.multi_reduction <add>, %89, %cst_57 [0] : vector<256x16xf32> to vector<16xf32>
    %95 = vector.shape_cast %94 : vector<16xf32> to vector<1x16xf32>
    %96 = tpu.concatenate %91, %93, %95 in 1 : vector<1x16xf32>, vector<1x16xf32>, vector<1x16xf32> -> vector<1x48xf32>
    %cst_58 = arith.constant 3.906250e-03 : f32
    %97 = vector.broadcast %cst_58 : f32 to vector<1x48xf32>
    %98 = arith.mulf %96, %97 : vector<1x48xf32>
    %99 = arith.truncf %98 : vector<1x48xf32> to vector<1x48xbf16>
    %c0_59 = arith.constant 0 : index
    %c0_60 = arith.constant 0 : index
    %100 = vector.load %arg8[%c0_59, %c0_60] : memref<48x3xbf16, #tpu.memory_space<vmem>>, vector<48x3xbf16>
    %cst_61 = arith.constant dense<0.000000e+00> : vector<1x3xf32>
    %101 = tpu.matmul %99, %100, %cst_61 {dimension_numbers = #tpu.dot_dimension_numbers<[1], [0], [0], [1], [0, 0, 1, 1], [], []>} : vector<1x48xbf16>, vector<48x3xbf16>, vector<1x3xf32> -> vector<1x3xf32>
    %cst_62 = arith.constant 0.000000e+00 : f32
    %102 = vector.broadcast %cst_62 : f32 to vector<1x3xf32>
    %103 = arith.maximumf %101, %102 : vector<1x3xf32>
    %104 = arith.truncf %103 : vector<1x3xf32> to vector<1x3xbf16>
    %c0_63 = arith.constant 0 : index
    %c0_64 = arith.constant 0 : index
    %105 = vector.load %arg9[%c0_63, %c0_64] : memref<3x48xbf16, #tpu.memory_space<vmem>>, vector<3x48xbf16>
    %cst_65 = arith.constant dense<0.000000e+00> : vector<1x48xf32>
    %106 = tpu.matmul %104, %105, %cst_65 {dimension_numbers = #tpu.dot_dimension_numbers<[1], [0], [0], [1], [0, 0, 1, 1], [], []>} : vector<1x3xbf16>, vector<3x48xbf16>, vector<1x48xf32> -> vector<1x48xf32>
    %107 = arith.negf %106 : vector<1x48xf32>
    %108 = math.exp %107 : vector<1x48xf32>
    %cst_66 = arith.constant 1.000000e+00 : f32
    %109 = vector.broadcast %cst_66 : f32 to vector<1x48xf32>
    %110 = arith.addf %109, %108 : vector<1x48xf32>
    %111 = arith.divf %109, %110 : vector<1x48xf32>
    %112 = vector.extract_strided_slice %111 {offsets = [0, 0], sizes = [1, 16], strides = [1, 1]} : vector<1x48xf32> to vector<1x16xf32>
    %113 = vector.broadcast %112 : vector<1x16xf32> to vector<256x16xf32>
    %114 = arith.mulf %83, %113 : vector<256x16xf32>
    %115 = arith.truncf %114 : vector<256x16xf32> to vector<256x16xbf16>
    %116 = vector.extract_strided_slice %111 {offsets = [0, 16], sizes = [1, 16], strides = [1, 1]} : vector<1x48xf32> to vector<1x16xf32>
    %117 = vector.broadcast %116 : vector<1x16xf32> to vector<256x16xf32>
    %118 = arith.mulf %86, %117 : vector<256x16xf32>
    %119 = arith.truncf %118 : vector<256x16xf32> to vector<256x16xbf16>
    %120 = vector.extract_strided_slice %111 {offsets = [0, 32], sizes = [1, 16], strides = [1, 1]} : vector<1x48xf32> to vector<1x16xf32>
    %121 = vector.broadcast %120 : vector<1x16xf32> to vector<256x16xf32>
    %122 = arith.mulf %89, %121 : vector<256x16xf32>
    %123 = arith.truncf %122 : vector<256x16xf32> to vector<256x16xbf16>
    %c0_67 = arith.constant 0 : index
    %c0_68 = arith.constant 0 : index
    %c0_69 = arith.constant 0 : index
    %124 = vector.load %arg10[%c0_67, %c0_68, %c0_69] : memref<3x16x16xbf16, #tpu.memory_space<vmem>>, vector<1x16x16xbf16>
    %125 = vector.shape_cast %124 : vector<1x16x16xbf16> to vector<16x16xbf16>
    %cst_70 = arith.constant dense<0.000000e+00> : vector<256x16xf32>
    %126 = tpu.matmul %115, %125, %cst_70 {dimension_numbers = #tpu.dot_dimension_numbers<[1], [0], [0], [1], [0, 0, 1, 1], [], []>} : vector<256x16xbf16>, vector<16x16xbf16>, vector<256x16xf32> -> vector<256x16xf32>
    %c1_71 = arith.constant 1 : index
    %c0_72 = arith.constant 0 : index
    %c0_73 = arith.constant 0 : index
    %127 = vector.load %arg10[%c1_71, %c0_72, %c0_73] : memref<3x16x16xbf16, #tpu.memory_space<vmem>>, vector<1x16x16xbf16>
    %128 = vector.shape_cast %127 : vector<1x16x16xbf16> to vector<16x16xbf16>
    %cst_74 = arith.constant dense<0.000000e+00> : vector<256x16xf32>
    %129 = tpu.matmul %119, %128, %cst_74 {dimension_numbers = #tpu.dot_dimension_numbers<[1], [0], [0], [1], [0, 0, 1, 1], [], []>} : vector<256x16xbf16>, vector<16x16xbf16>, vector<256x16xf32> -> vector<256x16xf32>
    %130 = arith.addf %126, %129 : vector<256x16xf32>
    %c2_75 = arith.constant 2 : index
    %c0_76 = arith.constant 0 : index
    %c0_77 = arith.constant 0 : index
    %131 = vector.load %arg10[%c2_75, %c0_76, %c0_77] : memref<3x16x16xbf16, #tpu.memory_space<vmem>>, vector<1x16x16xbf16>
    %132 = vector.shape_cast %131 : vector<1x16x16xbf16> to vector<16x16xbf16>
    %cst_78 = arith.constant dense<0.000000e+00> : vector<256x16xf32>
    %133 = tpu.matmul %123, %132, %cst_78 {dimension_numbers = #tpu.dot_dimension_numbers<[1], [0], [0], [1], [0, 0, 1, 1], [], []>} : vector<256x16xbf16>, vector<16x16xbf16>, vector<256x16xf32> -> vector<256x16xf32>
    %134 = arith.addf %130, %133 : vector<256x16xf32>
    %c0_79 = arith.constant 0 : index
    %c0_80 = arith.constant 0 : index
    %135 = vector.load %arg11[%c0_79, %c0_80] : memref<1x16xf32, #tpu.memory_space<vmem>>, vector<1x16xf32>
    %136 = vector.broadcast %135 : vector<1x16xf32> to vector<256x16xf32>
    %137 = arith.addf %134, %136 : vector<256x16xf32>
    %c0_81 = arith.constant 0 : index
    %c0_82 = arith.constant 0 : index
    %c0_83 = arith.constant 0 : index
    %138 = vector.load %arg12[%c0_81, %c0_82, %c0_83] : memref<1x256x16xf32, #tpu.memory_space<vmem>>, vector<1x256x16xf32>
    %139 = vector.shape_cast %138 : vector<1x256x16xf32> to vector<256x16xf32>
    %140 = vector.shape_cast %137 : vector<256x16xf32> to vector<1x256x16xf32>
    tpu.vector_store %arg12[%c0_81, %c0_82, %c0_83], %140 {strides = array<i32>} : memref<1x256x16xf32, #tpu.memory_space<vmem>>, vector<1x256x16xf32>,
    %cst_84 = arith.constant dense<0.000000e+00> : vector<16xf32>
    %141 = vector.multi_reduction <add>, %137, %cst_84 [0] : vector<256x16xf32> to vector<16xf32>
    %142 = vector.shape_cast %141 : vector<16xf32> to vector<1x16xf32>
    %cst_85 = arith.constant 3.906250e-03 : f32
    %143 = vector.broadcast %cst_85 : f32 to vector<1x16xf32>
    %144 = arith.mulf %142, %143 : vector<1x16xf32>
    %145 = vector.broadcast %144 : vector<1x16xf32> to vector<256x16xf32>
    %146 = arith.subf %137, %145 : vector<256x16xf32>
    %147 = arith.mulf %146, %146 : vector<256x16xf32>
    %cst_86 = arith.constant dense<0.000000e+00> : vector<16xf32>
    %148 = vector.multi_reduction <add>, %147, %cst_86 [0] : vector<256x16xf32> to vector<16xf32>
    %149 = vector.shape_cast %148 : vector<16xf32> to vector<1x16xf32>
    %150 = tpu.concatenate %142, %149 in 0 : vector<1x16xf32>, vector<1x16xf32> -> vector<2x16xf32>
    %c0_87 = arith.constant 0 : index
    %c0_88 = arith.constant 0 : index
    %c0_89 = arith.constant 0 : index
    %151 = vector.load %arg13[%c0_87, %c0_88, %c0_89] : memref<1x2x16xf32, #tpu.memory_space<vmem>>, vector<1x2x16xf32>
    %152 = vector.shape_cast %151 : vector<1x2x16xf32> to vector<2x16xf32>
    %153 = vector.shape_cast %150 : vector<2x16xf32> to vector<1x2x16xf32>
    tpu.vector_store %arg13[%c0_87, %c0_88, %c0_89], %153 {strides = array<i32>} : memref<1x2x16xf32, #tpu.memory_space<vmem>>, vector<1x2x16xf32>,
    return
  }
  func.func @transform_0(%arg0: i32) -> (i32, i32, i32, i32) {
    %c0_i32 = arith.constant 0 : i32
    %c0_i32_0 = arith.constant 0 : i32
    %c0_i32_1 = arith.constant 0 : i32
    %c0_i32_2 = arith.constant 0 : i32
    return %arg0, %c0_i32, %c0_i32_0, %c0_i32_1 : i32, i32, i32, i32
  }
  func.func @transform_1(%arg0: i32) -> (i32, i32) {
    %c0_i32 = arith.constant 0 : i32
    %c0_i32_0 = arith.constant 0 : i32
    %c0_i32_1 = arith.constant 0 : i32
    return %c0_i32, %c0_i32_0 : i32, i32
  }
  func.func @transform_2(%arg0: i32) -> (i32, i32, i32) {
    %c0_i32 = arith.constant 0 : i32
    %c0_i32_0 = arith.constant 0 : i32
    %c0_i32_1 = arith.constant 0 : i32
    %c0_i32_2 = arith.constant 0 : i32
    return %c0_i32, %c0_i32_0, %c0_i32_1 : i32, i32, i32
  }
  func.func @transform_3(%arg0: i32) -> (i32, i32, i32) {
    %c0_i32 = arith.constant 0 : i32
    %c0_i32_0 = arith.constant 0 : i32
    %c0_i32_1 = arith.constant 0 : i32
    %c0_i32_2 = arith.constant 0 : i32
    return %c0_i32, %c0_i32_0, %c0_i32_1 : i32, i32, i32
  }
  func.func @transform_4(%arg0: i32) -> (i32, i32) {
    %c0_i32 = arith.constant 0 : i32
    %c0_i32_0 = arith.constant 0 : i32
    %c0_i32_1 = arith.constant 0 : i32
    return %c0_i32, %c0_i32_0 : i32, i32
  }
  func.func @transform_5(%arg0: i32) -> (i32, i32) {
    %c0_i32 = arith.constant 0 : i32
    %c0_i32_0 = arith.constant 0 : i32
    %c0_i32_1 = arith.constant 0 : i32
    return %c0_i32, %c0_i32_0 : i32, i32
  }
  func.func @transform_6(%arg0: i32) -> (i32, i32) {
    %c0_i32 = arith.constant 0 : i32
    %c0_i32_0 = arith.constant 0 : i32
    %c0_i32_1 = arith.constant 0 : i32
    return %c0_i32, %c0_i32_0 : i32, i32
  }
  func.func @transform_7(%arg0: i32) -> (i32, i32) {
    %c0_i32 = arith.constant 0 : i32
    %c0_i32_0 = arith.constant 0 : i32
    %c0_i32_1 = arith.constant 0 : i32
    return %c0_i32, %c0_i32_0 : i32, i32
  }
  func.func @transform_8(%arg0: i32) -> (i32, i32) {
    %c0_i32 = arith.constant 0 : i32
    %c0_i32_0 = arith.constant 0 : i32
    %c0_i32_1 = arith.constant 0 : i32
    return %c0_i32, %c0_i32_0 : i32, i32
  }
  func.func @transform_9(%arg0: i32) -> (i32, i32, i32) {
    %c0_i32 = arith.constant 0 : i32
    %c0_i32_0 = arith.constant 0 : i32
    %c0_i32_1 = arith.constant 0 : i32
    %c0_i32_2 = arith.constant 0 : i32
    return %c0_i32, %c0_i32_0, %c0_i32_1 : i32, i32, i32
  }
  func.func @transform_10(%arg0: i32) -> (i32, i32) {
    %c0_i32 = arith.constant 0 : i32
    %c0_i32_0 = arith.constant 0 : i32
    %c0_i32_1 = arith.constant 0 : i32
    return %c0_i32, %c0_i32_0 : i32, i32
  }
  func.func @transform_11(%arg0: i32) -> (i32, i32, i32) {
    %c0_i32 = arith.constant 0 : i32
    %c0_i32_0 = arith.constant 0 : i32
    %c0_i32_1 = arith.constant 0 : i32
    return %arg0, %c0_i32, %c0_i32_0 : i32, i32, i32
  }
  func.func @transform_12(%arg0: i32) -> (i32, i32, i32) {
    %c0_i32 = arith.constant 0 : i32
    %c0_i32_0 = arith.constant 0 : i32
    %c0_i32_1 = arith.constant 0 : i32
    return %arg0, %c0_i32, %c0_i32_0 : i32, i32, i32
  }
}

</mosaic_0001>

<llo_original>
// kernel: msffe_pallas.1
$region0: #{msffe_pallas.1}
  #allocation0 [shape = 'u32[]', space=smem, size = 0x4, offset = 0x4, fixed_abs, tag = 'smem constant byte address 0x4 - core index']
  #allocation1 [shape = 'u32[144,128]{1,0:T(1,128)}', space=vmem, size = 0x12000, scoped, tag = 'internal scratch']
  %s0 = inlined_call_operand.vmem [shape: bf16[2,20,20,16], index: 0, kind: input, shape index: {}]
  %s1 = inlined_call_operand.vmem [shape: bf16[16,16], index: 1, kind: input, shape index: {}]
  %s2 = inlined_call_operand.vmem [shape: bf16[3,48,16], index: 2, kind: input, shape index: {}]
  %s3 = inlined_call_operand.vmem [shape: bf16[5,80,16], index: 3, kind: input, shape index: {}]
  %s4 = inlined_call_operand.vmem [shape: f32[1,16], index: 4, kind: input, shape index: {}]
  %s5 = inlined_call_operand.vmem [shape: f32[1,16], index: 5, kind: input, shape index: {}]
  %s6 = inlined_call_operand.vmem [shape: f32[1,16], index: 6, kind: input, shape index: {}]
  %s7 = inlined_call_operand.vmem [shape: bf16[48,3], index: 7, kind: input, shape index: {}]
  %s8 = inlined_call_operand.vmem [shape: bf16[3,48], index: 8, kind: input, shape index: {}]
  %s9 = inlined_call_operand.vmem [shape: bf16[3,16,16], index: 9, kind: input, shape index: {}]
  %s10 = inlined_call_operand.vmem [shape: f32[1,16], index: 10, kind: input, shape index: {}]
  %s11 = inlined_call_operand.vmem [shape: f32[2,256,16], index: 11, kind: output, shape index: {0}]
  %s12 = inlined_call_operand.vmem [shape: f32[2,2,16], index: 12, kind: output, shape index: {1}]
  %13 = xla_tuple %s11, %s12
  %s14 = sld [smem:[#allocation0]]
  $region85: #{msffe_pallas.1} parent=0
    _
  %s16 = ssub.s32 1, %s14
  %s17 = scalar_select 0, %s16, %s14
  loop: start=0, step=1, limit=4
  $region2: #{msffe_pallas.1} parent=0 // loop_pre_header
    _
  $region3: #{msffe_pallas.1} parent=0 // loop_header
    %s19 = sphi 0, %s23
    %p20 = scmp.ge.s32.totalorder %s19, 4
    %s29 = sphi 0, %s31
    %s32 = sphi 0, %s29
    %s33 = sphi 0, %s32
    %s49 = sphi 0, %s33
    %s53 = sphi 0, %s53
    %s55 = sphi 0, %s53
    %s56 = sphi 0, %s55
    %s70 = sphi 0, %s56
    %s74 = sphi 0, %s74
    %s76 = sphi 0, %s74
    %s77 = sphi 0, %s76
    %s91 = sphi 0, %s77
    %s95 = sphi 0, %s95
    %s97 = sphi 0, %s95
    %s98 = sphi 0, %s97
    %s112 = sphi 0, %s98
    %s116 = sphi 0, %s116
    %s118 = sphi 0, %s116
    %s119 = sphi 0, %s118
    %s133 = sphi 0, %s119
    %s137 = sphi 0, %s137
    %s139 = sphi 0, %s137
    %s140 = sphi 0, %s139
    %s154 = sphi 0, %s140
    %s158 = sphi 0, %s158
    %s160 = sphi 0, %s158
    %s161 = sphi 0, %s160
    %s175 = sphi 0, %s161
    %s179 = sphi 0, %s179
    %s181 = sphi 0, %s179
    %s182 = sphi 0, %s181
    %s196 = sphi 0, %s182
    %s200 = sphi 0, %s200
    %s202 = sphi 0, %s200
    %s203 = sphi 0, %s202
    %s217 = sphi 0, %s203
    %s221 = sphi 0, %s221
    %s223 = sphi 0, %s221
    %s224 = sphi 0, %s223
    %s238 = sphi 0, %s224
    %s242 = sphi 0, %s242
    %s244 = sphi 0, %s242
    %s245 = sphi 0, %s244
    %s259 = sphi 0, %s245
    %s265 = sphi 0, %s267
    %s268 = sphi 0, %s265
    %s269 = sphi 0, %s268
    %s285 = sphi 0, %s269
    %s291 = sphi 0, %s293
    %s294 = sphi 0, %s291
    %s295 = sphi 0, %s294
    %s311 = sphi 0, %s295
  $region4: #{msffe_pallas.1} parent=0 // loop_header_branch
    %22 = sbr.rel (%p20) target = $region8
  $region5: #{msffe_pallas.1} parent=0 // loop_body
    %s24 = ssub.s32 %s19, 1
    %s25 = ssub.s32 %s19, 2
    %s26 = sadd.s32 %s19, 1
    %s27 = ssub.s32 %s19, %s26
    %p28 = scmp.eq.s32.totalorder %s27, 0
    %s30 = sadd.s32 %s29, 1
    %s31 = scalar_select %p28, %s29, %s30
    %p34 = pneg %p28
    %p35 = scmp.eq.s32.totalorder %s19, 1
    %p36 = por %p34, %p35
    %p37 = scmp.ne.s32.totalorder %s29, %s32
    %p38 = scmp.eq.s32.totalorder %s19, 0
    %p39 = por %p37, %p38
    %p40 = scmp.ne.s32.totalorder %s29, %s32
    %p41 = scmp.eq.s32.totalorder %s24, 1
    %p42 = por %p40, %p41
    %p43 = scmp.ne.s32.totalorder %s32, %s33
    %p44 = scmp.eq.s32.totalorder %s24, 0
    %p45 = por %p43, %p44
    %p46 = scmp.ne.s32.totalorder %s32, %s33
    %p47 = scmp.eq.s32.totalorder %s25, 1
    %p48 = por %p46, %p47
    %p50 = scmp.ne.s32.totalorder %s33, %s49
    %p51 = scmp.eq.s32.totalorder %s25, 0
    %p52 = por %p50, %p51
    %s54 = sadd.s32 %s53, 1
    %p57 = scmp.eq.s32.totalorder %s19, 1
    %p58 = scmp.ne.s32.totalorder %s53, %s55
    %p59 = scmp.eq.s32.totalorder %s19, 0
    %p60 = por %p58, %p59
    %p61 = scmp.ne.s32.totalorder %s53, %s55
    %p62 = scmp.eq.s32.totalorder %s24, 1
    %p63 = por %p61, %p62
    %p64 = scmp.ne.s32.totalorder %s55, %s56
    %p65 = scmp.eq.s32.totalorder %s24, 0
    %p66 = por %p64, %p65
    %p67 = scmp.ne.s32.totalorder %s55, %s56
    %p68 = scmp.eq.s32.totalorder %s25, 1
    %p69 = por %p67, %p68
    %p71 = scmp.ne.s32.totalorder %s56, %s70
    %p72 = scmp.eq.s32.totalorder %s25, 0
    %p73 = por %p71, %p72
    %s75 = sadd.s32 %s74, 1
    %p78 = scmp.eq.s32.totalorder %s19, 1
    %p79 = scmp.ne.s32.totalorder %s74, %s76
    %p80 = scmp.eq.s32.totalorder %s19, 0
    %p81 = por %p79, %p80
    %p82 = scmp.ne.s32.totalorder %s74, %s76
    %p83 = scmp.eq.s32.totalorder %s24, 1
    %p84 = por %p82, %p83
    %p85 = scmp.ne.s32.totalorder %s76, %s77
    %p86 = scmp.eq.s32.totalorder %s24, 0
    %p87 = por %p85, %p86
    %p88 = scmp.ne.s32.totalorder %s76, %s77
    %p89 = scmp.eq.s32.totalorder %s25, 1
    %p90 = por %p88, %p89
    %p92 = scmp.ne.s32.totalorder %s77, %s91
    %p93 = scmp.eq.s32.totalorder %s25, 0
    %p94 = por %p92, %p93
    %s96 = sadd.s32 %s95, 1
    %p99 = scmp.eq.s32.totalorder %s19, 1
    %p100 = scmp.ne.s32.totalorder %s95, %s97
    %p101 = scmp.eq.s32.totalorder %s19, 0
    %p102 = por %p100, %p101
    %p103 = scmp.ne.s32.totalorder %s95, %s97
    %p104 = scmp.eq.s32.totalorder %s24, 1
    %p105 = por %p103, %p104
    %p106 = scmp.ne.s32.totalorder %s97, %s98
    %p107 = scmp.eq.s32.totalorder %s24, 0
    %p108 = por %p106, %p107
    %p109 = scmp.ne.s32.totalorder %s97, %s98
    %p110 = scmp.eq.s32.totalorder %s25, 1
    %p111 = por %p109, %p110
    %p113 = scmp.ne.s32.totalorder %s98, %s112
    %p114 = scmp.eq.s32.totalorder %s25, 0
    %p115 = por %p113, %p114
    %s117 = sadd.s32 %s116, 1
    %p120 = scmp.eq.s32.totalorder %s19, 1
    %p121 = scmp.ne.s32.totalorder %s116, %s118
    %p122 = scmp.eq.s32.totalorder %s19, 0
    %p123 = por %p121, %p122
    %p124 = scmp.ne.s32.totalorder %s116, %s118
    %p125 = scmp.eq.s32.totalorder %s24, 1
    %p126 = por %p124, %p125
    %p127 = scmp.ne.s32.totalorder %s118, %s119
    %p128 = scmp.eq.s32.totalorder %s24, 0
    %p129 = por %p127, %p128
    %p130 = scmp.ne.s32.totalorder %s118, %s119
    %p131 = scmp.eq.s32.totalorder %s25, 1
    %p132 = por %p130, %p131
    %p134 = scmp.ne.s32.totalorder %s119, %s133
    %p135 = scmp.eq.s32.totalorder %s25, 0
    %p136 = por %p134, %p135
    %s138 = sadd.s32 %s137, 1
    %p141 = scmp.eq.s32.totalorder %s19, 1
    %p142 = scmp.ne.s32.totalorder %s137, %s139
    %p143 = scmp.eq.s32.totalorder %s19, 0
    %p144 = por %p142, %p143
    %p145 = scmp.ne.s32.totalorder %s137, %s139
    %p146 = scmp.eq.s32.totalorder %s24, 1
    %p147 = por %p145, %p146
    %p148 = scmp.ne.s32.totalorder %s139, %s140
    %p149 = scmp.eq.s32.totalorder %s24, 0
    %p150 = por %p148, %p149
    %p151 = scmp.ne.s32.totalorder %s139, %s140
    %p152 = scmp.eq.s32.totalorder %s25, 1
    %p153 = por %p151, %p152
    %p155 = scmp.ne.s32.totalorder %s140, %s154
    %p156 = scmp.eq.s32.totalorder %s25, 0
    %p157 = por %p155, %p156
    %s159 = sadd.s32 %s158, 1
    %p162 = scmp.eq.s32.totalorder %s19, 1
    %p163 = scmp.ne.s32.totalorder %s158, %s160
    %p164 = scmp.eq.s32.totalorder %s19, 0
    %p165 = por %p163, %p164
    %p166 = scmp.ne.s32.totalorder %s158, %s160
    %p167 = scmp.eq.s32.totalorder %s24, 1
    %p168 = por %p166, %p167
    %p169 = scmp.ne.s32.totalorder %s160, %s161
    %p170 = scmp.eq.s32.totalorder %s24, 0
    %p171 = por %p169, %p170
    %p172 = scmp.ne.s32.totalorder %s160, %s161
    %p173 = scmp.eq.s32.totalorder %s25, 1
    %p174 = por %p172, %p173
    %p176 = scmp.ne.s32.totalorder %s161, %s175
    %p177 = scmp.eq.s32.totalorder %s25, 0
    %p178 = por %p176, %p177
    %s180 = sadd.s32 %s179, 1
    %p183 = scmp.eq.s32.totalorder %s19, 1
    %p184 = scmp.ne.s32.totalorder %s179, %s181
    %p185 = scmp.eq.s32.totalorder %s19, 0
    %p186 = por %p184, %p185
    %p187 = scmp.ne.s32.totalorder %s179, %s181
    %p188 = scmp.eq.s32.totalorder %s24, 1
    %p189 = por %p187, %p188
    %p190 = scmp.ne.s32.totalorder %s181, %s182
    %p191 = scmp.eq.s32.totalorder %s24, 0
    %p192 = por %p190, %p191
    %p193 = scmp.ne.s32.totalorder %s181, %s182
    %p194 = scmp.eq.s32.totalorder %s25, 1
    %p195 = por %p193, %p194
    %p197 = scmp.ne.s32.totalorder %s182, %s196
    %p198 = scmp.eq.s32.totalorder %s25, 0
    %p199 = por %p197, %p198
    %s201 = sadd.s32 %s200, 1
    %p204 = scmp.eq.s32.totalorder %s19, 1
    %p205 = scmp.ne.s32.totalorder %s200, %s202
    %p206 = scmp.eq.s32.totalorder %s19, 0
    %p207 = por %p205, %p206
    %p208 = scmp.ne.s32.totalorder %s200, %s202
    %p209 = scmp.eq.s32.totalorder %s24, 1
    %p210 = por %p208, %p209
    %p211 = scmp.ne.s32.totalorder %s202, %s203
    %p212 = scmp.eq.s32.totalorder %s24, 0
    %p213 = por %p211, %p212
    %p214 = scmp.ne.s32.totalorder %s202, %s203
    %p215 = scmp.eq.s32.totalorder %s25, 1
    %p216 = por %p214, %p215
    %p218 = scmp.ne.s32.totalorder %s203, %s217
    %p219 = scmp.eq.s32.totalorder %s25, 0
    %p220 = por %p218, %p219
    %s222 = sadd.s32 %s221, 1
    %p225 = scmp.eq.s32.totalorder %s19, 1
    %p226 = scmp.ne.s32.totalorder %s221, %s223
    %p227 = scmp.eq.s32.totalorder %s19, 0
    %p228 = por %p226, %p227
    %p229 = scmp.ne.s32.totalorder %s221, %s223
    %p230 = scmp.eq.s32.totalorder %s24, 1
    %p231 = por %p229, %p230
    %p232 = scmp.ne.s32.totalorder %s223, %s224
    %p233 = scmp.eq.s32.totalorder %s24, 0
    %p234 = por %p232, %p233
    %p235 = scmp.ne.s32.totalorder %s223, %s224
    %p236 = scmp.eq.s32.totalorder %s25, 1
    %p237 = por %p235, %p236
    %p239 = scmp.ne.s32.totalorder %s224, %s238
    %p240 = scmp.eq.s32.totalorder %s25, 0
    %p241 = por %p239, %p240
    %s243 = sadd.s32 %s242, 1
    %p246 = scmp.eq.s32.totalorder %s19, 1
    %p247 = scmp.ne.s32.totalorder %s242, %s244
    %p248 = scmp.eq.s32.totalorder %s19, 0
    %p249 = por %p247, %p248
    %p250 = scmp.ne.s32.totalorder %s242, %s244
    %p251 = scmp.eq.s32.totalorder %s24, 1
    %p252 = por %p250, %p251
    %p253 = scmp.ne.s32.totalorder %s244, %s245
    %p254 = scmp.eq.s32.totalorder %s24, 0
    %p255 = por %p253, %p254
    %p256 = scmp.ne.s32.totalorder %s244, %s245
    %p257 = scmp.eq.s32.totalorder %s25, 1
    %p258 = por %p256, %p257
    %p260 = scmp.ne.s32.totalorder %s245, %s259
    %p261 = scmp.eq.s32.totalorder %s25, 0
    %p262 = por %p260, %p261
    %s263 = ssub.s32 %s19, %s26
    %p264 = scmp.eq.s32.totalorder %s263, 0
    %s266 = sadd.s32 %s265, 1
    %s267 = scalar_select %p264, %s265, %s266
    %p270 = pneg %p264
    %p271 = scmp.eq.s32.totalorder %s19, 1
    %p272 = por %p270, %p271
    %p273 = scmp.ne.s32.totalorder %s265, %s268
    %p274 = scmp.eq.s32.totalorder %s19, 0
    %p275 = por %p273, %p274
    %p276 = scmp.ne.s32.totalorder %s265, %s268
    %p277 = scmp.eq.s32.totalorder %s24, 1
    %p278 = por %p276, %p277
    %p279 = scmp.ne.s32.totalorder %s268, %s269
    %p280 = scmp.eq.s32.totalorder %s24, 0
    %p281 = por %p279, %p280
    %p282 = scmp.ne.s32.totalorder %s268, %s269
    %p283 = scmp.eq.s32.totalorder %s25, 1
    %p284 = por %p282, %p283
    %p286 = scmp.ne.s32.totalorder %s269, %s285
    %p287 = scmp.eq.s32.totalorder %s25, 0
    %p288 = por %p286, %p287
    %s289 = ssub.s32 %s19, %s26
    %p290 = scmp.eq.s32.totalorder %s289, 0
    %s292 = sadd.s32 %s291, 1
    %s293 = scalar_select %p290, %s291, %s292
    %p296 = pneg %p290
    %p297 = scmp.eq.s32.totalorder %s19, 1
    %p298 = por %p296, %p297
    %p299 = scmp.ne.s32.totalorder %s291, %s294
    %p300 = scmp.eq.s32.totalorder %s19, 0
    %p301 = por %p299, %p300
    %p302 = scmp.ne.s32.totalorder %s291, %s294
    %p303 = scmp.eq.s32.totalorder %s24, 1
    %p304 = por %p302, %p303
    %p305 = scmp.ne.s32.totalorder %s294, %s295
    %p306 = scmp.eq.s32.totalorder %s24, 0
    %p307 = por %p305, %p306
    %p308 = scmp.ne.s32.totalorder %s294, %s295
    %p309 = scmp.eq.s32.totalorder %s25, 1
    %p310 = por %p308, %p309
    %p312 = scmp.ne.s32.totalorder %s295, %s311
    %p313 = scmp.eq.s32.totalorder %s25, 0
    %p314 = por %p312, %p313
    %p315 = scmp.le.s32.totalorder 1, %s19
    %p316 = scmp.lt.s32.totalorder %s19, 3
    %p317 = pnand %p315, %p316
    %p318 = pneg %p317
    // Predicated region
    $region9: #{msffe_pallas.1} parent=5 // pred_check
      _
    $region10: #{msffe_pallas.1} parent=5 // pred_check_branch
      %320 = sbr.rel (%p317) target = $region12
    $region11: #{msffe_pallas.1} parent=5 // pred_region
      %s321 = ssub.s32 %s19, 1
      // Predicated region
      $region13: #{msffe_pallas.1} parent=11 // pred_check
        %p322 = pneg %p66
      $region14: #{msffe_pallas.1} parent=11 // pred_check_branch
        %324 = sbr.rel (%p322) target = $region16
      $region15: #{msffe_pallas.1} parent=11 // pred_region
        _
      $region16: #{msffe_pallas.1} parent=11 // pred_fallthru
        _
      // Predicated region
      $region17: #{msffe_pallas.1} parent=11 // pred_check
        %p325 = pneg %p87
      $region18: #{msffe_pallas.1} parent=11 // pred_check_branch
        %327 = sbr.rel (%p325) target = $region20
      $region19: #{msffe_pallas.1} parent=11 // pred_region
        _
      $region20: #{msffe_pallas.1} parent=11 // pred_fallthru
        _
      // Predicated region
      $region21: #{msffe_pallas.1} parent=11 // pred_check
        %p328 = pneg %p108
      $region22: #{msffe_pallas.1} parent=11 // pred_check_branch
        %330 = sbr.rel (%p328) target = $region24
      $region23: #{msffe_pallas.1} parent=11 // pred_region
        _
      $region24: #{msffe_pallas.1} parent=11 // pred_fallthru
        _
      // Predicated region
      $region25: #{msffe_pallas.1} parent=11 // pred_check
        %p331 = pneg %p129
      $region26: #{msffe_pallas.1} parent=11 // pred_check_branch
        %333 = sbr.rel (%p331) target = $region28
      $region27: #{msffe_pallas.1} parent=11 // pred_region
        _
      $region28: #{msffe_pallas.1} parent=11 // pred_fallthru
        _
      // Predicated region
      $region29: #{msffe_pallas.1} parent=11 // pred_check
        %p334 = pneg %p150
      $region30: #{msffe_pallas.1} parent=11 // pred_check_branch
        %336 = sbr.rel (%p334) target = $region32
      $region31: #{msffe_pallas.1} parent=11 // pred_region
        _
      $region32: #{msffe_pallas.1} parent=11 // pred_fallthru
        _
      // Predicated region
      $region33: #{msffe_pallas.1} parent=11 // pred_check
        %p337 = pneg %p171
      $region34: #{msffe_pallas.1} parent=11 // pred_check_branch
        %339 = sbr.rel (%p337) target = $region36
      $region35: #{msffe_pallas.1} parent=11 // pred_region
        _
      $region36: #{msffe_pallas.1} parent=11 // pred_fallthru
        _
      // Predicated region
      $region37: #{msffe_pallas.1} parent=11 // pred_check
        %p340 = pneg %p192
      $region38: #{msffe_pallas.1} parent=11 // pred_check_branch
        %342 = sbr.rel (%p340) target = $region40
      $region39: #{msffe_pallas.1} parent=11 // pred_region
        _
      $region40: #{msffe_pallas.1} parent=11 // pred_fallthru
        _
      // Predicated region
      $region41: #{msffe_pallas.1} parent=11 // pred_check
        %p343 = pneg %p213
      $region42: #{msffe_pallas.1} parent=11 // pred_check_branch
        %345 = sbr.rel (%p343) target = $region44
      $region43: #{msffe_pallas.1} parent=11 // pred_region
        _
      $region44: #{msffe_pallas.1} parent=11 // pred_fallthru
        _
      // Predicated region
      $region45: #{msffe_pallas.1} parent=11 // pred_check
        %p346 = pneg %p234
      $region46: #{msffe_pallas.1} parent=11 // pred_check_branch
        %348 = sbr.rel (%p346) target = $region48
      $region47: #{msffe_pallas.1} parent=11 // pred_region
        _
      $region48: #{msffe_pallas.1} parent=11 // pred_fallthru
        _
      // Predicated region
      $region49: #{msffe_pallas.1} parent=11 // pred_check
        %p349 = pneg %p255
      $region50: #{msffe_pallas.1} parent=11 // pred_check_branch
        %351 = sbr.rel (%p349) target = $region52
      $region51: #{msffe_pallas.1} parent=11 // pred_region
        _
      $region52: #{msffe_pallas.1} parent=11 // pred_fallthru
        _
    $region12: #{msffe_pallas.1} parent=5 // pred_fallthru
      _
    %p352 = scmp.lt.s32.totalorder %s19, 2
    // Predicated region
    $region53: #{msffe_pallas.1} parent=5 // pred_check
      %p353 = pneg %p352
    $region54: #{msffe_pallas.1} parent=5 // pred_check_branch
      %355 = sbr.rel (%p353) target = $region56
    $region55: #{msffe_pallas.1} parent=5 // pred_region
      // Predicated region
      $region57: #{msffe_pallas.1} parent=55 // pred_check
        %p356 = pneg %p39
      $region58: #{msffe_pallas.1} parent=55 // pred_check_branch
        %358 = sbr.rel (%p356) target = $region60
      $region59: #{msffe_pallas.1} parent=55 // pred_region
        %p359 = scmp.lt.s32.totalorder %s19, 1
        %s360 = scalar_select %p359, %s19, 1
        %s361 = smul.addr %s360, 60
        %s362 = smul.addr %s361, 4
        %s363 = scalar_lea.vmem %s0, %s362
      $region60: #{msffe_pallas.1} parent=55 // pred_fallthru
        _
    $region56: #{msffe_pallas.1} parent=5 // pred_fallthru
      _
    %p364 = scmp.le.s32.totalorder 1, %s19
    %p365 = scmp.lt.s32.totalorder %s19, 3
    %p366 = pnand %p364, %p365
    %p367 = pneg %p366
    // Predicated region
    $region61: #{msffe_pallas.1} parent=5 // pred_check
      _
    $region62: #{msffe_pallas.1} parent=5 // pred_check_branch
      %369 = sbr.rel (%p366) target = $region64
    $region63: #{msffe_pallas.1} parent=5 // pred_region
      %s370 = ssub.s32 %s19, 1
      %p371 = scmp.lt.s32.totalorder %s24, 1
      %s372 = scalar_select %p371, %s24, 1
      %s373 = smul.addr %s372, 60
      %s374 = smul.addr %s373, 4
      %s375 = scalar_lea.vmem %s0, %s374
      %p376 = pneg %p45
      %p377 = pneg %p42
      %p378 = pneg %p66
      %p379 = pneg %p63
      %p380 = pneg %p87
      %p381 = pneg %p84
      %p382 = pneg %p108
      %p383 = pneg %p105
      %p384 = pneg %p129
      %p385 = pneg %p126
      %p386 = pneg %p150
      %p387 = pneg %p147
      %p388 = pneg %p171
      %p389 = pneg %p168
      %p390 = pneg %p192
      %p391 = pneg %p189
      %p392 = pneg %p213
      %p393 = pneg %p210
      %p394 = pneg %p234
      %p395 = pneg %p231
      %p396 = pneg %p255
      %p397 = pneg %p252
      %p398 = pneg %p281
      %p399 = pneg %p278
      %p400 = scmp.lt.s32.totalorder %s24, 1
      %s401 = scalar_select %p400, %s24, 1
      %s402 = smul.addr %s401, 32
      %s403 = smul.addr %s402, 8
      %s404 = scalar_lea.vmem %s11, %s403
      %p405 = pneg %p307
      %p406 = pneg %p304
      %p407 = scmp.lt.s32.totalorder %s24, 1
      %s408 = scalar_select %p407, %s24, 1
      %s409 = smul.addr %s408, 2
      %s410 = scalar_lea.vmem %s12, %s409
      %p411 = scmp.lt.s32.totalorder %s24, 1
      %s412 = scalar_select %p411, %s24, 1
      %s413 = smul.addr %s412, 60
      %s414 = smul.addr %s413, 4
      %s415 = scalar_lea.vmem %s0, %s414
      %p416 = scmp.lt.s32.totalorder %s24, 1
      %s417 = scalar_select %p416, %s24, 1
      %s418 = smul.addr %s417, 32
      %s419 = smul.addr %s418, 8
      %s420 = scalar_lea.vmem %s11, %s419
      %p421 = scmp.lt.s32.totalorder %s24, 1
      %s422 = scalar_select %p421, %s24, 1
      %s423 = smul.addr %s422, 2
      %s424 = scalar_lea.vmem %s12, %s423
      %v426 = vld [vmem:[%s415] sm:$0xe]
      %v427 = vld [vmem:[%s415 + $0x4] sm:$0xf]
      %v428 = vld [vmem:[%s415 + $0x8] sm:$0x1]
      %v429 = vld [vmem:[%s415 + $0xc] sm:$0xe]
      %v430 = vld [vmem:[%s415 + $0x10] sm:$0xf]
      %v431 = vld [vmem:[%s415 + $0x14] sm:$0x1]
      %v432 = vld [vmem:[%s415 + $0x18] sm:$0xe]
      %v433 = vld [vmem:[%s415 + $0x1c] sm:$0xf]
      %v434 = vld [vmem:[%s415 + $0x20] sm:$0x1]
      %v435 = vld [vmem:[%s415 + $0x24] sm:$0xe]
      %v436 = vld [vmem:[%s415 + $0x28] sm:$0xf]
      %v437 = vld [vmem:[%s415 + $0x2c] sm:$0x1]
      %v438 = vld [vmem:[%s415 + $0x30] sm:$0xe]
      %v439 = vld [vmem:[%s415 + $0x34] sm:$0xf]
      %v440 = vld [vmem:[%s415 + $0x38] sm:$0x1]
      %v441 = vld [vmem:[%s415 + $0x3c] sm:$0xe]
      %v442 = vld [vmem:[%s415 + $0x40] sm:$0xf]
      %v443 = vld [vmem:[%s415 + $0x44] sm:$0x1]
      %v444 = vld [vmem:[%s415 + $0x48] sm:$0xe]
      %v445 = vld [vmem:[%s415 + $0x4c] sm:$0xf]
      %v446 = vld [vmem:[%s415 + $0x50] sm:$0x1]
      %v447 = vld [vmem:[%s415 + $0x54] sm:$0xe]
      %v448 = vld [vmem:[%s415 + $0x58] sm:$0xf]
      %v449 = vld [vmem:[%s415 + $0x5c] sm:$0x1]
      %v450 = vld [vmem:[%s415 + $0x60] sm:$0xe]
      %v451 = vld [vmem:[%s415 + $0x64] sm:$0xf]
      %v452 = vld [vmem:[%s415 + $0x68] sm:$0x1]
      %v453 = vld [vmem:[%s415 + $0x6c] sm:$0xe]
      %v454 = vld [vmem:[%s415 + $0x70] sm:$0xf]
      %v455 = vld [vmem:[%s415 + $0x74] sm:$0x1]
      %v456 = vld [vmem:[%s415 + $0x78] sm:$0xe]
      %v457 = vld [vmem:[%s415 + $0x7c] sm:$0xf]
      %v458 = vld [vmem:[%s415 + $0x80] sm:$0x1]
      %v459 = vld [vmem:[%s415 + $0x84] sm:$0xe]
      %v460 = vld [vmem:[%s415 + $0x88] sm:$0xf]
      %v461 = vld [vmem:[%s415 + $0x8c] sm:$0x1]
      %v462 = vld [vmem:[%s415 + $0x90] sm:$0xe]
      %v463 = vld [vmem:[%s415 + $0x94] sm:$0xf]
      %v464 = vld [vmem:[%s415 + $0x98] sm:$0x1]
      %v465 = vld [vmem:[%s415 + $0x9c] sm:$0xe]
      %v466 = vld [vmem:[%s415 + $0xa0] sm:$0xf]
      %v467 = vld [vmem:[%s415 + $0xa4] sm:$0x1]
      %v468 = vld [vmem:[%s415 + $0xa8] sm:$0xe]
      %v469 = vld [vmem:[%s415 + $0xac] sm:$0xf]
      %v470 = vld [vmem:[%s415 + $0xb0] sm:$0x1]
      %v471 = vld [vmem:[%s415 + $0xb4] sm:$0xe]
      %v472 = vld [vmem:[%s415 + $0xb8] sm:$0xf]
      %v473 = vld [vmem:[%s415 + $0xbc] sm:$0x1]
      %v474 = vld [vmem:[%s415 + $0xc0] sm:$0xe]
      %v475 = vld [vmem:[%s415 + $0xc4] sm:$0xf]
      %v476 = vld [vmem:[%s415 + $0xc8] sm:$0x1]
      %v477 = vld [vmem:[%s415 + $0xcc] sm:$0xe]
      %v478 = vld [vmem:[%s415 + $0xd0] sm:$0xf]
      %v479 = vld [vmem:[%s415 + $0xd4] sm:$0x1]
      %v480 = vld [vmem:[%s415 + $0xd8] sm:$0xe]
      %v481 = vld [vmem:[%s415 + $0xdc] sm:$0xf]
      %v482 = vld [vmem:[%s415 + $0xe0] sm:$0x1]
      %v483 = vld [vmem:[%s415 + $0xe4] sm:$0xe]
      %v484 = vld [vmem:[%s415 + $0xe8] sm:$0xf]
      %v485 = vld [vmem:[%s415 + $0xec] sm:$0x1]
      %v534 = vunpack.c.l.b16 %v432
      %v535 = vunpack.c.l.b16 %v433
      %v536 = vunpack.c.l.b16 %v434
      %v537 = vunpack.c.l.b16 %v435
      %v538 = vunpack.c.l.b16 %v436
      %v539 = vunpack.c.l.b16 %v437
      %v540 = vunpack.c.l.b16 %v438
      %v541 = vunpack.c.l.b16 %v439
      %v542 = vunpack.c.l.b16 %v440
      %v543 = vunpack.c.l.b16 %v441
      %v544 = vunpack.c.l.b16 %v442
      %v545 = vunpack.c.l.b16 %v443
      %v546 = vunpack.c.l.b16 %v444
      %v547 = vunpack.c.l.b16 %v445
      %v548 = vunpack.c.l.b16 %v446
      %v549 = vunpack.c.l.b16 %v447
      %v550 = vunpack.c.l.b16 %v448
      %v551 = vunpack.c.l.b16 %v449
      %v552 = vunpack.c.l.b16 %v450
      %v553 = vunpack.c.l.b16 %v451
      %v554 = vunpack.c.l.b16 %v452
      %v555 = vunpack.c.l.b16 %v453
      %v556 = vunpack.c.l.b16 %v454
      %v557 = vunpack.c.l.b16 %v455
      %v558 = vunpack.c.l.b16 %v456
      %v559 = vunpack.c.l.b16 %v457
      %v560 = vunpack.c.l.b16 %v458
      %v561 = vunpack.c.l.b16 %v459
      %v562 = vunpack.c.l.b16 %v460
      %v563 = vunpack.c.l.b16 %v461
      %v564 = vunpack.c.l.b16 %v462
      %v565 = vunpack.c.l.b16 %v463
      %v566 = vunpack.c.l.b16 %v464
      %v567 = vunpack.c.l.b16 %v465
      %v568 = vunpack.c.l.b16 %v466
      %v569 = vunpack.c.l.b16 %v467
      %v570 = vunpack.c.l.b16 %v468
      %v571 = vunpack.c.l.b16 %v469
      %v572 = vunpack.c.l.b16 %v470
      %v573 = vunpack.c.l.b16 %v471
      %v574 = vunpack.c.l.b16 %v472
      %v575 = vunpack.c.l.b16 %v473
      %v576 = vunpack.c.l.b16 %v474
      %v577 = vunpack.c.l.b16 %v475
      %v578 = vunpack.c.l.b16 %v476
      %v579 = vunpack.c.l.b16 %v477
      %v580 = vunpack.c.l.b16 %v478
      %v581 = vunpack.c.l.b16 %v479
      %v582 = vpack.c.b16 %v535, %v534
      %v583 = vpack.c.b16 %v536, %v536
      %v584 = vpack.c.b16 %v538, %v537
      %v585 = vpack.c.b16 %v539, %v539
      %v586 = vpack.c.b16 %v541, %v540
      %v587 = vpack.c.b16 %v542, %v542
      %v588 = vpack.c.b16 %v544, %v543
      %v589 = vpack.c.b16 %v545, %v545
      %v590 = vpack.c.b16 %v547, %v546
      %v591 = vpack.c.b16 %v548, %v548
      %v592 = vpack.c.b16 %v550, %v549
      %v593 = vpack.c.b16 %v551, %v551
      %v594 = vpack.c.b16 %v553, %v552
      %v595 = vpack.c.b16 %v554, %v554
      %v596 = vpack.c.b16 %v556, %v555
      %v597 = vpack.c.b16 %v557, %v557
      %v598 = vpack.c.b16 %v559, %v558
      %v599 = vpack.c.b16 %v560, %v560
      %v600 = vpack.c.b16 %v562, %v561
      %v601 = vpack.c.b16 %v563, %v563
      %v602 = vpack.c.b16 %v565, %v564
      %v603 = vpack.c.b16 %v566, %v566
      %v604 = vpack.c.b16 %v568, %v567
      %v605 = vpack.c.b16 %v569, %v569
      %v606 = vpack.c.b16 %v571, %v570
      %v607 = vpack.c.b16 %v572, %v572
      %v608 = vpack.c.b16 %v574, %v573
      %v609 = vpack.c.b16 %v575, %v575
      %v610 = vpack.c.b16 %v577, %v576
      %v611 = vpack.c.b16 %v578, %v578
      %v612 = vpack.c.b16 %v580, %v579
      %v613 = vpack.c.b16 %v581, %v581
      %v617 = vunpack.c.l.b16 %v429
      %v618 = vunpack.c.l.b16 %v430
      %v619 = vunpack.c.l.b16 %v431
      %v620 = vpack.c.b16 %v618, %v617
      %v621 = vpack.c.b16 %v619, %v619
      %622 = vrot.lane.b32.xlu0 %v620, 16
      %v623 = vpop.permute.xlu0 %622
      %624 = vrot.lane.b32.xlu0 %v621, 16
      %v625 = vpop.permute.xlu0 %624
      %626 = vrot.lane.b32.xlu0 %v582, 16
      %v627 = vpop.permute.xlu0 %626
      %628 = vrot.lane.b32.xlu0 %v583, 16
      %v629 = vpop.permute.xlu0 %628
      %630 = vrot.lane.b32.xlu0 %v584, 16
      %v631 = vpop.permute.xlu0 %630
      %632 = vrot.lane.b32.xlu0 %v585, 16
      %v633 = vpop.permute.xlu0 %632
      %634 = vrot.lane.b32.xlu0 %v586, 16
      %v635 = vpop.permute.xlu0 %634
      %636 = vrot.lane.b32.xlu0 %v587, 16
      %v637 = vpop.permute.xlu0 %636
      %638 = vrot.lane.b32.xlu0 %v588, 16
      %v639 = vpop.permute.xlu0 %638
      %640 = vrot.lane.b32.xlu0 %v589, 16
      %v641 = vpop.permute.xlu0 %640
      %642 = vrot.lane.b32.xlu0 %v590, 16
      %v643 = vpop.permute.xlu0 %642
      %644 = vrot.lane.b32.xlu0 %v591, 16
      %v645 = vpop.permute.xlu0 %644
      %646 = vrot.lane.b32.xlu0 %v592, 16
      %v647 = vpop.permute.xlu0 %646
      %648 = vrot.lane.b32.xlu0 %v593, 16
      %v649 = vpop.permute.xlu0 %648
      %650 = vrot.lane.b32.xlu0 %v594, 16
      %v651 = vpop.permute.xlu0 %650
      %652 = vrot.lane.b32.xlu0 %v595, 16
      %v653 = vpop.permute.xlu0 %652
      %654 = vrot.lane.b32.xlu0 %v596, 16
      %v655 = vpop.permute.xlu0 %654
      %656 = vrot.lane.b32.xlu0 %v597, 16
      %v657 = vpop.permute.xlu0 %656
      %658 = vrot.lane.b32.xlu0 %v598, 16
      %v659 = vpop.permute.xlu0 %658
      %660 = vrot.lane.b32.xlu0 %v599, 16
      %v661 = vpop.permute.xlu0 %660
      %662 = vrot.lane.b32.xlu0 %v600, 16
      %v663 = vpop.permute.xlu0 %662
      %664 = vrot.lane.b32.xlu0 %v601, 16
      %v665 = vpop.permute.xlu0 %664
      %666 = vrot.lane.b32.xlu0 %v602, 16
      %v667 = vpop.permute.xlu0 %666
      %668 = vrot.lane.b32.xlu0 %v603, 16
      %v669 = vpop.permute.xlu0 %668
      %670 = vrot.lane.b32.xlu0 %v604, 16
      %v671 = vpop.permute.xlu0 %670
      %672 = vrot.lane.b32.xlu0 %v605, 16
      %v673 = vpop.permute.xlu0 %672
      %674 = vrot.lane.b32.xlu0 %v606, 16
      %v675 = vpop.permute.xlu0 %674
      %676 = vrot.lane.b32.xlu0 %v607, 16
      %v677 = vpop.permute.xlu0 %676
      %678 = vrot.lane.b32.xlu0 %v608, 16
      %v679 = vpop.permute.xlu0 %678
      %680 = vrot.lane.b32.xlu0 %v609, 16
      %v681 = vpop.permute.xlu0 %680
      %682 = vrot.lane.b32.xlu0 %v610, 16
      %v683 = vpop.permute.xlu0 %682
      %684 = vrot.lane.b32.xlu0 %v611, 16
      %v685 = vpop.permute.xlu0 %684
      %v689 = vunpack.c.l.b16 %v480
      %v690 = vunpack.c.l.b16 %v481
      %v691 = vunpack.c.l.b16 %v482
      %v692 = vpack.c.b16 %v690, %v689
      %v693 = vpack.c.b16 %v691, %v691
      %694 = vrot.lane.b32.xlu0 %v584, 32
      %v695 = vpop.permute.xlu0 %694
      %696 = vrot.lane.b32.xlu0 %v585, 32
      %v697 = vpop.permute.xlu0 %696
      %698 = vrot.lane.b32.xlu0 %v586, 32
      %v699 = vpop.permute.xlu0 %698
      %700 = vrot.lane.b32.xlu0 %v587, 32
      %v701 = vpop.permute.xlu0 %700
      %702 = vrot.lane.b32.xlu0 %v588, 32
      %v703 = vpop.permute.xlu0 %702
      %704 = vrot.lane.b32.xlu0 %v589, 32
      %v705 = vpop.permute.xlu0 %704
      %706 = vrot.lane.b32.xlu0 %v590, 32
      %v707 = vpop.permute.xlu0 %706
      %708 = vrot.lane.b32.xlu0 %v591, 32
      %v709 = vpop.permute.xlu0 %708
      %710 = vrot.lane.b32.xlu0 %v592, 32
      %v711 = vpop.permute.xlu0 %710
      %712 = vrot.lane.b32.xlu0 %v593, 32
      %v713 = vpop.permute.xlu0 %712
      %714 = vrot.lane.b32.xlu0 %v594, 32
      %v715 = vpop.permute.xlu0 %714
      %716 = vrot.lane.b32.xlu0 %v595, 32
      %v717 = vpop.permute.xlu0 %716
      %718 = vrot.lane.b32.xlu0 %v596, 32
      %v719 = vpop.permute.xlu0 %718
      %720 = vrot.lane.b32.xlu0 %v597, 32
      %v721 = vpop.permute.xlu0 %720
      %722 = vrot.lane.b32.xlu0 %v598, 32
      %v723 = vpop.permute.xlu0 %722
      %724 = vrot.lane.b32.xlu0 %v599, 32
      %v725 = vpop.permute.xlu0 %724
      %726 = vrot.lane.b32.xlu0 %v600, 32
      %v727 = vpop.permute.xlu0 %726
      %728 = vrot.lane.b32.xlu0 %v601, 32
      %v729 = vpop.permute.xlu0 %728
      %730 = vrot.lane.b32.xlu0 %v602, 32
      %v731 = vpop.permute.xlu0 %730
      %732 = vrot.lane.b32.xlu0 %v603, 32
      %v733 = vpop.permute.xlu0 %732
      %734 = vrot.lane.b32.xlu0 %v604, 32
      %v735 = vpop.permute.xlu0 %734
      %736 = vrot.lane.b32.xlu0 %v605, 32
      %v737 = vpop.permute.xlu0 %736
      %738 = vrot.lane.b32.xlu0 %v606, 32
      %v739 = vpop.permute.xlu0 %738
      %740 = vrot.lane.b32.xlu0 %v607, 32
      %v741 = vpop.permute.xlu0 %740
      %742 = vrot.lane.b32.xlu0 %v608, 32
      %v743 = vpop.permute.xlu0 %742
      %744 = vrot.lane.b32.xlu0 %v609, 32
      %v745 = vpop.permute.xlu0 %744
      %746 = vrot.lane.b32.xlu0 %v610, 32
      %v747 = vpop.permute.xlu0 %746
      %748 = vrot.lane.b32.xlu0 %v611, 32
      %v749 = vpop.permute.xlu0 %748
      %750 = vrot.lane.b32.xlu0 %v612, 32
      %v751 = vpop.permute.xlu0 %750
      %752 = vrot.lane.b32.xlu0 %v613, 32
      %v753 = vpop.permute.xlu0 %752
      %754 = vrot.lane.b32.xlu0 %v692, 32
      %v755 = vpop.permute.xlu0 %754
      %756 = vrot.lane.b32.xlu0 %v693, 32
      %v757 = vpop.permute.xlu0 %756
      %v761 = vunpack.c.l.b16 %v426
      %v762 = vunpack.c.l.b16 %v427
      %v763 = vunpack.c.l.b16 %v428
      %v764 = vpack.c.b16 %v762, %v761
      %v765 = vpack.c.b16 %v763, %v763
      %766 = vrot.lane.b32.xlu0 %v764, 48
      %v767 = vpop.permute.xlu0 %766
      %768 = vrot.lane.b32.xlu0 %v765, 48
      %v769 = vpop.permute.xlu0 %768
      %770 = vrot.lane.b32.xlu0 %v620, 48
      %v771 = vpop.permute.xlu0 %770
      %772 = vrot.lane.b32.xlu0 %v621, 48
      %v773 = vpop.permute.xlu0 %772
      %774 = vrot.lane.b32.xlu0 %v582, 48
      %v775 = vpop.permute.xlu0 %774
      %776 = vrot.lane.b32.xlu0 %v583, 48
      %v777 = vpop.permute.xlu0 %776
      %778 = vrot.lane.b32.xlu0 %v584, 48
      %v779 = vpop.permute.xlu0 %778
      %780 = vrot.lane.b32.xlu0 %v585, 48
      %v781 = vpop.permute.xlu0 %780
      %782 = vrot.lane.b32.xlu0 %v586, 48
      %v783 = vpop.permute.xlu0 %782
      %784 = vrot.lane.b32.xlu0 %v587, 48
      %v785 = vpop.permute.xlu0 %784
      %786 = vrot.lane.b32.xlu0 %v588, 48
      %v787 = vpop.permute.xlu0 %786
      %788 = vrot.lane.b32.xlu0 %v589, 48
      %v789 = vpop.permute.xlu0 %788
      %790 = vrot.lane.b32.xlu0 %v590, 48
      %v791 = vpop.permute.xlu0 %790
      %792 = vrot.lane.b32.xlu0 %v591, 48
      %v793 = vpop.permute.xlu0 %792
      %794 = vrot.lane.b32.xlu0 %v592, 48
      %v795 = vpop.permute.xlu0 %794
      %796 = vrot.lane.b32.xlu0 %v593, 48
      %v797 = vpop.permute.xlu0 %796
      %798 = vrot.lane.b32.xlu0 %v594, 48
      %v799 = vpop.permute.xlu0 %798
      %800 = vrot.lane.b32.xlu0 %v595, 48
      %v801 = vpop.permute.xlu0 %800
      %802 = vrot.lane.b32.xlu0 %v596, 48
      %v803 = vpop.permute.xlu0 %802
      %804 = vrot.lane.b32.xlu0 %v597, 48
      %v805 = vpop.permute.xlu0 %804
      %806 = vrot.lane.b32.xlu0 %v598, 48
      %v807 = vpop.permute.xlu0 %806
      %808 = vrot.lane.b32.xlu0 %v599, 48
      %v809 = vpop.permute.xlu0 %808
      %810 = vrot.lane.b32.xlu0 %v600, 48
      %v811 = vpop.permute.xlu0 %810
      %812 = vrot.lane.b32.xlu0 %v601, 48
      %v813 = vpop.permute.xlu0 %812
      %814 = vrot.lane.b32.xlu0 %v602, 48
      %v815 = vpop.permute.xlu0 %814
      %816 = vrot.lane.b32.xlu0 %v603, 48
      %v817 = vpop.permute.xlu0 %816
      %818 = vrot.lane.b32.xlu0 %v604, 48
      %v819 = vpop.permute.xlu0 %818
      %820 = vrot.lane.b32.xlu0 %v605, 48
      %v821 = vpop.permute.xlu0 %820
      %822 = vrot.lane.b32.xlu0 %v606, 48
      %v823 = vpop.permute.xlu0 %822
      %824 = vrot.lane.b32.xlu0 %v607, 48
      %v825 = vpop.permute.xlu0 %824
      %826 = vrot.lane.b32.xlu0 %v608, 48
      %v827 = vpop.permute.xlu0 %826
      %828 = vrot.lane.b32.xlu0 %v609, 48
      %v829 = vpop.permute.xlu0 %828
      %v833 = vunpack.c.l.b16 %v483
      %v834 = vunpack.c.l.b16 %v484
      %v835 = vunpack.c.l.b16 %v485
      %v836 = vpack.c.b16 %v834, %v833
      %v837 = vpack.c.b16 %v835, %v835
      %838 = vrot.lane.b32.xlu0 %v586, 64
      %v839 = vpop.permute.xlu0 %838
      %840 = vrot.lane.b32.xlu0 %v587, 64
      %v841 = vpop.permute.xlu0 %840
      %842 = vrot.lane.b32.xlu0 %v588, 64
      %v843 = vpop.permute.xlu0 %842
      %844 = vrot.lane.b32.xlu0 %v589, 64
      %v845 = vpop.permute.xlu0 %844
      %846 = vrot.lane.b32.xlu0 %v590, 64
      %v847 = vpop.permute.xlu0 %846
      %848 = vrot.lane.b32.xlu0 %v591, 64
      %v849 = vpop.permute.xlu0 %848
      %850 = vrot.lane.b32.xlu0 %v592, 64
      %v851 = vpop.permute.xlu0 %850
      %852 = vrot.lane.b32.xlu0 %v593, 64
      %v853 = vpop.permute.xlu0 %852
      %854 = vrot.lane.b32.xlu0 %v594, 64
      %v855 = vpop.permute.xlu0 %854
      %856 = vrot.lane.b32.xlu0 %v595, 64
      %v857 = vpop.permute.xlu0 %856
      %858 = vrot.lane.b32.xlu0 %v596, 64
      %v859 = vpop.permute.xlu0 %858
      %860 = vrot.lane.b32.xlu0 %v597, 64
      %v861 = vpop.permute.xlu0 %860
      %862 = vrot.lane.b32.xlu0 %v598, 64
      %v863 = vpop.permute.xlu0 %862
      %864 = vrot.lane.b32.xlu0 %v599, 64
      %v865 = vpop.permute.xlu0 %864
      %866 = vrot.lane.b32.xlu0 %v600, 64
      %v867 = vpop.permute.xlu0 %866
      %868 = vrot.lane.b32.xlu0 %v601, 64
      %v869 = vpop.permute.xlu0 %868
      %870 = vrot.lane.b32.xlu0 %v602, 64
      %v871 = vpop.permute.xlu0 %870
      %872 = vrot.lane.b32.xlu0 %v603, 64
      %v873 = vpop.permute.xlu0 %872
      %874 = vrot.lane.b32.xlu0 %v604, 64
      %v875 = vpop.permute.xlu0 %874
      %876 = vrot.lane.b32.xlu0 %v605, 64
      %v877 = vpop.permute.xlu0 %876
      %878 = vrot.lane.b32.xlu0 %v606, 64
      %v879 = vpop.permute.xlu0 %878
      %880 = vrot.lane.b32.xlu0 %v607, 64
      %v881 = vpop.permute.xlu0 %880
      %882 = vrot.lane.b32.xlu0 %v608, 64
      %v883 = vpop.permute.xlu0 %882
      %884 = vrot.lane.b32.xlu0 %v609, 64
      %v885 = vpop.permute.xlu0 %884
      %886 = vrot.lane.b32.xlu0 %v610, 64
      %v887 = vpop.permute.xlu0 %886
      %888 = vrot.lane.b32.xlu0 %v611, 64
      %v889 = vpop.permute.xlu0 %888
      %890 = vrot.lane.b32.xlu0 %v612, 64
      %v891 = vpop.permute.xlu0 %890
      %892 = vrot.lane.b32.xlu0 %v613, 64
      %v893 = vpop.permute.xlu0 %892
      %894 = vrot.lane.b32.xlu0 %v692, 64
      %v895 = vpop.permute.xlu0 %894
      %896 = vrot.lane.b32.xlu0 %v693, 64
      %v897 = vpop.permute.xlu0 %896
      %898 = vrot.lane.b32.xlu0 %v836, 64
      %v899 = vpop.permute.xlu0 %898
      %900 = vrot.lane.b32.xlu0 %v837, 64
      %v901 = vpop.permute.xlu0 %900
      %vm902 = vcmask 130048
      %v905 = vsel %vm902, %v582, %v623
      %v908 = vsel %vm902, %v583, %v625
      %v911 = vsel %vm902, %v584, %v627
      %v914 = vsel %vm902, %v585, %v629
      %v917 = vsel %vm902, %v586, %v631
      %v920 = vsel %vm902, %v587, %v633
      %v923 = vsel %vm902, %v588, %v635
      %v926 = vsel %vm902, %v589, %v637
      %v929 = vsel %vm902, %v590, %v639
      %v932 = vsel %vm902, %v591, %v641
      %v935 = vsel %vm902, %v592, %v643
      %v938 = vsel %vm902, %v593, %v645
      %v941 = vsel %vm902, %v594, %v647
      %v944 = vsel %vm902, %v595, %v649
      %v947 = vsel %vm902, %v596, %v651
      %v950 = vsel %vm902, %v597, %v653
      %v953 = vsel %vm902, %v598, %v655
      %v956 = vsel %vm902, %v599, %v657
      %v959 = vsel %vm902, %v600, %v659
      %v962 = vsel %vm902, %v601, %v661
      %v965 = vsel %vm902, %v602, %v663
      %v968 = vsel %vm902, %v603, %v665
      %v971 = vsel %vm902, %v604, %v667
      %v974 = vsel %vm902, %v605, %v669
      %v977 = vsel %vm902, %v606, %v671
      %v980 = vsel %vm902, %v607, %v673
      %v983 = vsel %vm902, %v608, %v675
      %v986 = vsel %vm902, %v609, %v677
      %v989 = vsel %vm902, %v610, %v679
      %v992 = vsel %vm902, %v611, %v681
      %v995 = vsel %vm902, %v612, %v683
      %v998 = vsel %vm902, %v613, %v685
      %vm999 = vcmask 261120
      %v1001 = vsel %vm999, %v905, %v695
      %v1003 = vsel %vm999, %v908, %v697
      %v1005 = vsel %vm999, %v911, %v699
      %v1007 = vsel %vm999, %v914, %v701
      %v1009 = vsel %vm999, %v917, %v703
      %v1011 = vsel %vm999, %v920, %v705
      %v1013 = vsel %vm999, %v923, %v707
      %v1015 = vsel %vm999, %v926, %v709
      %v1017 = vsel %vm999, %v929, %v711
      %v1019 = vsel %vm999, %v932, %v713
      %v1021 = vsel %vm999, %v935, %v715
      %v1023 = vsel %vm999, %v938, %v717
      %v1025 = vsel %vm999, %v941, %v719
      %v1027 = vsel %vm999, %v944, %v721
      %v1029 = vsel %vm999, %v947, %v723
      %v1031 = vsel %vm999, %v950, %v725
      %v1033 = vsel %vm999, %v953, %v727
      %v1035 = vsel %vm999, %v956, %v729
      %v1037 = vsel %vm999, %v959, %v731
      %v1039 = vsel %vm999, %v962, %v733
      %v1041 = vsel %vm999, %v965, %v735
      %v1043 = vsel %vm999, %v968, %v737
      %v1045 = vsel %vm999, %v971, %v739
      %v1047 = vsel %vm999, %v974, %v741
      %v1049 = vsel %vm999, %v977, %v743
      %v1051 = vsel %vm999, %v980, %v745
      %v1053 = vsel %vm999, %v983, %v747
      %v1055 = vsel %vm999, %v986, %v749
      %v1057 = vsel %vm999, %v989, %v751
      %v1059 = vsel %vm999, %v992, %v753
      %v1061 = vsel %vm999, %v995, %v755
      %v1063 = vsel %vm999, %v998, %v757
      %vm1064 = vcmask 392192
      %v1066 = vsel %vm1064, %v1001, %v767
      %v1068 = vsel %vm1064, %v1003, %v769
      %v1070 = vsel %vm1064, %v1005, %v771
      %v1072 = vsel %vm1064, %v1007, %v773
      %v1074 = vsel %vm1064, %v1009, %v775
      %v1076 = vsel %vm1064, %v1011, %v777
      %v1078 = vsel %vm1064, %v1013, %v779
      %v1080 = vsel %vm1064, %v1015, %v781
      %v1082 = vsel %vm1064, %v1017, %v783
      %v1084 = vsel %vm1064, %v1019, %v785
      %v1086 = vsel %vm1064, %v1021, %v787
      %v1088 = vsel %vm1064, %v1023, %v789
      %v1090 = vsel %vm1064, %v1025, %v791
      %v1092 = vsel %vm1064, %v1027, %v793
      %v1094 = vsel %vm1064, %v1029, %v795
      %v1096 = vsel %vm1064, %v1031, %v797
      %v1098 = vsel %vm1064, %v1033, %v799
      %v1100 = vsel %vm1064, %v1035, %v801
      %v1102 = vsel %vm1064, %v1037, %v803
      %v1104 = vsel %vm1064, %v1039, %v805
      %v1106 = vsel %vm1064, %v1041, %v807
      %v1108 = vsel %vm1064, %v1043, %v809
      %v1110 = vsel %vm1064, %v1045, %v811
      %v1112 = vsel %vm1064, %v1047, %v813
      %v1114 = vsel %vm1064, %v1049, %v815
      %v1116 = vsel %vm1064, %v1051, %v817
      %v1118 = vsel %vm1064, %v1053, %v819
      %v1120 = vsel %vm1064, %v1055, %v821
      %v1122 = vsel %vm1064, %v1057, %v823
      %v1124 = vsel %vm1064, %v1059, %v825
      %v1126 = vsel %vm1064, %v1061, %v827
      %v1128 = vsel %vm1064, %v1063, %v829
      %vm1129 = vcmask 523264
      %v1131 = vsel %vm1129, %v1066, %v839
      %v1133 = vsel %vm1129, %v1068, %v841
      %v1135 = vsel %vm1129, %v1070, %v843
      %v1137 = vsel %vm1129, %v1072, %v845
      %v1139 = vsel %vm1129, %v1074, %v847
      %v1141 = vsel %vm1129, %v1076, %v849
      %v1143 = vsel %vm1129, %v1078, %v851
      %v1145 = vsel %vm1129, %v1080, %v853
      %v1147 = vsel %vm1129, %v1082, %v855
      %v1149 = vsel %vm1129, %v1084, %v857
      %v1151 = vsel %vm1129, %v1086, %v859
      %v1153 = vsel %vm1129, %v1088, %v861
      %v1155 = vsel %vm1129, %v1090, %v863
      %v1157 = vsel %vm1129, %v1092, %v865
      %v1159 = vsel %vm1129, %v1094, %v867
      %v1161 = vsel %vm1129, %v1096, %v869
      %v1163 = vsel %vm1129, %v1098, %v871
      %v1165 = vsel %vm1129, %v1100, %v873
      %v1167 = vsel %vm1129, %v1102, %v875
      %v1169 = vsel %vm1129, %v1104, %v877
      %v1171 = vsel %vm1129, %v1106, %v879
      %v1173 = vsel %vm1129, %v1108, %v881
      %v1175 = vsel %vm1129, %v1110, %v883
      %v1177 = vsel %vm1129, %v1112, %v885
      %v1179 = vsel %vm1129, %v1114, %v887
      %v1181 = vsel %vm1129, %v1116, %v889
      %v1183 = vsel %vm1129, %v1118, %v891
      %v1185 = vsel %vm1129, %v1120, %v893
      %v1187 = vsel %vm1129, %v1122, %v895
      %v1189 = vsel %vm1129, %v1124, %v897
      %v1191 = vsel %vm1129, %v1126, %v899
      %v1193 = vsel %vm1129, %v1128, %v901
      %vm1226 = vcmask 1046528
      %v1227 = vrot.slane %v1131, 1
      %v1228 = vrot.slane %v1133, 1
      %v1229 = vsel %vm1226, %v1227, %v1228
      %v1230 = vrot.slane %v1135, 1
      %v1231 = vrot.slane %v1137, 1
      %v1232 = vsel %vm1226, %v1230, %v1231
      %v1233 = vrot.slane %v1139, 1
      %v1234 = vrot.slane %v1141, 1
      %v1235 = vsel %vm1226, %v1233, %v1234
      %v1236 = vrot.slane %v1143, 1
      %v1237 = vrot.slane %v1145, 1
      %v1238 = vsel %vm1226, %v1236, %v1237
      %v1239 = vrot.slane %v1147, 1
      %v1240 = vrot.slane %v1149, 1
      %v1241 = vsel %vm1226, %v1239, %v1240
      %v1242 = vrot.slane %v1151, 1
      %v1243 = vrot.slane %v1153, 1
      %v1244 = vsel %vm1226, %v1242, %v1243
      %v1245 = vrot.slane %v1155, 1
      %v1246 = vrot.slane %v1157, 1
      %v1247 = vsel %vm1226, %v1245, %v1246
      %v1248 = vrot.slane %v1159, 1
      %v1249 = vrot.slane %v1161, 1
      %v1250 = vsel %vm1226, %v1248, %v1249
      %v1251 = vrot.slane %v1163, 1
      %v1252 = vrot.slane %v1165, 1
      %v1253 = vsel %vm1226, %v1251, %v1252
      %v1254 = vrot.slane %v1167, 1
      %v1255 = vrot.slane %v1169, 1
      %v1256 = vsel %vm1226, %v1254, %v1255
      %v1257 = vrot.slane %v1171, 1
      %v1258 = vrot.slane %v1173, 1
      %v1259 = vsel %vm1226, %v1257, %v1258
      %v1260 = vrot.slane %v1175, 1
      %v1261 = vrot.slane %v1177, 1
      %v1262 = vsel %vm1226, %v1260, %v1261
      %v1263 = vrot.slane %v1179, 1
      %v1264 = vrot.slane %v1181, 1
      %v1265 = vsel %vm1226, %v1263, %v1264
      %v1266 = vrot.slane %v1183, 1
      %v1267 = vrot.slane %v1185, 1
      %v1268 = vsel %vm1226, %v1266, %v1267
      %v1269 = vrot.slane %v1187, 1
      %v1270 = vrot.slane %v1189, 1
      %v1271 = vsel %vm1226, %v1269, %v1270
      %v1272 = vrot.slane %v1191, 1
      %v1273 = vrot.slane %v1193, 1
      %v1274 = vsel %vm1226, %v1272, %v1273
      %v1275 = vld [vmem:[%s3] sm:$0xf]
      %v1276 = vld [vmem:[%s3 + $0x4] sm:$0xf]
      %v1277 = vld [vmem:[%s3 + $0x8] sm:$0xf]
      %v1278 = vld [vmem:[%s3 + $0xc] sm:$0xf]
      %v1279 = vld [vmem:[%s3 + $0x10] sm:$0xf]
      %v1280 = vld [vmem:[%s3 + $0x14] sm:$0xf]
      %v1281 = vld [vmem:[%s3 + $0x18] sm:$0xf]
      %v1282 = vld [vmem:[%s3 + $0x1c] sm:$0xf]
      %v1283 = vld [vmem:[%s3 + $0x20] sm:$0xf]
      %v1284 = vld [vmem:[%s3 + $0x24] sm:$0xf]
      %v1285 = vld [vmem:[%s2] sm:$0xf]
      %v1286 = vld [vmem:[%s2 + $0x4] sm:$0xf]
      %v1287 = vld [vmem:[%s2 + $0x8] sm:$0xf]
      %v1288 = vld [vmem:[%s2 + $0xc] sm:$0xf]
      %v1289 = vld [vmem:[%s2 + $0x10] sm:$0xf]
      %v1290 = vld [vmem:[%s2 + $0x14] sm:$0xf]
      %v1291 = vld [vmem:[%s1] sm:$0xf]
      %v1292 = vld [vmem:[%s1 + $0x4] sm:$0xf]
      %v1293 = vld [vmem:[%s415] sm:$0xf]
      %v1294 = vld [vmem:[%s415 + $0xc] sm:$0xf]
      %v1295 = vld [vmem:[%s415 + $0x18] sm:$0xf]
      %v1296 = vld [vmem:[%s415 + $0x24] sm:$0xf]
      %v1297 = vld [vmem:[%s415 + $0x30] sm:$0xf]
      %v1298 = vld [vmem:[%s415 + $0x3c] sm:$0xf]
      %v1299 = vld [vmem:[%s415 + $0x48] sm:$0xf]
      %v1300 = vld [vmem:[%s415 + $0x54] sm:$0xf]
      %v1301 = vld [vmem:[%s415 + $0x60] sm:$0xf]
      %v1302 = vld [vmem:[%s415 + $0x6c] sm:$0xf]
      %v1303 = vld [vmem:[%s415 + $0x78] sm:$0xf]
      %v1304 = vld [vmem:[%s415 + $0x84] sm:$0xf]
      %v1305 = vld [vmem:[%s415 + $0x90] sm:$0xf]
      %v1306 = vld [vmem:[%s415 + $0x9c] sm:$0xf]
      %v1307 = vld [vmem:[%s415 + $0xa8] sm:$0xf]
      %v1308 = vld [vmem:[%s415 + $0xb4] sm:$0xf]
      %v1309 = vld [vmem:[%s415 + $0xc0] sm:$0xf]
      %v1310 = vld [vmem:[%s415 + $0xcc] sm:$0xf]
      %v1311 = vld [vmem:[%s415 + $0xd8] sm:$0xf]
      %v1312 = vld [vmem:[%s415 + $0xe4] sm:$0xf]
      %v1329 = vunpack.c.l.b16 %v1295
      %v1330 = vunpack.c.l.b16 %v1296
      %v1331 = vunpack.c.l.b16 %v1297
      %v1332 = vunpack.c.l.b16 %v1298
      %v1333 = vunpack.c.l.b16 %v1299
      %v1334 = vunpack.c.l.b16 %v1300
      %v1335 = vunpack.c.l.b16 %v1301
      %v1336 = vunpack.c.l.b16 %v1302
      %v1337 = vunpack.c.l.b16 %v1303
      %v1338 = vunpack.c.l.b16 %v1304
      %v1339 = vunpack.c.l.b16 %v1305
      %v1340 = vunpack.c.l.b16 %v1306
      %v1341 = vunpack.c.l.b16 %v1307
      %v1342 = vunpack.c.l.b16 %v1308
      %v1343 = vunpack.c.l.b16 %v1309
      %v1344 = vunpack.c.l.b16 %v1310
      %v1345 = vpack.c.b16 %v535, %v1329
      %v1346 = vpack.c.b16 %v538, %v1330
      %v1347 = vpack.c.b16 %v541, %v1331
      %v1348 = vpack.c.b16 %v544, %v1332
      %v1349 = vpack.c.b16 %v547, %v1333
      %v1350 = vpack.c.b16 %v550, %v1334
      %v1351 = vpack.c.b16 %v553, %v1335
      %v1352 = vpack.c.b16 %v556, %v1336
      %v1353 = vpack.c.b16 %v559, %v1337
      %v1354 = vpack.c.b16 %v562, %v1338
      %v1355 = vpack.c.b16 %v565, %v1339
      %v1356 = vpack.c.b16 %v568, %v1340
      %v1357 = vpack.c.b16 %v571, %v1341
      %v1358 = vpack.c.b16 %v574, %v1342
      %v1359 = vpack.c.b16 %v577, %v1343
      %v1360 = vpack.c.b16 %v580, %v1344
      %v1362 = vunpack.c.l.b16 %v1294
      %v1363 = vpack.c.b16 %v618, %v1362
      %1364 = vrot.lane.b32.xlu0 %v1363, 16
      %v1365 = vpop.permute.xlu0 %1364
      %1366 = vrot.lane.b32.xlu0 %v1345, 16
      %v1367 = vpop.permute.xlu0 %1366
      %1368 = vrot.lane.b32.xlu0 %v1346, 16
      %v1369 = vpop.permute.xlu0 %1368
      %1370 = vrot.lane.b32.xlu0 %v1347, 16
      %v1371 = vpop.permute.xlu0 %1370
      %1372 = vrot.lane.b32.xlu0 %v1348, 16
      %v1373 = vpop.permute.xlu0 %1372
      %1374 = vrot.lane.b32.xlu0 %v1349, 16
      %v1375 = vpop.permute.xlu0 %1374
      %1376 = vrot.lane.b32.xlu0 %v1350, 16
      %v1377 = vpop.permute.xlu0 %1376
      %1378 = vrot.lane.b32.xlu0 %v1351, 16
      %v1379 = vpop.permute.xlu0 %1378
      %1380 = vrot.lane.b32.xlu0 %v1352, 16
      %v1381 = vpop.permute.xlu0 %1380
      %1382 = vrot.lane.b32.xlu0 %v1353, 16
      %v1383 = vpop.permute.xlu0 %1382
      %1384 = vrot.lane.b32.xlu0 %v1354, 16
      %v1385 = vpop.permute.xlu0 %1384
      %1386 = vrot.lane.b32.xlu0 %v1355, 16
      %v1387 = vpop.permute.xlu0 %1386
      %1388 = vrot.lane.b32.xlu0 %v1356, 16
      %v1389 = vpop.permute.xlu0 %1388
      %1390 = vrot.lane.b32.xlu0 %v1357, 16
      %v1391 = vpop.permute.xlu0 %1390
      %1392 = vrot.lane.b32.xlu0 %v1358, 16
      %v1393 = vpop.permute.xlu0 %1392
      %1394 = vrot.lane.b32.xlu0 %v1359, 16
      %v1395 = vpop.permute.xlu0 %1394
      %v1397 = vunpack.c.l.b16 %v1311
      %v1398 = vpack.c.b16 %v690, %v1397
      %1399 = vrot.lane.b32.xlu0 %v1346, 32
      %v1400 = vpop.permute.xlu0 %1399
      %1401 = vrot.lane.b32.xlu0 %v1347, 32
      %v1402 = vpop.permute.xlu0 %1401
      %1403 = vrot.lane.b32.xlu0 %v1348, 32
      %v1404 = vpop.permute.xlu0 %1403
      %1405 = vrot.lane.b32.xlu0 %v1349, 32
      %v1406 = vpop.permute.xlu0 %1405
      %1407 = vrot.lane.b32.xlu0 %v1350, 32
      %v1408 = vpop.permute.xlu0 %1407
      %1409 = vrot.lane.b32.xlu0 %v1351, 32
      %v1410 = vpop.permute.xlu0 %1409
      %1411 = vrot.lane.b32.xlu0 %v1352, 32
      %v1412 = vpop.permute.xlu0 %1411
      %1413 = vrot.lane.b32.xlu0 %v1353, 32
      %v1414 = vpop.permute.xlu0 %1413
      %1415 = vrot.lane.b32.xlu0 %v1354, 32
      %v1416 = vpop.permute.xlu0 %1415
      %1417 = vrot.lane.b32.xlu0 %v1355, 32
      %v1418 = vpop.permute.xlu0 %1417
      %1419 = vrot.lane.b32.xlu0 %v1356, 32
      %v1420 = vpop.permute.xlu0 %1419
      %1421 = vrot.lane.b32.xlu0 %v1357, 32
      %v1422 = vpop.permute.xlu0 %1421
      %1423 = vrot.lane.b32.xlu0 %v1358, 32
      %v1424 = vpop.permute.xlu0 %1423
      %1425 = vrot.lane.b32.xlu0 %v1359, 32
      %v1426 = vpop.permute.xlu0 %1425
      %1427 = vrot.lane.b32.xlu0 %v1360, 32
      %v1428 = vpop.permute.xlu0 %1427
      %1429 = vrot.lane.b32.xlu0 %v1398, 32
      %v1430 = vpop.permute.xlu0 %1429
      %v1432 = vunpack.c.l.b16 %v1293
      %v1433 = vpack.c.b16 %v762, %v1432
      %1434 = vrot.lane.b32.xlu0 %v1433, 48
      %v1435 = vpop.permute.xlu0 %1434
      %1436 = vrot.lane.b32.xlu0 %v1363, 48
      %v1437 = vpop.permute.xlu0 %1436
      %1438 = vrot.lane.b32.xlu0 %v1345, 48
      %v1439 = vpop.permute.xlu0 %1438
      %1440 = vrot.lane.b32.xlu0 %v1346, 48
      %v1441 = vpop.permute.xlu0 %1440
      %1442 = vrot.lane.b32.xlu0 %v1347, 48
      %v1443 = vpop.permute.xlu0 %1442
      %1444 = vrot.lane.b32.xlu0 %v1348, 48
      %v1445 = vpop.permute.xlu0 %1444
      %1446 = vrot.lane.b32.xlu0 %v1349, 48
      %v1447 = vpop.permute.xlu0 %1446
      %1448 = vrot.lane.b32.xlu0 %v1350, 48
      %v1449 = vpop.permute.xlu0 %1448
      %1450 = vrot.lane.b32.xlu0 %v1351, 48
      %v1451 = vpop.permute.xlu0 %1450
      %1452 = vrot.lane.b32.xlu0 %v1352, 48
      %v1453 = vpop.permute.xlu0 %1452
      %1454 = vrot.lane.b32.xlu0 %v1353, 48
      %v1455 = vpop.permute.xlu0 %1454
      %1456 = vrot.lane.b32.xlu0 %v1354, 48
      %v1457 = vpop.permute.xlu0 %1456
      %1458 = vrot.lane.b32.xlu0 %v1355, 48
      %v1459 = vpop.permute.xlu0 %1458
      %1460 = vrot.lane.b32.xlu0 %v1356, 48
      %v1461 = vpop.permute.xlu0 %1460
      %1462 = vrot.lane.b32.xlu0 %v1357, 48
      %v1463 = vpop.permute.xlu0 %1462
      %1464 = vrot.lane.b32.xlu0 %v1358, 48
      %v1465 = vpop.permute.xlu0 %1464
      %v1467 = vunpack.c.l.b16 %v1312
      %v1468 = vpack.c.b16 %v834, %v1467
      %1469 = vrot.lane.b32.xlu0 %v1347, 64
      %v1470 = vpop.permute.xlu0 %1469
      %1471 = vrot.lane.b32.xlu0 %v1348, 64
      %v1472 = vpop.permute.xlu0 %1471
      %1473 = vrot.lane.b32.xlu0 %v1349, 64
      %v1474 = vpop.permute.xlu0 %1473
      %1475 = vrot.lane.b32.xlu0 %v1350, 64
      %v1476 = vpop.permute.xlu0 %1475
      %1477 = vrot.lane.b32.xlu0 %v1351, 64
      %v1478 = vpop.permute.xlu0 %1477
      %1479 = vrot.lane.b32.xlu0 %v1352, 64
      %v1480 = vpop.permute.xlu0 %1479
      %1481 = vrot.lane.b32.xlu0 %v1353, 64
      %v1482 = vpop.permute.xlu0 %1481
      %1483 = vrot.lane.b32.xlu0 %v1354, 64
      %v1484 = vpop.permute.xlu0 %1483
      %1485 = vrot.lane.b32.xlu0 %v1355, 64
      %v1486 = vpop.permute.xlu0 %1485
      %1487 = vrot.lane.b32.xlu0 %v1356, 64
      %v1488 = vpop.permute.xlu0 %1487
      %1489 = vrot.lane.b32.xlu0 %v1357, 64
      %v1490 = vpop.permute.xlu0 %1489
      %1491 = vrot.lane.b32.xlu0 %v1358, 64
      %v1492 = vpop.permute.xlu0 %1491
      %1493 = vrot.lane.b32.xlu0 %v1359, 64
      %v1494 = vpop.permute.xlu0 %1493
      %1495 = vrot.lane.b32.xlu0 %v1360, 64
      %v1496 = vpop.permute.xlu0 %1495
      %1497 = vrot.lane.b32.xlu0 %v1398, 64
      %v1498 = vpop.permute.xlu0 %1497
      %1499 = vrot.lane.b32.xlu0 %v1468, 64
      %v1500 = vpop.permute.xlu0 %1499
      %v1503 = vsel %vm902, %v1345, %v1365
      %v1506 = vsel %vm902, %v1346, %v1367
      %v1509 = vsel %vm902, %v1347, %v1369
      %v1512 = vsel %vm902, %v1348, %v1371
      %v1515 = vsel %vm902, %v1349, %v1373
      %v1518 = vsel %vm902, %v1350, %v1375
      %v1521 = vsel %vm902, %v1351, %v1377
      %v1524 = vsel %vm902, %v1352, %v1379
      %v1527 = vsel %vm902, %v1353, %v1381
      %v1530 = vsel %vm902, %v1354, %v1383
      %v1533 = vsel %vm902, %v1355, %v1385
      %v1536 = vsel %vm902, %v1356, %v1387
      %v1539 = vsel %vm902, %v1357, %v1389
      %v1542 = vsel %vm902, %v1358, %v1391
      %v1545 = vsel %vm902, %v1359, %v1393
      %v1548 = vsel %vm902, %v1360, %v1395
      %v1550 = vsel %vm999, %v1503, %v1400
      %v1552 = vsel %vm999, %v1506, %v1402
      %v1554 = vsel %vm999, %v1509, %v1404
      %v1556 = vsel %vm999, %v1512, %v1406
      %v1558 = vsel %vm999, %v1515, %v1408
      %v1560 = vsel %vm999, %v1518, %v1410
      %v1562 = vsel %vm999, %v1521, %v1412
      %v1564 = vsel %vm999, %v1524, %v1414
      %v1566 = vsel %vm999, %v1527, %v1416
      %v1568 = vsel %vm999, %v1530, %v1418
      %v1570 = vsel %vm999, %v1533, %v1420
      %v1572 = vsel %vm999, %v1536, %v1422
      %v1574 = vsel %vm999, %v1539, %v1424
      %v1576 = vsel %vm999, %v1542, %v1426
      %v1578 = vsel %vm999, %v1545, %v1428
      %v1580 = vsel %vm999, %v1548, %v1430
      %v1582 = vsel %vm1064, %v1550, %v1435
      %v1584 = vsel %vm1064, %v1552, %v1437
      %v1586 = vsel %vm1064, %v1554, %v1439
      %v1588 = vsel %vm1064, %v1556, %v1441
      %v1590 = vsel %vm1064, %v1558, %v1443
      %v1592 = vsel %vm1064, %v1560, %v1445
      %v1594 = vsel %vm1064, %v1562, %v1447
      %v1596 = vsel %vm1064, %v1564, %v1449
      %v1598 = vsel %vm1064, %v1566, %v1451
      %v1600 = vsel %vm1064, %v1568, %v1453
      %v1602 = vsel %vm1064, %v1570, %v1455
      %v1604 = vsel %vm1064, %v1572, %v1457
      %v1606 = vsel %vm1064, %v1574, %v1459
      %v1608 = vsel %vm1064, %v1576, %v1461
      %v1610 = vsel %vm1064, %v1578, %v1463
      %v1612 = vsel %vm1064, %v1580, %v1465
      %v1614 = vsel %vm1129, %v1582, %v1470
      %v1616 = vsel %vm1129, %v1584, %v1472
      %v1618 = vsel %vm1129, %v1586, %v1474
      %v1620 = vsel %vm1129, %v1588, %v1476
      %v1622 = vsel %vm1129, %v1590, %v1478
      %v1624 = vsel %vm1129, %v1592, %v1480
      %v1626 = vsel %vm1129, %v1594, %v1482
      %v1628 = vsel %vm1129, %v1596, %v1484
      %v1630 = vsel %vm1129, %v1598, %v1486
      %v1632 = vsel %vm1129, %v1600, %v1488
      %v1634 = vsel %vm1129, %v1602, %v1490
      %v1636 = vsel %vm1129, %v1604, %v1492
      %v1638 = vsel %vm1129, %v1606, %v1494
      %v1640 = vsel %vm1129, %v1608, %v1496
      %v1642 = vsel %vm1129, %v1610, %v1498
      %v1644 = vsel %vm1129, %v1612, %v1500
      %vm1645 = vsmask.f32 7424
      %v1646 = vshrl.u32 %v1614, 16
      %v1648 = vshll.u32 %v1614, 16
      %v1650 = vrot.slane %v1648, 1
      %v1651 = vor.u32 %v1646, %v1650
      %v1652 = vshll.u32 %v1133, 16
      %v1654 = vrot.slane %v1652, 1
      %v1655 = vsel %vm1645, %v1651, %v1654
      %v1656 = vshrl.u32 %v1616, 16
      %v1658 = vshll.u32 %v1616, 16
      %v1660 = vrot.slane %v1658, 1
      %v1661 = vor.u32 %v1656, %v1660
      %v1662 = vshll.u32 %v1137, 16
      %v1664 = vrot.slane %v1662, 1
      %v1665 = vsel %vm1645, %v1661, %v1664
      %v1666 = vshrl.u32 %v1618, 16
      %v1668 = vshll.u32 %v1618, 16
      %v1670 = vrot.slane %v1668, 1
      %v1671 = vor.u32 %v1666, %v1670
      %v1672 = vshll.u32 %v1141, 16
      %v1674 = vrot.slane %v1672, 1
      %v1675 = vsel %vm1645, %v1671, %v1674
      %v1676 = vshrl.u32 %v1620, 16
      %v1678 = vshll.u32 %v1620, 16
      %v1680 = vrot.slane %v1678, 1
      %v1681 = vor.u32 %v1676, %v1680
      %v1682 = vshll.u32 %v1145, 16
      %v1684 = vrot.slane %v1682, 1
      %v1685 = vsel %vm1645, %v1681, %v1684
      %v1686 = vshrl.u32 %v1622, 16
      %v1688 = vshll.u32 %v1622, 16
      %v1690 = vrot.slane %v1688, 1
      %v1691 = vor.u32 %v1686, %v1690
      %v1692 = vshll.u32 %v1149, 16
      %v1694 = vrot.slane %v1692, 1
      %v1695 = vsel %vm1645, %v1691, %v1694
      %v1696 = vshrl.u32 %v1624, 16
      %v1698 = vshll.u32 %v1624, 16
      %v1700 = vrot.slane %v1698, 1
      %v1701 = vor.u32 %v1696, %v1700
      %v1702 = vshll.u32 %v1153, 16
      %v1704 = vrot.slane %v1702, 1
      %v1705 = vsel %vm1645, %v1701, %v1704
      %v1706 = vshrl.u32 %v1626, 16
      %v1708 = vshll.u32 %v1626, 16
      %v1710 = vrot.slane %v1708, 1
      %v1711 = vor.u32 %v1706, %v1710
      %v1712 = vshll.u32 %v1157, 16
      %v1714 = vrot.slane %v1712, 1
      %v1715 = vsel %vm1645, %v1711, %v1714
      %v1716 = vshrl.u32 %v1628, 16
      %v1718 = vshll.u32 %v1628, 16
      %v1720 = vrot.slane %v1718, 1
      %v1721 = vor.u32 %v1716, %v1720
      %v1722 = vshll.u32 %v1161, 16
      %v1724 = vrot.slane %v1722, 1
      %v1725 = vsel %vm1645, %v1721, %v1724
      %v1726 = vshrl.u32 %v1630, 16
      %v1728 = vshll.u32 %v1630, 16
      %v1730 = vrot.slane %v1728, 1
      %v1731 = vor.u32 %v1726, %v1730
      %v1732 = vshll.u32 %v1165, 16
      %v1734 = vrot.slane %v1732, 1
      %v1735 = vsel %vm1645, %v1731, %v1734
      %v1736 = vshrl.u32 %v1632, 16
      %v1738 = vshll.u32 %v1632, 16
      %v1740 = vrot.slane %v1738, 1
      %v1741 = vor.u32 %v1736, %v1740
      %v1742 = vshll.u32 %v1169, 16
      %v1744 = vrot.slane %v1742, 1
      %v1745 = vsel %vm1645, %v1741, %v1744
      %v1746 = vshrl.u32 %v1634, 16
      %v1748 = vshll.u32 %v1634, 16
      %v1750 = vrot.slane %v1748, 1
      %v1751 = vor.u32 %v1746, %v1750
      %v1752 = vshll.u32 %v1173, 16
      %v1754 = vrot.slane %v1752, 1
      %v1755 = vsel %vm1645, %v1751, %v1754
      %v1756 = vshrl.u32 %v1636, 16
      %v1758 = vshll.u32 %v1636, 16
      %v1760 = vrot.slane %v1758, 1
      %v1761 = vor.u32 %v1756, %v1760
      %v1762 = vshll.u32 %v1177, 16
      %v1764 = vrot.slane %v1762, 1
      %v1765 = vsel %vm1645, %v1761, %v1764
      %v1766 = vshrl.u32 %v1638, 16
      %v1768 = vshll.u32 %v1638, 16
      %v1770 = vrot.slane %v1768, 1
      %v1771 = vor.u32 %v1766, %v1770
      %v1772 = vshll.u32 %v1181, 16
      %v1774 = vrot.slane %v1772, 1
      %v1775 = vsel %vm1645, %v1771, %v1774
      %v1776 = vshrl.u32 %v1640, 16
      %v1778 = vshll.u32 %v1640, 16
      %v1780 = vrot.slane %v1778, 1
      %v1781 = vor.u32 %v1776, %v1780
      %v1782 = vshll.u32 %v1185, 16
      %v1784 = vrot.slane %v1782, 1
      %v1785 = vsel %vm1645, %v1781, %v1784
      %v1786 = vshrl.u32 %v1642, 16
      %v1788 = vshll.u32 %v1642, 16
      %v1790 = vrot.slane %v1788, 1
      %v1791 = vor.u32 %v1786, %v1790
      %v1792 = vshll.u32 %v1189, 16
      %v1794 = vrot.slane %v1792, 1
      %v1795 = vsel %vm1645, %v1791, %v1794
      %v1796 = vshrl.u32 %v1644, 16
      %v1798 = vshll.u32 %v1644, 16
      %v1800 = vrot.slane %v1798, 1
      %v1801 = vor.u32 %v1796, %v1800
      %v1802 = vshll.u32 %v1193, 16
      %v1804 = vrot.slane %v1802, 1
      %v1805 = vsel %vm1645, %v1801, %v1804
      %s1806 = scalar_lea.vmem %s3, 40
      %v1807 = vld [vmem:[%s1806] sm:$0xf]
      %v1808 = vld [vmem:[%s1806 + $0x4] sm:$0xf]
      %v1809 = vld [vmem:[%s1806 + $0x8] sm:$0xf]
      %v1810 = vld [vmem:[%s1806 + $0xc] sm:$0xf]
      %v1811 = vld [vmem:[%s1806 + $0x10] sm:$0xf]
      %v1812 = vld [vmem:[%s1806 + $0x14] sm:$0xf]
      %v1813 = vld [vmem:[%s1806 + $0x18] sm:$0xf]
      %v1814 = vld [vmem:[%s1806 + $0x1c] sm:$0xf]
      %v1815 = vld [vmem:[%s1806 + $0x20] sm:$0xf]
      %v1816 = vld [vmem:[%s1806 + $0x24] sm:$0xf]
      %v1827 = vunpack.c.l.b16 %v1807
      %v1828 = vunpack.c.l.b16 %v1808
      %v1829 = vunpack.c.l.b16 %v1809
      %v1830 = vunpack.c.l.b16 %v1810
      %v1831 = vunpack.c.l.b16 %v1811
      %v1832 = vunpack.c.l.b16 %v1812
      %v1833 = vunpack.c.l.b16 %v1813
      %v1834 = vunpack.c.l.b16 %v1814
      %v1835 = vunpack.c.l.b16 %v1815
      %v1836 = vunpack.c.l.b16 %v1816
      %v1837 = vpack.c.b16 %v1828, %v1827
      %v1838 = vpack.c.b16 %v1830, %v1829
      %v1839 = vpack.c.b16 %v1832, %v1831
      %v1840 = vpack.c.b16 %v1834, %v1833
      %v1841 = vpack.c.b16 %v1836, %v1835
      %vm1847 = vcmask 654336
      %v1849 = vsel %vm1847, %v1655, 0
      %v1852 = vsel %vm1847, %v1665, 0
      %v1855 = vsel %vm1847, %v1675, 0
      %v1858 = vsel %vm1847, %v1685, 0
      %v1861 = vsel %vm1847, %v1695, 0
      %v1864 = vsel %vm1847, %v1705, 0
      %v1867 = vsel %vm1847, %v1715, 0
      %v1870 = vsel %vm1847, %v1725, 0
      %v1873 = vsel %vm1847, %v1735, 0
      %v1876 = vsel %vm1847, %v1745, 0
      %v1879 = vsel %vm1847, %v1755, 0
      %v1882 = vsel %vm1847, %v1765, 0
      %v1885 = vsel %vm1847, %v1775, 0
      %v1888 = vsel %vm1847, %v1785, 0
      %v1891 = vsel %vm1847, %v1795, 0
      %v1894 = vsel %vm1847, %v1805, 0
      %1896 = vmatprep.subr.bf16.mxu0 0
      %1897 = vmatpush1.bf16.msra.mxu0 %v1837
      %1898 = vmatprep.subr.bf16.mxu0 0
      %1899 = vmatpush1.bf16.msra.mxu0 %v1838
      %1900 = vmatprep.subr.bf16.mxu0 0
      %1901 = vmatpush1.bf16.msra.mxu0 %v1839
      %1902 = vmatprep.subr.bf16.mxu0 0
      %1903 = vmatpush1.bf16.msra.mxu0 %v1840
      %1904 = vmatprep.subr.bf16.mxu0 0
      %1905 = vmatpush1.bf16.msra.mxu0 %v1841
      %1906 = vmatprep.subr.bf16.mxu0 0
      %1907 = vmatpush1.bf16.msra.mxu0 0
      %1908 = vmatprep.subr.bf16.mxu0 0
      %1909 = vmatpush1.bf16.msra.mxu0 0
      %1910 = vmatprep.subr.bf16.mxu0 0
      %1911 = vmatpush1.bf16.msra.mxu0 0
      %1912 = vmatprep.subr.bf16.mxu0 0
      %1913 = vmatpush1.bf16.msra.mxu0 0
      %1914 = vmatprep.subr.bf16.mxu0 0
      %1915 = vmatpush1.bf16.msra.mxu0 0
      %1916 = vmatprep.subr.bf16.mxu0 0
      %1917 = vmatpush1.bf16.msra.mxu0 0
      %1918 = vmatprep.subr.bf16.mxu0 0
      %1919 = vmatpush1.bf16.msra.mxu0 0
      %1920 = vmatprep.subr.bf16.mxu0 0
      %1921 = vmatpush1.bf16.msra.mxu0 0
      %1922 = vmatprep.subr.bf16.mxu0 0
      %1923 = vmatpush1.bf16.msra.mxu0 0
      %1924 = vmatprep.subr.bf16.mxu0 0
      %1925 = vmatpush1.bf16.msra.mxu0 0
      %1926 = vmatprep.subr.bf16.mxu0 0
      %1927 = vmatpush1.bf16.msra.mxu0 0
      %1928 = vmatprep.mubr.bf16.mxu0 0
      %1929 = vmatmul.mubr.bf16.gmra.mrb[0].mxu0 %v1849
      %v1930 = vpop.f32.mrb[0].mxu0
      %v1931 = vadd.f32 0.0, %v1930
      %v1932 = vpop.f32.mrb[0].mxu0
      %v1933 = vpop.f32.mrb[0].mxu0
      %v1934 = vadd.f32 0.0, %v1933
      %v1935 = vpop.f32.mrb[0].mxu0
      %1936 = vmatprep.mubr.bf16.mxu0 0
      %1937 = vmatmul.mubr.bf16.gmra.mrb[0].mxu0 %v1852
      %v1938 = vpop.f32.mrb[0].mxu0
      %v1939 = vadd.f32 0.0, %v1938
      %v1940 = vpop.f32.mrb[0].mxu0
      %v1941 = vpop.f32.mrb[0].mxu0
      %v1942 = vadd.f32 0.0, %v1941
      %v1943 = vpop.f32.mrb[0].mxu0
      %1944 = vmatprep.mubr.bf16.mxu0 0
      %1945 = vmatmul.mubr.bf16.gmra.mrb[0].mxu0 %v1855
      %v1946 = vpop.f32.mrb[0].mxu0
      %v1947 = vadd.f32 0.0, %v1946
      %v1948 = vpop.f32.mrb[0].mxu0
      %v1949 = vpop.f32.mrb[0].mxu0
      %v1950 = vadd.f32 0.0, %v1949
      %v1951 = vpop.f32.mrb[0].mxu0
      %1952 = vmatprep.mubr.bf16.mxu0 0
      %1953 = vmatmul.mubr.bf16.gmra.mrb[0].mxu0 %v1858
      %v1954 = vpop.f32.mrb[0].mxu0
      %v1955 = vadd.f32 0.0, %v1954
      %v1956 = vpop.f32.mrb[0].mxu0
      %v1957 = vpop.f32.mrb[0].mxu0
      %v1958 = vadd.f32 0.0, %v1957
      %v1959 = vpop.f32.mrb[0].mxu0
      %1960 = vmatprep.mubr.bf16.mxu0 0
      %1961 = vmatmul.mubr.bf16.gmra.mrb[0].mxu0 %v1861
      %v1962 = vpop.f32.mrb[0].mxu0
      %v1963 = vadd.f32 0.0, %v1962
      %v1964 = vpop.f32.mrb[0].mxu0
      %v1965 = vpop.f32.mrb[0].mxu0
      %v1966 = vadd.f32 0.0, %v1965
      %v1967 = vpop.f32.mrb[0].mxu0
      %1968 = vmatprep.mubr.bf16.mxu0 0
      %1969 = vmatmul.mubr.bf16.gmra.mrb[0].mxu0 %v1864
      %v1970 = vpop.f32.mrb[0].mxu0
      %v1971 = vadd.f32 0.0, %v1970
      %v1972 = vpop.f32.mrb[0].mxu0
      %v1973 = vpop.f32.mrb[0].mxu0
      %v1974 = vadd.f32 0.0, %v1973
      %v1975 = vpop.f32.mrb[0].mxu0
      %1976 = vmatprep.mubr.bf16.mxu0 0
      %1977 = vmatmul.mubr.bf16.gmra.mrb[0].mxu0 %v1867
      %v1978 = vpop.f32.mrb[0].mxu0
      %v1979 = vadd.f32 0.0, %v1978
      %v1980 = vpop.f32.mrb[0].mxu0
      %v1981 = vpop.f32.mrb[0].mxu0
      %v1982 = vadd.f32 0.0, %v1981
      %v1983 = vpop.f32.mrb[0].mxu0
      %1984 = vmatprep.mubr.bf16.mxu0 0
      %1985 = vmatmul.mubr.bf16.gmra.mrb[0].mxu0 %v1870
      %v1986 = vpop.f32.mrb[0].mxu0
      %v1987 = vadd.f32 0.0, %v1986
      %v1988 = vpop.f32.mrb[0].mxu0
      %v1989 = vpop.f32.mrb[0].mxu0
      %v1990 = vadd.f32 0.0, %v1989
      %v1991 = vpop.f32.mrb[0].mxu0
      %1992 = vmatprep.mubr.bf16.mxu0 0
      %1993 = vmatmul.mubr.bf16.gmra.mrb[0].mxu0 %v1873
      %v1994 = vpop.f32.mrb[0].mxu0
      %v1995 = vadd.f32 0.0, %v1994
      %v1996 = vpop.f32.mrb[0].mxu0
      %v1997 = vpop.f32.mrb[0].mxu0
      %v1998 = vadd.f32 0.0, %v1997
      %v1999 = vpop.f32.mrb[0].mxu0
      %2000 = vmatprep.mubr.bf16.mxu0 0
      %2001 = vmatmul.mubr.bf16.gmra.mrb[0].mxu0 %v1876
      %v2002 = vpop.f32.mrb[0].mxu0
      %v2003 = vadd.f32 0.0, %v2002
      %v2004 = vpop.f32.mrb[0].mxu0
      %v2005 = vpop.f32.mrb[0].mxu0
      %v2006 = vadd.f32 0.0, %v2005
      %v2007 = vpop.f32.mrb[0].mxu0
      %2008 = vmatprep.mubr.bf16.mxu0 0
      %2009 = vmatmul.mubr.bf16.gmra.mrb[0].mxu0 %v1879
      %v2010 = vpop.f32.mrb[0].mxu0
      %v2011 = vadd.f32 0.0, %v2010
      %v2012 = vpop.f32.mrb[0].mxu0
      %v2013 = vpop.f32.mrb[0].mxu0
      %v2014 = vadd.f32 0.0, %v2013
      %v2015 = vpop.f32.mrb[0].mxu0
      %2016 = vmatprep.mubr.bf16.mxu0 0
      %2017 = vmatmul.mubr.bf16.gmra.mrb[0].mxu0 %v1882
      %v2018 = vpop.f32.mrb[0].mxu0
      %v2019 = vadd.f32 0.0, %v2018
      %v2020 = vpop.f32.mrb[0].mxu0
      %v2021 = vpop.f32.mrb[0].mxu0
      %v2022 = vadd.f32 0.0, %v2021
      %v2023 = vpop.f32.mrb[0].mxu0
      %2024 = vmatprep.mubr.bf16.mxu0 0
      %2025 = vmatmul.mubr.bf16.gmra.mrb[0].mxu0 %v1885
      %v2026 = vpop.f32.mrb[0].mxu0
      %v2027 = vadd.f32 0.0, %v2026
      %v2028 = vpop.f32.mrb[0].mxu0
      %v2029 = vpop.f32.mrb[0].mxu0
      %v2030 = vadd.f32 0.0, %v2029
      %v2031 = vpop.f32.mrb[0].mxu0
      %2032 = vmatprep.mubr.bf16.mxu0 0
      %2033 = vmatmul.mubr.bf16.gmra.mrb[0].mxu0 %v1888
      %v2034 = vpop.f32.mrb[0].mxu0
      %v2035 = vadd.f32 0.0, %v2034
      %v2036 = vpop.f32.mrb[0].mxu0
      %v2037 = vpop.f32.mrb[0].mxu0
      %v2038 = vadd.f32 0.0, %v2037
      %v2039 = vpop.f32.mrb[0].mxu0
      %2040 = vmatprep.mubr.bf16.mxu0 0
      %2041 = vmatmul.mubr.bf16.gmra.mrb[0].mxu0 %v1891
      %v2042 = vpop.f32.mrb[0].mxu0
      %v2043 = vadd.f32 0.0, %v2042
      %v2044 = vpop.f32.mrb[0].mxu0
      %v2045 = vpop.f32.mrb[0].mxu0
      %v2046 = vadd.f32 0.0, %v2045
      %v2047 = vpop.f32.mrb[0].mxu0
      %2048 = vmatprep.mubr.bf16.mxu0 0
      %2049 = vmatmul.mubr.bf16.gmra.mrb[0].mxu0 %v1894
      %v2050 = vpop.f32.mrb[0].mxu0
      %v2051 = vadd.f32 0.0, %v2050
      %v2052 = vpop.f32.mrb[0].mxu0
      %v2053 = vpop.f32.mrb[0].mxu0
      %v2054 = vadd.f32 0.0, %v2053
      %v2055 = vpop.f32.mrb[0].mxu0
      %2056 = vdwg.mxu0
      %v2067 = vunpack.c.l.b16 %v1275
      %v2068 = vunpack.c.l.b16 %v1276
      %v2069 = vunpack.c.l.b16 %v1277
      %v2070 = vunpack.c.l.b16 %v1278
      %v2071 = vunpack.c.l.b16 %v1279
      %v2072 = vunpack.c.l.b16 %v1280
      %v2073 = vunpack.c.l.b16 %v1281
      %v2074 = vunpack.c.l.b16 %v1282
      %v2075 = vunpack.c.l.b16 %v1283
      %v2076 = vunpack.c.l.b16 %v1284
      %v2077 = vpack.c.b16 %v2068, %v2067
      %v2078 = vpack.c.b16 %v2070, %v2069
      %v2079 = vpack.c.b16 %v2072, %v2071
      %v2080 = vpack.c.b16 %v2074, %v2073
      %v2081 = vpack.c.b16 %v2076, %v2075
      %v2088 = vsel %vm1847, %v1229, 0
      %v2091 = vsel %vm1847, %v1232, 0
      %v2094 = vsel %vm1847, %v1235, 0
      %v2097 = vsel %vm1847, %v1238, 0
      %v2100 = vsel %vm1847, %v1241, 0
      %v2103 = vsel %vm1847, %v1244, 0
      %v2106 = vsel %vm1847, %v1247, 0
      %v2109 = vsel %vm1847, %v1250, 0
      %v2112 = vsel %vm1847, %v1253, 0
      %v2115 = vsel %vm1847, %v1256, 0
      %v2118 = vsel %vm1847, %v1259, 0
      %v2121 = vsel %vm1847, %v1262, 0
      %v2124 = vsel %vm1847, %v1265, 0
      %v2127 = vsel %vm1847, %v1268, 0
      %v2130 = vsel %vm1847, %v1271, 0
      %v2133 = vsel %vm1847, %v1274, 0
      %2135 = vmatprep.subr.bf16.mxu0 0
      %2136 = vmatpush1.bf16.msra.mxu0 %v2077
      %2137 = vmatprep.subr.bf16.mxu0 0
      %2138 = vmatpush1.bf16.msra.mxu0 %v2078
      %2139 = vmatprep.subr.bf16.mxu0 0
      %2140 = vmatpush1.bf16.msra.mxu0 %v2079
      %2141 = vmatprep.subr.bf16.mxu0 0
      %2142 = vmatpush1.bf16.msra.mxu0 %v2080
      %2143 = vmatprep.subr.bf16.mxu0 0
      %2144 = vmatpush1.bf16.msra.mxu0 %v2081
      %2145 = vmatprep.subr.bf16.mxu0 0
      %2146 = vmatpush1.bf16.msra.mxu0 0
      %2147 = vmatprep.subr.bf16.mxu0 0
      %2148 = vmatpush1.bf16.msra.mxu0 0
      %2149 = vmatprep.subr.bf16.mxu0 0
      %2150 = vmatpush1.bf16.msra.mxu0 0
      %2151 = vmatprep.subr.bf16.mxu0 0
      %2152 = vmatpush1.bf16.msra.mxu0 0
      %2153 = vmatprep.subr.bf16.mxu0 0
      %2154 = vmatpush1.bf16.msra.mxu0 0
      %2155 = vmatprep.subr.bf16.mxu0 0
      %2156 = vmatpush1.bf16.msra.mxu0 0
      %2157 = vmatprep.subr.bf16.mxu0 0
      %2158 = vmatpush1.bf16.msra.mxu0 0
      %2159 = vmatprep.subr.bf16.mxu0 0
      %2160 = vmatpush1.bf16.msra.mxu0 0
      %2161 = vmatprep.subr.bf16.mxu0 0
      %2162 = vmatpush1.bf16.msra.mxu0 0
      %2163 = vmatprep.subr.bf16.mxu0 0
      %2164 = vmatpush1.bf16.msra.mxu0 0
      %2165 = vmatprep.subr.bf16.mxu0 0
      %2166 = vmatpush1.bf16.msra.mxu0 0
      %2167 = vmatprep.mubr.bf16.mxu0 0
      %2168 = vmatmul.mubr.bf16.gmra.mrb[0].mxu0 %v2088
      %v2169 = vpop.f32.mrb[0].mxu0
      %v2170 = vadd.f32 %v1931, %v2169
      %v2171 = vpop.f32.mrb[0].mxu0
      %v2172 = vpop.f32.mrb[0].mxu0
      %v2173 = vadd.f32 %v1934, %v2172
      %v2174 = vpop.f32.mrb[0].mxu0
      %2175 = vmatprep.mubr.bf16.mxu0 0
      %2176 = vmatmul.mubr.bf16.gmra.mrb[0].mxu0 %v2091
      %v2177 = vpop.f32.mrb[0].mxu0
      %v2178 = vadd.f32 %v1939, %v2177
      %v2179 = vpop.f32.mrb[0].mxu0
      %v2180 = vpop.f32.mrb[0].mxu0
      %v2181 = vadd.f32 %v1942, %v2180
      %v2182 = vpop.f32.mrb[0].mxu0
      %2183 = vmatprep.mubr.bf16.mxu0 0
      %2184 = vmatmul.mubr.bf16.gmra.mrb[0].mxu0 %v2094
      %v2185 = vpop.f32.mrb[0].mxu0
      %v2186 = vadd.f32 %v1947, %v2185
      %v2187 = vpop.f32.mrb[0].mxu0
      %v2188 = vpop.f32.mrb[0].mxu0
      %v2189 = vadd.f32 %v1950, %v2188
      %v2190 = vpop.f32.mrb[0].mxu0
      %2191 = vmatprep.mubr.bf16.mxu0 0
      %2192 = vmatmul.mubr.bf16.gmra.mrb[0].mxu0 %v2097
      %v2193 = vpop.f32.mrb[0].mxu0
      %v2194 = vadd.f32 %v1955, %v2193
      %v2195 = vpop.f32.mrb[0].mxu0
      %v2196 = vpop.f32.mrb[0].mxu0
      %v2197 = vadd.f32 %v1958, %v2196
      %v2198 = vpop.f32.mrb[0].mxu0
      %2199 = vmatprep.mubr.bf16.mxu0 0
      %2200 = vmatmul.mubr.bf16.gmra.mrb[0].mxu0 %v2100
      %v2201 = vpop.f32.mrb[0].mxu0
      %v2202 = vadd.f32 %v1963, %v2201
      %v2203 = vpop.f32.mrb[0].mxu0
      %v2204 = vpop.f32.mrb[0].mxu0
      %v2205 = vadd.f32 %v1966, %v2204
      %v2206 = vpop.f32.mrb[0].mxu0
      %2207 = vmatprep.mubr.bf16.mxu0 0
      %2208 = vmatmul.mubr.bf16.gmra.mrb[0].mxu0 %v2103
      %v2209 = vpop.f32.mrb[0].mxu0
      %v2210 = vadd.f32 %v1971, %v2209
      %v2211 = vpop.f32.mrb[0].mxu0
      %v2212 = vpop.f32.mrb[0].mxu0
      %v2213 = vadd.f32 %v1974, %v2212
      %v2214 = vpop.f32.mrb[0].mxu0
      %2215 = vmatprep.mubr.bf16.mxu0 0
      %2216 = vmatmul.mubr.bf16.gmra.mrb[0].mxu0 %v2106
      %v2217 = vpop.f32.mrb[0].mxu0
      %v2218 = vadd.f32 %v1979, %v2217
      %v2219 = vpop.f32.mrb[0].mxu0
      %v2220 = vpop.f32.mrb[0].mxu0
      %v2221 = vadd.f32 %v1982, %v2220
      %v2222 = vpop.f32.mrb[0].mxu0
      %2223 = vmatprep.mubr.bf16.mxu0 0
      %2224 = vmatmul.mubr.bf16.gmra.mrb[0].mxu0 %v2109
      %v2225 = vpop.f32.mrb[0].mxu0
      %v2226 = vadd.f32 %v1987, %v2225
      %v2227 = vpop.f32.mrb[0].mxu0
      %v2228 = vpop.f32.mrb[0].mxu0
      %v2229 = vadd.f32 %v1990, %v2228
      %v2230 = vpop.f32.mrb[0].mxu0
      %2231 = vmatprep.mubr.bf16.mxu0 0
      %2232 = vmatmul.mubr.bf16.gmra.mrb[0].mxu0 %v2112
      %v2233 = vpop.f32.mrb[0].mxu0
      %v2234 = vadd.f32 %v1995, %v2233
      %v2235 = vpop.f32.mrb[0].mxu0
      %v2236 = vpop.f32.mrb[0].mxu0
      %v2237 = vadd.f32 %v1998, %v2236
      %v2238 = vpop.f32.mrb[0].mxu0
      %2239 = vmatprep.mubr.bf16.mxu0 0
      %2240 = vmatmul.mubr.bf16.gmra.mrb[0].mxu0 %v2115
      %v2241 = vpop.f32.mrb[0].mxu0
      %v2242 = vadd.f32 %v2003, %v2241
      %v2243 = vpop.f32.mrb[0].mxu0
      %v2244 = vpop.f32.mrb[0].mxu0
      %v2245 = vadd.f32 %v2006, %v2244
      %v2246 = vpop.f32.mrb[0].mxu0
      %2247 = vmatprep.mubr.bf16.mxu0 0
      %2248 = vmatmul.mubr.bf16.gmra.mrb[0].mxu0 %v2118
      %v2249 = vpop.f32.mrb[0].mxu0
      %v2250 = vadd.f32 %v2011, %v2249
      %v2251 = vpop.f32.mrb[0].mxu0
      %v2252 = vpop.f32.mrb[0].mxu0
      %v2253 = vadd.f32 %v2014, %v2252
      %v2254 = vpop.f32.mrb[0].mxu0
      %2255 = vmatprep.mubr.bf16.mxu0 0
      %2256 = vmatmul.mubr.bf16.gmra.mrb[0].mxu0 %v2121
      %v2257 = vpop.f32.mrb[0].mxu0
      %v2258 = vadd.f32 %v2019, %v2257
      %v2259 = vpop.f32.mrb[0].mxu0
      %v2260 = vpop.f32.mrb[0].mxu0
      %v2261 = vadd.f32 %v2022, %v2260
      %v2262 = vpop.f32.mrb[0].mxu0
      %2263 = vmatprep.mubr.bf16.mxu0 0
      %2264 = vmatmul.mubr.bf16.gmra.mrb[0].mxu0 %v2124
      %v2265 = vpop.f32.mrb[0].mxu0
      %v2266 = vadd.f32 %v2027, %v2265
      %v2267 = vpop.f32.mrb[0].mxu0
      %v2268 = vpop.f32.mrb[0].mxu0
      %v2269 = vadd.f32 %v2030, %v2268
      %v2270 = vpop.f32.mrb[0].mxu0
      %2271 = vmatprep.mubr.bf16.mxu0 0
      %2272 = vmatmul.mubr.bf16.gmra.mrb[0].mxu0 %v2127
      %v2273 = vpop.f32.mrb[0].mxu0
      %v2274 = vadd.f32 %v2035, %v2273
      %v2275 = vpop.f32.mrb[0].mxu0
      %v2276 = vpop.f32.mrb[0].mxu0
      %v2277 = vadd.f32 %v2038, %v2276
      %v2278 = vpop.f32.mrb[0].mxu0
      %2279 = vmatprep.mubr.bf16.mxu0 0
      %2280 = vmatmul.mubr.bf16.gmra.mrb[0].mxu0 %v2130
      %v2281 = vpop.f32.mrb[0].mxu0
      %v2282 = vadd.f32 %v2043, %v2281
      %v2283 = vpop.f32.mrb[0].mxu0
      %v2284 = vpop.f32.mrb[0].mxu0
      %v2285 = vadd.f32 %v2046, %v2284
      %v2286 = vpop.f32.mrb[0].mxu0
      %2287 = vmatprep.mubr.bf16.mxu0 0
      %2288 = vmatmul.mubr.bf16.gmra.mrb[0].mxu0 %v2133
      %v2289 = vpop.f32.mrb[0].mxu0
      %v2290 = vadd.f32 %v2051, %v2289
      %v2291 = vpop.f32.mrb[0].mxu0
      %v2292 = vpop.f32.mrb[0].mxu0
      %v2293 = vadd.f32 %v2054, %v2292
      %v2294 = vpop.f32.mrb[0].mxu0
      %2295 = vdwg.mxu0
      %s2296 = scalar_lea.vmem %s2, 24
      %v2297 = vld [vmem:[%s2296] sm:$0xf]
      %v2298 = vld [vmem:[%s2296 + $0x4] sm:$0xf]
      %v2299 = vld [vmem:[%s2296 + $0x8] sm:$0xf]
      %v2300 = vld [vmem:[%s2296 + $0xc] sm:$0xf]
      %v2301 = vld [vmem:[%s2296 + $0x10] sm:$0xf]
      %v2302 = vld [vmem:[%s2296 + $0x14] sm:$0xf]
      %v2309 = vunpack.c.l.b16 %v2297
      %v2310 = vunpack.c.l.b16 %v2298
      %v2311 = vunpack.c.l.b16 %v2299
      %v2312 = vunpack.c.l.b16 %v2300
      %v2313 = vunpack.c.l.b16 %v2301
      %v2314 = vunpack.c.l.b16 %v2302
      %v2315 = vpack.c.b16 %v2310, %v2309
      %v2316 = vpack.c.b16 %v2312, %v2311
      %v2317 = vpack.c.b16 %v2314, %v2313
      %v2321 = vsel %vm1064, %v1655, 0
      %v2323 = vsel %vm1064, %v1665, 0
      %v2325 = vsel %vm1064, %v1675, 0
      %v2327 = vsel %vm1064, %v1685, 0
      %v2329 = vsel %vm1064, %v1695, 0
      %v2331 = vsel %vm1064, %v1705, 0
      %v2333 = vsel %vm1064, %v1715, 0
      %v2335 = vsel %vm1064, %v1725, 0
      %v2337 = vsel %vm1064, %v1735, 0
      %v2339 = vsel %vm1064, %v1745, 0
      %v2341 = vsel %vm1064, %v1755, 0
      %v2343 = vsel %vm1064, %v1765, 0
      %v2345 = vsel %vm1064, %v1775, 0
      %v2347 = vsel %vm1064, %v1785, 0
      %v2349 = vsel %vm1064, %v1795, 0
      %v2351 = vsel %vm1064, %v1805, 0
      %2353 = vmatprep.subr.bf16.mxu0 0
      %2354 = vmatpush1.bf16.msra.mxu0 %v2315
      %2355 = vmatprep.subr.bf16.mxu0 0
      %2356 = vmatpush1.bf16.msra.mxu0 %v2316
      %2357 = vmatprep.subr.bf16.mxu0 0
      %2358 = vmatpush1.bf16.msra.mxu0 %v2317
      %2359 = vmatprep.subr.bf16.mxu0 0
      %2360 = vmatpush1.bf16.msra.mxu0 0
      %2361 = vmatprep.subr.bf16.mxu0 0
      %2362 = vmatpush1.bf16.msra.mxu0 0
      %2363 = vmatprep.subr.bf16.mxu0 0
      %2364 = vmatpush1.bf16.msra.mxu0 0
      %2365 = vmatprep.subr.bf16.mxu0 0
      %2366 = vmatpush1.bf16.msra.mxu0 0
      %2367 = vmatprep.subr.bf16.mxu0 0
      %2368 = vmatpush1.bf16.msra.mxu0 0
      %2369 = vmatprep.subr.bf16.mxu0 0
      %2370 = vmatpush1.bf16.msra.mxu0 0
      %2371 = vmatprep.subr.bf16.mxu0 0
      %2372 = vmatpush1.bf16.msra.mxu0 0
      %2373 = vmatprep.subr.bf16.mxu0 0
      %2374 = vmatpush1.bf16.msra.mxu0 0
      %2375 = vmatprep.subr.bf16.mxu0 0
      %2376 = vmatpush1.bf16.msra.mxu0 0
      %2377 = vmatprep.subr.bf16.mxu0 0
      %2378 = vmatpush1.bf16.msra.mxu0 0
      %2379 = vmatprep.subr.bf16.mxu0 0
      %2380 = vmatpush1.bf16.msra.mxu0 0
      %2381 = vmatprep.subr.bf16.mxu0 0
      %2382 = vmatpush1.bf16.msra.mxu0 0
      %2383 = vmatprep.subr.bf16.mxu0 0
      %2384 = vmatpush1.bf16.msra.mxu0 0
      %2385 = vmatprep.mubr.bf16.mxu0 0
      %2386 = vmatmul.mubr.bf16.gmra.mrb[0].mxu0 %v2321
      %v2387 = vpop.f32.mrb[0].mxu0
      %v2388 = vadd.f32 0.0, %v2387
      %v2389 = vpop.f32.mrb[0].mxu0
      %v2390 = vpop.f32.mrb[0].mxu0
      %v2391 = vadd.f32 0.0, %v2390
      %v2392 = vpop.f32.mrb[0].mxu0
      %2393 = vmatprep.mubr.bf16.mxu0 0
      %2394 = vmatmul.mubr.bf16.gmra.mrb[0].mxu0 %v2323
      %v2395 = vpop.f32.mrb[0].mxu0
      %v2396 = vadd.f32 0.0, %v2395
      %v2397 = vpop.f32.mrb[0].mxu0
      %v2398 = vpop.f32.mrb[0].mxu0
      %v2399 = vadd.f32 0.0, %v2398
      %v2400 = vpop.f32.mrb[0].mxu0
      %2401 = vmatprep.mubr.bf16.mxu0 0
      %2402 = vmatmul.mubr.bf16.gmra.mrb[0].mxu0 %v2325
      %v2403 = vpop.f32.mrb[0].mxu0
      %v2404 = vadd.f32 0.0, %v2403
      %v2405 = vpop.f32.mrb[0].mxu0
      %v2406 = vpop.f32.mrb[0].mxu0
      %v2407 = vadd.f32 0.0, %v2406
      %v2408 = vpop.f32.mrb[0].mxu0
      %2409 = vmatprep.mubr.bf16.mxu0 0
      %2410 = vmatmul.mubr.bf16.gmra.mrb[0].mxu0 %v2327
      %v2411 = vpop.f32.mrb[0].mxu0
      %v2412 = vadd.f32 0.0, %v2411
      %v2413 = vpop.f32.mrb[0].mxu0
      %v2414 = vpop.f32.mrb[0].mxu0
      %v2415 = vadd.f32 0.0, %v2414
      %v2416 = vpop.f32.mrb[0].mxu0
      %2417 = vmatprep.mubr.bf16.mxu0 0
      %2418 = vmatmul.mubr.bf16.gmra.mrb[0].mxu0 %v2329
      %v2419 = vpop.f32.mrb[0].mxu0
      %v2420 = vadd.f32 0.0, %v2419
      %v2421 = vpop.f32.mrb[0].mxu0
      %v2422 = vpop.f32.mrb[0].mxu0
      %v2423 = vadd.f32 0.0, %v2422
      %v2424 = vpop.f32.mrb[0].mxu0
      %2425 = vmatprep.mubr.bf16.mxu0 0
      %2426 = vmatmul.mubr.bf16.gmra.mrb[0].mxu0 %v2331
      %v2427 = vpop.f32.mrb[0].mxu0
      %v2428 = vadd.f32 0.0, %v2427
      %v2429 = vpop.f32.mrb[0].mxu0
      %v2430 = vpop.f32.mrb[0].mxu0
      %v2431 = vadd.f32 0.0, %v2430
      %v2432 = vpop.f32.mrb[0].mxu0
      %2433 = vmatprep.mubr.bf16.mxu0 0
      %2434 = vmatmul.mubr.bf16.gmra.mrb[0].mxu0 %v2333
      %v2435 = vpop.f32.mrb[0].mxu0
      %v2436 = vadd.f32 0.0, %v2435
      %v2437 = vpop.f32.mrb[0].mxu0
      %v2438 = vpop.f32.mrb[0].mxu0
      %v2439 = vadd.f32 0.0, %v2438
      %v2440 = vpop.f32.mrb[0].mxu0
      %2441 = vmatprep.mubr.bf16.mxu0 0
      %2442 = vmatmul.mubr.bf16.gmra.mrb[0].mxu0 %v2335
      %v2443 = vpop.f32.mrb[0].mxu0
      %v2444 = vadd.f32 0.0, %v2443
      %v2445 = vpop.f32.mrb[0].mxu0
      %v2446 = vpop.f32.mrb[0].mxu0
      %v2447 = vadd.f32 0.0, %v2446
      %v2448 = vpop.f32.mrb[0].mxu0
      %2449 = vmatprep.mubr.bf16.mxu0 0
      %2450 = vmatmul.mubr.bf16.gmra.mrb[0].mxu0 %v2337
      %v2451 = vpop.f32.mrb[0].mxu0
      %v2452 = vadd.f32 0.0, %v2451
      %v2453 = vpop.f32.mrb[0].mxu0
      %v2454 = vpop.f32.mrb[0].mxu0
      %v2455 = vadd.f32 0.0, %v2454
      %v2456 = vpop.f32.mrb[0].mxu0
      %2457 = vmatprep.mubr.bf16.mxu0 0
      %2458 = vmatmul.mubr.bf16.gmra.mrb[0].mxu0 %v2339
      %v2459 = vpop.f32.mrb[0].mxu0
      %v2460 = vadd.f32 0.0, %v2459
      %v2461 = vpop.f32.mrb[0].mxu0
      %v2462 = vpop.f32.mrb[0].mxu0
      %v2463 = vadd.f32 0.0, %v2462
      %v2464 = vpop.f32.mrb[0].mxu0
      %2465 = vmatprep.mubr.bf16.mxu0 0
      %2466 = vmatmul.mubr.bf16.gmra.mrb[0].mxu0 %v2341
      %v2467 = vpop.f32.mrb[0].mxu0
      %v2468 = vadd.f32 0.0, %v2467
      %v2469 = vpop.f32.mrb[0].mxu0
      %v2470 = vpop.f32.mrb[0].mxu0
      %v2471 = vadd.f32 0.0, %v2470
      %v2472 = vpop.f32.mrb[0].mxu0
      %2473 = vmatprep.mubr.bf16.mxu0 0
      %2474 = vmatmul.mubr.bf16.gmra.mrb[0].mxu0 %v2343
      %v2475 = vpop.f32.mrb[0].mxu0
      %v2476 = vadd.f32 0.0, %v2475
      %v2477 = vpop.f32.mrb[0].mxu0
      %v2478 = vpop.f32.mrb[0].mxu0
      %v2479 = vadd.f32 0.0, %v2478
      %v2480 = vpop.f32.mrb[0].mxu0
      %2481 = vmatprep.mubr.bf16.mxu0 0
      %2482 = vmatmul.mubr.bf16.gmra.mrb[0].mxu0 %v2345
      %v2483 = vpop.f32.mrb[0].mxu0
      %v2484 = vadd.f32 0.0, %v2483
      %v2485 = vpop.f32.mrb[0].mxu0
      %v2486 = vpop.f32.mrb[0].mxu0
      %v2487 = vadd.f32 0.0, %v2486
      %v2488 = vpop.f32.mrb[0].mxu0
      %2489 = vmatprep.mubr.bf16.mxu0 0
      %2490 = vmatmul.mubr.bf16.gmra.mrb[0].mxu0 %v2347
      %v2491 = vpop.f32.mrb[0].mxu0
      %v2492 = vadd.f32 0.0, %v2491
      %v2493 = vpop.f32.mrb[0].mxu0
      %v2494 = vpop.f32.mrb[0].mxu0
      %v2495 = vadd.f32 0.0, %v2494
      %v2496 = vpop.f32.mrb[0].mxu0
      %2497 = vmatprep.mubr.bf16.mxu0 0
      %2498 = vmatmul.mubr.bf16.gmra.mrb[0].mxu0 %v2349
      %v2499 = vpop.f32.mrb[0].mxu0
      %v2500 = vadd.f32 0.0, %v2499
      %v2501 = vpop.f32.mrb[0].mxu0
      %v2502 = vpop.f32.mrb[0].mxu0
      %v2503 = vadd.f32 0.0, %v2502
      %v2504 = vpop.f32.mrb[0].mxu0
      %2505 = vmatprep.mubr.bf16.mxu0 0
      %2506 = vmatmul.mubr.bf16.gmra.mrb[0].mxu0 %v2351
      %v2507 = vpop.f32.mrb[0].mxu0
      %v2508 = vadd.f32 0.0, %v2507
      %v2509 = vpop.f32.mrb[0].mxu0
      %v2510 = vpop.f32.mrb[0].mxu0
      %v2511 = vadd.f32 0.0, %v2510
      %v2512 = vpop.f32.mrb[0].mxu0
      %2513 = vdwg.mxu0
      %v2520 = vunpack.c.l.b16 %v1285
      %v2521 = vunpack.c.l.b16 %v1286
      %v2522 = vunpack.c.l.b16 %v1287
      %v2523 = vunpack.c.l.b16 %v1288
      %v2524 = vunpack.c.l.b16 %v1289
      %v2525 = vunpack.c.l.b16 %v1290
      %v2526 = vpack.c.b16 %v2521, %v2520
      %v2527 = vpack.c.b16 %v2523, %v2522
      %v2528 = vpack.c.b16 %v2525, %v2524
      %v2532 = vsel %vm1064, %v1229, 0
      %v2534 = vsel %vm1064, %v1232, 0
      %v2536 = vsel %vm1064, %v1235, 0
      %v2538 = vsel %vm1064, %v1238, 0
      %v2540 = vsel %vm1064, %v1241, 0
      %v2542 = vsel %vm1064, %v1244, 0
      %v2544 = vsel %vm1064, %v1247, 0
      %v2546 = vsel %vm1064, %v1250, 0
      %v2548 = vsel %vm1064, %v1253, 0
      %v2550 = vsel %vm1064, %v1256, 0
      %v2552 = vsel %vm1064, %v1259, 0
      %v2554 = vsel %vm1064, %v1262, 0
      %v2556 = vsel %vm1064, %v1265, 0
      %v2558 = vsel %vm1064, %v1268, 0
      %v2560 = vsel %vm1064, %v1271, 0
      %v2562 = vsel %vm1064, %v1274, 0
      %2564 = vmatprep.subr.bf16.mxu0 0
      %2565 = vmatpush1.bf16.msra.mxu0 %v2526
      %2566 = vmatprep.subr.bf16.mxu0 0
      %2567 = vmatpush1.bf16.msra.mxu0 %v2527
      %2568 = vmatprep.subr.bf16.mxu0 0
      %2569 = vmatpush1.bf16.msra.mxu0 %v2528
      %2570 = vmatprep.subr.bf16.mxu0 0
      %2571 = vmatpush1.bf16.msra.mxu0 0
      %2572 = vmatprep.subr.bf16.mxu0 0
      %2573 = vmatpush1.bf16.msra.mxu0 0
      %2574 = vmatprep.subr.bf16.mxu0 0
      %2575 = vmatpush1.bf16.msra.mxu0 0
      %2576 = vmatprep.subr.bf16.mxu0 0
      %2577 = vmatpush1.bf16.msra.mxu0 0
      %2578 = vmatprep.subr.bf16.mxu0 0
      %2579 = vmatpush1.bf16.msra.mxu0 0
      %2580 = vmatprep.subr.bf16.mxu0 0
      %2581 = vmatpush1.bf16.msra.mxu0 0
      %2582 = vmatprep.subr.bf16.mxu0 0
      %2583 = vmatpush1.bf16.msra.mxu0 0
      %2584 = vmatprep.subr.bf16.mxu0 0
      %2585 = vmatpush1.bf16.msra.mxu0 0
      %2586 = vmatprep.subr.bf16.mxu0 0
      %2587 = vmatpush1.bf16.msra.mxu0 0
      %2588 = vmatprep.subr.bf16.mxu0 0
      %2589 = vmatpush1.bf16.msra.mxu0 0
      %2590 = vmatprep.subr.bf16.mxu0 0
      %2591 = vmatpush1.bf16.msra.mxu0 0
      %2592 = vmatprep.subr.bf16.mxu0 0
      %2593 = vmatpush1.bf16.msra.mxu0 0
      %2594 = vmatprep.subr.bf16.mxu0 0
      %2595 = vmatpush1.bf16.msra.mxu0 0
      %2596 = vmatprep.mubr.bf16.mxu0 0
      %2597 = vmatmul.mubr.bf16.gmra.mrb[0].mxu0 %v2532
      %v2598 = vpop.f32.mrb[0].mxu0
      %v2599 = vadd.f32 %v2388, %v2598
      %v2600 = vpop.f32.mrb[0].mxu0
      %v2601 = vpop.f32.mrb[0].mxu0
      %v2602 = vadd.f32 %v2391, %v2601
      %v2603 = vpop.f32.mrb[0].mxu0
      %2604 = vmatprep.mubr.bf16.mxu0 0
      %2605 = vmatmul.mubr.bf16.gmra.mrb[0].mxu0 %v2534
      %v2606 = vpop.f32.mrb[0].mxu0
      %v2607 = vadd.f32 %v2396, %v2606
      %v2608 = vpop.f32.mrb[0].mxu0
      %v2609 = vpop.f32.mrb[0].mxu0
      %v2610 = vadd.f32 %v2399, %v2609
      %v2611 = vpop.f32.mrb[0].mxu0
      %2612 = vmatprep.mubr.bf16.mxu0 0
      %2613 = vmatmul.mubr.bf16.gmra.mrb[0].mxu0 %v2536
      %v2614 = vpop.f32.mrb[0].mxu0
      %v2615 = vadd.f32 %v2404, %v2614
      %v2616 = vpop.f32.mrb[0].mxu0
      %v2617 = vpop.f32.mrb[0].mxu0
      %v2618 = vadd.f32 %v2407, %v2617
      %v2619 = vpop.f32.mrb[0].mxu0
      %2620 = vmatprep.mubr.bf16.mxu0 0
      %2621 = vmatmul.mubr.bf16.gmra.mrb[0].mxu0 %v2538
      %v2622 = vpop.f32.mrb[0].mxu0
      %v2623 = vadd.f32 %v2412, %v2622
      %v2624 = vpop.f32.mrb[0].mxu0
      %v2625 = vpop.f32.mrb[0].mxu0
      %v2626 = vadd.f32 %v2415, %v2625
      %v2627 = vpop.f32.mrb[0].mxu0
      %2628 = vmatprep.mubr.bf16.mxu0 0
      %2629 = vmatmul.mubr.bf16.gmra.mrb[0].mxu0 %v2540
      %v2630 = vpop.f32.mrb[0].mxu0
      %v2631 = vadd.f32 %v2420, %v2630
      %v2632 = vpop.f32.mrb[0].mxu0
      %v2633 = vpop.f32.mrb[0].mxu0
      %v2634 = vadd.f32 %v2423, %v2633
      %v2635 = vpop.f32.mrb[0].mxu0
      %2636 = vmatprep.mubr.bf16.mxu0 0
      %2637 = vmatmul.mubr.bf16.gmra.mrb[0].mxu0 %v2542
      %v2638 = vpop.f32.mrb[0].mxu0
      %v2639 = vadd.f32 %v2428, %v2638
      %v2640 = vpop.f32.mrb[0].mxu0
      %v2641 = vpop.f32.mrb[0].mxu0
      %v2642 = vadd.f32 %v2431, %v2641
      %v2643 = vpop.f32.mrb[0].mxu0
      %2644 = vmatprep.mubr.bf16.mxu0 0
      %2645 = vmatmul.mubr.bf16.gmra.mrb[0].mxu0 %v2544
      %v2646 = vpop.f32.mrb[0].mxu0
      %v2647 = vadd.f32 %v2436, %v2646
      %v2648 = vpop.f32.mrb[0].mxu0
      %v2649 = vpop.f32.mrb[0].mxu0
      %v2650 = vadd.f32 %v2439, %v2649
      %v2651 = vpop.f32.mrb[0].mxu0
      %2652 = vmatprep.mubr.bf16.mxu0 0
      %2653 = vmatmul.mubr.bf16.gmra.mrb[0].mxu0 %v2546
      %v2654 = vpop.f32.mrb[0].mxu0
      %v2655 = vadd.f32 %v2444, %v2654
      %v2656 = vpop.f32.mrb[0].mxu0
      %v2657 = vpop.f32.mrb[0].mxu0
      %v2658 = vadd.f32 %v2447, %v2657
      %v2659 = vpop.f32.mrb[0].mxu0
      %2660 = vmatprep.mubr.bf16.mxu0 0
      %2661 = vmatmul.mubr.bf16.gmra.mrb[0].mxu0 %v2548
      %v2662 = vpop.f32.mrb[0].mxu0
      %v2663 = vadd.f32 %v2452, %v2662
      %v2664 = vpop.f32.mrb[0].mxu0
      %v2665 = vpop.f32.mrb[0].mxu0
      %v2666 = vadd.f32 %v2455, %v2665
      %v2667 = vpop.f32.mrb[0].mxu0
      %2668 = vmatprep.mubr.bf16.mxu0 0
      %2669 = vmatmul.mubr.bf16.gmra.mrb[0].mxu0 %v2550
      %v2670 = vpop.f32.mrb[0].mxu0
      %v2671 = vadd.f32 %v2460, %v2670
      %v2672 = vpop.f32.mrb[0].mxu0
      %v2673 = vpop.f32.mrb[0].mxu0
      %v2674 = vadd.f32 %v2463, %v2673
      %v2675 = vpop.f32.mrb[0].mxu0
      %2676 = vmatprep.mubr.bf16.mxu0 0
      %2677 = vmatmul.mubr.bf16.gmra.mrb[0].mxu0 %v2552
      %v2678 = vpop.f32.mrb[0].mxu0
      %v2679 = vadd.f32 %v2468, %v2678
      %v2680 = vpop.f32.mrb[0].mxu0
      %v2681 = vpop.f32.mrb[0].mxu0
      %v2682 = vadd.f32 %v2471, %v2681
      %v2683 = vpop.f32.mrb[0].mxu0
      %2684 = vmatprep.mubr.bf16.mxu0 0
      %2685 = vmatmul.mubr.bf16.gmra.mrb[0].mxu0 %v2554
      %v2686 = vpop.f32.mrb[0].mxu0
      %v2687 = vadd.f32 %v2476, %v2686
      %v2688 = vpop.f32.mrb[0].mxu0
      %v2689 = vpop.f32.mrb[0].mxu0
      %v2690 = vadd.f32 %v2479, %v2689
      %v2691 = vpop.f32.mrb[0].mxu0
      %2692 = vmatprep.mubr.bf16.mxu0 0
      %2693 = vmatmul.mubr.bf16.gmra.mrb[0].mxu0 %v2556
      %v2694 = vpop.f32.mrb[0].mxu0
      %v2695 = vadd.f32 %v2484, %v2694
      %v2696 = vpop.f32.mrb[0].mxu0
      %v2697 = vpop.f32.mrb[0].mxu0
      %v2698 = vadd.f32 %v2487, %v2697
      %v2699 = vpop.f32.mrb[0].mxu0
      %2700 = vmatprep.mubr.bf16.mxu0 0
      %2701 = vmatmul.mubr.bf16.gmra.mrb[0].mxu0 %v2558
      %v2702 = vpop.f32.mrb[0].mxu0
      %v2703 = vadd.f32 %v2492, %v2702
      %v2704 = vpop.f32.mrb[0].mxu0
      %v2705 = vpop.f32.mrb[0].mxu0
      %v2706 = vadd.f32 %v2495, %v2705
      %v2707 = vpop.f32.mrb[0].mxu0
      %2708 = vmatprep.mubr.bf16.mxu0 0
      %2709 = vmatmul.mubr.bf16.gmra.mrb[0].mxu0 %v2560
      %v2710 = vpop.f32.mrb[0].mxu0
      %v2711 = vadd.f32 %v2500, %v2710
      %v2712 = vpop.f32.mrb[0].mxu0
      %v2713 = vpop.f32.mrb[0].mxu0
      %v2714 = vadd.f32 %v2503, %v2713
      %v2715 = vpop.f32.mrb[0].mxu0
      %2716 = vmatprep.mubr.bf16.mxu0 0
      %2717 = vmatmul.mubr.bf16.gmra.mrb[0].mxu0 %v2562
      %v2718 = vpop.f32.mrb[0].mxu0
      %v2719 = vadd.f32 %v2508, %v2718
      %v2720 = vpop.f32.mrb[0].mxu0
      %v2721 = vpop.f32.mrb[0].mxu0
      %v2722 = vadd.f32 %v2511, %v2721
      %v2723 = vpop.f32.mrb[0].mxu0
      %2724 = vdwg.mxu0
      %v2725 = vld [vmem:[%s415 + $0x8] sm:$0x3]
      %v2726 = vld [vmem:[%s415 + $0x14] sm:$0x3]
      %v2727 = vld [vmem:[%s415 + $0x20] sm:$0x3]
      %v2728 = vld [vmem:[%s415 + $0x2c] sm:$0x3]
      %v2729 = vld [vmem:[%s415 + $0x38] sm:$0x3]
      %v2730 = vld [vmem:[%s415 + $0x44] sm:$0x3]
      %v2731 = vld [vmem:[%s415 + $0x50] sm:$0x3]
      %v2732 = vld [vmem:[%s415 + $0x5c] sm:$0x3]
      %v2733 = vld [vmem:[%s415 + $0x68] sm:$0x3]
      %v2734 = vld [vmem:[%s415 + $0x74] sm:$0x3]
      %v2735 = vld [vmem:[%s415 + $0x80] sm:$0x3]
      %v2736 = vld [vmem:[%s415 + $0x8c] sm:$0x3]
      %v2737 = vld [vmem:[%s415 + $0x98] sm:$0x3]
      %v2738 = vld [vmem:[%s415 + $0xa4] sm:$0x3]
      %v2739 = vld [vmem:[%s415 + $0xb0] sm:$0x3]
      %v2740 = vld [vmem:[%s415 + $0xbc] sm:$0x3]
      %v2741 = vld [vmem:[%s415 + $0xc8] sm:$0x3]
      %v2742 = vld [vmem:[%s415 + $0xd4] sm:$0x3]
      %v2743 = vld [vmem:[%s415 + $0xe0] sm:$0x3]
      %v2744 = vld [vmem:[%s415 + $0xec] sm:$0x3]
      %v2761 = vunpack.c.l.b16 %v2727
      %v2762 = vunpack.c.l.b16 %v2728
      %v2763 = vunpack.c.l.b16 %v2729
      %v2764 = vunpack.c.l.b16 %v2730
      %v2765 = vunpack.c.l.b16 %v2731
      %v2766 = vunpack.c.l.b16 %v2732
      %v2767 = vunpack.c.l.b16 %v2733
      %v2768 = vunpack.c.l.b16 %v2734
      %v2769 = vunpack.c.l.b16 %v2735
      %v2770 = vunpack.c.l.b16 %v2736
      %v2771 = vunpack.c.l.b16 %v2737
      %v2772 = vunpack.c.l.b16 %v2738
      %v2773 = vunpack.c.l.b16 %v2739
      %v2774 = vunpack.c.l.b16 %v2740
      %v2775 = vunpack.c.l.b16 %v2741
      %v2776 = vunpack.c.l.b16 %v2742
      %v2777 = vpack.c.b16 %v2761, %v2761
      %v2778 = vpack.c.b16 %v2762, %v2762
      %v2779 = vpack.c.b16 %v2763, %v2763
      %v2780 = vpack.c.b16 %v2764, %v2764
      %v2781 = vpack.c.b16 %v2765, %v2765
      %v2782 = vpack.c.b16 %v2766, %v2766
      %v2783 = vpack.c.b16 %v2767, %v2767
      %v2784 = vpack.c.b16 %v2768, %v2768
      %v2785 = vpack.c.b16 %v2769, %v2769
      %v2786 = vpack.c.b16 %v2770, %v2770
      %v2787 = vpack.c.b16 %v2771, %v2771
      %v2788 = vpack.c.b16 %v2772, %v2772
      %v2789 = vpack.c.b16 %v2773, %v2773
      %v2790 = vpack.c.b16 %v2774, %v2774
      %v2791 = vpack.c.b16 %v2775, %v2775
      %v2792 = vpack.c.b16 %v2776, %v2776
      %v2794 = vunpack.c.l.b16 %v2726
      %v2795 = vpack.c.b16 %v2794, %v2794
      %2796 = vrot.lane.b32.xlu0 %v2795, 16
      %v2797 = vpop.permute.xlu0 %2796
      %2798 = vrot.lane.b32.xlu0 %v2777, 16
      %v2799 = vpop.permute.xlu0 %2798
      %2800 = vrot.lane.b32.xlu0 %v2778, 16
      %v2801 = vpop.permute.xlu0 %2800
      %2802 = vrot.lane.b32.xlu0 %v2779, 16
      %v2803 = vpop.permute.xlu0 %2802
      %2804 = vrot.lane.b32.xlu0 %v2780, 16
      %v2805 = vpop.permute.xlu0 %2804
      %2806 = vrot.lane.b32.xlu0 %v2781, 16
      %v2807 = vpop.permute.xlu0 %2806
      %2808 = vrot.lane.b32.xlu0 %v2782, 16
      %v2809 = vpop.permute.xlu0 %2808
      %2810 = vrot.lane.b32.xlu0 %v2783, 16
      %v2811 = vpop.permute.xlu0 %2810
      %2812 = vrot.lane.b32.xlu0 %v2784, 16
      %v2813 = vpop.permute.xlu0 %2812
      %2814 = vrot.lane.b32.xlu0 %v2785, 16
      %v2815 = vpop.permute.xlu0 %2814
      %2816 = vrot.lane.b32.xlu0 %v2786, 16
      %v2817 = vpop.permute.xlu0 %2816
      %2818 = vrot.lane.b32.xlu0 %v2787, 16
      %v2819 = vpop.permute.xlu0 %2818
      %2820 = vrot.lane.b32.xlu0 %v2788, 16
      %v2821 = vpop.permute.xlu0 %2820
      %2822 = vrot.lane.b32.xlu0 %v2789, 16
      %v2823 = vpop.permute.xlu0 %2822
      %2824 = vrot.lane.b32.xlu0 %v2790, 16
      %v2825 = vpop.permute.xlu0 %2824
      %2826 = vrot.lane.b32.xlu0 %v2791, 16
      %v2827 = vpop.permute.xlu0 %2826
      %v2829 = vunpack.c.l.b16 %v2743
      %v2830 = vpack.c.b16 %v2829, %v2829
      %2831 = vrot.lane.b32.xlu0 %v2778, 32
      %v2832 = vpop.permute.xlu0 %2831
      %2833 = vrot.lane.b32.xlu0 %v2779, 32
      %v2834 = vpop.permute.xlu0 %2833
      %2835 = vrot.lane.b32.xlu0 %v2780, 32
      %v2836 = vpop.permute.xlu0 %2835
      %2837 = vrot.lane.b32.xlu0 %v2781, 32
      %v2838 = vpop.permute.xlu0 %2837
      %2839 = vrot.lane.b32.xlu0 %v2782, 32
      %v2840 = vpop.permute.xlu0 %2839
      %2841 = vrot.lane.b32.xlu0 %v2783, 32
      %v2842 = vpop.permute.xlu0 %2841
      %2843 = vrot.lane.b32.xlu0 %v2784, 32
      %v2844 = vpop.permute.xlu0 %2843
      %2845 = vrot.lane.b32.xlu0 %v2785, 32
      %v2846 = vpop.permute.xlu0 %2845
      %2847 = vrot.lane.b32.xlu0 %v2786, 32
      %v2848 = vpop.permute.xlu0 %2847
      %2849 = vrot.lane.b32.xlu0 %v2787, 32
      %v2850 = vpop.permute.xlu0 %2849
      %2851 = vrot.lane.b32.xlu0 %v2788, 32
      %v2852 = vpop.permute.xlu0 %2851
      %2853 = vrot.lane.b32.xlu0 %v2789, 32
      %v2854 = vpop.permute.xlu0 %2853
      %2855 = vrot.lane.b32.xlu0 %v2790, 32
      %v2856 = vpop.permute.xlu0 %2855
      %2857 = vrot.lane.b32.xlu0 %v2791, 32
      %v2858 = vpop.permute.xlu0 %2857
      %2859 = vrot.lane.b32.xlu0 %v2792, 32
      %v2860 = vpop.permute.xlu0 %2859
      %2861 = vrot.lane.b32.xlu0 %v2830, 32
      %v2862 = vpop.permute.xlu0 %2861
      %v2864 = vunpack.c.l.b16 %v2725
      %v2865 = vpack.c.b16 %v2864, %v2864
      %2866 = vrot.lane.b32.xlu0 %v2865, 48
      %v2867 = vpop.permute.xlu0 %2866
      %2868 = vrot.lane.b32.xlu0 %v2795, 48
      %v2869 = vpop.permute.xlu0 %2868
      %2870 = vrot.lane.b32.xlu0 %v2777, 48
      %v2871 = vpop.permute.xlu0 %2870
      %2872 = vrot.lane.b32.xlu0 %v2778, 48
      %v2873 = vpop.permute.xlu0 %2872
      %2874 = vrot.lane.b32.xlu0 %v2779, 48
      %v2875 = vpop.permute.xlu0 %2874
      %2876 = vrot.lane.b32.xlu0 %v2780, 48
      %v2877 = vpop.permute.xlu0 %2876
      %2878 = vrot.lane.b32.xlu0 %v2781, 48
      %v2879 = vpop.permute.xlu0 %2878
      %2880 = vrot.lane.b32.xlu0 %v2782, 48
      %v2881 = vpop.permute.xlu0 %2880
      %2882 = vrot.lane.b32.xlu0 %v2783, 48
      %v2883 = vpop.permute.xlu0 %2882
      %2884 = vrot.lane.b32.xlu0 %v2784, 48
      %v2885 = vpop.permute.xlu0 %2884
      %2886 = vrot.lane.b32.xlu0 %v2785, 48
      %v2887 = vpop.permute.xlu0 %2886
      %2888 = vrot.lane.b32.xlu0 %v2786, 48
      %v2889 = vpop.permute.xlu0 %2888
      %2890 = vrot.lane.b32.xlu0 %v2787, 48
      %v2891 = vpop.permute.xlu0 %2890
      %2892 = vrot.lane.b32.xlu0 %v2788, 48
      %v2893 = vpop.permute.xlu0 %2892
      %2894 = vrot.lane.b32.xlu0 %v2789, 48
      %v2895 = vpop.permute.xlu0 %2894
      %2896 = vrot.lane.b32.xlu0 %v2790, 48
      %v2897 = vpop.permute.xlu0 %2896
      %v2899 = vunpack.c.l.b16 %v2744
      %v2900 = vpack.c.b16 %v2899, %v2899
      %2901 = vrot.lane.b32.xlu0 %v2779, 64
      %v2902 = vpop.permute.xlu0 %2901
      %2903 = vrot.lane.b32.xlu0 %v2780, 64
      %v2904 = vpop.permute.xlu0 %2903
      %2905 = vrot.lane.b32.xlu0 %v2781, 64
      %v2906 = vpop.permute.xlu0 %2905
      %2907 = vrot.lane.b32.xlu0 %v2782, 64
      %v2908 = vpop.permute.xlu0 %2907
      %2909 = vrot.lane.b32.xlu0 %v2783, 64
      %v2910 = vpop.permute.xlu0 %2909
      %2911 = vrot.lane.b32.xlu0 %v2784, 64
      %v2912 = vpop.permute.xlu0 %2911
      %2913 = vrot.lane.b32.xlu0 %v2785, 64
      %v2914 = vpop.permute.xlu0 %2913
      %2915 = vrot.lane.b32.xlu0 %v2786, 64
      %v2916 = vpop.permute.xlu0 %2915
      %2917 = vrot.lane.b32.xlu0 %v2787, 64
      %v2918 = vpop.permute.xlu0 %2917
      %2919 = vrot.lane.b32.xlu0 %v2788, 64
      %v2920 = vpop.permute.xlu0 %2919
      %2921 = vrot.lane.b32.xlu0 %v2789, 64
      %v2922 = vpop.permute.xlu0 %2921
      %2923 = vrot.lane.b32.xlu0 %v2790, 64
      %v2924 = vpop.permute.xlu0 %2923
      %2925 = vrot.lane.b32.xlu0 %v2791, 64
      %v2926 = vpop.permute.xlu0 %2925
      %2927 = vrot.lane.b32.xlu0 %v2792, 64
      %v2928 = vpop.permute.xlu0 %2927
      %2929 = vrot.lane.b32.xlu0 %v2830, 64
      %v2930 = vpop.permute.xlu0 %2929
      %2931 = vrot.lane.b32.xlu0 %v2900, 64
      %v2932 = vpop.permute.xlu0 %2931
      %v2935 = vsel %vm902, %v2777, %v2797
      %v2938 = vsel %vm902, %v2778, %v2799
      %v2941 = vsel %vm902, %v2779, %v2801
      %v2944 = vsel %vm902, %v2780, %v2803
      %v2947 = vsel %vm902, %v2781, %v2805
      %v2950 = vsel %vm902, %v2782, %v2807
      %v2953 = vsel %vm902, %v2783, %v2809
      %v2956 = vsel %vm902, %v2784, %v2811
      %v2959 = vsel %vm902, %v2785, %v2813
      %v2962 = vsel %vm902, %v2786, %v2815
      %v2965 = vsel %vm902, %v2787, %v2817
      %v2968 = vsel %vm902, %v2788, %v2819
      %v2971 = vsel %vm902, %v2789, %v2821
      %v2974 = vsel %vm902, %v2790, %v2823
      %v2977 = vsel %vm902, %v2791, %v2825
      %v2980 = vsel %vm902, %v2792, %v2827
      %v2982 = vsel %vm999, %v2935, %v2832
      %v2984 = vsel %vm999, %v2938, %v2834
      %v2986 = vsel %vm999, %v2941, %v2836
      %v2988 = vsel %vm999, %v2944, %v2838
      %v2990 = vsel %vm999, %v2947, %v2840
      %v2992 = vsel %vm999, %v2950, %v2842
      %v2994 = vsel %vm999, %v2953, %v2844
      %v2996 = vsel %vm999, %v2956, %v2846
      %v2998 = vsel %vm999, %v2959, %v2848
      %v3000 = vsel %vm999, %v2962, %v2850
      %v3002 = vsel %vm999, %v2965, %v2852
      %v3004 = vsel %vm999, %v2968, %v2854
      %v3006 = vsel %vm999, %v2971, %v2856
      %v3008 = vsel %vm999, %v2974, %v2858
      %v3010 = vsel %vm999, %v2977, %v2860
      %v3012 = vsel %vm999, %v2980, %v2862
      %v3014 = vsel %vm1064, %v2982, %v2867
      %v3016 = vsel %vm1064, %v2984, %v2869
      %v3018 = vsel %vm1064, %v2986, %v2871
      %v3020 = vsel %vm1064, %v2988, %v2873
      %v3022 = vsel %vm1064, %v2990, %v2875
      %v3024 = vsel %vm1064, %v2992, %v2877
      %v3026 = vsel %vm1064, %v2994, %v2879
      %v3028 = vsel %vm1064, %v2996, %v2881
      %v3030 = vsel %vm1064, %v2998, %v2883
      %v3032 = vsel %vm1064, %v3000, %v2885
      %v3034 = vsel %vm1064, %v3002, %v2887
      %v3036 = vsel %vm1064, %v3004, %v2889
      %v3038 = vsel %vm1064, %v3006, %v2891
      %v3040 = vsel %vm1064, %v3008, %v2893
      %v3042 = vsel %vm1064, %v3010, %v2895
      %v3044 = vsel %vm1064, %v3012, %v2897
      %v3046 = vsel %vm1129, %v3014, %v2902
      %v3048 = vsel %vm1129, %v3016, %v2904
      %v3050 = vsel %vm1129, %v3018, %v2906
      %v3052 = vsel %vm1129, %v3020, %v2908
      %v3054 = vsel %vm1129, %v3022, %v2910
      %v3056 = vsel %vm1129, %v3024, %v2912
      %v3058 = vsel %vm1129, %v3026, %v2914
      %v3060 = vsel %vm1129, %v3028, %v2916
      %v3062 = vsel %vm1129, %v3030, %v2918
      %v3064 = vsel %vm1129, %v3032, %v2920
      %v3066 = vsel %vm1129, %v3034, %v2922
      %v3068 = vsel %vm1129, %v3036, %v2924
      %v3070 = vsel %vm1129, %v3038, %v2926
      %v3072 = vsel %vm1129, %v3040, %v2928
      %v3074 = vsel %vm1129, %v3042, %v2930
      %v3076 = vsel %vm1129, %v3044, %v2932
      %vm3077 = vsmask.f32 6400
      %v3078 = vshrl.u32 %v1131, 16
      %v3080 = vrot.slane %v3078, 1
      %v3081 = vshll.u32 %v1131, 16
      %v3083 = vrot.slane %v3081, 2
      %v3084 = vor.u32 %v3080, %v3083
      %v3085 = vshrl.u32 %v3046, 16
      %v3087 = vrot.slane %v3085, 1
      %v3088 = vshll.u32 %v3046, 16
      %v3090 = vrot.slane %v3088, 2
      %v3091 = vor.u32 %v3087, %v3090
      %v3092 = vsel %vm3077, %v3084, %v3091
      %v3093 = vshrl.u32 %v1135, 16
      %v3095 = vrot.slane %v3093, 1
      %v3096 = vshll.u32 %v1135, 16
      %v3098 = vrot.slane %v3096, 2
      %v3099 = vor.u32 %v3095, %v3098
      %v3100 = vshrl.u32 %v3048, 16
      %v3102 = vrot.slane %v3100, 1
      %v3103 = vshll.u32 %v3048, 16
      %v3105 = vrot.slane %v3103, 2
      %v3106 = vor.u32 %v3102, %v3105
      %v3107 = vsel %vm3077, %v3099, %v3106
      %v3108 = vshrl.u32 %v1139, 16
      %v3110 = vrot.slane %v3108, 1
      %v3111 = vshll.u32 %v1139, 16
      %v3113 = vrot.slane %v3111, 2
      %v3114 = vor.u32 %v3110, %v3113
      %v3115 = vshrl.u32 %v3050, 16
      %v3117 = vrot.slane %v3115, 1
      %v3118 = vshll.u32 %v3050, 16
      %v3120 = vrot.slane %v3118, 2
      %v3121 = vor.u32 %v3117, %v3120
      %v3122 = vsel %vm3077, %v3114, %v3121
      %v3123 = vshrl.u32 %v1143, 16
      %v3125 = vrot.slane %v3123, 1
      %v3126 = vshll.u32 %v1143, 16
      %v3128 = vrot.slane %v3126, 2
      %v3129 = vor.u32 %v3125, %v3128
      %v3130 = vshrl.u32 %v3052, 16
      %v3132 = vrot.slane %v3130, 1
      %v3133 = vshll.u32 %v3052, 16
      %v3135 = vrot.slane %v3133, 2
      %v3136 = vor.u32 %v3132, %v3135
      %v3137 = vsel %vm3077, %v3129, %v3136
      %v3138 = vshrl.u32 %v1147, 16
      %v3140 = vrot.slane %v3138, 1
      %v3141 = vshll.u32 %v1147, 16
      %v3143 = vrot.slane %v3141, 2
      %v3144 = vor.u32 %v3140, %v3143
      %v3145 = vshrl.u32 %v3054, 16
      %v3147 = vrot.slane %v3145, 1
      %v3148 = vshll.u32 %v3054, 16
      %v3150 = vrot.slane %v3148, 2
      %v3151 = vor.u32 %v3147, %v3150
      %v3152 = vsel %vm3077, %v3144, %v3151
      %v3153 = vshrl.u32 %v1151, 16
      %v3155 = vrot.slane %v3153, 1
      %v3156 = vshll.u32 %v1151, 16
      %v3158 = vrot.slane %v3156, 2
      %v3159 = vor.u32 %v3155, %v3158
      %v3160 = vshrl.u32 %v3056, 16
      %v3162 = vrot.slane %v3160, 1
      %v3163 = vshll.u32 %v3056, 16
      %v3165 = vrot.slane %v3163, 2
      %v3166 = vor.u32 %v3162, %v3165
      %v3167 = vsel %vm3077, %v3159, %v3166
      %v3168 = vshrl.u32 %v1155, 16
      %v3170 = vrot.slane %v3168, 1
      %v3171 = vshll.u32 %v1155, 16
      %v3173 = vrot.slane %v3171, 2
      %v3174 = vor.u32 %v3170, %v3173
      %v3175 = vshrl.u32 %v3058, 16
      %v3177 = vrot.slane %v3175, 1
      %v3178 = vshll.u32 %v3058, 16
      %v3180 = vrot.slane %v3178, 2
      %v3181 = vor.u32 %v3177, %v3180
      %v3182 = vsel %vm3077, %v3174, %v3181
      %v3183 = vshrl.u32 %v1159, 16
      %v3185 = vrot.slane %v3183, 1
      %v3186 = vshll.u32 %v1159, 16
      %v3188 = vrot.slane %v3186, 2
      %v3189 = vor.u32 %v3185, %v3188
      %v3190 = vshrl.u32 %v3060, 16
      %v3192 = vrot.slane %v3190, 1
      %v3193 = vshll.u32 %v3060, 16
      %v3195 = vrot.slane %v3193, 2
      %v3196 = vor.u32 %v3192, %v3195
      %v3197 = vsel %vm3077, %v3189, %v3196
      %v3198 = vshrl.u32 %v1163, 16
      %v3200 = vrot.slane %v3198, 1
      %v3201 = vshll.u32 %v1163, 16
      %v3203 = vrot.slane %v3201, 2
      %v3204 = vor.u32 %v3200, %v3203
      %v3205 = vshrl.u32 %v3062, 16
      %v3207 = vrot.slane %v3205, 1
      %v3208 = vshll.u32 %v3062, 16
      %v3210 = vrot.slane %v3208, 2
      %v3211 = vor.u32 %v3207, %v3210
      %v3212 = vsel %vm3077, %v3204, %v3211
      %v3213 = vshrl.u32 %v1167, 16
      %v3215 = vrot.slane %v3213, 1
      %v3216 = vshll.u32 %v1167, 16
      %v3218 = vrot.slane %v3216, 2
      %v3219 = vor.u32 %v3215, %v3218
      %v3220 = vshrl.u32 %v3064, 16
      %v3222 = vrot.slane %v3220, 1
      %v3223 = vshll.u32 %v3064, 16
      %v3225 = vrot.slane %v3223, 2
      %v3226 = vor.u32 %v3222, %v3225
      %v3227 = vsel %vm3077, %v3219, %v3226
      %v3228 = vshrl.u32 %v1171, 16
      %v3230 = vrot.slane %v3228, 1
      %v3231 = vshll.u32 %v1171, 16
      %v3233 = vrot.slane %v3231, 2
      %v3234 = vor.u32 %v3230, %v3233
      %v3235 = vshrl.u32 %v3066, 16
      %v3237 = vrot.slane %v3235, 1
      %v3238 = vshll.u32 %v3066, 16
      %v3240 = vrot.slane %v3238, 2
      %v3241 = vor.u32 %v3237, %v3240
      %v3242 = vsel %vm3077, %v3234, %v3241
      %v3243 = vshrl.u32 %v1175, 16
      %v3245 = vrot.slane %v3243, 1
      %v3246 = vshll.u32 %v1175, 16
      %v3248 = vrot.slane %v3246, 2
      %v3249 = vor.u32 %v3245, %v3248
      %v3250 = vshrl.u32 %v3068, 16
      %v3252 = vrot.slane %v3250, 1
      %v3253 = vshll.u32 %v3068, 16
      %v3255 = vrot.slane %v3253, 2
      %v3256 = vor.u32 %v3252, %v3255
      %v3257 = vsel %vm3077, %v3249, %v3256
      %v3258 = vshrl.u32 %v1179, 16
      %v3260 = vrot.slane %v3258, 1
      %v3261 = vshll.u32 %v1179, 16
      %v3263 = vrot.slane %v3261, 2
      %v3264 = vor.u32 %v3260, %v3263
      %v3265 = vshrl.u32 %v3070, 16
      %v3267 = vrot.slane %v3265, 1
      %v3268 = vshll.u32 %v3070, 16
      %v3270 = vrot.slane %v3268, 2
      %v3271 = vor.u32 %v3267, %v3270
      %v3272 = vsel %vm3077, %v3264, %v3271
      %v3273 = vshrl.u32 %v1183, 16
      %v3275 = vrot.slane %v3273, 1
      %v3276 = vshll.u32 %v1183, 16
      %v3278 = vrot.slane %v3276, 2
      %v3279 = vor.u32 %v3275, %v3278
      %v3280 = vshrl.u32 %v3072, 16
      %v3282 = vrot.slane %v3280, 1
      %v3283 = vshll.u32 %v3072, 16
      %v3285 = vrot.slane %v3283, 2
      %v3286 = vor.u32 %v3282, %v3285
      %v3287 = vsel %vm3077, %v3279, %v3286
      %v3288 = vshrl.u32 %v1187, 16
      %v3290 = vrot.slane %v3288, 1
      %v3291 = vshll.u32 %v1187, 16
      %v3293 = vrot.slane %v3291, 2
      %v3294 = vor.u32 %v3290, %v3293
      %v3295 = vshrl.u32 %v3074, 16
      %v3297 = vrot.slane %v3295, 1
      %v3298 = vshll.u32 %v3074, 16
      %v3300 = vrot.slane %v3298, 2
      %v3301 = vor.u32 %v3297, %v3300
      %v3302 = vsel %vm3077, %v3294, %v3301
      %v3303 = vshrl.u32 %v1191, 16
      %v3305 = vrot.slane %v3303, 1
      %v3306 = vshll.u32 %v1191, 16
      %v3308 = vrot.slane %v3306, 2
      %v3309 = vor.u32 %v3305, %v3308
      %v3310 = vshrl.u32 %v3076, 16
      %v3312 = vrot.slane %v3310, 1
      %v3313 = vshll.u32 %v3076, 16
      %v3315 = vrot.slane %v3313, 2
      %v3316 = vor.u32 %v3312, %v3315
      %v3317 = vsel %vm3077, %v3309, %v3316
      %s3318 = scalar_lea.vmem %s3, 80
      %v3319 = vld [vmem:[%s3318] sm:$0xf]
      %v3320 = vld [vmem:[%s3318 + $0x4] sm:$0xf]
      %v3321 = vld [vmem:[%s3318 + $0x8] sm:$0xf]
      %v3322 = vld [vmem:[%s3318 + $0xc] sm:$0xf]
      %v3323 = vld [vmem:[%s3318 + $0x10] sm:$0xf]
      %v3324 = vld [vmem:[%s3318 + $0x14] sm:$0xf]
      %v3325 = vld [vmem:[%s3318 + $0x18] sm:$0xf]
      %v3326 = vld [vmem:[%s3318 + $0x1c] sm:$0xf]
      %v3327 = vld [vmem:[%s3318 + $0x20] sm:$0xf]
      %v3328 = vld [vmem:[%s3318 + $0x24] sm:$0xf]
      %v3339 = vunpack.c.l.b16 %v3319
      %v3340 = vunpack.c.l.b16 %v3320
      %v3341 = vunpack.c.l.b16 %v3321
      %v3342 = vunpack.c.l.b16 %v3322
      %v3343 = vunpack.c.l.b16 %v3323
      %v3344 = vunpack.c.l.b16 %v3324
      %v3345 = vunpack.c.l.b16 %v3325
      %v3346 = vunpack.c.l.b16 %v3326
      %v3347 = vunpack.c.l.b16 %v3327
      %v3348 = vunpack.c.l.b16 %v3328
      %v3349 = vpack.c.b16 %v3340, %v3339
      %v3350 = vpack.c.b16 %v3342, %v3341
      %v3351 = vpack.c.b16 %v3344, %v3343
      %v3352 = vpack.c.b16 %v3346, %v3345
      %v3353 = vpack.c.b16 %v3348, %v3347
      %v3360 = vsel %vm1847, %v3092, 0
      %v3363 = vsel %vm1847, %v3107, 0
      %v3366 = vsel %vm1847, %v3122, 0
      %v3369 = vsel %vm1847, %v3137, 0
      %v3372 = vsel %vm1847, %v3152, 0
      %v3375 = vsel %vm1847, %v3167, 0
      %v3378 = vsel %vm1847, %v3182, 0
      %v3381 = vsel %vm1847, %v3197, 0
      %v3384 = vsel %vm1847, %v3212, 0
      %v3387 = vsel %vm1847, %v3227, 0
      %v3390 = vsel %vm1847, %v3242, 0
      %v3393 = vsel %vm1847, %v3257, 0
      %v3396 = vsel %vm1847, %v3272, 0
      %v3399 = vsel %vm1847, %v3287, 0
      %v3402 = vsel %vm1847, %v3302, 0
      %v3405 = vsel %vm1847, %v3317, 0
      %3407 = vmatprep.subr.bf16.mxu0 0
      %3408 = vmatpush1.bf16.msra.mxu0 %v3349
      %3409 = vmatprep.subr.bf16.mxu0 0
      %3410 = vmatpush1.bf16.msra.mxu0 %v3350
      %3411 = vmatprep.subr.bf16.mxu0 0
      %3412 = vmatpush1.bf16.msra.mxu0 %v3351
      %3413 = vmatprep.subr.bf16.mxu0 0
      %3414 = vmatpush1.bf16.msra.mxu0 %v3352
      %3415 = vmatprep.subr.bf16.mxu0 0
      %3416 = vmatpush1.bf16.msra.mxu0 %v3353
      %3417 = vmatprep.subr.bf16.mxu0 0
      %3418 = vmatpush1.bf16.msra.mxu0 0
      %3419 = vmatprep.subr.bf16.mxu0 0
      %3420 = vmatpush1.bf16.msra.mxu0 0
      %3421 = vmatprep.subr.bf16.mxu0 0
      %3422 = vmatpush1.bf16.msra.mxu0 0
      %3423 = vmatprep.subr.bf16.mxu0 0
      %3424 = vmatpush1.bf16.msra.mxu0 0
      %3425 = vmatprep.subr.bf16.mxu0 0
      %3426 = vmatpush1.bf16.msra.mxu0 0
      %3427 = vmatprep.subr.bf16.mxu0 0
      %3428 = vmatpush1.bf16.msra.mxu0 0
      %3429 = vmatprep.subr.bf16.mxu0 0
      %3430 = vmatpush1.bf16.msra.mxu0 0
      %3431 = vmatprep.subr.bf16.mxu0 0
      %3432 = vmatpush1.bf16.msra.mxu0 0
      %3433 = vmatprep.subr.bf16.mxu0 0
      %3434 = vmatpush1.bf16.msra.mxu0 0
      %3435 = vmatprep.subr.bf16.mxu0 0
      %3436 = vmatpush1.bf16.msra.mxu0 0
      %3437 = vmatprep.subr.bf16.mxu0 0
      %3438 = vmatpush1.bf16.msra.mxu0 0
      %3439 = vmatprep.mubr.bf16.mxu0 0
      %3440 = vmatmul.mubr.bf16.gmra.mrb[0].mxu0 %v3360
      %v3441 = vpop.f32.mrb[0].mxu0
      %v3442 = vadd.f32 0.0, %v3441
      %v3443 = vpop.f32.mrb[0].mxu0
      %v3444 = vpop.f32.mrb[0].mxu0
      %v3445 = vadd.f32 0.0, %v3444
      %v3446 = vpop.f32.mrb[0].mxu0
      %3447 = vmatprep.mubr.bf16.mxu0 0
      %3448 = vmatmul.mubr.bf16.gmra.mrb[0].mxu0 %v3363
      %v3449 = vpop.f32.mrb[0].mxu0
      %v3450 = vadd.f32 0.0, %v3449
      %v3451 = vpop.f32.mrb[0].mxu0
      %v3452 = vpop.f32.mrb[0].mxu0
      %v3453 = vadd.f32 0.0, %v3452
      %v3454 = vpop.f32.mrb[0].mxu0
      %3455 = vmatprep.mubr.bf16.mxu0 0
      %3456 = vmatmul.mubr.bf16.gmra.mrb[0].mxu0 %v3366
      %v3457 = vpop.f32.mrb[0].mxu0
      %v3458 = vadd.f32 0.0, %v3457
      %v3459 = vpop.f32.mrb[0].mxu0
      %v3460 = vpop.f32.mrb[0].mxu0
      %v3461 = vadd.f32 0.0, %v3460
      %v3462 = vpop.f32.mrb[0].mxu0
      %3463 = vmatprep.mubr.bf16.mxu0 0
      %3464 = vmatmul.mubr.bf16.gmra.mrb[0].mxu0 %v3369
      %v3465 = vpop.f32.mrb[0].mxu0
      %v3466 = vadd.f32 0.0, %v3465
      %v3467 = vpop.f32.mrb[0].mxu0
      %v3468 = vpop.f32.mrb[0].mxu0
      %v3469 = vadd.f32 0.0, %v3468
      %v3470 = vpop.f32.mrb[0].mxu0
      %3471 = vmatprep.mubr.bf16.mxu0 0
      %3472 = vmatmul.mubr.bf16.gmra.mrb[0].mxu0 %v3372
      %v3473 = vpop.f32.mrb[0].mxu0
      %v3474 = vadd.f32 0.0, %v3473
      %v3475 = vpop.f32.mrb[0].mxu0
      %v3476 = vpop.f32.mrb[0].mxu0
      %v3477 = vadd.f32 0.0, %v3476
      %v3478 = vpop.f32.mrb[0].mxu0
      %3479 = vmatprep.mubr.bf16.mxu0 0
      %3480 = vmatmul.mubr.bf16.gmra.mrb[0].mxu0 %v3375
      %v3481 = vpop.f32.mrb[0].mxu0
      %v3482 = vadd.f32 0.0, %v3481
      %v3483 = vpop.f32.mrb[0].mxu0
      %v3484 = vpop.f32.mrb[0].mxu0
      %v3485 = vadd.f32 0.0, %v3484
      %v3486 = vpop.f32.mrb[0].mxu0
      %3487 = vmatprep.mubr.bf16.mxu0 0
      %3488 = vmatmul.mubr.bf16.gmra.mrb[0].mxu0 %v3378
      %v3489 = vpop.f32.mrb[0].mxu0
      %v3490 = vadd.f32 0.0, %v3489
      %v3491 = vpop.f32.mrb[0].mxu0
      %v3492 = vpop.f32.mrb[0].mxu0
      %v3493 = vadd.f32 0.0, %v3492
      %v3494 = vpop.f32.mrb[0].mxu0
      %3495 = vmatprep.mubr.bf16.mxu0 0
      %3496 = vmatmul.mubr.bf16.gmra.mrb[0].mxu0 %v3381
      %v3497 = vpop.f32.mrb[0].mxu0
      %v3498 = vadd.f32 0.0, %v3497
      %v3499 = vpop.f32.mrb[0].mxu0
      %v3500 = vpop.f32.mrb[0].mxu0
      %v3501 = vadd.f32 0.0, %v3500
      %v3502 = vpop.f32.mrb[0].mxu0
      %3503 = vmatprep.mubr.bf16.mxu0 0
      %3504 = vmatmul.mubr.bf16.gmra.mrb[0].mxu0 %v3384
      %v3505 = vpop.f32.mrb[0].mxu0
      %v3506 = vadd.f32 0.0, %v3505
      %v3507 = vpop.f32.mrb[0].mxu0
      %v3508 = vpop.f32.mrb[0].mxu0
      %v3509 = vadd.f32 0.0, %v3508
      %v3510 = vpop.f32.mrb[0].mxu0
      %3511 = vmatprep.mubr.bf16.mxu0 0
      %3512 = vmatmul.mubr.bf16.gmra.mrb[0].mxu0 %v3387
      %v3513 = vpop.f32.mrb[0].mxu0
      %v3514 = vadd.f32 0.0, %v3513
      %v3515 = vpop.f32.mrb[0].mxu0
      %v3516 = vpop.f32.mrb[0].mxu0
      %v3517 = vadd.f32 0.0, %v3516
      %v3518 = vpop.f32.mrb[0].mxu0
      %3519 = vmatprep.mubr.bf16.mxu0 0
      %3520 = vmatmul.mubr.bf16.gmra.mrb[0].mxu0 %v3390
      %v3521 = vpop.f32.mrb[0].mxu0
      %v3522 = vadd.f32 0.0, %v3521
      %v3523 = vpop.f32.mrb[0].mxu0
      %v3524 = vpop.f32.mrb[0].mxu0
      %v3525 = vadd.f32 0.0, %v3524
      %v3526 = vpop.f32.mrb[0].mxu0
      %3527 = vmatprep.mubr.bf16.mxu0 0
      %3528 = vmatmul.mubr.bf16.gmra.mrb[0].mxu0 %v3393
      %v3529 = vpop.f32.mrb[0].mxu0
      %v3530 = vadd.f32 0.0, %v3529
      %v3531 = vpop.f32.mrb[0].mxu0
      %v3532 = vpop.f32.mrb[0].mxu0
      %v3533 = vadd.f32 0.0, %v3532
      %v3534 = vpop.f32.mrb[0].mxu0
      %3535 = vmatprep.mubr.bf16.mxu0 0
      %3536 = vmatmul.mubr.bf16.gmra.mrb[0].mxu0 %v3396
      %v3537 = vpop.f32.mrb[0].mxu0
      %v3538 = vadd.f32 0.0, %v3537
      %v3539 = vpop.f32.mrb[0].mxu0
      %v3540 = vpop.f32.mrb[0].mxu0
      %v3541 = vadd.f32 0.0, %v3540
      %v3542 = vpop.f32.mrb[0].mxu0
      %3543 = vmatprep.mubr.bf16.mxu0 0
      %3544 = vmatmul.mubr.bf16.gmra.mrb[0].mxu0 %v3399
      %v3545 = vpop.f32.mrb[0].mxu0
      %v3546 = vadd.f32 0.0, %v3545
      %v3547 = vpop.f32.mrb[0].mxu0
      %v3548 = vpop.f32.mrb[0].mxu0
      %v3549 = vadd.f32 0.0, %v3548
      %v3550 = vpop.f32.mrb[0].mxu0
      %3551 = vmatprep.mubr.bf16.mxu0 0
      %3552 = vmatmul.mubr.bf16.gmra.mrb[0].mxu0 %v3402
      %v3553 = vpop.f32.mrb[0].mxu0
      %v3554 = vadd.f32 0.0, %v3553
      %v3555 = vpop.f32.mrb[0].mxu0
      %v3556 = vpop.f32.mrb[0].mxu0
      %v3557 = vadd.f32 0.0, %v3556
      %v3558 = vpop.f32.mrb[0].mxu0
      %3559 = vmatprep.mubr.bf16.mxu0 0
      %3560 = vmatmul.mubr.bf16.gmra.mrb[0].mxu0 %v3405
      %v3561 = vpop.f32.mrb[0].mxu0
      %v3562 = vadd.f32 0.0, %v3561
      %v3563 = vpop.f32.mrb[0].mxu0
      %v3564 = vpop.f32.mrb[0].mxu0
      %v3565 = vadd.f32 0.0, %v3564
      %v3566 = vpop.f32.mrb[0].mxu0
      %3567 = vdwg.mxu0
      %v3568 = vadd.f32 %v2170, %v3442
      %v3569 = vadd.f32 %v2173, %v3445
      %v3570 = vadd.f32 %v2178, %v3450
      %v3571 = vadd.f32 %v2181, %v3453
      %v3572 = vadd.f32 %v2186, %v3458
      %v3573 = vadd.f32 %v2189, %v3461
      %v3574 = vadd.f32 %v2194, %v3466
      %v3575 = vadd.f32 %v2197, %v3469
      %v3576 = vadd.f32 %v2202, %v3474
      %v3577 = vadd.f32 %v2205, %v3477
      %v3578 = vadd.f32 %v2210, %v3482
      %v3579 = vadd.f32 %v2213, %v3485
      %v3580 = vadd.f32 %v2218, %v3490
      %v3581 = vadd.f32 %v2221, %v3493
      %v3582 = vadd.f32 %v2226, %v3498
      %v3583 = vadd.f32 %v2229, %v3501
      %v3584 = vadd.f32 %v2234, %v3506
      %v3585 = vadd.f32 %v2237, %v3509
      %v3586 = vadd.f32 %v2242, %v3514
      %v3587 = vadd.f32 %v2245, %v3517
      %v3588 = vadd.f32 %v2250, %v3522
      %v3589 = vadd.f32 %v2253, %v3525
      %v3590 = vadd.f32 %v2258, %v3530
      %v3591 = vadd.f32 %v2261, %v3533
      %v3592 = vadd.f32 %v2266, %v3538
      %v3593 = vadd.f32 %v2269, %v3541
      %v3594 = vadd.f32 %v2274, %v3546
      %v3595 = vadd.f32 %v2277, %v3549
      %v3596 = vadd.f32 %v2282, %v3554
      %v3597 = vadd.f32 %v2285, %v3557
      %v3598 = vadd.f32 %v2290, %v3562
      %v3599 = vadd.f32 %v2293, %v3565
      %s3600 = scalar_lea.vmem %s2, 48
      %v3601 = vld [vmem:[%s3600] sm:$0xf]
      %v3602 = vld [vmem:[%s3600 + $0x4] sm:$0xf]
      %v3603 = vld [vmem:[%s3600 + $0x8] sm:$0xf]
      %v3604 = vld [vmem:[%s3600 + $0xc] sm:$0xf]
      %v3605 = vld [vmem:[%s3600 + $0x10] sm:$0xf]
      %v3606 = vld [vmem:[%s3600 + $0x14] sm:$0xf]
      %v3613 = vunpack.c.l.b16 %v3601
      %v3614 = vunpack.c.l.b16 %v3602
      %v3615 = vunpack.c.l.b16 %v3603
      %v3616 = vunpack.c.l.b16 %v3604
      %v3617 = vunpack.c.l.b16 %v3605
      %v3618 = vunpack.c.l.b16 %v3606
      %v3619 = vpack.c.b16 %v3614, %v3613
      %v3620 = vpack.c.b16 %v3616, %v3615
      %v3621 = vpack.c.b16 %v3618, %v3617
      %v3625 = vsel %vm1064, %v3092, 0
      %v3627 = vsel %vm1064, %v3107, 0
      %v3629 = vsel %vm1064, %v3122, 0
      %v3631 = vsel %vm1064, %v3137, 0
      %v3633 = vsel %vm1064, %v3152, 0
      %v3635 = vsel %vm1064, %v3167, 0
      %v3637 = vsel %vm1064, %v3182, 0
      %v3639 = vsel %vm1064, %v3197, 0
      %v3641 = vsel %vm1064, %v3212, 0
      %v3643 = vsel %vm1064, %v3227, 0
      %v3645 = vsel %vm1064, %v3242, 0
      %v3647 = vsel %vm1064, %v3257, 0
      %v3649 = vsel %vm1064, %v3272, 0
      %v3651 = vsel %vm1064, %v3287, 0
      %v3653 = vsel %vm1064, %v3302, 0
      %v3655 = vsel %vm1064, %v3317, 0
      %3657 = vmatprep.subr.bf16.mxu0 0
      %3658 = vmatpush1.bf16.msra.mxu0 %v3619
      %3659 = vmatprep.subr.bf16.mxu0 0
      %3660 = vmatpush1.bf16.msra.mxu0 %v3620
      %3661 = vmatprep.subr.bf16.mxu0 0
      %3662 = vmatpush1.bf16.msra.mxu0 %v3621
      %3663 = vmatprep.subr.bf16.mxu0 0
      %3664 = vmatpush1.bf16.msra.mxu0 0
      %3665 = vmatprep.subr.bf16.mxu0 0
      %3666 = vmatpush1.bf16.msra.mxu0 0
      %3667 = vmatprep.subr.bf16.mxu0 0
      %3668 = vmatpush1.bf16.msra.mxu0 0
      %3669 = vmatprep.subr.bf16.mxu0 0
      %3670 = vmatpush1.bf16.msra.mxu0 0
      %3671 = vmatprep.subr.bf16.mxu0 0
      %3672 = vmatpush1.bf16.msra.mxu0 0
      %3673 = vmatprep.subr.bf16.mxu0 0
      %3674 = vmatpush1.bf16.msra.mxu0 0
      %3675 = vmatprep.subr.bf16.mxu0 0
      %3676 = vmatpush1.bf16.msra.mxu0 0
      %3677 = vmatprep.subr.bf16.mxu0 0
      %3678 = vmatpush1.bf16.msra.mxu0 0
      %3679 = vmatprep.subr.bf16.mxu0 0
      %3680 = vmatpush1.bf16.msra.mxu0 0
      %3681 = vmatprep.subr.bf16.mxu0 0
      %3682 = vmatpush1.bf16.msra.mxu0 0
      %3683 = vmatprep.subr.bf16.mxu0 0
      %3684 = vmatpush1.bf16.msra.mxu0 0
      %3685 = vmatprep.subr.bf16.mxu0 0
      %3686 = vmatpush1.bf16.msra.mxu0 0
      %3687 = vmatprep.subr.bf16.mxu0 0
      %3688 = vmatpush1.bf16.msra.mxu0 0
      %3689 = vmatprep.mubr.bf16.mxu0 0
      %3690 = vmatmul.mubr.bf16.gmra.mrb[0].mxu0 %v3625
      %v3691 = vpop.f32.mrb[0].mxu0
      %v3692 = vadd.f32 0.0, %v3691
      %v3693 = vpop.f32.mrb[0].mxu0
      %v3694 = vpop.f32.mrb[0].mxu0
      %v3695 = vadd.f32 0.0, %v3694
      %v3696 = vpop.f32.mrb[0].mxu0
      %3697 = vmatprep.mubr.bf16.mxu0 0
      %3698 = vmatmul.mubr.bf16.gmra.mrb[0].mxu0 %v3627
      %v3699 = vpop.f32.mrb[0].mxu0
      %v3700 = vadd.f32 0.0, %v3699
      %v3701 = vpop.f32.mrb[0].mxu0
      %v3702 = vpop.f32.mrb[0].mxu0
      %v3703 = vadd.f32 0.0, %v3702
      %v3704 = vpop.f32.mrb[0].mxu0
      %3705 = vmatprep.mubr.bf16.mxu0 0
      %3706 = vmatmul.mubr.bf16.gmra.mrb[0].mxu0 %v3629
      %v3707 = vpop.f32.mrb[0].mxu0
      %v3708 = vadd.f32 0.0, %v3707
      %v3709 = vpop.f32.mrb[0].mxu0
      %v3710 = vpop.f32.mrb[0].mxu0
      %v3711 = vadd.f32 0.0, %v3710
      %v3712 = vpop.f32.mrb[0].mxu0
      %3713 = vmatprep.mubr.bf16.mxu0 0
      %3714 = vmatmul.mubr.bf16.gmra.mrb[0].mxu0 %v3631
      %v3715 = vpop.f32.mrb[0].mxu0
      %v3716 = vadd.f32 0.0, %v3715
      %v3717 = vpop.f32.mrb[0].mxu0
      %v3718 = vpop.f32.mrb[0].mxu0
      %v3719 = vadd.f32 0.0, %v3718
      %v3720 = vpop.f32.mrb[0].mxu0
      %3721 = vmatprep.mubr.bf16.mxu0 0
      %3722 = vmatmul.mubr.bf16.gmra.mrb[0].mxu0 %v3633
      %v3723 = vpop.f32.mrb[0].mxu0
      %v3724 = vadd.f32 0.0, %v3723
      %v3725 = vpop.f32.mrb[0].mxu0
      %v3726 = vpop.f32.mrb[0].mxu0
      %v3727 = vadd.f32 0.0, %v3726
      %v3728 = vpop.f32.mrb[0].mxu0
      %3729 = vmatprep.mubr.bf16.mxu0 0
      %3730 = vmatmul.mubr.bf16.gmra.mrb[0].mxu0 %v3635
      %v3731 = vpop.f32.mrb[0].mxu0
      %v3732 = vadd.f32 0.0, %v3731
      %v3733 = vpop.f32.mrb[0].mxu0
      %v3734 = vpop.f32.mrb[0].mxu0
      %v3735 = vadd.f32 0.0, %v3734
      %v3736 = vpop.f32.mrb[0].mxu0
      %3737 = vmatprep.mubr.bf16.mxu0 0
      %3738 = vmatmul.mubr.bf16.gmra.mrb[0].mxu0 %v3637
      %v3739 = vpop.f32.mrb[0].mxu0
      %v3740 = vadd.f32 0.0, %v3739
      %v3741 = vpop.f32.mrb[0].mxu0
      %v3742 = vpop.f32.mrb[0].mxu0
      %v3743 = vadd.f32 0.0, %v3742
      %v3744 = vpop.f32.mrb[0].mxu0
      %3745 = vmatprep.mubr.bf16.mxu0 0
      %3746 = vmatmul.mubr.bf16.gmra.mrb[0].mxu0 %v3639
      %v3747 = vpop.f32.mrb[0].mxu0
      %v3748 = vadd.f32 0.0, %v3747
      %v3749 = vpop.f32.mrb[0].mxu0
      %v3750 = vpop.f32.mrb[0].mxu0
      %v3751 = vadd.f32 0.0, %v3750
      %v3752 = vpop.f32.mrb[0].mxu0
      %3753 = vmatprep.mubr.bf16.mxu0 0
      %3754 = vmatmul.mubr.bf16.gmra.mrb[0].mxu0 %v3641
      %v3755 = vpop.f32.mrb[0].mxu0
      %v3756 = vadd.f32 0.0, %v3755
      %v3757 = vpop.f32.mrb[0].mxu0
      %v3758 = vpop.f32.mrb[0].mxu0
      %v3759 = vadd.f32 0.0, %v3758
      %v3760 = vpop.f32.mrb[0].mxu0
      %3761 = vmatprep.mubr.bf16.mxu0 0
      %3762 = vmatmul.mubr.bf16.gmra.mrb[0].mxu0 %v3643
      %v3763 = vpop.f32.mrb[0].mxu0
      %v3764 = vadd.f32 0.0, %v3763
      %v3765 = vpop.f32.mrb[0].mxu0
      %v3766 = vpop.f32.mrb[0].mxu0
      %v3767 = vadd.f32 0.0, %v3766
      %v3768 = vpop.f32.mrb[0].mxu0
      %3769 = vmatprep.mubr.bf16.mxu0 0
      %3770 = vmatmul.mubr.bf16.gmra.mrb[0].mxu0 %v3645
      %v3771 = vpop.f32.mrb[0].mxu0
      %v3772 = vadd.f32 0.0, %v3771
      %v3773 = vpop.f32.mrb[0].mxu0
      %v3774 = vpop.f32.mrb[0].mxu0
      %v3775 = vadd.f32 0.0, %v3774
      %v3776 = vpop.f32.mrb[0].mxu0
      %3777 = vmatprep.mubr.bf16.mxu0 0
      %3778 = vmatmul.mubr.bf16.gmra.mrb[0].mxu0 %v3647
      %v3779 = vpop.f32.mrb[0].mxu0
      %v3780 = vadd.f32 0.0, %v3779
      %v3781 = vpop.f32.mrb[0].mxu0
      %v3782 = vpop.f32.mrb[0].mxu0
      %v3783 = vadd.f32 0.0, %v3782
      %v3784 = vpop.f32.mrb[0].mxu0
      %3785 = vmatprep.mubr.bf16.mxu0 0
      %3786 = vmatmul.mubr.bf16.gmra.mrb[0].mxu0 %v3649
      %v3787 = vpop.f32.mrb[0].mxu0
      %v3788 = vadd.f32 0.0, %v3787
      %v3789 = vpop.f32.mrb[0].mxu0
      %v3790 = vpop.f32.mrb[0].mxu0
      %v3791 = vadd.f32 0.0, %v3790
      %v3792 = vpop.f32.mrb[0].mxu0
      %3793 = vmatprep.mubr.bf16.mxu0 0
      %3794 = vmatmul.mubr.bf16.gmra.mrb[0].mxu0 %v3651
      %v3795 = vpop.f32.mrb[0].mxu0
      %v3796 = vadd.f32 0.0, %v3795
      %v3797 = vpop.f32.mrb[0].mxu0
      %v3798 = vpop.f32.mrb[0].mxu0
      %v3799 = vadd.f32 0.0, %v3798
      %v3800 = vpop.f32.mrb[0].mxu0
      %3801 = vmatprep.mubr.bf16.mxu0 0
      %3802 = vmatmul.mubr.bf16.gmra.mrb[0].mxu0 %v3653
      %v3803 = vpop.f32.mrb[0].mxu0
      %v3804 = vadd.f32 0.0, %v3803
      %v3805 = vpop.f32.mrb[0].mxu0
      %v3806 = vpop.f32.mrb[0].mxu0
      %v3807 = vadd.f32 0.0, %v3806
      %v3808 = vpop.f32.mrb[0].mxu0
      %3809 = vmatprep.mubr.bf16.mxu0 0
      %3810 = vmatmul.mubr.bf16.gmra.mrb[0].mxu0 %v3655
      %v3811 = vpop.f32.mrb[0].mxu0
      %v3812 = vadd.f32 0.0, %v3811
      %v3813 = vpop.f32.mrb[0].mxu0
      %v3814 = vpop.f32.mrb[0].mxu0
      %v3815 = vadd.f32 0.0, %v3814
      %v3816 = vpop.f32.mrb[0].mxu0
      %3817 = vdwg.mxu0
      %v3818 = vadd.f32 %v2599, %v3692
      %v3819 = vadd.f32 %v2602, %v3695
      %v3820 = vadd.f32 %v2607, %v3700
      %v3821 = vadd.f32 %v2610, %v3703
      %v3822 = vadd.f32 %v2615, %v3708
      %v3823 = vadd.f32 %v2618, %v3711
      %v3824 = vadd.f32 %v2623, %v3716
      %v3825 = vadd.f32 %v2626, %v3719
      %v3826 = vadd.f32 %v2631, %v3724
      %v3827 = vadd.f32 %v2634, %v3727
      %v3828 = vadd.f32 %v2639, %v3732
      %v3829 = vadd.f32 %v2642, %v3735
      %v3830 = vadd.f32 %v2647, %v3740
      %v3831 = vadd.f32 %v2650, %v3743
      %v3832 = vadd.f32 %v2655, %v3748
      %v3833 = vadd.f32 %v2658, %v3751
      %v3834 = vadd.f32 %v2663, %v3756
      %v3835 = vadd.f32 %v2666, %v3759
      %v3836 = vadd.f32 %v2671, %v3764
      %v3837 = vadd.f32 %v2674, %v3767
      %v3838 = vadd.f32 %v2679, %v3772
      %v3839 = vadd.f32 %v2682, %v3775
      %v3840 = vadd.f32 %v2687, %v3780
      %v3841 = vadd.f32 %v2690, %v3783
      %v3842 = vadd.f32 %v2695, %v3788
      %v3843 = vadd.f32 %v2698, %v3791
      %v3844 = vadd.f32 %v2703, %v3796
      %v3845 = vadd.f32 %v2706, %v3799
      %v3846 = vadd.f32 %v2711, %v3804
      %v3847 = vadd.f32 %v2714, %v3807
      %v3848 = vadd.f32 %v2719, %v3812
      %v3849 = vadd.f32 %v2722, %v3815
      %v3850 = vld [vmem:[%s415] sm:$0xf]
      %v3851 = vld [vmem:[%s415 + $0x4] sm:$0xf]
      %v3852 = vld [vmem:[%s415 + $0xc] sm:$0xf]
      %v3853 = vld [vmem:[%s415 + $0x10] sm:$0xf]
      %v3854 = vld [vmem:[%s415 + $0x18] sm:$0xf]
      %v3855 = vld [vmem:[%s415 + $0x1c] sm:$0xf]
      %v3856 = vld [vmem:[%s415 + $0x24] sm:$0xf]
      %v3857 = vld [vmem:[%s415 + $0x28] sm:$0xf]
      %v3858 = vld [vmem:[%s415 + $0x30] sm:$0xf]
      %v3859 = vld [vmem:[%s415 + $0x34] sm:$0xf]
      %v3860 = vld [vmem:[%s415 + $0x3c] sm:$0xf]
      %v3861 = vld [vmem:[%s415 + $0x40] sm:$0xf]
      %v3862 = vld [vmem:[%s415 + $0x48] sm:$0xf]
      %v3863 = vld [vmem:[%s415 + $0x4c] sm:$0xf]
      %v3864 = vld [vmem:[%s415 + $0x54] sm:$0xf]
      %v3865 = vld [vmem:[%s415 + $0x58] sm:$0xf]
      %v3866 = vld [vmem:[%s415 + $0x60] sm:$0xf]
      %v3867 = vld [vmem:[%s415 + $0x64] sm:$0xf]
      %v3868 = vld [vmem:[%s415 + $0x6c] sm:$0xf]
      %v3869 = vld [vmem:[%s415 + $0x70] sm:$0xf]
      %v3870 = vld [vmem:[%s415 + $0x78] sm:$0xf]
      %v3871 = vld [vmem:[%s415 + $0x7c] sm:$0xf]
      %v3872 = vld [vmem:[%s415 + $0x84] sm:$0xf]
      %v3873 = vld [vmem:[%s415 + $0x88] sm:$0xf]
      %v3874 = vld [vmem:[%s415 + $0x90] sm:$0xf]
      %v3875 = vld [vmem:[%s415 + $0x94] sm:$0xf]
      %v3876 = vld [vmem:[%s415 + $0x9c] sm:$0xf]
      %v3877 = vld [vmem:[%s415 + $0xa0] sm:$0xf]
      %v3878 = vld [vmem:[%s415 + $0xa8] sm:$0xf]
      %v3879 = vld [vmem:[%s415 + $0xac] sm:$0xf]
      %v3880 = vld [vmem:[%s415 + $0xb4] sm:$0xf]
      %v3881 = vld [vmem:[%s415 + $0xb8] sm:$0xf]
      %v3882 = vld [vmem:[%s415 + $0xc0] sm:$0xf]
      %v3883 = vld [vmem:[%s415 + $0xc4] sm:$0xf]
      %v3884 = vld [vmem:[%s415 + $0xcc] sm:$0xf]
      %v3885 = vld [vmem:[%s415 + $0xd0] sm:$0xf]
      %v3886 = vld [vmem:[%s415 + $0xd8] sm:$0xf]
      %v3887 = vld [vmem:[%s415 + $0xdc] sm:$0xf]
      %v3888 = vld [vmem:[%s415 + $0xe4] sm:$0xf]
      %v3889 = vld [vmem:[%s415 + $0xe8] sm:$0xf]
      %v3922 = vunpack.c.l.b16 %v3854
      %v3923 = vunpack.c.l.b16 %v3855
      %v3924 = vunpack.c.l.b16 %v3856
      %v3925 = vunpack.c.l.b16 %v3857
      %v3926 = vunpack.c.l.b16 %v3858
      %v3927 = vunpack.c.l.b16 %v3859
      %v3928 = vunpack.c.l.b16 %v3860
      %v3929 = vunpack.c.l.b16 %v3861
      %v3930 = vunpack.c.l.b16 %v3862
      %v3931 = vunpack.c.l.b16 %v3863
      %v3932 = vunpack.c.l.b16 %v3864
      %v3933 = vunpack.c.l.b16 %v3865
      %v3934 = vunpack.c.l.b16 %v3866
      %v3935 = vunpack.c.l.b16 %v3867
      %v3936 = vunpack.c.l.b16 %v3868
      %v3937 = vunpack.c.l.b16 %v3869
      %v3938 = vunpack.c.l.b16 %v3870
      %v3939 = vunpack.c.l.b16 %v3871
      %v3940 = vunpack.c.l.b16 %v3872
      %v3941 = vunpack.c.l.b16 %v3873
      %v3942 = vunpack.c.l.b16 %v3874
      %v3943 = vunpack.c.l.b16 %v3875
      %v3944 = vunpack.c.l.b16 %v3876
      %v3945 = vunpack.c.l.b16 %v3877
      %v3946 = vunpack.c.l.b16 %v3878
      %v3947 = vunpack.c.l.b16 %v3879
      %v3948 = vunpack.c.l.b16 %v3880
      %v3949 = vunpack.c.l.b16 %v3881
      %v3950 = vunpack.c.l.b16 %v3882
      %v3951 = vunpack.c.l.b16 %v3883
      %v3952 = vunpack.c.l.b16 %v3884
      %v3953 = vunpack.c.l.b16 %v3885
      %v3954 = vpack.c.b16 %v3923, %v3922
      %v3955 = vpack.c.b16 %v3925, %v3924
      %v3956 = vpack.c.b16 %v3927, %v3926
      %v3957 = vpack.c.b16 %v3929, %v3928
      %v3958 = vpack.c.b16 %v3931, %v3930
      %v3959 = vpack.c.b16 %v3933, %v3932
      %v3960 = vpack.c.b16 %v3935, %v3934
      %v3961 = vpack.c.b16 %v3937, %v3936
      %v3962 = vpack.c.b16 %v3939, %v3938
      %v3963 = vpack.c.b16 %v3941, %v3940
      %v3964 = vpack.c.b16 %v3943, %v3942
      %v3965 = vpack.c.b16 %v3945, %v3944
      %v3966 = vpack.c.b16 %v3947, %v3946
      %v3967 = vpack.c.b16 %v3949, %v3948
      %v3968 = vpack.c.b16 %v3951, %v3950
      %v3969 = vpack.c.b16 %v3953, %v3952
      %v3972 = vunpack.c.l.b16 %v3852
      %v3973 = vunpack.c.l.b16 %v3853
      %v3974 = vpack.c.b16 %v3973, %v3972
      %3975 = vrot.lane.b32.xlu0 %v3974, 16
      %v3976 = vpop.permute.xlu0 %3975
      %3977 = vrot.lane.b32.xlu0 %v3954, 16
      %v3978 = vpop.permute.xlu0 %3977
      %3979 = vrot.lane.b32.xlu0 %v3955, 16
      %v3980 = vpop.permute.xlu0 %3979
      %3981 = vrot.lane.b32.xlu0 %v3956, 16
      %v3982 = vpop.permute.xlu0 %3981
      %3983 = vrot.lane.b32.xlu0 %v3957, 16
      %v3984 = vpop.permute.xlu0 %3983
      %3985 = vrot.lane.b32.xlu0 %v3958, 16
      %v3986 = vpop.permute.xlu0 %3985
      %3987 = vrot.lane.b32.xlu0 %v3959, 16
      %v3988 = vpop.permute.xlu0 %3987
      %3989 = vrot.lane.b32.xlu0 %v3960, 16
      %v3990 = vpop.permute.xlu0 %3989
      %3991 = vrot.lane.b32.xlu0 %v3961, 16
      %v3992 = vpop.permute.xlu0 %3991
      %3993 = vrot.lane.b32.xlu0 %v3962, 16
      %v3994 = vpop.permute.xlu0 %3993
      %3995 = vrot.lane.b32.xlu0 %v3963, 16
      %v3996 = vpop.permute.xlu0 %3995
      %3997 = vrot.lane.b32.xlu0 %v3964, 16
      %v3998 = vpop.permute.xlu0 %3997
      %3999 = vrot.lane.b32.xlu0 %v3965, 16
      %v4000 = vpop.permute.xlu0 %3999
      %4001 = vrot.lane.b32.xlu0 %v3966, 16
      %v4002 = vpop.permute.xlu0 %4001
      %4003 = vrot.lane.b32.xlu0 %v3967, 16
      %v4004 = vpop.permute.xlu0 %4003
      %4005 = vrot.lane.b32.xlu0 %v3968, 16
      %v4006 = vpop.permute.xlu0 %4005
      %v4009 = vunpack.c.l.b16 %v3886
      %v4010 = vunpack.c.l.b16 %v3887
      %v4011 = vpack.c.b16 %v4010, %v4009
      %4012 = vrot.lane.b32.xlu0 %v3955, 32
      %v4013 = vpop.permute.xlu0 %4012
      %4014 = vrot.lane.b32.xlu0 %v3956, 32
      %v4015 = vpop.permute.xlu0 %4014
      %4016 = vrot.lane.b32.xlu0 %v3957, 32
      %v4017 = vpop.permute.xlu0 %4016
      %4018 = vrot.lane.b32.xlu0 %v3958, 32
      %v4019 = vpop.permute.xlu0 %4018
      %4020 = vrot.lane.b32.xlu0 %v3959, 32
      %v4021 = vpop.permute.xlu0 %4020
      %4022 = vrot.lane.b32.xlu0 %v3960, 32
      %v4023 = vpop.permute.xlu0 %4022
      %4024 = vrot.lane.b32.xlu0 %v3961, 32
      %v4025 = vpop.permute.xlu0 %4024
      %4026 = vrot.lane.b32.xlu0 %v3962, 32
      %v4027 = vpop.permute.xlu0 %4026
      %4028 = vrot.lane.b32.xlu0 %v3963, 32
      %v4029 = vpop.permute.xlu0 %4028
      %4030 = vrot.lane.b32.xlu0 %v3964, 32
      %v4031 = vpop.permute.xlu0 %4030
      %4032 = vrot.lane.b32.xlu0 %v3965, 32
      %v4033 = vpop.permute.xlu0 %4032
      %4034 = vrot.lane.b32.xlu0 %v3966, 32
      %v4035 = vpop.permute.xlu0 %4034
      %4036 = vrot.lane.b32.xlu0 %v3967, 32
      %v4037 = vpop.permute.xlu0 %4036
      %4038 = vrot.lane.b32.xlu0 %v3968, 32
      %v4039 = vpop.permute.xlu0 %4038
      %4040 = vrot.lane.b32.xlu0 %v3969, 32
      %v4041 = vpop.permute.xlu0 %4040
      %4042 = vrot.lane.b32.xlu0 %v4011, 32
      %v4043 = vpop.permute.xlu0 %4042
      %v4046 = vunpack.c.l.b16 %v3850
      %v4047 = vunpack.c.l.b16 %v3851
      %v4048 = vpack.c.b16 %v4047, %v4046
      %4049 = vrot.lane.b32.xlu0 %v4048, 48
      %v4050 = vpop.permute.xlu0 %4049
      %4051 = vrot.lane.b32.xlu0 %v3974, 48
      %v4052 = vpop.permute.xlu0 %4051
      %4053 = vrot.lane.b32.xlu0 %v3954, 48
      %v4054 = vpop.permute.xlu0 %4053
      %4055 = vrot.lane.b32.xlu0 %v3955, 48
      %v4056 = vpop.permute.xlu0 %4055
      %4057 = vrot.lane.b32.xlu0 %v3956, 48
      %v4058 = vpop.permute.xlu0 %4057
      %4059 = vrot.lane.b32.xlu0 %v3957, 48
      %v4060 = vpop.permute.xlu0 %4059
      %4061 = vrot.lane.b32.xlu0 %v3958, 48
      %v4062 = vpop.permute.xlu0 %4061
      %4063 = vrot.lane.b32.xlu0 %v3959, 48
      %v4064 = vpop.permute.xlu0 %4063
      %4065 = vrot.lane.b32.xlu0 %v3960, 48
      %v4066 = vpop.permute.xlu0 %4065
      %4067 = vrot.lane.b32.xlu0 %v3961, 48
      %v4068 = vpop.permute.xlu0 %4067
      %4069 = vrot.lane.b32.xlu0 %v3962, 48
      %v4070 = vpop.permute.xlu0 %4069
      %4071 = vrot.lane.b32.xlu0 %v3963, 48
      %v4072 = vpop.permute.xlu0 %4071
      %4073 = vrot.lane.b32.xlu0 %v3964, 48
      %v4074 = vpop.permute.xlu0 %4073
      %4075 = vrot.lane.b32.xlu0 %v3965, 48
      %v4076 = vpop.permute.xlu0 %4075
      %4077 = vrot.lane.b32.xlu0 %v3966, 48
      %v4078 = vpop.permute.xlu0 %4077
      %4079 = vrot.lane.b32.xlu0 %v3967, 48
      %v4080 = vpop.permute.xlu0 %4079
      %v4083 = vunpack.c.l.b16 %v3888
      %v4084 = vunpack.c.l.b16 %v3889
      %v4085 = vpack.c.b16 %v4084, %v4083
      %4086 = vrot.lane.b32.xlu0 %v3956, 64
      %v4087 = vpop.permute.xlu0 %4086
      %4088 = vrot.lane.b32.xlu0 %v3957, 64
      %v4089 = vpop.permute.xlu0 %4088
      %4090 = vrot.lane.b32.xlu0 %v3958, 64
      %v4091 = vpop.permute.xlu0 %4090
      %4092 = vrot.lane.b32.xlu0 %v3959, 64
      %v4093 = vpop.permute.xlu0 %4092
      %4094 = vrot.lane.b32.xlu0 %v3960, 64
      %v4095 = vpop.permute.xlu0 %4094
      %4096 = vrot.lane.b32.xlu0 %v3961, 64
      %v4097 = vpop.permute.xlu0 %4096
      %4098 = vrot.lane.b32.xlu0 %v3962, 64
      %v4099 = vpop.permute.xlu0 %4098
      %4100 = vrot.lane.b32.xlu0 %v3963, 64
      %v4101 = vpop.permute.xlu0 %4100
      %4102 = vrot.lane.b32.xlu0 %v3964, 64
      %v4103 = vpop.permute.xlu0 %4102
      %4104 = vrot.lane.b32.xlu0 %v3965, 64
      %v4105 = vpop.permute.xlu0 %4104
      %4106 = vrot.lane.b32.xlu0 %v3966, 64
      %v4107 = vpop.permute.xlu0 %4106
      %4108 = vrot.lane.b32.xlu0 %v3967, 64
      %v4109 = vpop.permute.xlu0 %4108
      %4110 = vrot.lane.b32.xlu0 %v3968, 64
      %v4111 = vpop.permute.xlu0 %4110
      %4112 = vrot.lane.b32.xlu0 %v3969, 64
      %v4113 = vpop.permute.xlu0 %4112
      %4114 = vrot.lane.b32.xlu0 %v4011, 64
      %v4115 = vpop.permute.xlu0 %4114
      %4116 = vrot.lane.b32.xlu0 %v4085, 64
      %v4117 = vpop.permute.xlu0 %4116
      %v4120 = vsel %vm902, %v3954, %v3976
      %v4123 = vsel %vm902, %v3955, %v3978
      %v4126 = vsel %vm902, %v3956, %v3980
      %v4129 = vsel %vm902, %v3957, %v3982
      %v4132 = vsel %vm902, %v3958, %v3984
      %v4135 = vsel %vm902, %v3959, %v3986
      %v4138 = vsel %vm902, %v3960, %v3988
      %v4141 = vsel %vm902, %v3961, %v3990
      %v4144 = vsel %vm902, %v3962, %v3992
      %v4147 = vsel %vm902, %v3963, %v3994
      %v4150 = vsel %vm902, %v3964, %v3996
      %v4153 = vsel %vm902, %v3965, %v3998
      %v4156 = vsel %vm902, %v3966, %v4000
      %v4159 = vsel %vm902, %v3967, %v4002
      %v4162 = vsel %vm902, %v3968, %v4004
      %v4165 = vsel %vm902, %v3969, %v4006
      %v4167 = vsel %vm999, %v4120, %v4013
      %v4169 = vsel %vm999, %v4123, %v4015
      %v4171 = vsel %vm999, %v4126, %v4017
      %v4173 = vsel %vm999, %v4129, %v4019
      %v4175 = vsel %vm999, %v4132, %v4021
      %v4177 = vsel %vm999, %v4135, %v4023
      %v4179 = vsel %vm999, %v4138, %v4025
      %v4181 = vsel %vm999, %v4141, %v4027
      %v4183 = vsel %vm999, %v4144, %v4029
      %v4185 = vsel %vm999, %v4147, %v4031
      %v4187 = vsel %vm999, %v4150, %v4033
      %v4189 = vsel %vm999, %v4153, %v4035
      %v4191 = vsel %vm999, %v4156, %v4037
      %v4193 = vsel %vm999, %v4159, %v4039
      %v4195 = vsel %vm999, %v4162, %v4041
      %v4197 = vsel %vm999, %v4165, %v4043
      %v4199 = vsel %vm1064, %v4167, %v4050
      %v4201 = vsel %vm1064, %v4169, %v4052
      %v4203 = vsel %vm1064, %v4171, %v4054
      %v4205 = vsel %vm1064, %v4173, %v4056
      %v4207 = vsel %vm1064, %v4175, %v4058
      %v4209 = vsel %vm1064, %v4177, %v4060
      %v4211 = vsel %vm1064, %v4179, %v4062
      %v4213 = vsel %vm1064, %v4181, %v4064
      %v4215 = vsel %vm1064, %v4183, %v4066
      %v4217 = vsel %vm1064, %v4185, %v4068
      %v4219 = vsel %vm1064, %v4187, %v4070
      %v4221 = vsel %vm1064, %v4189, %v4072
      %v4223 = vsel %vm1064, %v4191, %v4074
      %v4225 = vsel %vm1064, %v4193, %v4076
      %v4227 = vsel %vm1064, %v4195, %v4078
      %v4229 = vsel %vm1064, %v4197, %v4080
      %v4231 = vsel %vm1129, %v4199, %v4087
      %v4233 = vsel %vm1129, %v4201, %v4089
      %v4235 = vsel %vm1129, %v4203, %v4091
      %v4237 = vsel %vm1129, %v4205, %v4093
      %v4239 = vsel %vm1129, %v4207, %v4095
      %v4241 = vsel %vm1129, %v4209, %v4097
      %v4243 = vsel %vm1129, %v4211, %v4099
      %v4245 = vsel %vm1129, %v4213, %v4101
      %v4247 = vsel %vm1129, %v4215, %v4103
      %v4249 = vsel %vm1129, %v4217, %v4105
      %v4251 = vsel %vm1129, %v4219, %v4107
      %v4253 = vsel %vm1129, %v4221, %v4109
      %v4255 = vsel %vm1129, %v4223, %v4111
      %v4257 = vsel %vm1129, %v4225, %v4113
      %v4259 = vsel %vm1129, %v4227, %v4115
      %v4261 = vsel %vm1129, %v4229, %v4117
      %s4262 = scalar_lea.vmem %s3, 120
      %v4263 = vld [vmem:[%s4262] sm:$0xf]
      %v4264 = vld [vmem:[%s4262 + $0x4] sm:$0xf]
      %v4265 = vld [vmem:[%s4262 + $0x8] sm:$0xf]
      %v4266 = vld [vmem:[%s4262 + $0xc] sm:$0xf]
      %v4267 = vld [vmem:[%s4262 + $0x10] sm:$0xf]
      %v4268 = vld [vmem:[%s4262 + $0x14] sm:$0xf]
      %v4269 = vld [vmem:[%s4262 + $0x18] sm:$0xf]
      %v4270 = vld [vmem:[%s4262 + $0x1c] sm:$0xf]
      %v4271 = vld [vmem:[%s4262 + $0x20] sm:$0xf]
      %v4272 = vld [vmem:[%s4262 + $0x24] sm:$0xf]
      %v4283 = vunpack.c.l.b16 %v4263
      %v4284 = vunpack.c.l.b16 %v4264
      %v4285 = vunpack.c.l.b16 %v4265
      %v4286 = vunpack.c.l.b16 %v4266
      %v4287 = vunpack.c.l.b16 %v4267
      %v4288 = vunpack.c.l.b16 %v4268
      %v4289 = vunpack.c.l.b16 %v4269
      %v4290 = vunpack.c.l.b16 %v4270
      %v4291 = vunpack.c.l.b16 %v4271
      %v4292 = vunpack.c.l.b16 %v4272
      %v4293 = vpack.c.b16 %v4284, %v4283
      %v4294 = vpack.c.b16 %v4286, %v4285
      %v4295 = vpack.c.b16 %v4288, %v4287
      %v4296 = vpack.c.b16 %v4290, %v4289
      %v4297 = vpack.c.b16 %v4292, %v4291
      %v4303 = vsel %vm1847, %v4231, 0
      %v4305 = vsel %vm1847, %v4233, 0
      %v4307 = vsel %vm1847, %v4235, 0
      %v4309 = vsel %vm1847, %v4237, 0
      %v4311 = vsel %vm1847, %v4239, 0
      %v4313 = vsel %vm1847, %v4241, 0
      %v4315 = vsel %vm1847, %v4243, 0
      %v4317 = vsel %vm1847, %v4245, 0
      %v4319 = vsel %vm1847, %v4247, 0
      %v4321 = vsel %vm1847, %v4249, 0
      %v4323 = vsel %vm1847, %v4251, 0
      %v4325 = vsel %vm1847, %v4253, 0
      %v4327 = vsel %vm1847, %v4255, 0
      %v4329 = vsel %vm1847, %v4257, 0
      %v4331 = vsel %vm1847, %v4259, 0
      %v4333 = vsel %vm1847, %v4261, 0
      %4335 = vmatprep.subr.bf16.mxu0 0
      %4336 = vmatpush1.bf16.msra.mxu0 %v4293
      %4337 = vmatprep.subr.bf16.mxu0 0
      %4338 = vmatpush1.bf16.msra.mxu0 %v4294
      %4339 = vmatprep.subr.bf16.mxu0 0
      %4340 = vmatpush1.bf16.msra.mxu0 %v4295
      %4341 = vmatprep.subr.bf16.mxu0 0
      %4342 = vmatpush1.bf16.msra.mxu0 %v4296
      %4343 = vmatprep.subr.bf16.mxu0 0
      %4344 = vmatpush1.bf16.msra.mxu0 %v4297
      %4345 = vmatprep.subr.bf16.mxu0 0
      %4346 = vmatpush1.bf16.msra.mxu0 0
      %4347 = vmatprep.subr.bf16.mxu0 0
      %4348 = vmatpush1.bf16.msra.mxu0 0
      %4349 = vmatprep.subr.bf16.mxu0 0
      %4350 = vmatpush1.bf16.msra.mxu0 0
      %4351 = vmatprep.subr.bf16.mxu0 0
      %4352 = vmatpush1.bf16.msra.mxu0 0
      %4353 = vmatprep.subr.bf16.mxu0 0
      %4354 = vmatpush1.bf16.msra.mxu0 0
      %4355 = vmatprep.subr.bf16.mxu0 0
      %4356 = vmatpush1.bf16.msra.mxu0 0
      %4357 = vmatprep.subr.bf16.mxu0 0
      %4358 = vmatpush1.bf16.msra.mxu0 0
      %4359 = vmatprep.subr.bf16.mxu0 0
      %4360 = vmatpush1.bf16.msra.mxu0 0
      %4361 = vmatprep.subr.bf16.mxu0 0
      %4362 = vmatpush1.bf16.msra.mxu0 0
      %4363 = vmatprep.subr.bf16.mxu0 0
      %4364 = vmatpush1.bf16.msra.mxu0 0
      %4365 = vmatprep.subr.bf16.mxu0 0
      %4366 = vmatpush1.bf16.msra.mxu0 0
      %4367 = vmatprep.mubr.bf16.mxu0 0
      %4368 = vmatmul.mubr.bf16.gmra.mrb[0].mxu0 %v4303
      %v4369 = vpop.f32.mrb[0].mxu0
      %v4370 = vadd.f32 0.0, %v4369
      %v4371 = vpop.f32.mrb[0].mxu0
      %v4372 = vpop.f32.mrb[0].mxu0
      %v4373 = vadd.f32 0.0, %v4372
      %v4374 = vpop.f32.mrb[0].mxu0
      %4375 = vmatprep.mubr.bf16.mxu0 0
      %4376 = vmatmul.mubr.bf16.gmra.mrb[0].mxu0 %v4305
      %v4377 = vpop.f32.mrb[0].mxu0
      %v4378 = vadd.f32 0.0, %v4377
      %v4379 = vpop.f32.mrb[0].mxu0
      %v4380 = vpop.f32.mrb[0].mxu0
      %v4381 = vadd.f32 0.0, %v4380
      %v4382 = vpop.f32.mrb[0].mxu0
      %4383 = vmatprep.mubr.bf16.mxu0 0
      %4384 = vmatmul.mubr.bf16.gmra.mrb[0].mxu0 %v4307
      %v4385 = vpop.f32.mrb[0].mxu0
      %v4386 = vadd.f32 0.0, %v4385
      %v4387 = vpop.f32.mrb[0].mxu0
      %v4388 = vpop.f32.mrb[0].mxu0
      %v4389 = vadd.f32 0.0, %v4388
      %v4390 = vpop.f32.mrb[0].mxu0
      %4391 = vmatprep.mubr.bf16.mxu0 0
      %4392 = vmatmul.mubr.bf16.gmra.mrb[0].mxu0 %v4309
      %v4393 = vpop.f32.mrb[0].mxu0
      %v4394 = vadd.f32 0.0, %v4393
      %v4395 = vpop.f32.mrb[0].mxu0
      %v4396 = vpop.f32.mrb[0].mxu0
      %v4397 = vadd.f32 0.0, %v4396
      %v4398 = vpop.f32.mrb[0].mxu0
      %4399 = vmatprep.mubr.bf16.mxu0 0
      %4400 = vmatmul.mubr.bf16.gmra.mrb[0].mxu0 %v4311
      %v4401 = vpop.f32.mrb[0].mxu0
      %v4402 = vadd.f32 0.0, %v4401
      %v4403 = vpop.f32.mrb[0].mxu0
      %v4404 = vpop.f32.mrb[0].mxu0
      %v4405 = vadd.f32 0.0, %v4404
      %v4406 = vpop.f32.mrb[0].mxu0
      %4407 = vmatprep.mubr.bf16.mxu0 0
      %4408 = vmatmul.mubr.bf16.gmra.mrb[0].mxu0 %v4313
      %v4409 = vpop.f32.mrb[0].mxu0
      %v4410 = vadd.f32 0.0, %v4409
      %v4411 = vpop.f32.mrb[0].mxu0
      %v4412 = vpop.f32.mrb[0].mxu0
      %v4413 = vadd.f32 0.0, %v4412
      %v4414 = vpop.f32.mrb[0].mxu0
      %4415 = vmatprep.mubr.bf16.mxu0 0
      %4416 = vmatmul.mubr.bf16.gmra.mrb[0].mxu0 %v4315
      %v4417 = vpop.f32.mrb[0].mxu0
      %v4418 = vadd.f32 0.0, %v4417
      %v4419 = vpop.f32.mrb[0].mxu0
      %v4420 = vpop.f32.mrb[0].mxu0
      %v4421 = vadd.f32 0.0, %v4420
      %v4422 = vpop.f32.mrb[0].mxu0
      %4423 = vmatprep.mubr.bf16.mxu0 0
      %4424 = vmatmul.mubr.bf16.gmra.mrb[0].mxu0 %v4317
      %v4425 = vpop.f32.mrb[0].mxu0
      %v4426 = vadd.f32 0.0, %v4425
      %v4427 = vpop.f32.mrb[0].mxu0
      %v4428 = vpop.f32.mrb[0].mxu0
      %v4429 = vadd.f32 0.0, %v4428
      %v4430 = vpop.f32.mrb[0].mxu0
      %4431 = vmatprep.mubr.bf16.mxu0 0
      %4432 = vmatmul.mubr.bf16.gmra.mrb[0].mxu0 %v4319
      %v4433 = vpop.f32.mrb[0].mxu0
      %v4434 = vadd.f32 0.0, %v4433
      %v4435 = vpop.f32.mrb[0].mxu0
      %v4436 = vpop.f32.mrb[0].mxu0
      %v4437 = vadd.f32 0.0, %v4436
      %v4438 = vpop.f32.mrb[0].mxu0
      %4439 = vmatprep.mubr.bf16.mxu0 0
      %4440 = vmatmul.mubr.bf16.gmra.mrb[0].mxu0 %v4321
      %v4441 = vpop.f32.mrb[0].mxu0
      %v4442 = vadd.f32 0.0, %v4441
      %v4443 = vpop.f32.mrb[0].mxu0
      %v4444 = vpop.f32.mrb[0].mxu0
      %v4445 = vadd.f32 0.0, %v4444
      %v4446 = vpop.f32.mrb[0].mxu0
      %4447 = vmatprep.mubr.bf16.mxu0 0
      %4448 = vmatmul.mubr.bf16.gmra.mrb[0].mxu0 %v4323
      %v4449 = vpop.f32.mrb[0].mxu0
      %v4450 = vadd.f32 0.0, %v4449
      %v4451 = vpop.f32.mrb[0].mxu0
      %v4452 = vpop.f32.mrb[0].mxu0
      %v4453 = vadd.f32 0.0, %v4452
      %v4454 = vpop.f32.mrb[0].mxu0
      %4455 = vmatprep.mubr.bf16.mxu0 0
      %4456 = vmatmul.mubr.bf16.gmra.mrb[0].mxu0 %v4325
      %v4457 = vpop.f32.mrb[0].mxu0
      %v4458 = vadd.f32 0.0, %v4457
      %v4459 = vpop.f32.mrb[0].mxu0
      %v4460 = vpop.f32.mrb[0].mxu0
      %v4461 = vadd.f32 0.0, %v4460
      %v4462 = vpop.f32.mrb[0].mxu0
      %4463 = vmatprep.mubr.bf16.mxu0 0
      %4464 = vmatmul.mubr.bf16.gmra.mrb[0].mxu0 %v4327
      %v4465 = vpop.f32.mrb[0].mxu0
      %v4466 = vadd.f32 0.0, %v4465
      %v4467 = vpop.f32.mrb[0].mxu0
      %v4468 = vpop.f32.mrb[0].mxu0
      %v4469 = vadd.f32 0.0, %v4468
      %v4470 = vpop.f32.mrb[0].mxu0
      %4471 = vmatprep.mubr.bf16.mxu0 0
      %4472 = vmatmul.mubr.bf16.gmra.mrb[0].mxu0 %v4329
      %v4473 = vpop.f32.mrb[0].mxu0
      %v4474 = vadd.f32 0.0, %v4473
      %v4475 = vpop.f32.mrb[0].mxu0
      %v4476 = vpop.f32.mrb[0].mxu0
      %v4477 = vadd.f32 0.0, %v4476
      %v4478 = vpop.f32.mrb[0].mxu0
      %4479 = vmatprep.mubr.bf16.mxu0 0
      %4480 = vmatmul.mubr.bf16.gmra.mrb[0].mxu0 %v4331
      %v4481 = vpop.f32.mrb[0].mxu0
      %v4482 = vadd.f32 0.0, %v4481
      %v4483 = vpop.f32.mrb[0].mxu0
      %v4484 = vpop.f32.mrb[0].mxu0
      %v4485 = vadd.f32 0.0, %v4484
      %v4486 = vpop.f32.mrb[0].mxu0
      %4487 = vmatprep.mubr.bf16.mxu0 0
      %4488 = vmatmul.mubr.bf16.gmra.mrb[0].mxu0 %v4333
      %v4489 = vpop.f32.mrb[0].mxu0
      %v4490 = vadd.f32 0.0, %v4489
      %v4491 = vpop.f32.mrb[0].mxu0
      %v4492 = vpop.f32.mrb[0].mxu0
      %v4493 = vadd.f32 0.0, %v4492
      %v4494 = vpop.f32.mrb[0].mxu0
      %4495 = vdwg.mxu0
      %v4496 = vadd.f32 %v3568, %v4370
      %v4497 = vadd.f32 %v3569, %v4373
      %v4498 = vadd.f32 %v3570, %v4378
      %v4499 = vadd.f32 %v3571, %v4381
      %v4500 = vadd.f32 %v3572, %v4386
      %v4501 = vadd.f32 %v3573, %v4389
      %v4502 = vadd.f32 %v3574, %v4394
      %v4503 = vadd.f32 %v3575, %v4397
      %v4504 = vadd.f32 %v3576, %v4402
      %v4505 = vadd.f32 %v3577, %v4405
      %v4506 = vadd.f32 %v3578, %v4410
      %v4507 = vadd.f32 %v3579, %v4413
      %v4508 = vadd.f32 %v3580, %v4418
      %v4509 = vadd.f32 %v3581, %v4421
      %v4510 = vadd.f32 %v3582, %v4426
      %v4511 = vadd.f32 %v3583, %v4429
      %v4512 = vadd.f32 %v3584, %v4434
      %v4513 = vadd.f32 %v3585, %v4437
      %v4514 = vadd.f32 %v3586, %v4442
      %v4515 = vadd.f32 %v3587, %v4445
      %v4516 = vadd.f32 %v3588, %v4450
      %v4517 = vadd.f32 %v3589, %v4453
      %v4518 = vadd.f32 %v3590, %v4458
      %v4519 = vadd.f32 %v3591, %v4461
      %v4520 = vadd.f32 %v3592, %v4466
      %v4521 = vadd.f32 %v3593, %v4469
      %v4522 = vadd.f32 %v3594, %v4474
      %v4523 = vadd.f32 %v3595, %v4477
      %v4524 = vadd.f32 %v3596, %v4482
      %v4525 = vadd.f32 %v3597, %v4485
      %v4526 = vadd.f32 %v3598, %v4490
      %v4527 = vadd.f32 %v3599, %v4493
      %v4528 = vld [vmem:[%s415] sm:$0xc]
      %v4529 = vld [vmem:[%s415 + $0xc] sm:$0xc]
      %v4530 = vld [vmem:[%s415 + $0x18] sm:$0xc]
      %v4531 = vld [vmem:[%s415 + $0x24] sm:$0xc]
      %v4532 = vld [vmem:[%s415 + $0x30] sm:$0xc]
      %v4533 = vld [vmem:[%s415 + $0x3c] sm:$0xc]
      %v4534 = vld [vmem:[%s415 + $0x48] sm:$0xc]
      %v4535 = vld [vmem:[%s415 + $0x54] sm:$0xc]
      %v4536 = vld [vmem:[%s415 + $0x60] sm:$0xc]
      %v4537 = vld [vmem:[%s415 + $0x6c] sm:$0xc]
      %v4538 = vld [vmem:[%s415 + $0x78] sm:$0xc]
      %v4539 = vld [vmem:[%s415 + $0x84] sm:$0xc]
      %v4540 = vld [vmem:[%s415 + $0x90] sm:$0xc]
      %v4541 = vld [vmem:[%s415 + $0x9c] sm:$0xc]
      %v4542 = vld [vmem:[%s415 + $0xa8] sm:$0xc]
      %v4543 = vld [vmem:[%s415 + $0xb4] sm:$0xc]
      %v4544 = vld [vmem:[%s415 + $0xc0] sm:$0xc]
      %v4545 = vld [vmem:[%s415 + $0xcc] sm:$0xc]
      %v4546 = vld [vmem:[%s415 + $0xd8] sm:$0xc]
      %v4547 = vld [vmem:[%s415 + $0xe4] sm:$0xc]
      %v4564 = vunpack.c.l.b16 %v4530
      %v4565 = vunpack.c.l.b16 %v4531
      %v4566 = vunpack.c.l.b16 %v4532
      %v4567 = vunpack.c.l.b16 %v4533
      %v4568 = vunpack.c.l.b16 %v4534
      %v4569 = vunpack.c.l.b16 %v4535
      %v4570 = vunpack.c.l.b16 %v4536
      %v4571 = vunpack.c.l.b16 %v4537
      %v4572 = vunpack.c.l.b16 %v4538
      %v4573 = vunpack.c.l.b16 %v4539
      %v4574 = vunpack.c.l.b16 %v4540
      %v4575 = vunpack.c.l.b16 %v4541
      %v4576 = vunpack.c.l.b16 %v4542
      %v4577 = vunpack.c.l.b16 %v4543
      %v4578 = vunpack.c.l.b16 %v4544
      %v4579 = vunpack.c.l.b16 %v4545
      %v4580 = vpack.c.b16 %v535, %v4564
      %v4581 = vpack.c.b16 %v538, %v4565
      %v4582 = vpack.c.b16 %v541, %v4566
      %v4583 = vpack.c.b16 %v544, %v4567
      %v4584 = vpack.c.b16 %v547, %v4568
      %v4585 = vpack.c.b16 %v550, %v4569
      %v4586 = vpack.c.b16 %v553, %v4570
      %v4587 = vpack.c.b16 %v556, %v4571
      %v4588 = vpack.c.b16 %v559, %v4572
      %v4589 = vpack.c.b16 %v562, %v4573
      %v4590 = vpack.c.b16 %v565, %v4574
      %v4591 = vpack.c.b16 %v568, %v4575
      %v4592 = vpack.c.b16 %v571, %v4576
      %v4593 = vpack.c.b16 %v574, %v4577
      %v4594 = vpack.c.b16 %v577, %v4578
      %v4595 = vpack.c.b16 %v580, %v4579
      %v4597 = vunpack.c.l.b16 %v4529
      %v4598 = vpack.c.b16 %v618, %v4597
      %4599 = vrot.lane.b32.xlu0 %v4598, 16
      %v4600 = vpop.permute.xlu0 %4599
      %4601 = vrot.lane.b32.xlu0 %v4580, 16
      %v4602 = vpop.permute.xlu0 %4601
      %4603 = vrot.lane.b32.xlu0 %v4581, 16
      %v4604 = vpop.permute.xlu0 %4603
      %4605 = vrot.lane.b32.xlu0 %v4582, 16
      %v4606 = vpop.permute.xlu0 %4605
      %4607 = vrot.lane.b32.xlu0 %v4583, 16
      %v4608 = vpop.permute.xlu0 %4607
      %4609 = vrot.lane.b32.xlu0 %v4584, 16
      %v4610 = vpop.permute.xlu0 %4609
      %4611 = vrot.lane.b32.xlu0 %v4585, 16
      %v4612 = vpop.permute.xlu0 %4611
      %4613 = vrot.lane.b32.xlu0 %v4586, 16
      %v4614 = vpop.permute.xlu0 %4613
      %4615 = vrot.lane.b32.xlu0 %v4587, 16
      %v4616 = vpop.permute.xlu0 %4615
      %4617 = vrot.lane.b32.xlu0 %v4588, 16
      %v4618 = vpop.permute.xlu0 %4617
      %4619 = vrot.lane.b32.xlu0 %v4589, 16
      %v4620 = vpop.permute.xlu0 %4619
      %4621 = vrot.lane.b32.xlu0 %v4590, 16
      %v4622 = vpop.permute.xlu0 %4621
      %4623 = vrot.lane.b32.xlu0 %v4591, 16
      %v4624 = vpop.permute.xlu0 %4623
      %4625 = vrot.lane.b32.xlu0 %v4592, 16
      %v4626 = vpop.permute.xlu0 %4625
      %4627 = vrot.lane.b32.xlu0 %v4593, 16
      %v4628 = vpop.permute.xlu0 %4627
      %4629 = vrot.lane.b32.xlu0 %v4594, 16
      %v4630 = vpop.permute.xlu0 %4629
      %v4632 = vunpack.c.l.b16 %v4546
      %v4633 = vpack.c.b16 %v690, %v4632
      %4634 = vrot.lane.b32.xlu0 %v4581, 32
      %v4635 = vpop.permute.xlu0 %4634
      %4636 = vrot.lane.b32.xlu0 %v4582, 32
      %v4637 = vpop.permute.xlu0 %4636
      %4638 = vrot.lane.b32.xlu0 %v4583, 32
      %v4639 = vpop.permute.xlu0 %4638
      %4640 = vrot.lane.b32.xlu0 %v4584, 32
      %v4641 = vpop.permute.xlu0 %4640
      %4642 = vrot.lane.b32.xlu0 %v4585, 32
      %v4643 = vpop.permute.xlu0 %4642
      %4644 = vrot.lane.b32.xlu0 %v4586, 32
      %v4645 = vpop.permute.xlu0 %4644
      %4646 = vrot.lane.b32.xlu0 %v4587, 32
      %v4647 = vpop.permute.xlu0 %4646
      %4648 = vrot.lane.b32.xlu0 %v4588, 32
      %v4649 = vpop.permute.xlu0 %4648
      %4650 = vrot.lane.b32.xlu0 %v4589, 32
      %v4651 = vpop.permute.xlu0 %4650
      %4652 = vrot.lane.b32.xlu0 %v4590, 32
      %v4653 = vpop.permute.xlu0 %4652
      %4654 = vrot.lane.b32.xlu0 %v4591, 32
      %v4655 = vpop.permute.xlu0 %4654
      %4656 = vrot.lane.b32.xlu0 %v4592, 32
      %v4657 = vpop.permute.xlu0 %4656
      %4658 = vrot.lane.b32.xlu0 %v4593, 32
      %v4659 = vpop.permute.xlu0 %4658
      %4660 = vrot.lane.b32.xlu0 %v4594, 32
      %v4661 = vpop.permute.xlu0 %4660
      %4662 = vrot.lane.b32.xlu0 %v4595, 32
      %v4663 = vpop.permute.xlu0 %4662
      %4664 = vrot.lane.b32.xlu0 %v4633, 32
      %v4665 = vpop.permute.xlu0 %4664
      %v4667 = vunpack.c.l.b16 %v4528
      %v4668 = vpack.c.b16 %v762, %v4667
      %4669 = vrot.lane.b32.xlu0 %v4668, 48
      %v4670 = vpop.permute.xlu0 %4669
      %4671 = vrot.lane.b32.xlu0 %v4598, 48
      %v4672 = vpop.permute.xlu0 %4671
      %4673 = vrot.lane.b32.xlu0 %v4580, 48
      %v4674 = vpop.permute.xlu0 %4673
      %4675 = vrot.lane.b32.xlu0 %v4581, 48
      %v4676 = vpop.permute.xlu0 %4675
      %4677 = vrot.lane.b32.xlu0 %v4582, 48
      %v4678 = vpop.permute.xlu0 %4677
      %4679 = vrot.lane.b32.xlu0 %v4583, 48
      %v4680 = vpop.permute.xlu0 %4679
      %4681 = vrot.lane.b32.xlu0 %v4584, 48
      %v4682 = vpop.permute.xlu0 %4681
      %4683 = vrot.lane.b32.xlu0 %v4585, 48
      %v4684 = vpop.permute.xlu0 %4683
      %4685 = vrot.lane.b32.xlu0 %v4586, 48
      %v4686 = vpop.permute.xlu0 %4685
      %4687 = vrot.lane.b32.xlu0 %v4587, 48
      %v4688 = vpop.permute.xlu0 %4687
      %4689 = vrot.lane.b32.xlu0 %v4588, 48
      %v4690 = vpop.permute.xlu0 %4689
      %4691 = vrot.lane.b32.xlu0 %v4589, 48
      %v4692 = vpop.permute.xlu0 %4691
      %4693 = vrot.lane.b32.xlu0 %v4590, 48
      %v4694 = vpop.permute.xlu0 %4693
      %4695 = vrot.lane.b32.xlu0 %v4591, 48
      %v4696 = vpop.permute.xlu0 %4695
      %4697 = vrot.lane.b32.xlu0 %v4592, 48
      %v4698 = vpop.permute.xlu0 %4697
      %4699 = vrot.lane.b32.xlu0 %v4593, 48
      %v4700 = vpop.permute.xlu0 %4699
      %v4702 = vunpack.c.l.b16 %v4547
      %v4703 = vpack.c.b16 %v834, %v4702
      %4704 = vrot.lane.b32.xlu0 %v4582, 64
      %v4705 = vpop.permute.xlu0 %4704
      %4706 = vrot.lane.b32.xlu0 %v4583, 64
      %v4707 = vpop.permute.xlu0 %4706
      %4708 = vrot.lane.b32.xlu0 %v4584, 64
      %v4709 = vpop.permute.xlu0 %4708
      %4710 = vrot.lane.b32.xlu0 %v4585, 64
      %v4711 = vpop.permute.xlu0 %4710
      %4712 = vrot.lane.b32.xlu0 %v4586, 64
      %v4713 = vpop.permute.xlu0 %4712
      %4714 = vrot.lane.b32.xlu0 %v4587, 64
      %v4715 = vpop.permute.xlu0 %4714
      %4716 = vrot.lane.b32.xlu0 %v4588, 64
      %v4717 = vpop.permute.xlu0 %4716
      %4718 = vrot.lane.b32.xlu0 %v4589, 64
      %v4719 = vpop.permute.xlu0 %4718
      %4720 = vrot.lane.b32.xlu0 %v4590, 64
      %v4721 = vpop.permute.xlu0 %4720
      %4722 = vrot.lane.b32.xlu0 %v4591, 64
      %v4723 = vpop.permute.xlu0 %4722
      %4724 = vrot.lane.b32.xlu0 %v4592, 64
      %v4725 = vpop.permute.xlu0 %4724
      %4726 = vrot.lane.b32.xlu0 %v4593, 64
      %v4727 = vpop.permute.xlu0 %4726
      %4728 = vrot.lane.b32.xlu0 %v4594, 64
      %v4729 = vpop.permute.xlu0 %4728
      %4730 = vrot.lane.b32.xlu0 %v4595, 64
      %v4731 = vpop.permute.xlu0 %4730
      %4732 = vrot.lane.b32.xlu0 %v4633, 64
      %v4733 = vpop.permute.xlu0 %4732
      %4734 = vrot.lane.b32.xlu0 %v4703, 64
      %v4735 = vpop.permute.xlu0 %4734
      %v4738 = vsel %vm902, %v4580, %v4600
      %v4741 = vsel %vm902, %v4581, %v4602
      %v4744 = vsel %vm902, %v4582, %v4604
      %v4747 = vsel %vm902, %v4583, %v4606
      %v4750 = vsel %vm902, %v4584, %v4608
      %v4753 = vsel %vm902, %v4585, %v4610
      %v4756 = vsel %vm902, %v4586, %v4612
      %v4759 = vsel %vm902, %v4587, %v4614
      %v4762 = vsel %vm902, %v4588, %v4616
      %v4765 = vsel %vm902, %v4589, %v4618
      %v4768 = vsel %vm902, %v4590, %v4620
      %v4771 = vsel %vm902, %v4591, %v4622
      %v4774 = vsel %vm902, %v4592, %v4624
      %v4777 = vsel %vm902, %v4593, %v4626
      %v4780 = vsel %vm902, %v4594, %v4628
      %v4783 = vsel %vm902, %v4595, %v4630
      %v4785 = vsel %vm999, %v4738, %v4635
      %v4787 = vsel %vm999, %v4741, %v4637
      %v4789 = vsel %vm999, %v4744, %v4639
      %v4791 = vsel %vm999, %v4747, %v4641
      %v4793 = vsel %vm999, %v4750, %v4643
      %v4795 = vsel %vm999, %v4753, %v4645
      %v4797 = vsel %vm999, %v4756, %v4647
      %v4799 = vsel %vm999, %v4759, %v4649
      %v4801 = vsel %vm999, %v4762, %v4651
      %v4803 = vsel %vm999, %v4765, %v4653
      %v4805 = vsel %vm999, %v4768, %v4655
      %v4807 = vsel %vm999, %v4771, %v4657
      %v4809 = vsel %vm999, %v4774, %v4659
      %v4811 = vsel %vm999, %v4777, %v4661
      %v4813 = vsel %vm999, %v4780, %v4663
      %v4815 = vsel %vm999, %v4783, %v4665
      %v4817 = vsel %vm1064, %v4785, %v4670
      %v4819 = vsel %vm1064, %v4787, %v4672
      %v4821 = vsel %vm1064, %v4789, %v4674
      %v4823 = vsel %vm1064, %v4791, %v4676
      %v4825 = vsel %vm1064, %v4793, %v4678
      %v4827 = vsel %vm1064, %v4795, %v4680
      %v4829 = vsel %vm1064, %v4797, %v4682
      %v4831 = vsel %vm1064, %v4799, %v4684
      %v4833 = vsel %vm1064, %v4801, %v4686
      %v4835 = vsel %vm1064, %v4803, %v4688
      %v4837 = vsel %vm1064, %v4805, %v4690
      %v4839 = vsel %vm1064, %v4807, %v4692
      %v4841 = vsel %vm1064, %v4809, %v4694
      %v4843 = vsel %vm1064, %v4811, %v4696
      %v4845 = vsel %vm1064, %v4813, %v4698
      %v4847 = vsel %vm1064, %v4815, %v4700
      %v4849 = vsel %vm1129, %v4817, %v4705
      %v4851 = vsel %vm1129, %v4819, %v4707
      %v4853 = vsel %vm1129, %v4821, %v4709
      %v4855 = vsel %vm1129, %v4823, %v4711
      %v4857 = vsel %vm1129, %v4825, %v4713
      %v4859 = vsel %vm1129, %v4827, %v4715
      %v4861 = vsel %vm1129, %v4829, %v4717
      %v4863 = vsel %vm1129, %v4831, %v4719
      %v4865 = vsel %vm1129, %v4833, %v4721
      %v4867 = vsel %vm1129, %v4835, %v4723
      %v4869 = vsel %vm1129, %v4837, %v4725
      %v4871 = vsel %vm1129, %v4839, %v4727
      %v4873 = vsel %vm1129, %v4841, %v4729
      %v4875 = vsel %vm1129, %v4843, %v4731
      %v4877 = vsel %vm1129, %v4845, %v4733
      %v4879 = vsel %vm1129, %v4847, %v4735
      %vm4912 = vcmask 1045504
      %v4913 = vrot.slane %v4849, 2
      %v4914 = vrot.slane %v3046, 2
      %v4915 = vsel %vm4912, %v4913, %v4914
      %v4916 = vrot.slane %v4851, 2
      %v4917 = vrot.slane %v3048, 2
      %v4918 = vsel %vm4912, %v4916, %v4917
      %v4919 = vrot.slane %v4853, 2
      %v4920 = vrot.slane %v3050, 2
      %v4921 = vsel %vm4912, %v4919, %v4920
      %v4922 = vrot.slane %v4855, 2
      %v4923 = vrot.slane %v3052, 2
      %v4924 = vsel %vm4912, %v4922, %v4923
      %v4925 = vrot.slane %v4857, 2
      %v4926 = vrot.slane %v3054, 2
      %v4927 = vsel %vm4912, %v4925, %v4926
      %v4928 = vrot.slane %v4859, 2
      %v4929 = vrot.slane %v3056, 2
      %v4930 = vsel %vm4912, %v4928, %v4929
      %v4931 = vrot.slane %v4861, 2
      %v4932 = vrot.slane %v3058, 2
      %v4933 = vsel %vm4912, %v4931, %v4932
      %v4934 = vrot.slane %v4863, 2
      %v4935 = vrot.slane %v3060, 2
      %v4936 = vsel %vm4912, %v4934, %v4935
      %v4937 = vrot.slane %v4865, 2
      %v4938 = vrot.slane %v3062, 2
      %v4939 = vsel %vm4912, %v4937, %v4938
      %v4940 = vrot.slane %v4867, 2
      %v4941 = vrot.slane %v3064, 2
      %v4942 = vsel %vm4912, %v4940, %v4941
      %v4943 = vrot.slane %v4869, 2
      %v4944 = vrot.slane %v3066, 2
      %v4945 = vsel %vm4912, %v4943, %v4944
      %v4946 = vrot.slane %v4871, 2
      %v4947 = vrot.slane %v3068, 2
      %v4948 = vsel %vm4912, %v4946, %v4947
      %v4949 = vrot.slane %v4873, 2
      %v4950 = vrot.slane %v3070, 2
      %v4951 = vsel %vm4912, %v4949, %v4950
      %v4952 = vrot.slane %v4875, 2
      %v4953 = vrot.slane %v3072, 2
      %v4954 = vsel %vm4912, %v4952, %v4953
      %v4955 = vrot.slane %v4877, 2
      %v4956 = vrot.slane %v3074, 2
      %v4957 = vsel %vm4912, %v4955, %v4956
      %v4958 = vrot.slane %v4879, 2
      %v4959 = vrot.slane %v3076, 2
      %v4960 = vsel %vm4912, %v4958, %v4959
      %s4961 = scalar_lea.vmem %s3, 160
      %v4962 = vld [vmem:[%s4961] sm:$0xf]
      %v4963 = vld [vmem:[%s4961 + $0x4] sm:$0xf]
      %v4964 = vld [vmem:[%s4961 + $0x8] sm:$0xf]
      %v4965 = vld [vmem:[%s4961 + $0xc] sm:$0xf]
      %v4966 = vld [vmem:[%s4961 + $0x10] sm:$0xf]
      %v4967 = vld [vmem:[%s4961 + $0x14] sm:$0xf]
      %v4968 = vld [vmem:[%s4961 + $0x18] sm:$0xf]
      %v4969 = vld [vmem:[%s4961 + $0x1c] sm:$0xf]
      %v4970 = vld [vmem:[%s4961 + $0x20] sm:$0xf]
      %v4971 = vld [vmem:[%s4961 + $0x24] sm:$0xf]
      %v4982 = vunpack.c.l.b16 %v4962
      %v4983 = vunpack.c.l.b16 %v4963
      %v4984 = vunpack.c.l.b16 %v4964
      %v4985 = vunpack.c.l.b16 %v4965
      %v4986 = vunpack.c.l.b16 %v4966
      %v4987 = vunpack.c.l.b16 %v4967
      %v4988 = vunpack.c.l.b16 %v4968
      %v4989 = vunpack.c.l.b16 %v4969
      %v4990 = vunpack.c.l.b16 %v4970
      %v4991 = vunpack.c.l.b16 %v4971
      %v4992 = vpack.c.b16 %v4983, %v4982
      %v4993 = vpack.c.b16 %v4985, %v4984
      %v4994 = vpack.c.b16 %v4987, %v4986
      %v4995 = vpack.c.b16 %v4989, %v4988
      %v4996 = vpack.c.b16 %v4991, %v4990
      %v5003 = vsel %vm1847, %v4915, 0
      %v5006 = vsel %vm1847, %v4918, 0
      %v5009 = vsel %vm1847, %v4921, 0
      %v5012 = vsel %vm1847, %v4924, 0
      %v5015 = vsel %vm1847, %v4927, 0
      %v5018 = vsel %vm1847, %v4930, 0
      %v5021 = vsel %vm1847, %v4933, 0
      %v5024 = vsel %vm1847, %v4936, 0
      %v5027 = vsel %vm1847, %v4939, 0
      %v5030 = vsel %vm1847, %v4942, 0
      %v5033 = vsel %vm1847, %v4945, 0
      %v5036 = vsel %vm1847, %v4948, 0
      %v5039 = vsel %vm1847, %v4951, 0
      %v5042 = vsel %vm1847, %v4954, 0
      %v5045 = vsel %vm1847, %v4957, 0
      %v5048 = vsel %vm1847, %v4960, 0
      %5050 = vmatprep.subr.bf16.mxu0 0
      %5051 = vmatpush1.bf16.msra.mxu0 %v4992
      %5052 = vmatprep.subr.bf16.mxu0 0
      %5053 = vmatpush1.bf16.msra.mxu0 %v4993
      %5054 = vmatprep.subr.bf16.mxu0 0
      %5055 = vmatpush1.bf16.msra.mxu0 %v4994
      %5056 = vmatprep.subr.bf16.mxu0 0
      %5057 = vmatpush1.bf16.msra.mxu0 %v4995
      %5058 = vmatprep.subr.bf16.mxu0 0
      %5059 = vmatpush1.bf16.msra.mxu0 %v4996
      %5060 = vmatprep.subr.bf16.mxu0 0
      %5061 = vmatpush1.bf16.msra.mxu0 0
      %5062 = vmatprep.subr.bf16.mxu0 0
      %5063 = vmatpush1.bf16.msra.mxu0 0
      %5064 = vmatprep.subr.bf16.mxu0 0
      %5065 = vmatpush1.bf16.msra.mxu0 0
      %5066 = vmatprep.subr.bf16.mxu0 0
      %5067 = vmatpush1.bf16.msra.mxu0 0
      %5068 = vmatprep.subr.bf16.mxu0 0
      %5069 = vmatpush1.bf16.msra.mxu0 0
      %5070 = vmatprep.subr.bf16.mxu0 0
      %5071 = vmatpush1.bf16.msra.mxu0 0
      %5072 = vmatprep.subr.bf16.mxu0 0
      %5073 = vmatpush1.bf16.msra.mxu0 0
      %5074 = vmatprep.subr.bf16.mxu0 0
      %5075 = vmatpush1.bf16.msra.mxu0 0
      %5076 = vmatprep.subr.bf16.mxu0 0
      %5077 = vmatpush1.bf16.msra.mxu0 0
      %5078 = vmatprep.subr.bf16.mxu0 0
      %5079 = vmatpush1.bf16.msra.mxu0 0
      %5080 = vmatprep.subr.bf16.mxu0 0
      %5081 = vmatpush1.bf16.msra.mxu0 0
      %5082 = vmatprep.mubr.bf16.mxu0 0
      %5083 = vmatmul.mubr.bf16.gmra.mrb[0].mxu0 %v5003
      %v5084 = vpop.f32.mrb[0].mxu0
      %v5085 = vadd.f32 0.0, %v5084
      %v5086 = vpop.f32.mrb[0].mxu0
      %v5087 = vpop.f32.mrb[0].mxu0
      %v5088 = vadd.f32 0.0, %v5087
      %v5089 = vpop.f32.mrb[0].mxu0
      %5090 = vmatprep.mubr.bf16.mxu0 0
      %5091 = vmatmul.mubr.bf16.gmra.mrb[0].mxu0 %v5006
      %v5092 = vpop.f32.mrb[0].mxu0
      %v5093 = vadd.f32 0.0, %v5092
      %v5094 = vpop.f32.mrb[0].mxu0
      %v5095 = vpop.f32.mrb[0].mxu0
      %v5096 = vadd.f32 0.0, %v5095
      %v5097 = vpop.f32.mrb[0].mxu0
      %5098 = vmatprep.mubr.bf16.mxu0 0
      %5099 = vmatmul.mubr.bf16.gmra.mrb[0].mxu0 %v5009
      %v5100 = vpop.f32.mrb[0].mxu0
      %v5101 = vadd.f32 0.0, %v5100
      %v5102 = vpop.f32.mrb[0].mxu0
      %v5103 = vpop.f32.mrb[0].mxu0
      %v5104 = vadd.f32 0.0, %v5103
      %v5105 = vpop.f32.mrb[0].mxu0
      %5106 = vmatprep.mubr.bf16.mxu0 0
      %5107 = vmatmul.mubr.bf16.gmra.mrb[0].mxu0 %v5012
      %v5108 = vpop.f32.mrb[0].mxu0
      %v5109 = vadd.f32 0.0, %v5108
      %v5110 = vpop.f32.mrb[0].mxu0
      %v5111 = vpop.f32.mrb[0].mxu0
      %v5112 = vadd.f32 0.0, %v5111
      %v5113 = vpop.f32.mrb[0].mxu0
      %5114 = vmatprep.mubr.bf16.mxu0 0
      %5115 = vmatmul.mubr.bf16.gmra.mrb[0].mxu0 %v5015
      %v5116 = vpop.f32.mrb[0].mxu0
      %v5117 = vadd.f32 0.0, %v5116
      %v5118 = vpop.f32.mrb[0].mxu0
      %v5119 = vpop.f32.mrb[0].mxu0
      %v5120 = vadd.f32 0.0, %v5119
      %v5121 = vpop.f32.mrb[0].mxu0
      %5122 = vmatprep.mubr.bf16.mxu0 0
      %5123 = vmatmul.mubr.bf16.gmra.mrb[0].mxu0 %v5018
      %v5124 = vpop.f32.mrb[0].mxu0
      %v5125 = vadd.f32 0.0, %v5124
      %v5126 = vpop.f32.mrb[0].mxu0
      %v5127 = vpop.f32.mrb[0].mxu0
      %v5128 = vadd.f32 0.0, %v5127
      %v5129 = vpop.f32.mrb[0].mxu0
      %5130 = vmatprep.mubr.bf16.mxu0 0
      %5131 = vmatmul.mubr.bf16.gmra.mrb[0].mxu0 %v5021
      %v5132 = vpop.f32.mrb[0].mxu0
      %v5133 = vadd.f32 0.0, %v5132
      %v5134 = vpop.f32.mrb[0].mxu0
      %v5135 = vpop.f32.mrb[0].mxu0
      %v5136 = vadd.f32 0.0, %v5135
      %v5137 = vpop.f32.mrb[0].mxu0
      %5138 = vmatprep.mubr.bf16.mxu0 0
      %5139 = vmatmul.mubr.bf16.gmra.mrb[0].mxu0 %v5024
      %v5140 = vpop.f32.mrb[0].mxu0
      %v5141 = vadd.f32 0.0, %v5140
      %v5142 = vpop.f32.mrb[0].mxu0
      %v5143 = vpop.f32.mrb[0].mxu0
      %v5144 = vadd.f32 0.0, %v5143
      %v5145 = vpop.f32.mrb[0].mxu0
      %5146 = vmatprep.mubr.bf16.mxu0 0
      %5147 = vmatmul.mubr.bf16.gmra.mrb[0].mxu0 %v5027
      %v5148 = vpop.f32.mrb[0].mxu0
      %v5149 = vadd.f32 0.0, %v5148
      %v5150 = vpop.f32.mrb[0].mxu0
      %v5151 = vpop.f32.mrb[0].mxu0
      %v5152 = vadd.f32 0.0, %v5151
      %v5153 = vpop.f32.mrb[0].mxu0
      %5154 = vmatprep.mubr.bf16.mxu0 0
      %5155 = vmatmul.mubr.bf16.gmra.mrb[0].mxu0 %v5030
      %v5156 = vpop.f32.mrb[0].mxu0
      %v5157 = vadd.f32 0.0, %v5156
      %v5158 = vpop.f32.mrb[0].mxu0
      %v5159 = vpop.f32.mrb[0].mxu0
      %v5160 = vadd.f32 0.0, %v5159
      %v5161 = vpop.f32.mrb[0].mxu0
      %5162 = vmatprep.mubr.bf16.mxu0 0
      %5163 = vmatmul.mubr.bf16.gmra.mrb[0].mxu0 %v5033
      %v5164 = vpop.f32.mrb[0].mxu0
      %v5165 = vadd.f32 0.0, %v5164
      %v5166 = vpop.f32.mrb[0].mxu0
      %v5167 = vpop.f32.mrb[0].mxu0
      %v5168 = vadd.f32 0.0, %v5167
      %v5169 = vpop.f32.mrb[0].mxu0
      %5170 = vmatprep.mubr.bf16.mxu0 0
      %5171 = vmatmul.mubr.bf16.gmra.mrb[0].mxu0 %v5036
      %v5172 = vpop.f32.mrb[0].mxu0
      %v5173 = vadd.f32 0.0, %v5172
      %v5174 = vpop.f32.mrb[0].mxu0
      %v5175 = vpop.f32.mrb[0].mxu0
      %v5176 = vadd.f32 0.0, %v5175
      %v5177 = vpop.f32.mrb[0].mxu0
      %5178 = vmatprep.mubr.bf16.mxu0 0
      %5179 = vmatmul.mubr.bf16.gmra.mrb[0].mxu0 %v5039
      %v5180 = vpop.f32.mrb[0].mxu0
      %v5181 = vadd.f32 0.0, %v5180
      %v5182 = vpop.f32.mrb[0].mxu0
      %v5183 = vpop.f32.mrb[0].mxu0
      %v5184 = vadd.f32 0.0, %v5183
      %v5185 = vpop.f32.mrb[0].mxu0
      %5186 = vmatprep.mubr.bf16.mxu0 0
      %5187 = vmatmul.mubr.bf16.gmra.mrb[0].mxu0 %v5042
      %v5188 = vpop.f32.mrb[0].mxu0
      %v5189 = vadd.f32 0.0, %v5188
      %v5190 = vpop.f32.mrb[0].mxu0
      %v5191 = vpop.f32.mrb[0].mxu0
      %v5192 = vadd.f32 0.0, %v5191
      %v5193 = vpop.f32.mrb[0].mxu0
      %5194 = vmatprep.mubr.bf16.mxu0 0
      %5195 = vmatmul.mubr.bf16.gmra.mrb[0].mxu0 %v5045
      %v5196 = vpop.f32.mrb[0].mxu0
      %v5197 = vadd.f32 0.0, %v5196
      %v5198 = vpop.f32.mrb[0].mxu0
      %v5199 = vpop.f32.mrb[0].mxu0
      %v5200 = vadd.f32 0.0, %v5199
      %v5201 = vpop.f32.mrb[0].mxu0
      %5202 = vmatprep.mubr.bf16.mxu0 0
      %5203 = vmatmul.mubr.bf16.gmra.mrb[0].mxu0 %v5048
      %v5204 = vpop.f32.mrb[0].mxu0
      %v5205 = vadd.f32 0.0, %v5204
      %v5206 = vpop.f32.mrb[0].mxu0
      %v5207 = vpop.f32.mrb[0].mxu0
      %v5208 = vadd.f32 0.0, %v5207
      %v5209 = vpop.f32.mrb[0].mxu0
      %5210 = vdwg.mxu0
      %v5211 = vadd.f32 %v4496, %v5085
      %v5212 = vadd.f32 %v4497, %v5088
      %v5213 = vadd.f32 %v4498, %v5093
      %v5214 = vadd.f32 %v4499, %v5096
      %v5215 = vadd.f32 %v4500, %v5101
      %v5216 = vadd.f32 %v4501, %v5104
      %v5217 = vadd.f32 %v4502, %v5109
      %v5218 = vadd.f32 %v4503, %v5112
      %v5219 = vadd.f32 %v4504, %v5117
      %v5220 = vadd.f32 %v4505, %v5120
      %v5221 = vadd.f32 %v4506, %v5125
      %v5222 = vadd.f32 %v4507, %v5128
      %v5223 = vadd.f32 %v4508, %v5133
      %v5224 = vadd.f32 %v4509, %v5136
      %v5225 = vadd.f32 %v4510, %v5141
      %v5226 = vadd.f32 %v4511, %v5144
      %v5227 = vadd.f32 %v4512, %v5149
      %v5228 = vadd.f32 %v4513, %v5152
      %v5229 = vadd.f32 %v4514, %v5157
      %v5230 = vadd.f32 %v4515, %v5160
      %v5231 = vadd.f32 %v4516, %v5165
      %v5232 = vadd.f32 %v4517, %v5168
      %v5233 = vadd.f32 %v4518, %v5173
      %v5234 = vadd.f32 %v4519, %v5176
      %v5235 = vadd.f32 %v4520, %v5181
      %v5236 = vadd.f32 %v4521, %v5184
      %v5237 = vadd.f32 %v4522, %v5189
      %v5238 = vadd.f32 %v4523, %v5192
      %v5239 = vadd.f32 %v4524, %v5197
      %v5240 = vadd.f32 %v4525, %v5200
      %v5241 = vadd.f32 %v4526, %v5205
      %v5242 = vadd.f32 %v4527, %v5208
      %v5243 = vld [vmem:[%s4] sm:$0x1]
      %v5245 = vlaneseq
      %v5246 = vshrl.u32 %v5245, 7
      %v5247 = vsub.s32 0, %v5246
      %v5248 = vrot.slane %v5243, %v5247
      %v5252 = vunpack.c.l.b16 %v1291
      %v5253 = vunpack.c.l.b16 %v1292
      %v5254 = vpack.c.b16 %v5253, %v5252
      %v5256 = vsel %vm902, %v1229, 0
      %v5258 = vsel %vm902, %v1232, 0
      %v5260 = vsel %vm902, %v1235, 0
      %v5262 = vsel %vm902, %v1238, 0
      %v5264 = vsel %vm902, %v1241, 0
      %v5266 = vsel %vm902, %v1244, 0
      %v5268 = vsel %vm902, %v1247, 0
      %v5270 = vsel %vm902, %v1250, 0
      %v5272 = vsel %vm902, %v1253, 0
      %v5274 = vsel %vm902, %v1256, 0
      %v5276 = vsel %vm902, %v1259, 0
      %v5278 = vsel %vm902, %v1262, 0
      %v5280 = vsel %vm902, %v1265, 0
      %v5282 = vsel %vm902, %v1268, 0
      %v5284 = vsel %vm902, %v1271, 0
      %v5286 = vsel %vm902, %v1274, 0
      %5288 = vmatprep.subr.bf16.mxu0 0
      %5289 = vmatpush1.bf16.msra.mxu0 %v5254
      %5290 = vmatprep.subr.bf16.mxu0 0
      %5291 = vmatpush1.bf16.msra.mxu0 0
      %5292 = vmatprep.subr.bf16.mxu0 0
      %5293 = vmatpush1.bf16.msra.mxu0 0
      %5294 = vmatprep.subr.bf16.mxu0 0
      %5295 = vmatpush1.bf16.msra.mxu0 0
      %5296 = vmatprep.subr.bf16.mxu0 0
      %5297 = vmatpush1.bf16.msra.mxu0 0
      %5298 = vmatprep.subr.bf16.mxu0 0
      %5299 = vmatpush1.bf16.msra.mxu0 0
      %5300 = vmatprep.subr.bf16.mxu0 0
      %5301 = vmatpush1.bf16.msra.mxu0 0
      %5302 = vmatprep.subr.bf16.mxu0 0
      %5303 = vmatpush1.bf16.msra.mxu0 0
      %5304 = vmatprep.subr.bf16.mxu0 0
      %5305 = vmatpush1.bf16.msra.mxu0 0
      %5306 = vmatprep.subr.bf16.mxu0 0
      %5307 = vmatpush1.bf16.msra.mxu0 0
      %5308 = vmatprep.subr.bf16.mxu0 0
      %5309 = vmatpush1.bf16.msra.mxu0 0
      %5310 = vmatprep.subr.bf16.mxu0 0
      %5311 = vmatpush1.bf16.msra.mxu0 0
      %5312 = vmatprep.subr.bf16.mxu0 0
      %5313 = vmatpush1.bf16.msra.mxu0 0
      %5314 = vmatprep.subr.bf16.mxu0 0
      %5315 = vmatpush1.bf16.msra.mxu0 0
      %5316 = vmatprep.subr.bf16.mxu0 0
      %5317 = vmatpush1.bf16.msra.mxu0 0
      %5318 = vmatprep.subr.bf16.mxu0 0
      %5319 = vmatpush1.bf16.msra.mxu0 0
      %5320 = vmatprep.mubr.bf16.mxu0 0
      %5321 = vmatmul.mubr.bf16.gmra.mrb[0].mxu0 %v5256
      %v5322 = vpop.f32.mrb[0].mxu0
      %v5323 = vadd.f32 %v5248, %v5322
      %v5324 = vpop.f32.mrb[0].mxu0
      %v5325 = vpop.f32.mrb[0].mxu0
      %v5326 = vadd.f32 %v5248, %v5325
      %v5327 = vpop.f32.mrb[0].mxu0
      %5328 = vmatprep.mubr.bf16.mxu0 0
      %5329 = vmatmul.mubr.bf16.gmra.mrb[0].mxu0 %v5258
      %v5330 = vpop.f32.mrb[0].mxu0
      %v5331 = vadd.f32 %v5248, %v5330
      %v5332 = vpop.f32.mrb[0].mxu0
      %v5333 = vpop.f32.mrb[0].mxu0
      %v5334 = vadd.f32 %v5248, %v5333
      %v5335 = vpop.f32.mrb[0].mxu0
      %5336 = vmatprep.mubr.bf16.mxu0 0
      %5337 = vmatmul.mubr.bf16.gmra.mrb[0].mxu0 %v5260
      %v5338 = vpop.f32.mrb[0].mxu0
      %v5339 = vadd.f32 %v5248, %v5338
      %v5340 = vpop.f32.mrb[0].mxu0
      %v5341 = vpop.f32.mrb[0].mxu0
      %v5342 = vadd.f32 %v5248, %v5341
      %v5343 = vpop.f32.mrb[0].mxu0
      %5344 = vmatprep.mubr.bf16.mxu0 0
      %5345 = vmatmul.mubr.bf16.gmra.mrb[0].mxu0 %v5262
      %v5346 = vpop.f32.mrb[0].mxu0
      %v5347 = vadd.f32 %v5248, %v5346
      %v5348 = vpop.f32.mrb[0].mxu0
      %v5349 = vpop.f32.mrb[0].mxu0
      %v5350 = vadd.f32 %v5248, %v5349
      %v5351 = vpop.f32.mrb[0].mxu0
      %5352 = vmatprep.mubr.bf16.mxu0 0
      %5353 = vmatmul.mubr.bf16.gmra.mrb[0].mxu0 %v5264
      %v5354 = vpop.f32.mrb[0].mxu0
      %v5355 = vadd.f32 %v5248, %v5354
      %v5356 = vpop.f32.mrb[0].mxu0
      %v5357 = vpop.f32.mrb[0].mxu0
      %v5358 = vadd.f32 %v5248, %v5357
      %v5359 = vpop.f32.mrb[0].mxu0
      %5360 = vmatprep.mubr.bf16.mxu0 0
      %5361 = vmatmul.mubr.bf16.gmra.mrb[0].mxu0 %v5266
      %v5362 = vpop.f32.mrb[0].mxu0
      %v5363 = vadd.f32 %v5248, %v5362
      %v5364 = vpop.f32.mrb[0].mxu0
      %v5365 = vpop.f32.mrb[0].mxu0
      %v5366 = vadd.f32 %v5248, %v5365
      %v5367 = vpop.f32.mrb[0].mxu0
      %5368 = vmatprep.mubr.bf16.mxu0 0
      %5369 = vmatmul.mubr.bf16.gmra.mrb[0].mxu0 %v5268
      %v5370 = vpop.f32.mrb[0].mxu0
      %v5371 = vadd.f32 %v5248, %v5370
      %v5372 = vpop.f32.mrb[0].mxu0
      %v5373 = vpop.f32.mrb[0].mxu0
      %v5374 = vadd.f32 %v5248, %v5373
      %v5375 = vpop.f32.mrb[0].mxu0
      %5376 = vmatprep.mubr.bf16.mxu0 0
      %5377 = vmatmul.mubr.bf16.gmra.mrb[0].mxu0 %v5270
      %v5378 = vpop.f32.mrb[0].mxu0
      %v5379 = vadd.f32 %v5248, %v5378
      %v5380 = vpop.f32.mrb[0].mxu0
      %v5381 = vpop.f32.mrb[0].mxu0
      %v5382 = vadd.f32 %v5248, %v5381
      %v5383 = vpop.f32.mrb[0].mxu0
      %5384 = vmatprep.mubr.bf16.mxu0 0
      %5385 = vmatmul.mubr.bf16.gmra.mrb[0].mxu0 %v5272
      %v5386 = vpop.f32.mrb[0].mxu0
      %v5387 = vadd.f32 %v5248, %v5386
      %v5388 = vpop.f32.mrb[0].mxu0
      %v5389 = vpop.f32.mrb[0].mxu0
      %v5390 = vadd.f32 %v5248, %v5389
      %v5391 = vpop.f32.mrb[0].mxu0
      %5392 = vmatprep.mubr.bf16.mxu0 0
      %5393 = vmatmul.mubr.bf16.gmra.mrb[0].mxu0 %v5274
      %v5394 = vpop.f32.mrb[0].mxu0
      %v5395 = vadd.f32 %v5248, %v5394
      %v5396 = vpop.f32.mrb[0].mxu0
      %v5397 = vpop.f32.mrb[0].mxu0
      %v5398 = vadd.f32 %v5248, %v5397
      %v5399 = vpop.f32.mrb[0].mxu0
      %5400 = vmatprep.mubr.bf16.mxu0 0
      %5401 = vmatmul.mubr.bf16.gmra.mrb[0].mxu0 %v5276
      %v5402 = vpop.f32.mrb[0].mxu0
      %v5403 = vadd.f32 %v5248, %v5402
      %v5404 = vpop.f32.mrb[0].mxu0
      %v5405 = vpop.f32.mrb[0].mxu0
      %v5406 = vadd.f32 %v5248, %v5405
      %v5407 = vpop.f32.mrb[0].mxu0
      %5408 = vmatprep.mubr.bf16.mxu0 0
      %5409 = vmatmul.mubr.bf16.gmra.mrb[0].mxu0 %v5278
      %v5410 = vpop.f32.mrb[0].mxu0
      %v5411 = vadd.f32 %v5248, %v5410
      %v5412 = vpop.f32.mrb[0].mxu0
      %v5413 = vpop.f32.mrb[0].mxu0
      %v5414 = vadd.f32 %v5248, %v5413
      %v5415 = vpop.f32.mrb[0].mxu0
      %5416 = vmatprep.mubr.bf16.mxu0 0
      %5417 = vmatmul.mubr.bf16.gmra.mrb[0].mxu0 %v5280
      %v5418 = vpop.f32.mrb[0].mxu0
      %v5419 = vadd.f32 %v5248, %v5418
      %v5420 = vpop.f32.mrb[0].mxu0
      %v5421 = vpop.f32.mrb[0].mxu0
      %v5422 = vadd.f32 %v5248, %v5421
      %v5423 = vpop.f32.mrb[0].mxu0
      %5424 = vmatprep.mubr.bf16.mxu0 0
      %5425 = vmatmul.mubr.bf16.gmra.mrb[0].mxu0 %v5282
      %v5426 = vpop.f32.mrb[0].mxu0
      %v5427 = vadd.f32 %v5248, %v5426
      %v5428 = vpop.f32.mrb[0].mxu0
      %v5429 = vpop.f32.mrb[0].mxu0
      %v5430 = vadd.f32 %v5248, %v5429
      %v5431 = vpop.f32.mrb[0].mxu0
      %5432 = vmatprep.mubr.bf16.mxu0 0
      %5433 = vmatmul.mubr.bf16.gmra.mrb[0].mxu0 %v5284
      %v5434 = vpop.f32.mrb[0].mxu0
      %v5435 = vadd.f32 %v5248, %v5434
      %v5436 = vpop.f32.mrb[0].mxu0
      %v5437 = vpop.f32.mrb[0].mxu0
      %v5438 = vadd.f32 %v5248, %v5437
      %v5439 = vpop.f32.mrb[0].mxu0
      %5440 = vmatprep.mubr.bf16.mxu0 0
      %5441 = vmatmul.mubr.bf16.gmra.mrb[0].mxu0 %v5286
      %v5442 = vpop.f32.mrb[0].mxu0
      %v5443 = vadd.f32 %v5248, %v5442
      %v5444 = vpop.f32.mrb[0].mxu0
      %v5445 = vpop.f32.mrb[0].mxu0
      %v5446 = vadd.f32 %v5248, %v5445
      %v5447 = vpop.f32.mrb[0].mxu0
      %5448 = vdwg.mxu0
      %v5449 = vld [vmem:[%s5] sm:$0x1]
      %v5451 = vlaneseq
      %v5452 = vshrl.u32 %v5451, 7
      %v5453 = vsub.s32 0, %v5452
      %v5454 = vrot.slane %v5449, %v5453
      %v5456 = vadd.f32 %v3818, %v5454
      %v5457 = vadd.f32 %v3819, %v5454
      %v5458 = vadd.f32 %v3820, %v5454
      %v5459 = vadd.f32 %v3821, %v5454
      %v5460 = vadd.f32 %v3822, %v5454
      %v5461 = vadd.f32 %v3823, %v5454
      %v5462 = vadd.f32 %v3824, %v5454
      %v5463 = vadd.f32 %v3825, %v5454
      %v5464 = vadd.f32 %v3826, %v5454
      %v5465 = vadd.f32 %v3827, %v5454
      %v5466 = vadd.f32 %v3828, %v5454
      %v5467 = vadd.f32 %v3829, %v5454
      %v5468 = vadd.f32 %v3830, %v5454
      %v5469 = vadd.f32 %v3831, %v5454
      %v5470 = vadd.f32 %v3832, %v5454
      %v5471 = vadd.f32 %v3833, %v5454
      %v5472 = vadd.f32 %v3834, %v5454
      %v5473 = vadd.f32 %v3835, %v5454
      %v5474 = vadd.f32 %v3836, %v5454
      %v5475 = vadd.f32 %v3837, %v5454
      %v5476 = vadd.f32 %v3838, %v5454
      %v5477 = vadd.f32 %v3839, %v5454
      %v5478 = vadd.f32 %v3840, %v5454
      %v5479 = vadd.f32 %v3841, %v5454
      %v5480 = vadd.f32 %v3842, %v5454
      %v5481 = vadd.f32 %v3843, %v5454
      %v5482 = vadd.f32 %v3844, %v5454
      %v5483 = vadd.f32 %v3845, %v5454
      %v5484 = vadd.f32 %v3846, %v5454
      %v5485 = vadd.f32 %v3847, %v5454
      %v5486 = vadd.f32 %v3848, %v5454
      %v5487 = vadd.f32 %v3849, %v5454
      %v5488 = vld [vmem:[%s6] sm:$0x1]
      %v5490 = vlaneseq
      %v5491 = vshrl.u32 %v5490, 7
      %v5492 = vsub.s32 0, %v5491
      %v5493 = vrot.slane %v5488, %v5492
      %v5495 = vadd.f32 %v5211, %v5493
      %v5496 = vadd.f32 %v5212, %v5493
      %v5497 = vadd.f32 %v5213, %v5493
      %v5498 = vadd.f32 %v5214, %v5493
      %v5499 = vadd.f32 %v5215, %v5493
      %v5500 = vadd.f32 %v5216, %v5493
      %v5501 = vadd.f32 %v5217, %v5493
      %v5502 = vadd.f32 %v5218, %v5493
      %v5503 = vadd.f32 %v5219, %v5493
      %v5504 = vadd.f32 %v5220, %v5493
      %v5505 = vadd.f32 %v5221, %v5493
      %v5506 = vadd.f32 %v5222, %v5493
      %v5507 = vadd.f32 %v5223, %v5493
      %v5508 = vadd.f32 %v5224, %v5493
      %v5509 = vadd.f32 %v5225, %v5493
      %v5510 = vadd.f32 %v5226, %v5493
      %v5511 = vadd.f32 %v5227, %v5493
      %v5512 = vadd.f32 %v5228, %v5493
      %v5513 = vadd.f32 %v5229, %v5493
      %v5514 = vadd.f32 %v5230, %v5493
      %v5515 = vadd.f32 %v5231, %v5493
      %v5516 = vadd.f32 %v5232, %v5493
      %v5517 = vadd.f32 %v5233, %v5493
      %v5518 = vadd.f32 %v5234, %v5493
      %v5519 = vadd.f32 %v5235, %v5493
      %v5520 = vadd.f32 %v5236, %v5493
      %v5521 = vadd.f32 %v5237, %v5493
      %v5522 = vadd.f32 %v5238, %v5493
      %v5523 = vadd.f32 %v5239, %v5493
      %v5524 = vadd.f32 %v5240, %v5493
      %v5525 = vadd.f32 %v5241, %v5493
      %v5526 = vadd.f32 %v5242, %v5493
      %v5527 = vsel %vm902, %v5323, 0.0
      %v5528 = vsel %vm902, %v5326, 0.0
      %v5529 = vadd.f32 %v5527, %v5528
      %v5530 = vsel %vm902, %v5331, 0.0
      %v5531 = vadd.f32 %v5529, %v5530
      %v5532 = vsel %vm902, %v5334, 0.0
      %v5533 = vadd.f32 %v5531, %v5532
      %v5534 = vsel %vm902, %v5339, 0.0
      %v5535 = vadd.f32 %v5533, %v5534
      %v5536 = vsel %vm902, %v5342, 0.0
      %v5537 = vadd.f32 %v5535, %v5536
      %v5538 = vsel %vm902, %v5347, 0.0
      %v5539 = vadd.f32 %v5537, %v5538
      %v5540 = vsel %vm902, %v5350, 0.0
      %v5541 = vadd.f32 %v5539, %v5540
      %v5542 = vsel %vm902, %v5355, 0.0
      %v5543 = vadd.f32 %v5541, %v5542
      %v5544 = vsel %vm902, %v5358, 0.0
      %v5545 = vadd.f32 %v5543, %v5544
      %v5546 = vsel %vm902, %v5363, 0.0
      %v5547 = vadd.f32 %v5545, %v5546
      %v5548 = vsel %vm902, %v5366, 0.0
      %v5549 = vadd.f32 %v5547, %v5548
      %v5550 = vsel %vm902, %v5371, 0.0
      %v5551 = vadd.f32 %v5549, %v5550
      %v5552 = vsel %vm902, %v5374, 0.0
      %v5553 = vadd.f32 %v5551, %v5552
      %v5554 = vsel %vm902, %v5379, 0.0
      %v5555 = vadd.f32 %v5553, %v5554
      %v5556 = vsel %vm902, %v5382, 0.0
      %v5557 = vadd.f32 %v5555, %v5556
      %v5558 = vsel %vm902, %v5387, 0.0
      %v5559 = vadd.f32 %v5557, %v5558
      %v5560 = vsel %vm902, %v5390, 0.0
      %v5561 = vadd.f32 %v5559, %v5560
      %v5562 = vsel %vm902, %v5395, 0.0
      %v5563 = vadd.f32 %v5561, %v5562
      %v5564 = vsel %vm902, %v5398, 0.0
      %v5565 = vadd.f32 %v5563, %v5564
      %v5566 = vsel %vm902, %v5403, 0.0
      %v5567 = vadd.f32 %v5565, %v5566
      %v5568 = vsel %vm902, %v5406, 0.0
      %v5569 = vadd.f32 %v5567, %v5568
      %v5570 = vsel %vm902, %v5411, 0.0
      %v5571 = vadd.f32 %v5569, %v5570
      %v5572 = vsel %vm902, %v5414, 0.0
      %v5573 = vadd.f32 %v5571, %v5572
      %v5574 = vsel %vm902, %v5419, 0.0
      %v5575 = vadd.f32 %v5573, %v5574
      %v5576 = vsel %vm902, %v5422, 0.0
      %v5577 = vadd.f32 %v5575, %v5576
      %v5578 = vsel %vm902, %v5427, 0.0
      %v5579 = vadd.f32 %v5577, %v5578
      %v5580 = vsel %vm902, %v5430, 0.0
      %v5581 = vadd.f32 %v5579, %v5580
      %v5582 = vsel %vm902, %v5435, 0.0
      %v5583 = vadd.f32 %v5581, %v5582
      %v5584 = vsel %vm902, %v5438, 0.0
      %v5585 = vadd.f32 %v5583, %v5584
      %v5586 = vsel %vm902, %v5443, 0.0
      %v5587 = vadd.f32 %v5585, %v5586
      %v5588 = vsel %vm902, %v5446, 0.0
      %v5589 = vadd.f32 %v5587, %v5588
      %v5590 = vrot.slane %v5589, 4
      %v5591 = vadd.f32 %v5589, %v5590
      %v5592 = vrot.slane %v5591, 2
      %v5593 = vadd.f32 %v5591, %v5592
      %v5594 = vrot.slane %v5593, 1
      %v5595 = vadd.f32 %v5593, %v5594
      %v5596 = vsel %vm902, %v5456, 0.0
      %v5597 = vsel %vm902, %v5457, 0.0
      %v5598 = vadd.f32 %v5596, %v5597
      %v5599 = vsel %vm902, %v5458, 0.0
      %v5600 = vadd.f32 %v5598, %v5599
      %v5601 = vsel %vm902, %v5459, 0.0
      %v5602 = vadd.f32 %v5600, %v5601
      %v5603 = vsel %vm902, %v5460, 0.0
      %v5604 = vadd.f32 %v5602, %v5603
      %v5605 = vsel %vm902, %v5461, 0.0
      %v5606 = vadd.f32 %v5604, %v5605
      %v5607 = vsel %vm902, %v5462, 0.0
      %v5608 = vadd.f32 %v5606, %v5607
      %v5609 = vsel %vm902, %v5463, 0.0
      %v5610 = vadd.f32 %v5608, %v5609
      %v5611 = vsel %vm902, %v5464, 0.0
      %v5612 = vadd.f32 %v5610, %v5611
      %v5613 = vsel %vm902, %v5465, 0.0
      %v5614 = vadd.f32 %v5612, %v5613
      %v5615 = vsel %vm902, %v5466, 0.0
      %v5616 = vadd.f32 %v5614, %v5615
      %v5617 = vsel %vm902, %v5467, 0.0
      %v5618 = vadd.f32 %v5616, %v5617
      %v5619 = vsel %vm902, %v5468, 0.0
      %v5620 = vadd.f32 %v5618, %v5619
      %v5621 = vsel %vm902, %v5469, 0.0
      %v5622 = vadd.f32 %v5620, %v5621
      %v5623 = vsel %vm902, %v5470, 0.0
      %v5624 = vadd.f32 %v5622, %v5623
      %v5625 = vsel %vm902, %v5471, 0.0
      %v5626 = vadd.f32 %v5624, %v5625
      %v5627 = vsel %vm902, %v5472, 0.0
      %v5628 = vadd.f32 %v5626, %v5627
      %v5629 = vsel %vm902, %v5473, 0.0
      %v5630 = vadd.f32 %v5628, %v5629
      %v5631 = vsel %vm902, %v5474, 0.0
      %v5632 = vadd.f32 %v5630, %v5631
      %v5633 = vsel %vm902, %v5475, 0.0
      %v5634 = vadd.f32 %v5632, %v5633
      %v5635 = vsel %vm902, %v5476, 0.0
      %v5636 = vadd.f32 %v5634, %v5635
      %v5637 = vsel %vm902, %v5477, 0.0
      %v5638 = vadd.f32 %v5636, %v5637
      %v5639 = vsel %vm902, %v5478, 0.0
      %v5640 = vadd.f32 %v5638, %v5639
      %v5641 = vsel %vm902, %v5479, 0.0
      %v5642 = vadd.f32 %v5640, %v5641
      %v5643 = vsel %vm902, %v5480, 0.0
      %v5644 = vadd.f32 %v5642, %v5643
      %v5645 = vsel %vm902, %v5481, 0.0
      %v5646 = vadd.f32 %v5644, %v5645
      %v5647 = vsel %vm902, %v5482, 0.0
      %v5648 = vadd.f32 %v5646, %v5647
      %v5649 = vsel %vm902, %v5483, 0.0
      %v5650 = vadd.f32 %v5648, %v5649
      %v5651 = vsel %vm902, %v5484, 0.0
      %v5652 = vadd.f32 %v5650, %v5651
      %v5653 = vsel %vm902, %v5485, 0.0
      %v5654 = vadd.f32 %v5652, %v5653
      %v5655 = vsel %vm902, %v5486, 0.0
      %v5656 = vadd.f32 %v5654, %v5655
      %v5657 = vsel %vm902, %v5487, 0.0
      %v5658 = vadd.f32 %v5656, %v5657
      %v5659 = vrot.slane %v5658, 4
      %v5660 = vadd.f32 %v5658, %v5659
      %v5661 = vrot.slane %v5660, 2
      %v5662 = vadd.f32 %v5660, %v5661
      %v5663 = vrot.slane %v5662, 1
      %v5664 = vadd.f32 %v5662, %v5663
      %v5665 = vsel %vm902, %v5495, 0.0
      %v5666 = vsel %vm902, %v5496, 0.0
      %v5667 = vadd.f32 %v5665, %v5666
      %v5668 = vsel %vm902, %v5497, 0.0
      %v5669 = vadd.f32 %v5667, %v5668
      %v5670 = vsel %vm902, %v5498, 0.0
      %v5671 = vadd.f32 %v5669, %v5670
      %v5672 = vsel %vm902, %v5499, 0.0
      %v5673 = vadd.f32 %v5671, %v5672
      %v5674 = vsel %vm902, %v5500, 0.0
      %v5675 = vadd.f32 %v5673, %v5674
      %v5676 = vsel %vm902, %v5501, 0.0
      %v5677 = vadd.f32 %v5675, %v5676
      %v5678 = vsel %vm902, %v5502, 0.0
      %v5679 = vadd.f32 %v5677, %v5678
      %v5680 = vsel %vm902, %v5503, 0.0
      %v5681 = vadd.f32 %v5679, %v5680
      %v5682 = vsel %vm902, %v5504, 0.0
      %v5683 = vadd.f32 %v5681, %v5682
      %v5684 = vsel %vm902, %v5505, 0.0
      %v5685 = vadd.f32 %v5683, %v5684
      %v5686 = vsel %vm902, %v5506, 0.0
      %v5687 = vadd.f32 %v5685, %v5686
      %v5688 = vsel %vm902, %v5507, 0.0
      %v5689 = vadd.f32 %v5687, %v5688
      %v5690 = vsel %vm902, %v5508, 0.0
      %v5691 = vadd.f32 %v5689, %v5690
      %v5692 = vsel %vm902, %v5509, 0.0
      %v5693 = vadd.f32 %v5691, %v5692
      %v5694 = vsel %vm902, %v5510, 0.0
      %v5695 = vadd.f32 %v5693, %v5694
      %v5696 = vsel %vm902, %v5511, 0.0
      %v5697 = vadd.f32 %v5695, %v5696
      %v5698 = vsel %vm902, %v5512, 0.0
      %v5699 = vadd.f32 %v5697, %v5698
      %v5700 = vsel %vm902, %v5513, 0.0
      %v5701 = vadd.f32 %v5699, %v5700
      %v5702 = vsel %vm902, %v5514, 0.0
      %v5703 = vadd.f32 %v5701, %v5702
      %v5704 = vsel %vm902, %v5515, 0.0
      %v5705 = vadd.f32 %v5703, %v5704
      %v5706 = vsel %vm902, %v5516, 0.0
      %v5707 = vadd.f32 %v5705, %v5706
      %v5708 = vsel %vm902, %v5517, 0.0
      %v5709 = vadd.f32 %v5707, %v5708
      %v5710 = vsel %vm902, %v5518, 0.0
      %v5711 = vadd.f32 %v5709, %v5710
      %v5712 = vsel %vm902, %v5519, 0.0
      %v5713 = vadd.f32 %v5711, %v5712
      %v5714 = vsel %vm902, %v5520, 0.0
      %v5715 = vadd.f32 %v5713, %v5714
      %v5716 = vsel %vm902, %v5521, 0.0
      %v5717 = vadd.f32 %v5715, %v5716
      %v5718 = vsel %vm902, %v5522, 0.0
      %v5719 = vadd.f32 %v5717, %v5718
      %v5720 = vsel %vm902, %v5523, 0.0
      %v5721 = vadd.f32 %v5719, %v5720
      %v5722 = vsel %vm902, %v5524, 0.0
      %v5723 = vadd.f32 %v5721, %v5722
      %v5724 = vsel %vm902, %v5525, 0.0
      %v5725 = vadd.f32 %v5723, %v5724
      %v5726 = vsel %vm902, %v5526, 0.0
      %v5727 = vadd.f32 %v5725, %v5726
      %v5728 = vrot.slane %v5727, 4
      %v5729 = vadd.f32 %v5727, %v5728
      %v5730 = vrot.slane %v5729, 2
      %v5731 = vadd.f32 %v5729, %v5730
      %v5732 = vrot.slane %v5731, 1
      %v5733 = vadd.f32 %v5731, %v5732
      %5735 = vrot.lane.b32.xlu0 %v5664, 16
      %v5736 = vpop.permute.xlu0 %5735
      %5739 = vrot.lane.b32.xlu0 %v5733, 32
      %v5740 = vpop.permute.xlu0 %5739
      %v5742 = vsel %vm902, %v5595, %v5736
      %v5743 = vsel %vm999, %v5742, %v5740
      %v5744 = vmul.f32 %v5743, 0.00390625
      %v5745 = vpack.c.bf16 %v5744, %v5744
      %v5746 = vld [vmem:[%s7] sm:$0xf]
      %v5747 = vld [vmem:[%s7 + $0x4] sm:$0xf]
      %v5748 = vld [vmem:[%s7 + $0x8] sm:$0xf]
      %v5749 = vld [vmem:[%s7 + $0xc] sm:$0xf]
      %v5750 = vld [vmem:[%s7 + $0x10] sm:$0xf]
      %v5751 = vld [vmem:[%s7 + $0x14] sm:$0xf]
      %v5758 = vunpack.c.l.b16 %v5746
      %v5759 = vunpack.c.l.b16 %v5747
      %v5760 = vunpack.c.l.b16 %v5748
      %v5761 = vunpack.c.l.b16 %v5749
      %v5762 = vunpack.c.l.b16 %v5750
      %v5763 = vunpack.c.l.b16 %v5751
      %v5764 = vpack.c.b16 %v5759, %v5758
      %v5765 = vpack.c.b16 %v5761, %v5760
      %v5766 = vpack.c.b16 %v5763, %v5762
      %v5771 = vsel %vm1064, %v5745, 0
      %5773 = vmatprep.subr.bf16.mxu0 0
      %5774 = vmatpush1.bf16.msra.mxu0 %v5764
      %5775 = vmatprep.subr.bf16.mxu0 0
      %5776 = vmatpush1.bf16.msra.mxu0 %v5765
      %5777 = vmatprep.subr.bf16.mxu0 0
      %5778 = vmatpush1.bf16.msra.mxu0 %v5766
      %5779 = vmatprep.subr.bf16.mxu0 0
      %5780 = vmatpush1.bf16.msra.mxu0 0
      %5781 = vmatprep.subr.bf16.mxu0 0
      %5782 = vmatpush1.bf16.msra.mxu0 0
      %5783 = vmatprep.subr.bf16.mxu0 0
      %5784 = vmatpush1.bf16.msra.mxu0 0
      %5785 = vmatprep.subr.bf16.mxu0 0
      %5786 = vmatpush1.bf16.msra.mxu0 0
      %5787 = vmatprep.subr.bf16.mxu0 0
      %5788 = vmatpush1.bf16.msra.mxu0 0
      %5789 = vmatprep.subr.bf16.mxu0 0
      %5790 = vmatpush1.bf16.msra.mxu0 0
      %5791 = vmatprep.subr.bf16.mxu0 0
      %5792 = vmatpush1.bf16.msra.mxu0 0
      %5793 = vmatprep.subr.bf16.mxu0 0
      %5794 = vmatpush1.bf16.msra.mxu0 0
      %5795 = vmatprep.subr.bf16.mxu0 0
      %5796 = vmatpush1.bf16.msra.mxu0 0
      %5797 = vmatprep.subr.bf16.mxu0 0
      %5798 = vmatpush1.bf16.msra.mxu0 0
      %5799 = vmatprep.subr.bf16.mxu0 0
      %5800 = vmatpush1.bf16.msra.mxu0 0
      %5801 = vmatprep.subr.bf16.mxu0 0
      %5802 = vmatpush1.bf16.msra.mxu0 0
      %5803 = vmatprep.subr.bf16.mxu0 0
      %5804 = vmatpush1.bf16.msra.mxu0 0
      %5805 = vmatprep.mubr.bf16.mxu0 0
      %5806 = vmatmul.mubr.bf16.gmra.mrb[0].mxu0 %v5771
      %v5807 = vpop.f32.mrb[0].mxu0
      %v5808 = vadd.f32 0.0, %v5807
      %v5809 = vpop.f32.mrb[0].mxu0
      %v5810 = vpop.f32.mrb[0].mxu0
      %v5811 = vpop.f32.mrb[0].mxu0
      %5812 = vdwg.mxu0
      %v5813 = vmax.f32 %v5808, 0.0
      %v5814 = vpack.c.bf16 %v5813, %v5813
      %v5815 = vld [vmem:[%s8] sm:$0x3]
      %vm5816 = vcmask 23552
      %v5818 = vsel %vm5816, %v5814, 0
      %vm5820 = vcmask 1040384
      %vm5821 = vcmask 1041408
      %v5822 = vsel %vm5820, 4294967295, 65535
      %v5823 = vsel %vm5821, %v5822, 0
      %v5825 = vand.u32 %v5815, %v5823
      %5827 = vmatprep.subr.bf16.mxu0 0
      %5828 = vmatpush1.bf16.msra.mxu0 %v5825
      %5829 = vmatprep.subr.bf16.mxu0 0
      %5830 = vmatpush1.bf16.msra.mxu0 0
      %5831 = vmatprep.subr.bf16.mxu0 0
      %5832 = vmatpush1.bf16.msra.mxu0 0
      %5833 = vmatprep.subr.bf16.mxu0 0
      %5834 = vmatpush1.bf16.msra.mxu0 0
      %5835 = vmatprep.subr.bf16.mxu0 0
      %5836 = vmatpush1.bf16.msra.mxu0 0
      %5837 = vmatprep.subr.bf16.mxu0 0
      %5838 = vmatpush1.bf16.msra.mxu0 0
      %5839 = vmatprep.subr.bf16.mxu0 0
      %5840 = vmatpush1.bf16.msra.mxu0 0
      %5841 = vmatprep.subr.bf16.mxu0 0
      %5842 = vmatpush1.bf16.msra.mxu0 0
      %5843 = vmatprep.subr.bf16.mxu0 0
      %5844 = vmatpush1.bf16.msra.mxu0 0
      %5845 = vmatprep.subr.bf16.mxu0 0
      %5846 = vmatpush1.bf16.msra.mxu0 0
      %5847 = vmatprep.subr.bf16.mxu0 0
      %5848 = vmatpush1.bf16.msra.mxu0 0
      %5849 = vmatprep.subr.bf16.mxu0 0
      %5850 = vmatpush1.bf16.msra.mxu0 0
      %5851 = vmatprep.subr.bf16.mxu0 0
      %5852 = vmatpush1.bf16.msra.mxu0 0
      %5853 = vmatprep.subr.bf16.mxu0 0
      %5854 = vmatpush1.bf16.msra.mxu0 0
      %5855 = vmatprep.subr.bf16.mxu0 0
      %5856 = vmatpush1.bf16.msra.mxu0 0
      %5857 = vmatprep.subr.bf16.mxu0 0
      %5858 = vmatpush1.bf16.msra.mxu0 0
      %5859 = vmatprep.mubr.bf16.mxu0 0
      %5860 = vmatmul.mubr.bf16.gmra.mrb[0].mxu0 %v5818
      %v5861 = vpop.f32.mrb[0].mxu0
      %v5862 = vadd.f32 0.0, %v5861
      %v5863 = vpop.f32.mrb[0].mxu0
      %v5864 = vpop.f32.mrb[0].mxu0
      %v5865 = vpop.f32.mrb[0].mxu0
      %5866 = vdwg.mxu0
      %v5867 = vxor.u32 %v5862, 2147483648
      %v5868 = vmul.f32 %v5867, 1.442695
      %v5869 = vpow.pop %v5868
      %v5870 = vadd.f32 %v5869, 1.0
      %v5871 = vrcp.pop %v5870
      %v5872 = vmul.f32 1.0, %v5871
      %v5873 = vlaneseq
      %v5874 = vshrl.u32 %v5873, 7
      %v5875 = vsub.s32 0, %v5874
      %v5876 = vrot.slane %v5872, %v5875
      %v5877 = vmul.f32 %v5323, %v5876
      %v5878 = vmul.f32 %v5326, %v5876
      %v5879 = vmul.f32 %v5331, %v5876
      %v5880 = vmul.f32 %v5334, %v5876
      %v5881 = vmul.f32 %v5339, %v5876
      %v5882 = vmul.f32 %v5342, %v5876
      %v5883 = vmul.f32 %v5347, %v5876
      %v5884 = vmul.f32 %v5350, %v5876
      %v5885 = vmul.f32 %v5355, %v5876
      %v5886 = vmul.f32 %v5358, %v5876
      %v5887 = vmul.f32 %v5363, %v5876
      %v5888 = vmul.f32 %v5366, %v5876
      %v5889 = vmul.f32 %v5371, %v5876
      %v5890 = vmul.f32 %v5374, %v5876
      %v5891 = vmul.f32 %v5379, %v5876
      %v5892 = vmul.f32 %v5382, %v5876
      %v5893 = vmul.f32 %v5387, %v5876
      %v5894 = vmul.f32 %v5390, %v5876
      %v5895 = vmul.f32 %v5395, %v5876
      %v5896 = vmul.f32 %v5398, %v5876
      %v5897 = vmul.f32 %v5403, %v5876
      %v5898 = vmul.f32 %v5406, %v5876
      %v5899 = vmul.f32 %v5411, %v5876
      %v5900 = vmul.f32 %v5414, %v5876
      %v5901 = vmul.f32 %v5419, %v5876
      %v5902 = vmul.f32 %v5422, %v5876
      %v5903 = vmul.f32 %v5427, %v5876
      %v5904 = vmul.f32 %v5430, %v5876
      %v5905 = vmul.f32 %v5435, %v5876
      %v5906 = vmul.f32 %v5438, %v5876
      %v5907 = vmul.f32 %v5443, %v5876
      %v5908 = vmul.f32 %v5446, %v5876
      %v5909 = vpack.c.bf16 %v5878, %v5877
      %v5910 = vpack.c.bf16 %v5880, %v5879
      %v5911 = vpack.c.bf16 %v5882, %v5881
      %v5912 = vpack.c.bf16 %v5884, %v5883
      %v5913 = vpack.c.bf16 %v5886, %v5885
      %v5914 = vpack.c.bf16 %v5888, %v5887
      %v5915 = vpack.c.bf16 %v5890, %v5889
      %v5916 = vpack.c.bf16 %v5892, %v5891
      %v5917 = vpack.c.bf16 %v5894, %v5893
      %v5918 = vpack.c.bf16 %v5896, %v5895
      %v5919 = vpack.c.bf16 %v5898, %v5897
      %v5920 = vpack.c.bf16 %v5900, %v5899
      %v5921 = vpack.c.bf16 %v5902, %v5901
      %v5922 = vpack.c.bf16 %v5904, %v5903
      %v5923 = vpack.c.bf16 %v5906, %v5905
      %v5924 = vpack.c.bf16 %v5908, %v5907
      %5926 = vrot.lane.b32.xlu0 %v5876, 112
      %v5927 = vpop.permute.xlu0 %5926
      %v5929 = vmul.f32 %v5456, %v5927
      %v5930 = vmul.f32 %v5457, %v5927
      %v5931 = vmul.f32 %v5458, %v5927
      %v5932 = vmul.f32 %v5459, %v5927
      %v5933 = vmul.f32 %v5460, %v5927
      %v5934 = vmul.f32 %v5461, %v5927
      %v5935 = vmul.f32 %v5462, %v5927
      %v5936 = vmul.f32 %v5463, %v5927
      %v5937 = vmul.f32 %v5464, %v5927
      %v5938 = vmul.f32 %v5465, %v5927
      %v5939 = vmul.f32 %v5466, %v5927
      %v5940 = vmul.f32 %v5467, %v5927
      %v5941 = vmul.f32 %v5468, %v5927
      %v5942 = vmul.f32 %v5469, %v5927
      %v5943 = vmul.f32 %v5470, %v5927
      %v5944 = vmul.f32 %v5471, %v5927
      %v5945 = vmul.f32 %v5472, %v5927
      %v5946 = vmul.f32 %v5473, %v5927
      %v5947 = vmul.f32 %v5474, %v5927
      %v5948 = vmul.f32 %v5475, %v5927
      %v5949 = vmul.f32 %v5476, %v5927
      %v5950 = vmul.f32 %v5477, %v5927
      %v5951 = vmul.f32 %v5478, %v5927
      %v5952 = vmul.f32 %v5479, %v5927
      %v5953 = vmul.f32 %v5480, %v5927
      %v5954 = vmul.f32 %v5481, %v5927
      %v5955 = vmul.f32 %v5482, %v5927
      %v5956 = vmul.f32 %v5483, %v5927
      %v5957 = vmul.f32 %v5484, %v5927
      %v5958 = vmul.f32 %v5485, %v5927
      %v5959 = vmul.f32 %v5486, %v5927
      %v5960 = vmul.f32 %v5487, %v5927
      %v5961 = vpack.c.bf16 %v5930, %v5929
      %v5962 = vpack.c.bf16 %v5932, %v5931
      %v5963 = vpack.c.bf16 %v5934, %v5933
      %v5964 = vpack.c.bf16 %v5936, %v5935
      %v5965 = vpack.c.bf16 %v5938, %v5937
      %v5966 = vpack.c.bf16 %v5940, %v5939
      %v5967 = vpack.c.bf16 %v5942, %v5941
      %v5968 = vpack.c.bf16 %v5944, %v5943
      %v5969 = vpack.c.bf16 %v5946, %v5945
      %v5970 = vpack.c.bf16 %v5948, %v5947
      %v5971 = vpack.c.bf16 %v5950, %v5949
      %v5972 = vpack.c.bf16 %v5952, %v5951
      %v5973 = vpack.c.bf16 %v5954, %v5953
      %v5974 = vpack.c.bf16 %v5956, %v5955
      %v5975 = vpack.c.bf16 %v5958, %v5957
      %v5976 = vpack.c.bf16 %v5960, %v5959
      %5977 = vrot.lane.b32.xlu0 %v5876, 96
      %v5978 = vpop.permute.xlu0 %5977
      %v5980 = vmul.f32 %v5495, %v5978
      %v5981 = vmul.f32 %v5496, %v5978
      %v5982 = vmul.f32 %v5497, %v5978
      %v5983 = vmul.f32 %v5498, %v5978
      %v5984 = vmul.f32 %v5499, %v5978
      %v5985 = vmul.f32 %v5500, %v5978
      %v5986 = vmul.f32 %v5501, %v5978
      %v5987 = vmul.f32 %v5502, %v5978
      %v5988 = vmul.f32 %v5503, %v5978
      %v5989 = vmul.f32 %v5504, %v5978
      %v5990 = vmul.f32 %v5505, %v5978
      %v5991 = vmul.f32 %v5506, %v5978
      %v5992 = vmul.f32 %v5507, %v5978
      %v5993 = vmul.f32 %v5508, %v5978
      %v5994 = vmul.f32 %v5509, %v5978
      %v5995 = vmul.f32 %v5510, %v5978
      %v5996 = vmul.f32 %v5511, %v5978
      %v5997 = vmul.f32 %v5512, %v5978
      %v5998 = vmul.f32 %v5513, %v5978
      %v5999 = vmul.f32 %v5514, %v5978
      %v6000 = vmul.f32 %v5515, %v5978
      %v6001 = vmul.f32 %v5516, %v5978
      %v6002 = vmul.f32 %v5517, %v5978
      %v6003 = vmul.f32 %v5518, %v5978
      %v6004 = vmul.f32 %v5519, %v5978
      %v6005 = vmul.f32 %v5520, %v5978
      %v6006 = vmul.f32 %v5521, %v5978
      %v6007 = vmul.f32 %v5522, %v5978
      %v6008 = vmul.f32 %v5523, %v5978
      %v6009 = vmul.f32 %v5524, %v5978
      %v6010 = vmul.f32 %v5525, %v5978
      %v6011 = vmul.f32 %v5526, %v5978
      %v6012 = vpack.c.bf16 %v5981, %v5980
      %v6013 = vpack.c.bf16 %v5983, %v5982
      %v6014 = vpack.c.bf16 %v5985, %v5984
      %v6015 = vpack.c.bf16 %v5987, %v5986
      %v6016 = vpack.c.bf16 %v5989, %v5988
      %v6017 = vpack.c.bf16 %v5991, %v5990
      %v6018 = vpack.c.bf16 %v5993, %v5992
      %v6019 = vpack.c.bf16 %v5995, %v5994
      %v6020 = vpack.c.bf16 %v5997, %v5996
      %v6021 = vpack.c.bf16 %v5999, %v5998
      %v6022 = vpack.c.bf16 %v6001, %v6000
      %v6023 = vpack.c.bf16 %v6003, %v6002
      %v6024 = vpack.c.bf16 %v6005, %v6004
      %v6025 = vpack.c.bf16 %v6007, %v6006
      %v6026 = vpack.c.bf16 %v6009, %v6008
      %v6027 = vpack.c.bf16 %v6011, %v6010
      %v6028 = vld [vmem:[%s9] sm:$0xf]
      %v6029 = vld [vmem:[%s9 + $0x4] sm:$0xf]
      %s6030 = scalar_lea.vmem %s9, 8
      %v6031 = vld [vmem:[%s6030] sm:$0xf]
      %v6032 = vld [vmem:[%s6030 + $0x4] sm:$0xf]
      %v6035 = vunpack.c.l.b16 %v6031
      %v6036 = vunpack.c.l.b16 %v6032
      %v6037 = vpack.c.b16 %v6036, %v6035
      %v6040 = vsel %vm902, %v5961, 0
      %v6043 = vsel %vm902, %v5962, 0
      %v6046 = vsel %vm902, %v5963, 0
      %v6049 = vsel %vm902, %v5964, 0
      %v6052 = vsel %vm902, %v5965, 0
      %v6055 = vsel %vm902, %v5966, 0
      %v6058 = vsel %vm902, %v5967, 0
      %v6061 = vsel %vm902, %v5968, 0
      %v6064 = vsel %vm902, %v5969, 0
      %v6067 = vsel %vm902, %v5970, 0
      %v6070 = vsel %vm902, %v5971, 0
      %v6073 = vsel %vm902, %v5972, 0
      %v6076 = vsel %vm902, %v5973, 0
      %v6079 = vsel %vm902, %v5974, 0
      %v6082 = vsel %vm902, %v5975, 0
      %v6085 = vsel %vm902, %v5976, 0
      %6087 = vmatprep.subr.bf16.mxu0 0
      %6088 = vmatpush1.bf16.msra.mxu0 %v6037
      %6089 = vmatprep.subr.bf16.mxu0 0
      %6090 = vmatpush1.bf16.msra.mxu0 0
      %6091 = vmatprep.subr.bf16.mxu0 0
      %6092 = vmatpush1.bf16.msra.mxu0 0
      %6093 = vmatprep.subr.bf16.mxu0 0
      %6094 = vmatpush1.bf16.msra.mxu0 0
      %6095 = vmatprep.subr.bf16.mxu0 0
      %6096 = vmatpush1.bf16.msra.mxu0 0
      %6097 = vmatprep.subr.bf16.mxu0 0
      %6098 = vmatpush1.bf16.msra.mxu0 0
      %6099 = vmatprep.subr.bf16.mxu0 0
      %6100 = vmatpush1.bf16.msra.mxu0 0
      %6101 = vmatprep.subr.bf16.mxu0 0
      %6102 = vmatpush1.bf16.msra.mxu0 0
      %6103 = vmatprep.subr.bf16.mxu0 0
      %6104 = vmatpush1.bf16.msra.mxu0 0
      %6105 = vmatprep.subr.bf16.mxu0 0
      %6106 = vmatpush1.bf16.msra.mxu0 0
      %6107 = vmatprep.subr.bf16.mxu0 0
      %6108 = vmatpush1.bf16.msra.mxu0 0
      %6109 = vmatprep.subr.bf16.mxu0 0
      %6110 = vmatpush1.bf16.msra.mxu0 0
      %6111 = vmatprep.subr.bf16.mxu0 0
      %6112 = vmatpush1.bf16.msra.mxu0 0
      %6113 = vmatprep.subr.bf16.mxu0 0
      %6114 = vmatpush1.bf16.msra.mxu0 0
      %6115 = vmatprep.subr.bf16.mxu0 0
      %6116 = vmatpush1.bf16.msra.mxu0 0
      %6117 = vmatprep.subr.bf16.mxu0 0
      %6118 = vmatpush1.bf16.msra.mxu0 0
      %6119 = vmatprep.mubr.bf16.mxu0 0
      %6120 = vmatmul.mubr.bf16.gmra.mrb[0].mxu0 %v6040
      %v6121 = vpop.f32.mrb[0].mxu0
      %v6122 = vadd.f32 0.0, %v6121
      %v6123 = vpop.f32.mrb[0].mxu0
      %v6124 = vpop.f32.mrb[0].mxu0
      %v6125 = vadd.f32 0.0, %v6124
      %v6126 = vpop.f32.mrb[0].mxu0
      %6127 = vmatprep.mubr.bf16.mxu0 0
      %6128 = vmatmul.mubr.bf16.gmra.mrb[0].mxu0 %v6043
      %v6129 = vpop.f32.mrb[0].mxu0
      %v6130 = vadd.f32 0.0, %v6129
      %v6131 = vpop.f32.mrb[0].mxu0
      %v6132 = vpop.f32.mrb[0].mxu0
      %v6133 = vadd.f32 0.0, %v6132
      %v6134 = vpop.f32.mrb[0].mxu0
      %6135 = vmatprep.mubr.bf16.mxu0 0
      %6136 = vmatmul.mubr.bf16.gmra.mrb[0].mxu0 %v6046
      %v6137 = vpop.f32.mrb[0].mxu0
      %v6138 = vadd.f32 0.0, %v6137
      %v6139 = vpop.f32.mrb[0].mxu0
      %v6140 = vpop.f32.mrb[0].mxu0
      %v6141 = vadd.f32 0.0, %v6140
      %v6142 = vpop.f32.mrb[0].mxu0
      %6143 = vmatprep.mubr.bf16.mxu0 0
      %6144 = vmatmul.mubr.bf16.gmra.mrb[0].mxu0 %v6049
      %v6145 = vpop.f32.mrb[0].mxu0
      %v6146 = vadd.f32 0.0, %v6145
      %v6147 = vpop.f32.mrb[0].mxu0
      %v6148 = vpop.f32.mrb[0].mxu0
      %v6149 = vadd.f32 0.0, %v6148
      %v6150 = vpop.f32.mrb[0].mxu0
      %6151 = vmatprep.mubr.bf16.mxu0 0
      %6152 = vmatmul.mubr.bf16.gmra.mrb[0].mxu0 %v6052
      %v6153 = vpop.f32.mrb[0].mxu0
      %v6154 = vadd.f32 0.0, %v6153
      %v6155 = vpop.f32.mrb[0].mxu0
      %v6156 = vpop.f32.mrb[0].mxu0
      %v6157 = vadd.f32 0.0, %v6156
      %v6158 = vpop.f32.mrb[0].mxu0
      %6159 = vmatprep.mubr.bf16.mxu0 0
      %6160 = vmatmul.mubr.bf16.gmra.mrb[0].mxu0 %v6055
      %v6161 = vpop.f32.mrb[0].mxu0
      %v6162 = vadd.f32 0.0, %v6161
      %v6163 = vpop.f32.mrb[0].mxu0
      %v6164 = vpop.f32.mrb[0].mxu0
      %v6165 = vadd.f32 0.0, %v6164
      %v6166 = vpop.f32.mrb[0].mxu0
      %6167 = vmatprep.mubr.bf16.mxu0 0
      %6168 = vmatmul.mubr.bf16.gmra.mrb[0].mxu0 %v6058
      %v6169 = vpop.f32.mrb[0].mxu0
      %v6170 = vadd.f32 0.0, %v6169
      %v6171 = vpop.f32.mrb[0].mxu0
      %v6172 = vpop.f32.mrb[0].mxu0
      %v6173 = vadd.f32 0.0, %v6172
      %v6174 = vpop.f32.mrb[0].mxu0
      %6175 = vmatprep.mubr.bf16.mxu0 0
      %6176 = vmatmul.mubr.bf16.gmra.mrb[0].mxu0 %v6061
      %v6177 = vpop.f32.mrb[0].mxu0
      %v6178 = vadd.f32 0.0, %v6177
      %v6179 = vpop.f32.mrb[0].mxu0
      %v6180 = vpop.f32.mrb[0].mxu0
      %v6181 = vadd.f32 0.0, %v6180
      %v6182 = vpop.f32.mrb[0].mxu0
      %6183 = vmatprep.mubr.bf16.mxu0 0
      %6184 = vmatmul.mubr.bf16.gmra.mrb[0].mxu0 %v6064
      %v6185 = vpop.f32.mrb[0].mxu0
      %v6186 = vadd.f32 0.0, %v6185
      %v6187 = vpop.f32.mrb[0].mxu0
      %v6188 = vpop.f32.mrb[0].mxu0
      %v6189 = vadd.f32 0.0, %v6188
      %v6190 = vpop.f32.mrb[0].mxu0
      %6191 = vmatprep.mubr.bf16.mxu0 0
      %6192 = vmatmul.mubr.bf16.gmra.mrb[0].mxu0 %v6067
      %v6193 = vpop.f32.mrb[0].mxu0
      %v6194 = vadd.f32 0.0, %v6193
      %v6195 = vpop.f32.mrb[0].mxu0
      %v6196 = vpop.f32.mrb[0].mxu0
      %v6197 = vadd.f32 0.0, %v6196
      %v6198 = vpop.f32.mrb[0].mxu0
      %6199 = vmatprep.mubr.bf16.mxu0 0
      %6200 = vmatmul.mubr.bf16.gmra.mrb[0].mxu0 %v6070
      %v6201 = vpop.f32.mrb[0].mxu0
      %v6202 = vadd.f32 0.0, %v6201
      %v6203 = vpop.f32.mrb[0].mxu0
      %v6204 = vpop.f32.mrb[0].mxu0
      %v6205 = vadd.f32 0.0, %v6204
      %v6206 = vpop.f32.mrb[0].mxu0
      %6207 = vmatprep.mubr.bf16.mxu0 0
      %6208 = vmatmul.mubr.bf16.gmra.mrb[0].mxu0 %v6073
      %v6209 = vpop.f32.mrb[0].mxu0
      %v6210 = vadd.f32 0.0, %v6209
      %v6211 = vpop.f32.mrb[0].mxu0
      %v6212 = vpop.f32.mrb[0].mxu0
      %v6213 = vadd.f32 0.0, %v6212
      %v6214 = vpop.f32.mrb[0].mxu0
      %6215 = vmatprep.mubr.bf16.mxu0 0
      %6216 = vmatmul.mubr.bf16.gmra.mrb[0].mxu0 %v6076
      %v6217 = vpop.f32.mrb[0].mxu0
      %v6218 = vadd.f32 0.0, %v6217
      %v6219 = vpop.f32.mrb[0].mxu0
      %v6220 = vpop.f32.mrb[0].mxu0
      %v6221 = vadd.f32 0.0, %v6220
      %v6222 = vpop.f32.mrb[0].mxu0
      %6223 = vmatprep.mubr.bf16.mxu0 0
      %6224 = vmatmul.mubr.bf16.gmra.mrb[0].mxu0 %v6079
      %v6225 = vpop.f32.mrb[0].mxu0
      %v6226 = vadd.f32 0.0, %v6225
      %v6227 = vpop.f32.mrb[0].mxu0
      %v6228 = vpop.f32.mrb[0].mxu0
      %v6229 = vadd.f32 0.0, %v6228
      %v6230 = vpop.f32.mrb[0].mxu0
      %6231 = vmatprep.mubr.bf16.mxu0 0
      %6232 = vmatmul.mubr.bf16.gmra.mrb[0].mxu0 %v6082
      %v6233 = vpop.f32.mrb[0].mxu0
      %v6234 = vadd.f32 0.0, %v6233
      %v6235 = vpop.f32.mrb[0].mxu0
      %v6236 = vpop.f32.mrb[0].mxu0
      %v6237 = vadd.f32 0.0, %v6236
      %v6238 = vpop.f32.mrb[0].mxu0
      %6239 = vmatprep.mubr.bf16.mxu0 0
      %6240 = vmatmul.mubr.bf16.gmra.mrb[0].mxu0 %v6085
      %v6241 = vpop.f32.mrb[0].mxu0
      %v6242 = vadd.f32 0.0, %v6241
      %v6243 = vpop.f32.mrb[0].mxu0
      %v6244 = vpop.f32.mrb[0].mxu0
      %v6245 = vadd.f32 0.0, %v6244
      %v6246 = vpop.f32.mrb[0].mxu0
      %6247 = vdwg.mxu0
      %v6250 = vunpack.c.l.b16 %v6028
      %v6251 = vunpack.c.l.b16 %v6029
      %v6252 = vpack.c.b16 %v6251, %v6250
      %v6255 = vsel %vm902, %v5909, 0
      %v6258 = vsel %vm902, %v5910, 0
      %v6261 = vsel %vm902, %v5911, 0
      %v6264 = vsel %vm902, %v5912, 0
      %v6267 = vsel %vm902, %v5913, 0
      %v6270 = vsel %vm902, %v5914, 0
      %v6273 = vsel %vm902, %v5915, 0
      %v6276 = vsel %vm902, %v5916, 0
      %v6279 = vsel %vm902, %v5917, 0
      %v6282 = vsel %vm902, %v5918, 0
      %v6285 = vsel %vm902, %v5919, 0
      %v6288 = vsel %vm902, %v5920, 0
      %v6291 = vsel %vm902, %v5921, 0
      %v6294 = vsel %vm902, %v5922, 0
      %v6297 = vsel %vm902, %v5923, 0
      %v6300 = vsel %vm902, %v5924, 0
      %6302 = vmatprep.subr.bf16.mxu0 0
      %6303 = vmatpush1.bf16.msra.mxu0 %v6252
      %6304 = vmatprep.subr.bf16.mxu0 0
      %6305 = vmatpush1.bf16.msra.mxu0 0
      %6306 = vmatprep.subr.bf16.mxu0 0
      %6307 = vmatpush1.bf16.msra.mxu0 0
      %6308 = vmatprep.subr.bf16.mxu0 0
      %6309 = vmatpush1.bf16.msra.mxu0 0
      %6310 = vmatprep.subr.bf16.mxu0 0
      %6311 = vmatpush1.bf16.msra.mxu0 0
      %6312 = vmatprep.subr.bf16.mxu0 0
      %6313 = vmatpush1.bf16.msra.mxu0 0
      %6314 = vmatprep.subr.bf16.mxu0 0
      %6315 = vmatpush1.bf16.msra.mxu0 0
      %6316 = vmatprep.subr.bf16.mxu0 0
      %6317 = vmatpush1.bf16.msra.mxu0 0
      %6318 = vmatprep.subr.bf16.mxu0 0
      %6319 = vmatpush1.bf16.msra.mxu0 0
      %6320 = vmatprep.subr.bf16.mxu0 0
      %6321 = vmatpush1.bf16.msra.mxu0 0
      %6322 = vmatprep.subr.bf16.mxu0 0
      %6323 = vmatpush1.bf16.msra.mxu0 0
      %6324 = vmatprep.subr.bf16.mxu0 0
      %6325 = vmatpush1.bf16.msra.mxu0 0
      %6326 = vmatprep.subr.bf16.mxu0 0
      %6327 = vmatpush1.bf16.msra.mxu0 0
      %6328 = vmatprep.subr.bf16.mxu0 0
      %6329 = vmatpush1.bf16.msra.mxu0 0
      %6330 = vmatprep.subr.bf16.mxu0 0
      %6331 = vmatpush1.bf16.msra.mxu0 0
      %6332 = vmatprep.subr.bf16.mxu0 0
      %6333 = vmatpush1.bf16.msra.mxu0 0
      %6334 = vmatprep.mubr.bf16.mxu0 0
      %6335 = vmatmul.mubr.bf16.gmra.mrb[0].mxu0 %v6255
      %v6336 = vpop.f32.mrb[0].mxu0
      %v6337 = vadd.f32 %v6122, %v6336
      %v6338 = vpop.f32.mrb[0].mxu0
      %v6339 = vpop.f32.mrb[0].mxu0
      %v6340 = vadd.f32 %v6125, %v6339
      %v6341 = vpop.f32.mrb[0].mxu0
      %6342 = vmatprep.mubr.bf16.mxu0 0
      %6343 = vmatmul.mubr.bf16.gmra.mrb[0].mxu0 %v6258
      %v6344 = vpop.f32.mrb[0].mxu0
      %v6345 = vadd.f32 %v6130, %v6344
      %v6346 = vpop.f32.mrb[0].mxu0
      %v6347 = vpop.f32.mrb[0].mxu0
      %v6348 = vadd.f32 %v6133, %v6347
      %v6349 = vpop.f32.mrb[0].mxu0
      %6350 = vmatprep.mubr.bf16.mxu0 0
      %6351 = vmatmul.mubr.bf16.gmra.mrb[0].mxu0 %v6261
      %v6352 = vpop.f32.mrb[0].mxu0
      %v6353 = vadd.f32 %v6138, %v6352
      %v6354 = vpop.f32.mrb[0].mxu0
      %v6355 = vpop.f32.mrb[0].mxu0
      %v6356 = vadd.f32 %v6141, %v6355
      %v6357 = vpop.f32.mrb[0].mxu0
      %6358 = vmatprep.mubr.bf16.mxu0 0
      %6359 = vmatmul.mubr.bf16.gmra.mrb[0].mxu0 %v6264
      %v6360 = vpop.f32.mrb[0].mxu0
      %v6361 = vadd.f32 %v6146, %v6360
      %v6362 = vpop.f32.mrb[0].mxu0
      %v6363 = vpop.f32.mrb[0].mxu0
      %v6364 = vadd.f32 %v6149, %v6363
      %v6365 = vpop.f32.mrb[0].mxu0
      %6366 = vmatprep.mubr.bf16.mxu0 0
      %6367 = vmatmul.mubr.bf16.gmra.mrb[0].mxu0 %v6267
      %v6368 = vpop.f32.mrb[0].mxu0
      %v6369 = vadd.f32 %v6154, %v6368
      %v6370 = vpop.f32.mrb[0].mxu0
      %v6371 = vpop.f32.mrb[0].mxu0
      %v6372 = vadd.f32 %v6157, %v6371
      %v6373 = vpop.f32.mrb[0].mxu0
      %6374 = vmatprep.mubr.bf16.mxu0 0
      %6375 = vmatmul.mubr.bf16.gmra.mrb[0].mxu0 %v6270
      %v6376 = vpop.f32.mrb[0].mxu0
      %v6377 = vadd.f32 %v6162, %v6376
      %v6378 = vpop.f32.mrb[0].mxu0
      %v6379 = vpop.f32.mrb[0].mxu0
      %v6380 = vadd.f32 %v6165, %v6379
      %v6381 = vpop.f32.mrb[0].mxu0
      %6382 = vmatprep.mubr.bf16.mxu0 0
      %6383 = vmatmul.mubr.bf16.gmra.mrb[0].mxu0 %v6273
      %v6384 = vpop.f32.mrb[0].mxu0
      %v6385 = vadd.f32 %v6170, %v6384
      %v6386 = vpop.f32.mrb[0].mxu0
      %v6387 = vpop.f32.mrb[0].mxu0
      %v6388 = vadd.f32 %v6173, %v6387
      %v6389 = vpop.f32.mrb[0].mxu0
      %6390 = vmatprep.mubr.bf16.mxu0 0
      %6391 = vmatmul.mubr.bf16.gmra.mrb[0].mxu0 %v6276
      %v6392 = vpop.f32.mrb[0].mxu0
      %v6393 = vadd.f32 %v6178, %v6392
      %v6394 = vpop.f32.mrb[0].mxu0
      %v6395 = vpop.f32.mrb[0].mxu0
      %v6396 = vadd.f32 %v6181, %v6395
      %v6397 = vpop.f32.mrb[0].mxu0
      %6398 = vmatprep.mubr.bf16.mxu0 0
      %6399 = vmatmul.mubr.bf16.gmra.mrb[0].mxu0 %v6279
      %v6400 = vpop.f32.mrb[0].mxu0
      %v6401 = vadd.f32 %v6186, %v6400
      %v6402 = vpop.f32.mrb[0].mxu0
      %v6403 = vpop.f32.mrb[0].mxu0
      %v6404 = vadd.f32 %v6189, %v6403
      %v6405 = vpop.f32.mrb[0].mxu0
      %6406 = vmatprep.mubr.bf16.mxu0 0
      %6407 = vmatmul.mubr.bf16.gmra.mrb[0].mxu0 %v6282
      %v6408 = vpop.f32.mrb[0].mxu0
      %v6409 = vadd.f32 %v6194, %v6408
      %v6410 = vpop.f32.mrb[0].mxu0
      %v6411 = vpop.f32.mrb[0].mxu0
      %v6412 = vadd.f32 %v6197, %v6411
      %v6413 = vpop.f32.mrb[0].mxu0
      %6414 = vmatprep.mubr.bf16.mxu0 0
      %6415 = vmatmul.mubr.bf16.gmra.mrb[0].mxu0 %v6285
      %v6416 = vpop.f32.mrb[0].mxu0
      %v6417 = vadd.f32 %v6202, %v6416
      %v6418 = vpop.f32.mrb[0].mxu0
      %v6419 = vpop.f32.mrb[0].mxu0
      %v6420 = vadd.f32 %v6205, %v6419
      %v6421 = vpop.f32.mrb[0].mxu0
      %6422 = vmatprep.mubr.bf16.mxu0 0
      %6423 = vmatmul.mubr.bf16.gmra.mrb[0].mxu0 %v6288
      %v6424 = vpop.f32.mrb[0].mxu0
      %v6425 = vadd.f32 %v6210, %v6424
      %v6426 = vpop.f32.mrb[0].mxu0
      %v6427 = vpop.f32.mrb[0].mxu0
      %v6428 = vadd.f32 %v6213, %v6427
      %v6429 = vpop.f32.mrb[0].mxu0
      %6430 = vmatprep.mubr.bf16.mxu0 0
      %6431 = vmatmul.mubr.bf16.gmra.mrb[0].mxu0 %v6291
      %v6432 = vpop.f32.mrb[0].mxu0
      %v6433 = vadd.f32 %v6218, %v6432
      %v6434 = vpop.f32.mrb[0].mxu0
      %v6435 = vpop.f32.mrb[0].mxu0
      %v6436 = vadd.f32 %v6221, %v6435
      %v6437 = vpop.f32.mrb[0].mxu0
      %6438 = vmatprep.mubr.bf16.mxu0 0
      %6439 = vmatmul.mubr.bf16.gmra.mrb[0].mxu0 %v6294
      %v6440 = vpop.f32.mrb[0].mxu0
      %v6441 = vadd.f32 %v6226, %v6440
      %v6442 = vpop.f32.mrb[0].mxu0
      %v6443 = vpop.f32.mrb[0].mxu0
      %v6444 = vadd.f32 %v6229, %v6443
      %v6445 = vpop.f32.mrb[0].mxu0
      %6446 = vmatprep.mubr.bf16.mxu0 0
      %6447 = vmatmul.mubr.bf16.gmra.mrb[0].mxu0 %v6297
      %v6448 = vpop.f32.mrb[0].mxu0
      %v6449 = vadd.f32 %v6234, %v6448
      %v6450 = vpop.f32.mrb[0].mxu0
      %v6451 = vpop.f32.mrb[0].mxu0
      %v6452 = vadd.f32 %v6237, %v6451
      %v6453 = vpop.f32.mrb[0].mxu0
      %6454 = vmatprep.mubr.bf16.mxu0 0
      %6455 = vmatmul.mubr.bf16.gmra.mrb[0].mxu0 %v6300
      %v6456 = vpop.f32.mrb[0].mxu0
      %v6457 = vadd.f32 %v6242, %v6456
      %v6458 = vpop.f32.mrb[0].mxu0
      %v6459 = vpop.f32.mrb[0].mxu0
      %v6460 = vadd.f32 %v6245, %v6459
      %v6461 = vpop.f32.mrb[0].mxu0
      %6462 = vdwg.mxu0
      %s6463 = scalar_lea.vmem %s9, 16
      %v6464 = vld [vmem:[%s6463] sm:$0xf]
      %v6465 = vld [vmem:[%s6463 + $0x4] sm:$0xf]
      %v6468 = vunpack.c.l.b16 %v6464
      %v6469 = vunpack.c.l.b16 %v6465
      %v6470 = vpack.c.b16 %v6469, %v6468
      %v6473 = vsel %vm902, %v6012, 0
      %v6476 = vsel %vm902, %v6013, 0
      %v6479 = vsel %vm902, %v6014, 0
      %v6482 = vsel %vm902, %v6015, 0
      %v6485 = vsel %vm902, %v6016, 0
      %v6488 = vsel %vm902, %v6017, 0
      %v6491 = vsel %vm902, %v6018, 0
      %v6494 = vsel %vm902, %v6019, 0
      %v6497 = vsel %vm902, %v6020, 0
      %v6500 = vsel %vm902, %v6021, 0
      %v6503 = vsel %vm902, %v6022, 0
      %v6506 = vsel %vm902, %v6023, 0
      %v6509 = vsel %vm902, %v6024, 0
      %v6512 = vsel %vm902, %v6025, 0
      %v6515 = vsel %vm902, %v6026, 0
      %v6518 = vsel %vm902, %v6027, 0
      %6520 = vmatprep.subr.bf16.mxu0 0
      %6521 = vmatpush1.bf16.msra.mxu0 %v6470
      %6522 = vmatprep.subr.bf16.mxu0 0
      %6523 = vmatpush1.bf16.msra.mxu0 0
      %6524 = vmatprep.subr.bf16.mxu0 0
      %6525 = vmatpush1.bf16.msra.mxu0 0
      %6526 = vmatprep.subr.bf16.mxu0 0
      %6527 = vmatpush1.bf16.msra.mxu0 0
      %6528 = vmatprep.subr.bf16.mxu0 0
      %6529 = vmatpush1.bf16.msra.mxu0 0
      %6530 = vmatprep.subr.bf16.mxu0 0
      %6531 = vmatpush1.bf16.msra.mxu0 0
      %6532 = vmatprep.subr.bf16.mxu0 0
      %6533 = vmatpush1.bf16.msra.mxu0 0
      %6534 = vmatprep.subr.bf16.mxu0 0
      %6535 = vmatpush1.bf16.msra.mxu0 0
      %6536 = vmatprep.subr.bf16.mxu0 0
      %6537 = vmatpush1.bf16.msra.mxu0 0
      %6538 = vmatprep.subr.bf16.mxu0 0
      %6539 = vmatpush1.bf16.msra.mxu0 0
      %6540 = vmatprep.subr.bf16.mxu0 0
      %6541 = vmatpush1.bf16.msra.mxu0 0
      %6542 = vmatprep.subr.bf16.mxu0 0
      %6543 = vmatpush1.bf16.msra.mxu0 0
      %6544 = vmatprep.subr.bf16.mxu0 0
      %6545 = vmatpush1.bf16.msra.mxu0 0
      %6546 = vmatprep.subr.bf16.mxu0 0
      %6547 = vmatpush1.bf16.msra.mxu0 0
      %6548 = vmatprep.subr.bf16.mxu0 0
      %6549 = vmatpush1.bf16.msra.mxu0 0
      %6550 = vmatprep.subr.bf16.mxu0 0
      %6551 = vmatpush1.bf16.msra.mxu0 0
      %6552 = vmatprep.mubr.bf16.mxu0 0
      %6553 = vmatmul.mubr.bf16.gmra.mrb[0].mxu0 %v6473
      %v6554 = vpop.f32.mrb[0].mxu0
      %v6555 = vadd.f32 0.0, %v6554
      %v6556 = vpop.f32.mrb[0].mxu0
      %v6557 = vpop.f32.mrb[0].mxu0
      %v6558 = vadd.f32 0.0, %v6557
      %v6559 = vpop.f32.mrb[0].mxu0
      %6560 = vmatprep.mubr.bf16.mxu0 0
      %6561 = vmatmul.mubr.bf16.gmra.mrb[0].mxu0 %v6476
      %v6562 = vpop.f32.mrb[0].mxu0
      %v6563 = vadd.f32 0.0, %v6562
      %v6564 = vpop.f32.mrb[0].mxu0
      %v6565 = vpop.f32.mrb[0].mxu0
      %v6566 = vadd.f32 0.0, %v6565
      %v6567 = vpop.f32.mrb[0].mxu0
      %6568 = vmatprep.mubr.bf16.mxu0 0
      %6569 = vmatmul.mubr.bf16.gmra.mrb[0].mxu0 %v6479
      %v6570 = vpop.f32.mrb[0].mxu0
      %v6571 = vadd.f32 0.0, %v6570
      %v6572 = vpop.f32.mrb[0].mxu0
      %v6573 = vpop.f32.mrb[0].mxu0
      %v6574 = vadd.f32 0.0, %v6573
      %v6575 = vpop.f32.mrb[0].mxu0
      %6576 = vmatprep.mubr.bf16.mxu0 0
      %6577 = vmatmul.mubr.bf16.gmra.mrb[0].mxu0 %v6482
      %v6578 = vpop.f32.mrb[0].mxu0
      %v6579 = vadd.f32 0.0, %v6578
      %v6580 = vpop.f32.mrb[0].mxu0
      %v6581 = vpop.f32.mrb[0].mxu0
      %v6582 = vadd.f32 0.0, %v6581
      %v6583 = vpop.f32.mrb[0].mxu0
      %6584 = vmatprep.mubr.bf16.mxu0 0
      %6585 = vmatmul.mubr.bf16.gmra.mrb[0].mxu0 %v6485
      %v6586 = vpop.f32.mrb[0].mxu0
      %v6587 = vadd.f32 0.0, %v6586
      %v6588 = vpop.f32.mrb[0].mxu0
      %v6589 = vpop.f32.mrb[0].mxu0
      %v6590 = vadd.f32 0.0, %v6589
      %v6591 = vpop.f32.mrb[0].mxu0
      %6592 = vmatprep.mubr.bf16.mxu0 0
      %6593 = vmatmul.mubr.bf16.gmra.mrb[0].mxu0 %v6488
      %v6594 = vpop.f32.mrb[0].mxu0
      %v6595 = vadd.f32 0.0, %v6594
      %v6596 = vpop.f32.mrb[0].mxu0
      %v6597 = vpop.f32.mrb[0].mxu0
      %v6598 = vadd.f32 0.0, %v6597
      %v6599 = vpop.f32.mrb[0].mxu0
      %6600 = vmatprep.mubr.bf16.mxu0 0
      %6601 = vmatmul.mubr.bf16.gmra.mrb[0].mxu0 %v6491
      %v6602 = vpop.f32.mrb[0].mxu0
      %v6603 = vadd.f32 0.0, %v6602
      %v6604 = vpop.f32.mrb[0].mxu0
      %v6605 = vpop.f32.mrb[0].mxu0
      %v6606 = vadd.f32 0.0, %v6605
      %v6607 = vpop.f32.mrb[0].mxu0
      %6608 = vmatprep.mubr.bf16.mxu0 0
      %6609 = vmatmul.mubr.bf16.gmra.mrb[0].mxu0 %v6494
      %v6610 = vpop.f32.mrb[0].mxu0
      %v6611 = vadd.f32 0.0, %v6610
      %v6612 = vpop.f32.mrb[0].mxu0
      %v6613 = vpop.f32.mrb[0].mxu0
      %v6614 = vadd.f32 0.0, %v6613
      %v6615 = vpop.f32.mrb[0].mxu0
      %6616 = vmatprep.mubr.bf16.mxu0 0
      %6617 = vmatmul.mubr.bf16.gmra.mrb[0].mxu0 %v6497
      %v6618 = vpop.f32.mrb[0].mxu0
      %v6619 = vadd.f32 0.0, %v6618
      %v6620 = vpop.f32.mrb[0].mxu0
      %v6621 = vpop.f32.mrb[0].mxu0
      %v6622 = vadd.f32 0.0, %v6621
      %v6623 = vpop.f32.mrb[0].mxu0
      %6624 = vmatprep.mubr.bf16.mxu0 0
      %6625 = vmatmul.mubr.bf16.gmra.mrb[0].mxu0 %v6500
      %v6626 = vpop.f32.mrb[0].mxu0
      %v6627 = vadd.f32 0.0, %v6626
      %v6628 = vpop.f32.mrb[0].mxu0
      %v6629 = vpop.f32.mrb[0].mxu0
      %v6630 = vadd.f32 0.0, %v6629
      %v6631 = vpop.f32.mrb[0].mxu0
      %6632 = vmatprep.mubr.bf16.mxu0 0
      %6633 = vmatmul.mubr.bf16.gmra.mrb[0].mxu0 %v6503
      %v6634 = vpop.f32.mrb[0].mxu0
      %v6635 = vadd.f32 0.0, %v6634
      %v6636 = vpop.f32.mrb[0].mxu0
      %v6637 = vpop.f32.mrb[0].mxu0
      %v6638 = vadd.f32 0.0, %v6637
      %v6639 = vpop.f32.mrb[0].mxu0
      %6640 = vmatprep.mubr.bf16.mxu0 0
      %6641 = vmatmul.mubr.bf16.gmra.mrb[0].mxu0 %v6506
      %v6642 = vpop.f32.mrb[0].mxu0
      %v6643 = vadd.f32 0.0, %v6642
      %v6644 = vpop.f32.mrb[0].mxu0
      %v6645 = vpop.f32.mrb[0].mxu0
      %v6646 = vadd.f32 0.0, %v6645
      %v6647 = vpop.f32.mrb[0].mxu0
      %6648 = vmatprep.mubr.bf16.mxu0 0
      %6649 = vmatmul.mubr.bf16.gmra.mrb[0].mxu0 %v6509
      %v6650 = vpop.f32.mrb[0].mxu0
      %v6651 = vadd.f32 0.0, %v6650
      %v6652 = vpop.f32.mrb[0].mxu0
      %v6653 = vpop.f32.mrb[0].mxu0
      %v6654 = vadd.f32 0.0, %v6653
      %v6655 = vpop.f32.mrb[0].mxu0
      %6656 = vmatprep.mubr.bf16.mxu0 0
      %6657 = vmatmul.mubr.bf16.gmra.mrb[0].mxu0 %v6512
      %v6658 = vpop.f32.mrb[0].mxu0
      %v6659 = vadd.f32 0.0, %v6658
      %v6660 = vpop.f32.mrb[0].mxu0
      %v6661 = vpop.f32.mrb[0].mxu0
      %v6662 = vadd.f32 0.0, %v6661
      %v6663 = vpop.f32.mrb[0].mxu0
      %6664 = vmatprep.mubr.bf16.mxu0 0
      %6665 = vmatmul.mubr.bf16.gmra.mrb[0].mxu0 %v6515
      %v6666 = vpop.f32.mrb[0].mxu0
      %v6667 = vadd.f32 0.0, %v6666
      %v6668 = vpop.f32.mrb[0].mxu0
      %v6669 = vpop.f32.mrb[0].mxu0
      %v6670 = vadd.f32 0.0, %v6669
      %v6671 = vpop.f32.mrb[0].mxu0
      %6672 = vmatprep.mubr.bf16.mxu0 0
      %6673 = vmatmul.mubr.bf16.gmra.mrb[0].mxu0 %v6518
      %v6674 = vpop.f32.mrb[0].mxu0
      %v6675 = vadd.f32 0.0, %v6674
      %v6676 = vpop.f32.mrb[0].mxu0
      %v6677 = vpop.f32.mrb[0].mxu0
      %v6678 = vadd.f32 0.0, %v6677
      %v6679 = vpop.f32.mrb[0].mxu0
      %6680 = vdwg.mxu0
      %v6681 = vadd.f32 %v6337, %v6555
      %v6682 = vadd.f32 %v6340, %v6558
      %v6683 = vadd.f32 %v6345, %v6563
      %v6684 = vadd.f32 %v6348, %v6566
      %v6685 = vadd.f32 %v6353, %v6571
      %v6686 = vadd.f32 %v6356, %v6574
      %v6687 = vadd.f32 %v6361, %v6579
      %v6688 = vadd.f32 %v6364, %v6582
      %v6689 = vadd.f32 %v6369, %v6587
      %v6690 = vadd.f32 %v6372, %v6590
      %v6691 = vadd.f32 %v6377, %v6595
      %v6692 = vadd.f32 %v6380, %v6598
      %v6693 = vadd.f32 %v6385, %v6603
      %v6694 = vadd.f32 %v6388, %v6606
      %v6695 = vadd.f32 %v6393, %v6611
      %v6696 = vadd.f32 %v6396, %v6614
      %v6697 = vadd.f32 %v6401, %v6619
      %v6698 = vadd.f32 %v6404, %v6622
      %v6699 = vadd.f32 %v6409, %v6627
      %v6700 = vadd.f32 %v6412, %v6630
      %v6701 = vadd.f32 %v6417, %v6635
      %v6702 = vadd.f32 %v6420, %v6638
      %v6703 = vadd.f32 %v6425, %v6643
      %v6704 = vadd.f32 %v6428, %v6646
      %v6705 = vadd.f32 %v6433, %v6651
      %v6706 = vadd.f32 %v6436, %v6654
      %v6707 = vadd.f32 %v6441, %v6659
      %v6708 = vadd.f32 %v6444, %v6662
      %v6709 = vadd.f32 %v6449, %v6667
      %v6710 = vadd.f32 %v6452, %v6670
      %v6711 = vadd.f32 %v6457, %v6675
      %v6712 = vadd.f32 %v6460, %v6678
      %v6713 = vld [vmem:[%s10] sm:$0x1]
      %v6715 = vlaneseq
      %v6716 = vshrl.u32 %v6715, 7
      %v6717 = vsub.s32 0, %v6716
      %v6718 = vrot.slane %v6713, %v6717
      %v6720 = vadd.f32 %v6681, %v6718
      %v6721 = vadd.f32 %v6682, %v6718
      %v6722 = vadd.f32 %v6683, %v6718
      %v6723 = vadd.f32 %v6684, %v6718
      %v6724 = vadd.f32 %v6685, %v6718
      %v6725 = vadd.f32 %v6686, %v6718
      %v6726 = vadd.f32 %v6687, %v6718
      %v6727 = vadd.f32 %v6688, %v6718
      %v6728 = vadd.f32 %v6689, %v6718
      %v6729 = vadd.f32 %v6690, %v6718
      %v6730 = vadd.f32 %v6691, %v6718
      %v6731 = vadd.f32 %v6692, %v6718
      %v6732 = vadd.f32 %v6693, %v6718
      %v6733 = vadd.f32 %v6694, %v6718
      %v6734 = vadd.f32 %v6695, %v6718
      %v6735 = vadd.f32 %v6696, %v6718
      %v6736 = vadd.f32 %v6697, %v6718
      %v6737 = vadd.f32 %v6698, %v6718
      %v6738 = vadd.f32 %v6699, %v6718
      %v6739 = vadd.f32 %v6700, %v6718
      %v6740 = vadd.f32 %v6701, %v6718
      %v6741 = vadd.f32 %v6702, %v6718
      %v6742 = vadd.f32 %v6703, %v6718
      %v6743 = vadd.f32 %v6704, %v6718
      %v6744 = vadd.f32 %v6705, %v6718
      %v6745 = vadd.f32 %v6706, %v6718
      %v6746 = vadd.f32 %v6707, %v6718
      %v6747 = vadd.f32 %v6708, %v6718
      %v6748 = vadd.f32 %v6709, %v6718
      %v6749 = vadd.f32 %v6710, %v6718
      %v6750 = vadd.f32 %v6711, %v6718
      %v6751 = vadd.f32 %v6712, %v6718
      %6752 = vst.msk [vmem:[%s420] sm:$0xff] %vm902, %v6720
      %6753 = vst.msk [vmem:[%s420 + $0x8] sm:$0xff] %vm902, %v6721
      %6754 = vst.msk [vmem:[%s420 + $0x10] sm:$0xff] %vm902, %v6722
      %6755 = vst.msk [vmem:[%s420 + $0x18] sm:$0xff] %vm902, %v6723
      %6756 = vst.msk [vmem:[%s420 + $0x20] sm:$0xff] %vm902, %v6724
      %6757 = vst.msk [vmem:[%s420 + $0x28] sm:$0xff] %vm902, %v6725
      %6758 = vst.msk [vmem:[%s420 + $0x30] sm:$0xff] %vm902, %v6726
      %6759 = vst.msk [vmem:[%s420 + $0x38] sm:$0xff] %vm902, %v6727
      %6760 = vst.msk [vmem:[%s420 + $0x40] sm:$0xff] %vm902, %v6728
      %6761 = vst.msk [vmem:[%s420 + $0x48] sm:$0xff] %vm902, %v6729
      %6762 = vst.msk [vmem:[%s420 + $0x50] sm:$0xff] %vm902, %v6730
      %6763 = vst.msk [vmem:[%s420 + $0x58] sm:$0xff] %vm902, %v6731
      %6764 = vst.msk [vmem:[%s420 + $0x60] sm:$0xff] %vm902, %v6732
      %6765 = vst.msk [vmem:[%s420 + $0x68] sm:$0xff] %vm902, %v6733
      %6766 = vst.msk [vmem:[%s420 + $0x70] sm:$0xff] %vm902, %v6734
      %6767 = vst.msk [vmem:[%s420 + $0x78] sm:$0xff] %vm902, %v6735
      %6768 = vst.msk [vmem:[%s420 + $0x80] sm:$0xff] %vm902, %v6736
      %6769 = vst.msk [vmem:[%s420 + $0x88] sm:$0xff] %vm902, %v6737
      %6770 = vst.msk [vmem:[%s420 + $0x90] sm:$0xff] %vm902, %v6738
      %6771 = vst.msk [vmem:[%s420 + $0x98] sm:$0xff] %vm902, %v6739
      %6772 = vst.msk [vmem:[%s420 + $0xa0] sm:$0xff] %vm902, %v6740
      %6773 = vst.msk [vmem:[%s420 + $0xa8] sm:$0xff] %vm902, %v6741
      %6774 = vst.msk [vmem:[%s420 + $0xb0] sm:$0xff] %vm902, %v6742
      %6775 = vst.msk [vmem:[%s420 + $0xb8] sm:$0xff] %vm902, %v6743
      %6776 = vst.msk [vmem:[%s420 + $0xc0] sm:$0xff] %vm902, %v6744
      %6777 = vst.msk [vmem:[%s420 + $0xc8] sm:$0xff] %vm902, %v6745
      %6778 = vst.msk [vmem:[%s420 + $0xd0] sm:$0xff] %vm902, %v6746
      %6779 = vst.msk [vmem:[%s420 + $0xd8] sm:$0xff] %vm902, %v6747
      %6780 = vst.msk [vmem:[%s420 + $0xe0] sm:$0xff] %vm902, %v6748
      %6781 = vst.msk [vmem:[%s420 + $0xe8] sm:$0xff] %vm902, %v6749
      %6782 = vst.msk [vmem:[%s420 + $0xf0] sm:$0xff] %vm902, %v6750
      %6783 = vst.msk [vmem:[%s420 + $0xf8] sm:$0xff] %vm902, %v6751
      %v6784 = vsel %vm902, %v6720, 0.0
      %v6785 = vsel %vm902, %v6721, 0.0
      %v6786 = vadd.f32 %v6784, %v6785
      %v6787 = vsel %vm902, %v6722, 0.0
      %v6788 = vadd.f32 %v6786, %v6787
      %v6789 = vsel %vm902, %v6723, 0.0
      %v6790 = vadd.f32 %v6788, %v6789
      %v6791 = vsel %vm902, %v6724, 0.0
      %v6792 = vadd.f32 %v6790, %v6791
      %v6793 = vsel %vm902, %v6725, 0.0
      %v6794 = vadd.f32 %v6792, %v6793
      %v6795 = vsel %vm902, %v6726, 0.0
      %v6796 = vadd.f32 %v6794, %v6795
      %v6797 = vsel %vm902, %v6727, 0.0
      %v6798 = vadd.f32 %v6796, %v6797
      %v6799 = vsel %vm902, %v6728, 0.0
      %v6800 = vadd.f32 %v6798, %v6799
      %v6801 = vsel %vm902, %v6729, 0.0
      %v6802 = vadd.f32 %v6800, %v6801
      %v6803 = vsel %vm902, %v6730, 0.0
      %v6804 = vadd.f32 %v6802, %v6803
      %v6805 = vsel %vm902, %v6731, 0.0
      %v6806 = vadd.f32 %v6804, %v6805
      %v6807 = vsel %vm902, %v6732, 0.0
      %v6808 = vadd.f32 %v6806, %v6807
      %v6809 = vsel %vm902, %v6733, 0.0
      %v6810 = vadd.f32 %v6808, %v6809
      %v6811 = vsel %vm902, %v6734, 0.0
      %v6812 = vadd.f32 %v6810, %v6811
      %v6813 = vsel %vm902, %v6735, 0.0
      %v6814 = vadd.f32 %v6812, %v6813
      %v6815 = vsel %vm902, %v6736, 0.0
      %v6816 = vadd.f32 %v6814, %v6815
      %v6817 = vsel %vm902, %v6737, 0.0
      %v6818 = vadd.f32 %v6816, %v6817
      %v6819 = vsel %vm902, %v6738, 0.0
      %v6820 = vadd.f32 %v6818, %v6819
      %v6821 = vsel %vm902, %v6739, 0.0
      %v6822 = vadd.f32 %v6820, %v6821
      %v6823 = vsel %vm902, %v6740, 0.0
      %v6824 = vadd.f32 %v6822, %v6823
      %v6825 = vsel %vm902, %v6741, 0.0
      %v6826 = vadd.f32 %v6824, %v6825
      %v6827 = vsel %vm902, %v6742, 0.0
      %v6828 = vadd.f32 %v6826, %v6827
      %v6829 = vsel %vm902, %v6743, 0.0
      %v6830 = vadd.f32 %v6828, %v6829
      %v6831 = vsel %vm902, %v6744, 0.0
      %v6832 = vadd.f32 %v6830, %v6831
      %v6833 = vsel %vm902, %v6745, 0.0
      %v6834 = vadd.f32 %v6832, %v6833
      %v6835 = vsel %vm902, %v6746, 0.0
      %v6836 = vadd.f32 %v6834, %v6835
      %v6837 = vsel %vm902, %v6747, 0.0
      %v6838 = vadd.f32 %v6836, %v6837
      %v6839 = vsel %vm902, %v6748, 0.0
      %v6840 = vadd.f32 %v6838, %v6839
      %v6841 = vsel %vm902, %v6749, 0.0
      %v6842 = vadd.f32 %v6840, %v6841
      %v6843 = vsel %vm902, %v6750, 0.0
      %v6844 = vadd.f32 %v6842, %v6843
      %v6845 = vsel %vm902, %v6751, 0.0
      %v6846 = vadd.f32 %v6844, %v6845
      %v6847 = vrot.slane %v6846, 4
      %v6848 = vadd.f32 %v6846, %v6847
      %v6849 = vrot.slane %v6848, 2
      %v6850 = vadd.f32 %v6848, %v6849
      %v6851 = vrot.slane %v6850, 1
      %v6852 = vadd.f32 %v6850, %v6851
      %v6853 = vmul.f32 %v6852, 0.00390625
      %v6854 = vsub.f32 %v6720, %v6853
      %v6855 = vsub.f32 %v6721, %v6853
      %v6856 = vsub.f32 %v6722, %v6853
      %v6857 = vsub.f32 %v6723, %v6853
      %v6858 = vsub.f32 %v6724, %v6853
      %v6859 = vsub.f32 %v6725, %v6853
      %v6860 = vsub.f32 %v6726, %v6853
      %v6861 = vsub.f32 %v6727, %v6853
      %v6862 = vsub.f32 %v6728, %v6853
      %v6863 = vsub.f32 %v6729, %v6853
      %v6864 = vsub.f32 %v6730, %v6853
      %v6865 = vsub.f32 %v6731, %v6853
      %v6866 = vsub.f32 %v6732, %v6853
      %v6867 = vsub.f32 %v6733, %v6853
      %v6868 = vsub.f32 %v6734, %v6853
      %v6869 = vsub.f32 %v6735, %v6853
      %v6870 = vsub.f32 %v6736, %v6853
      %v6871 = vsub.f32 %v6737, %v6853
      %v6872 = vsub.f32 %v6738, %v6853
      %v6873 = vsub.f32 %v6739, %v6853
      %v6874 = vsub.f32 %v6740, %v6853
      %v6875 = vsub.f32 %v6741, %v6853
      %v6876 = vsub.f32 %v6742, %v6853
      %v6877 = vsub.f32 %v6743, %v6853
      %v6878 = vsub.f32 %v6744, %v6853
      %v6879 = vsub.f32 %v6745, %v6853
      %v6880 = vsub.f32 %v6746, %v6853
      %v6881 = vsub.f32 %v6747, %v6853
      %v6882 = vsub.f32 %v6748, %v6853
      %v6883 = vsub.f32 %v6749, %v6853
      %v6884 = vsub.f32 %v6750, %v6853
      %v6885 = vsub.f32 %v6751, %v6853
      %v6886 = vmul.f32 %v6854, %v6854
      %v6887 = vmul.f32 %v6855, %v6855
      %v6888 = vmul.f32 %v6856, %v6856
      %v6889 = vmul.f32 %v6857, %v6857
      %v6890 = vmul.f32 %v6858, %v6858
      %v6891 = vmul.f32 %v6859, %v6859
      %v6892 = vmul.f32 %v6860, %v6860
      %v6893 = vmul.f32 %v6861, %v6861
      %v6894 = vmul.f32 %v6862, %v6862
      %v6895 = vmul.f32 %v6863, %v6863
      %v6896 = vmul.f32 %v6864, %v6864
      %v6897 = vmul.f32 %v6865, %v6865
      %v6898 = vmul.f32 %v6866, %v6866
      %v6899 = vmul.f32 %v6867, %v6867
      %v6900 = vmul.f32 %v6868, %v6868
      %v6901 = vmul.f32 %v6869, %v6869
      %v6902 = vmul.f32 %v6870, %v6870
      %v6903 = vmul.f32 %v6871, %v6871
      %v6904 = vmul.f32 %v6872, %v6872
      %v6905 = vmul.f32 %v6873, %v6873
      %v6906 = vmul.f32 %v6874, %v6874
      %v6907 = vmul.f32 %v6875, %v6875
      %v6908 = vmul.f32 %v6876, %v6876
      %v6909 = vmul.f32 %v6877, %v6877
      %v6910 = vmul.f32 %v6878, %v6878
      %v6911 = vmul.f32 %v6879, %v6879
      %v6912 = vmul.f32 %v6880, %v6880
      %v6913 = vmul.f32 %v6881, %v6881
      %v6914 = vmul.f32 %v6882, %v6882
      %v6915 = vmul.f32 %v6883, %v6883
      %v6916 = vmul.f32 %v6884, %v6884
      %v6917 = vmul.f32 %v6885, %v6885
      %v6918 = vsel %vm902, %v6886, 0.0
      %v6919 = vsel %vm902, %v6887, 0.0
      %v6920 = vadd.f32 %v6918, %v6919
      %v6921 = vsel %vm902, %v6888, 0.0
      %v6922 = vadd.f32 %v6920, %v6921
      %v6923 = vsel %vm902, %v6889, 0.0
      %v6924 = vadd.f32 %v6922, %v6923
      %v6925 = vsel %vm902, %v6890, 0.0
      %v6926 = vadd.f32 %v6924, %v6925
      %v6927 = vsel %vm902, %v6891, 0.0
      %v6928 = vadd.f32 %v6926, %v6927
      %v6929 = vsel %vm902, %v6892, 0.0
      %v6930 = vadd.f32 %v6928, %v6929
      %v6931 = vsel %vm902, %v6893, 0.0
      %v6932 = vadd.f32 %v6930, %v6931
      %v6933 = vsel %vm902, %v6894, 0.0
      %v6934 = vadd.f32 %v6932, %v6933
      %v6935 = vsel %vm902, %v6895, 0.0
      %v6936 = vadd.f32 %v6934, %v6935
      %v6937 = vsel %vm902, %v6896, 0.0
      %v6938 = vadd.f32 %v6936, %v6937
      %v6939 = vsel %vm902, %v6897, 0.0
      %v6940 = vadd.f32 %v6938, %v6939
      %v6941 = vsel %vm902, %v6898, 0.0
      %v6942 = vadd.f32 %v6940, %v6941
      %v6943 = vsel %vm902, %v6899, 0.0
      %v6944 = vadd.f32 %v6942, %v6943
      %v6945 = vsel %vm902, %v6900, 0.0
      %v6946 = vadd.f32 %v6944, %v6945
      %v6947 = vsel %vm902, %v6901, 0.0
      %v6948 = vadd.f32 %v6946, %v6947
      %v6949 = vsel %vm902, %v6902, 0.0
      %v6950 = vadd.f32 %v6948, %v6949
      %v6951 = vsel %vm902, %v6903, 0.0
      %v6952 = vadd.f32 %v6950, %v6951
      %v6953 = vsel %vm902, %v6904, 0.0
      %v6954 = vadd.f32 %v6952, %v6953
      %v6955 = vsel %vm902, %v6905, 0.0
      %v6956 = vadd.f32 %v6954, %v6955
      %v6957 = vsel %vm902, %v6906, 0.0
      %v6958 = vadd.f32 %v6956, %v6957
      %v6959 = vsel %vm902, %v6907, 0.0
      %v6960 = vadd.f32 %v6958, %v6959
      %v6961 = vsel %vm902, %v6908, 0.0
      %v6962 = vadd.f32 %v6960, %v6961
      %v6963 = vsel %vm902, %v6909, 0.0
      %v6964 = vadd.f32 %v6962, %v6963
      %v6965 = vsel %vm902, %v6910, 0.0
      %v6966 = vadd.f32 %v6964, %v6965
      %v6967 = vsel %vm902, %v6911, 0.0
      %v6968 = vadd.f32 %v6966, %v6967
      %v6969 = vsel %vm902, %v6912, 0.0
      %v6970 = vadd.f32 %v6968, %v6969
      %v6971 = vsel %vm902, %v6913, 0.0
      %v6972 = vadd.f32 %v6970, %v6971
      %v6973 = vsel %vm902, %v6914, 0.0
      %v6974 = vadd.f32 %v6972, %v6973
      %v6975 = vsel %vm902, %v6915, 0.0
      %v6976 = vadd.f32 %v6974, %v6975
      %v6977 = vsel %vm902, %v6916, 0.0
      %v6978 = vadd.f32 %v6976, %v6977
      %v6979 = vsel %vm902, %v6917, 0.0
      %v6980 = vadd.f32 %v6978, %v6979
      %v6981 = vrot.slane %v6980, 4
      %v6982 = vadd.f32 %v6980, %v6981
      %v6983 = vrot.slane %v6982, 2
      %v6984 = vadd.f32 %v6982, %v6983
      %v6985 = vrot.slane %v6984, 1
      %v6986 = vadd.f32 %v6984, %v6985
      %v6987 = vsel %vm5820, %v6852, %v6986
      %vm6988 = vcmask 123904
      %6989 = vst.msk [vmem:[%s424] sm:$0x3] %vm6988, %v6987
      %p6990 = scmp.lt.s32.totalorder %s24, 1
      %s6991 = scalar_select %p6990, %s24, 1
      %s6992 = smul.addr %s6991, 32
      %s6993 = smul.addr %s6992, 8
      %s6994 = scalar_lea.vmem %s11, %s6993
      %p6995 = scmp.lt.s32.totalorder %s24, 1
      %s6996 = scalar_select %p6995, %s24, 1
      %s6997 = smul.addr %s6996, 2
      %s6998 = scalar_lea.vmem %s12, %s6997
      // Predicated region
      $region65: #{msffe_pallas.1} parent=63 // pred_check
        %p6999 = pneg %p278
      $region66: #{msffe_pallas.1} parent=63 // pred_check_branch
        %7001 = sbr.rel (%p6999) target = $region68
      $region67: #{msffe_pallas.1} parent=63 // pred_region
        _
      $region68: #{msffe_pallas.1} parent=63 // pred_fallthru
        _
      // Predicated region
      $region69: #{msffe_pallas.1} parent=63 // pred_check
        %p7002 = pneg %p304
      $region70: #{msffe_pallas.1} parent=63 // pred_check_branch
        %7004 = sbr.rel (%p7002) target = $region72
      $region71: #{msffe_pallas.1} parent=63 // pred_region
        _
      $region72: #{msffe_pallas.1} parent=63 // pred_fallthru
        _
    $region64: #{msffe_pallas.1} parent=5 // pred_fallthru
      _
    %p7005 = scmp.le.s32.totalorder 2, %s19
    // Predicated region
    $region73: #{msffe_pallas.1} parent=5 // pred_check
      %p7006 = pneg %p7005
    $region74: #{msffe_pallas.1} parent=5 // pred_check_branch
      %7008 = sbr.rel (%p7006) target = $region76
    $region75: #{msffe_pallas.1} parent=5 // pred_region
      %s7009 = ssub.s32 %s19, 2
      // Predicated region
      $region77: #{msffe_pallas.1} parent=75 // pred_check
        %p7010 = pneg %p284
      $region78: #{msffe_pallas.1} parent=75 // pred_check_branch
        %7012 = sbr.rel (%p7010) target = $region80
      $region79: #{msffe_pallas.1} parent=75 // pred_region
        %p7013 = scmp.lt.s32.totalorder %s25, 1
        %s7014 = scalar_select %p7013, %s25, 1
        %s7015 = smul.addr %s7014, 32
        %s7016 = smul.addr %s7015, 8
        %s7017 = scalar_lea.vmem %s11, %s7016
      $region80: #{msffe_pallas.1} parent=75 // pred_fallthru
        _
      // Predicated region
      $region81: #{msffe_pallas.1} parent=75 // pred_check
        %p7018 = pneg %p310
      $region82: #{msffe_pallas.1} parent=75 // pred_check_branch
        %7020 = sbr.rel (%p7018) target = $region84
      $region83: #{msffe_pallas.1} parent=75 // pred_region
        %p7021 = scmp.lt.s32.totalorder %s25, 1
        %s7022 = scalar_select %p7021, %s25, 1
        %s7023 = smul.addr %s7022, 2
        %s7024 = scalar_lea.vmem %s12, %s7023
      $region84: #{msffe_pallas.1} parent=75 // pred_fallthru
        _
    $region76: #{msffe_pallas.1} parent=5 // pred_fallthru
      _
  $region6: #{msffe_pallas.1} parent=0 // loop_footer
    %s23 = sadd.s32 1, %s19
  $region7: #{msffe_pallas.1} parent=0 // loop_footer_branch
    %18 = sbr.rel target = $region3
  $region8: #{msffe_pallas.1} parent=0 // loop_exit
    _

</llo_original>
